<compile_context>
chip_gen: v6e
topology: v6e:2x2x1
jax: 0.10.0
libtpu: 0.0.40
codegen_flags: <defaults>
</compile_context>

<pallas_src>
import jax
import jax.numpy as jnp
from jax.experimental import pallas as pl
from jax.experimental.pallas import tpu as pltpu

_LANE = 128


# ------------------ constant im2col selection matrices ----------------------

def _selection_cat(num_rows, in_hw, k, stride, dtype=jnp.float32):
    """0/1 matrix of shape (num_rows, k*k*_LANE).  Tap block t = dy*k + dx
    occupies lanes [t*_LANE, t*_LANE + out_hw^2); column p of block t selects
    input pixel (oy*stride+dy)*in_hw + (ox*stride+dx) (p = oy*out_hw + ox).
    Rows >= in_hw^2 and pad lanes stay all-zero."""
    out_hw = (in_hw - k) // stride + 1
    n_pix = out_hw * out_hw
    oy, ox = jnp.meshgrid(jnp.arange(out_hw), jnp.arange(out_hw), indexing="ij")
    blocks = []
    for dy in range(k):
        for dx in range(k):
            src = ((oy * stride + dy) * in_hw + (ox * stride + dx)).reshape(-1)
            blk = jax.nn.one_hot(src, num_rows, dtype=dtype).T     # (num_rows, n_pix)
            blk = jnp.pad(blk, ((0, 0), (0, _LANE - n_pix)))
            blocks.append(blk)
    return jnp.concatenate(blocks, axis=1)                          # (num_rows, k*k*128)


def _im2col_conv1_T(x, k=8, stride=4):
    """x: (N, C, H, W) -> (N, C*k*k, oh*ow); K-order (c, ky, kx), M-order (oy, ox).
    Only conv1's patches are built in XLA (they depend only on the raw input)."""
    n, c, h, w = x.shape
    oh = (h - k) // stride + 1
    ow = (w - k) // stride + 1
    rows = (jnp.arange(oh) * stride)[:, None] + jnp.arange(k)[None, :]
    cols = (jnp.arange(ow) * stride)[:, None] + jnp.arange(k)[None, :]
    p = x[:, :, rows[:, :, None, None], cols[None, None, :, :]]   # (n,c,oh,k,ow,k)
    p = p.transpose(0, 1, 3, 5, 2, 4)                             # (n,c,ky,kx,oy,ox)
    return p.reshape(n, c * k * k, oh * ow)


# ------------------------------ Pallas kernels -------------------------------

def _conv_stack_kernel(p1_ref, w1_ref, b1_ref, s2_ref, w2_ref, b2_ref,
                       s3_ref, w3_ref, b3_ref, o_ref, z2_ref, z3_ref):
    """One image per grid step; conv1/conv2/conv3 (+ReLU) fused, activations
    stay in VMEM, layout (channels on sublanes, pixels on the 128-lane axis)."""
    f32 = jnp.float32

    # conv1 + ReLU:  (32, 256) @ (256, 400) -> (32, 400)
    h1 = jnp.dot(w1_ref[...], p1_ref[0], preferred_element_type=f32)
    h1 = jnp.maximum(h1 + b1_ref[...], 0.0)

    # conv2 + ReLU: one gather matmul over all 16 taps, then one K=512 matmul.
    t2 = s2_ref.shape[1] // _LANE          # 16 taps
    cin2 = w2_ref.shape[1] // t2           # 32 input channels
    g2 = jnp.dot(h1, s2_ref[...], preferred_element_type=f32)           # (32, 16*128)
    for t in range(t2):                    # tile-aligned lane-block -> sublane repack
        z2_ref[t * cin2:(t + 1) * cin2, :] = g2[:, t * _LANE:(t + 1) * _LANE]
    h2 = jnp.dot(w2_ref[...], z2_ref[...], preferred_element_type=f32)  # (64, 128)
    h2 = jnp.maximum(h2 + b2_ref[...], 0.0)   # lanes >= 81 hold relu(b2); harmless

    # conv3 + ReLU: S3's rows >= 81 are zero, so the pad lanes of h2 are ignored.
    t3 = s3_ref.shape[1] // _LANE          # 9 taps
    cin3 = w3_ref.shape[1] // t3           # 64 input channels
    g3 = jnp.dot(h2, s3_ref[...], preferred_element_type=f32)           # (64, 9*128)
    for t in range(t3):
        z3_ref[t * cin3:(t + 1) * cin3, :] = g3[:, t * _LANE:(t + 1) * _LANE]
    h3 = jnp.dot(w3_ref[...], z3_ref[...], preferred_element_type=f32)  # (64, 128)
    h3 = jnp.maximum(h3 + b3_ref[...], 0.0)

    # keep only the 49 valid pixels; (64, 49) in (channel, pixel) order matches
    # PyTorch's (C, H, W) flatten for fc1.
    o_ref[0] = h3[:, :o_ref.shape[2]].astype(o_ref.dtype)


def _fc_kernel(x_ref, w1_ref, b1_ref, w2_ref, b2_ref, o_ref):
    h = jnp.dot(x_ref[...], w1_ref[...], preferred_element_type=jnp.float32)
    h = jnp.maximum(h + b1_ref[...], 0.0)
    y = jnp.dot(h, w2_ref[...], preferred_element_type=jnp.float32) + b2_ref[...]
    o_ref[...] = y.astype(o_ref.dtype)


# ------------------------------ Pallas wrappers ------------------------------

def conv_stack_pallas(patches1_T, cp):
    """patches1_T: (N, 256, 400).  Returns (N, 64, 49) conv3 activations laid out
    (channel, pixel) so that .reshape(N, 3136) equals PyTorch's flatten order."""
    n, k1, m1 = patches1_T.shape
    c3 = cp["w3"].shape[0]
    hw1 = int(round(m1 ** 0.5))            # 20
    hw2 = (hw1 - 4) // 2 + 1               # 9
    hw3 = (hw2 - 3) // 1 + 1               # 7
    m3 = hw3 * hw3                         # 49

    return pl.pallas_call(
        _conv_stack_kernel,
        out_shape=jax.ShapeDtypeStruct((n, c3, m3), jnp.float32),
        grid=(n,),
        in_specs=[
            pl.BlockSpec((1, k1, m1), lambda i: (i, 0, 0)),        # per-image patches
            pl.BlockSpec(cp["w1"].shape, lambda i: (0, 0)),        # (32, 256)
            pl.BlockSpec(cp["b1"].shape, lambda i: (0, 0)),        # (32, 1)
            pl.BlockSpec(cp["s2"].shape, lambda i: (0, 0)),        # (400, 2048)
            pl.BlockSpec(cp["w2"].shape, lambda i: (0, 0)),        # (64, 512)
            pl.BlockSpec(cp["b2"].shape, lambda i: (0, 0)),        # (64, 1)
            pl.BlockSpec(cp["s3"].shape, lambda i: (0, 0)),        # (128, 1152)
            pl.BlockSpec(cp["w3"].shape, lambda i: (0, 0)),        # (64, 576)
            pl.BlockSpec(cp["b3"].shape, lambda i: (0, 0)),        # (64, 1)
        ],
        out_specs=pl.BlockSpec((1, c3, m3), lambda i: (i, 0, 0)),
        scratch_shapes=[
            pltpu.VMEM((cp["w2"].shape[1], _LANE), jnp.float32),   # (512, 128)
            pltpu.VMEM((cp["w3"].shape[1], _LANE), jnp.float32),   # (576, 128)
        ],
        compiler_params=pltpu.CompilerParams(
            dimension_semantics=("parallel",),
            vmem_limit_bytes=32 << 20,
        ),
    )(patches1_T, cp["w1"], cp["b1"], cp["s2"], cp["w2"], cp["b2"],
      cp["s3"], cp["w3"], cp["b3"])


def fc_pallas(x, w1, b1, w2, b2):
    """y = (relu(x @ w1 + b1)) @ w2 + b2, fused in one call, no M padding.
    TODO(synk): fusing this into the conv call would need an in-kernel
    (64,49)->(1,3136) sublane->lane relayout; kept separate for lowering safety."""
    m, k = x.shape
    n1 = w1.shape[1]
    n2 = w2.shape[1]
    return pl.pallas_call(
        _fc_kernel,
        out_shape=jax.ShapeDtypeStruct((m, n2), jnp.float32),
        grid=(1,),
        in_specs=[
            pl.BlockSpec((m, k), lambda i: (0, 0)),
            pl.BlockSpec((k, n1), lambda i: (0, 0)),
            pl.BlockSpec((1, n1), lambda i: (0, 0)),
            pl.BlockSpec((n1, n2), lambda i: (0, 0)),
            pl.BlockSpec((1, n2), lambda i: (0, 0)),
        ],
        out_specs=pl.BlockSpec((m, n2), lambda i: (0, 0)),
        compiler_params=pltpu.CompilerParams(
            dimension_semantics=("arbitrary",),
            vmem_limit_bytes=32 << 20,
        ),
    )(x, w1, b1, w2, b2)


# -------------------------------- parameters --------------------------------

def init_params(key, in_channels, output_size):
    ks = jax.random.split(key, 10)
    scale = 0.05
    return {
        "c1_w": scale * jax.random.normal(ks[0], (32, in_channels, 8, 8), jnp.float32),
        "c1_b": scale * jax.random.normal(ks[1], (32,), jnp.float32),
        "c2_w": scale * jax.random.normal(ks[2], (64, 32, 4, 4), jnp.float32),
        "c2_b": scale * jax.random.normal(ks[3], (64,), jnp.float32),
        "c3_w": scale * jax.random.normal(ks[4], (64, 64, 3, 3), jnp.float32),
        "c3_b": scale * jax.random.normal(ks[5], (64,), jnp.float32),
        "fc1_w": scale * jax.random.normal(ks[6], (512, 3136), jnp.float32),
        "fc1_b": scale * jax.random.normal(ks[7], (512,), jnp.float32),
        "fc2_w": scale * jax.random.normal(ks[8], (output_size, 512), jnp.float32),
        "fc2_b": scale * jax.random.normal(ks[9], (output_size,), jnp.float32),
    }


def prepare_params(p, spatial=84):
    """One-time (outside the jitted forward) conversion of PyTorch-layout params
    into kernel-ready layouts + constant im2col selection matrices."""
    c1_w, c2_w, c3_w = p["c1_w"], p["c2_w"], p["c3_w"]
    hw1 = (spatial - 8) // 4 + 1        # 20
    hw2 = (hw1 - 4) // 2 + 1            # 9
    return {
        # conv1 as a single (C1, K1) matmul; K-order (in_c, ky, kx)
        "w1": c1_w.reshape(c1_w.shape[0], -1),
        "b1": p["c1_b"].reshape(-1, 1),
        # conv2 / conv3: lane-dense weights, column order (tap, in_channel)
        "w2": jnp.transpose(c2_w, (0, 2, 3, 1)).reshape(c2_w.shape[0], -1),  # (64, 512)
        "b2": p["c2_b"].reshape(-1, 1),
        "w3": jnp.transpose(c3_w, (0, 2, 3, 1)).reshape(c3_w.shape[0], -1),  # (64, 576)
        "b3": p["c3_b"].reshape(-1, 1),
        # lane-concatenated 0/1 selection matrices (exact in fp32), 128-padded taps
        "s2": _selection_cat(hw1 * hw1, hw1, 4, 2),     # (400, 16*128)
        "s3": _selection_cat(_LANE, hw2, 3, 1),         # (128,  9*128)
        # fc weights pre-transposed to (K, N)
        "fc1_w": p["fc1_w"].T,
        "fc1_b": p["fc1_b"].reshape(1, -1),
        "fc2_w": p["fc2_w"].T,
        "fc2_b": p["fc2_b"].reshape(1, -1),
    }


# ------------------------------- full forward --------------------------------

@jax.jit
def atari_deep_net_forward(cp, x):
    n = x.shape[0]
    patches1_T = _im2col_conv1_T(x)                 # (N, 256, 400)  -- XLA glue on raw input
    h = conv_stack_pallas(patches1_T, cp)           # (N, 64, 49)    -- one fused conv call
    h = h.reshape(n, -1)                            # (N, 3136) == PyTorch (C,H,W) flatten (free bitcast)
    return fc_pallas(h, cp["fc1_w"], cp["fc1_b"], cp["fc2_w"], cp["fc2_b"])


# -------------------------------- reference ----------------------------------

def _reference_forward(params, x):
    def conv(x, w, b, s):
        y = jax.lax.conv_general_dilated(
            x, w, window_strides=(s, s), padding="VALID",
            dimension_numbers=("NCHW", "OIHW", "NCHW"))
        return jax.nn.relu(y + b[None, :, None, None])
    h = conv(x, params["c1_w"], params["c1_b"], 4)
    h = conv(h, params["c2_w"], params["c2_b"], 2)
    h = conv(h, params["c3_w"], params["c3_b"], 1)
    h = h.reshape(h.shape[0], -1)
    h = jax.nn.relu(h @ params["fc1_w"].T + params["fc1_b"])
    return h @ params["fc2_w"].T + params["fc2_b"]


# ----------------------------------- main ------------------------------------

if __name__ == "__main__":
    key = jax.random.PRNGKey(0)
    k_param, k_x = jax.random.split(key)

    batch, in_channels, spatial = 2, 4, 84   # 84x84 is required by the fc(3136) layer
    output_size = 6

    params = init_params(k_param, in_channels, output_size)
    cp = prepare_params(params, spatial=spatial)
    x = jax.random.uniform(k_x, (batch, in_channels, spatial, spatial), jnp.float32)

    out = jax.block_until_ready(atari_deep_net_forward(cp, x))
    assert out.shape == (batch, output_size), out.shape

    ref = jax.block_until_ready(_reference_forward(params, x))
    assert jnp.allclose(out, ref, atol=1e-3, rtol=1e-3), float(jnp.max(jnp.abs(out - ref)))

    print("KERNEL_OK")
</pallas_src>

<mosaic_0001>
module attributes {stable_mosaic.version = 11 : i64} {
  func.func @_conv_stack_kernel(%arg0: i32, %arg1: memref<1x256x400xf32, #tpu.memory_space<vmem>>, %arg2: memref<32x256xf32, #tpu.memory_space<vmem>>, %arg3: memref<32x1xf32, #tpu.memory_space<vmem>>, %arg4: memref<400x2048xf32, #tpu.memory_space<vmem>>, %arg5: memref<64x512xf32, #tpu.memory_space<vmem>>, %arg6: memref<64x1xf32, #tpu.memory_space<vmem>>, %arg7: memref<128x1152xf32, #tpu.memory_space<vmem>>, %arg8: memref<64x576xf32, #tpu.memory_space<vmem>>, %arg9: memref<64x1xf32, #tpu.memory_space<vmem>>, %arg10: memref<1x64x49xf32, #tpu.memory_space<vmem>>, %arg11: memref<512x128xf32, #tpu.memory_space<vmem>>, %arg12: memref<576x128xf32, #tpu.memory_space<vmem>>) attributes {dimension_semantics = [#tpu.dimension_semantics<parallel>], iteration_bounds = array<i64: 2>, scalar_prefetch = 0 : i64, scratch_operands = 2 : i64, tpu.core_type = #tpu.core_type<tc>, window_params = [{transform_indices = @transform_0, window_bounds = array<i64: 1, 256, 400>}, {pipeline_mode = #tpu.pipeline_mode<synchronous>, transform_indices = @transform_1, window_bounds = array<i64: 32, 256>}, {pipeline_mode = #tpu.pipeline_mode<synchronous>, transform_indices = @transform_2, window_bounds = array<i64: 32, 1>}, {pipeline_mode = #tpu.pipeline_mode<synchronous>, transform_indices = @transform_3, window_bounds = array<i64: 400, 2048>}, {pipeline_mode = #tpu.pipeline_mode<synchronous>, transform_indices = @transform_4, window_bounds = array<i64: 64, 512>}, {pipeline_mode = #tpu.pipeline_mode<synchronous>, transform_indices = @transform_5, window_bounds = array<i64: 64, 1>}, {pipeline_mode = #tpu.pipeline_mode<synchronous>, transform_indices = @transform_6, window_bounds = array<i64: 128, 1152>}, {pipeline_mode = #tpu.pipeline_mode<synchronous>, transform_indices = @transform_7, window_bounds = array<i64: 64, 576>}, {pipeline_mode = #tpu.pipeline_mode<synchronous>, transform_indices = @transform_8, window_bounds = array<i64: 64, 1>}, {transform_indices = @transform_9, window_bounds = array<i64: 1, 64, 49>}]} {
    %c0 = arith.constant 0 : index
    %c0_0 = arith.constant 0 : index
    %0 = vector.load %arg2[%c0, %c0_0] : memref<32x256xf32, #tpu.memory_space<vmem>>, vector<32x256xf32>
    %c0_1 = arith.constant 0 : index
    %c0_2 = arith.constant 0 : index
    %c0_3 = arith.constant 0 : index
    %1 = vector.load %arg1[%c0_1, %c0_2, %c0_3] : memref<1x256x400xf32, #tpu.memory_space<vmem>>, vector<1x256x400xf32>
    %2 = vector.shape_cast %1 : vector<1x256x400xf32> to vector<256x400xf32>
    %cst = arith.constant dense<0.000000e+00> : vector<32x400xf32>
    %3 = tpu.matmul %0, %2, %cst {dimension_numbers = #tpu.dot_dimension_numbers<[1], [0], [0], [1], [0, 0, 1, 1], [], []>} : vector<32x256xf32>, vector<256x400xf32>, vector<32x400xf32> -> vector<32x400xf32>
    %c0_4 = arith.constant 0 : index
    %c0_5 = arith.constant 0 : index
    %4 = vector.load %arg3[%c0_4, %c0_5] : memref<32x1xf32, #tpu.memory_space<vmem>>, vector<32x1xf32>
    %5 = vector.broadcast %4 : vector<32x1xf32> to vector<32x400xf32>
    %6 = arith.addf %3, %5 : vector<32x400xf32>
    %cst_6 = arith.constant 0.000000e+00 : f32
    %7 = vector.broadcast %cst_6 : f32 to vector<32x400xf32>
    %8 = arith.maximumf %6, %7 : vector<32x400xf32>
    %c0_7 = arith.constant 0 : index
    %c0_8 = arith.constant 0 : index
    %9 = vector.load %arg4[%c0_7, %c0_8] : memref<400x2048xf32, #tpu.memory_space<vmem>>, vector<400x2048xf32>
    %cst_9 = arith.constant dense<0.000000e+00> : vector<32x2048xf32>
    %10 = tpu.matmul %8, %9, %cst_9 {dimension_numbers = #tpu.dot_dimension_numbers<[1], [0], [0], [1], [0, 0, 1, 1], [], []>} : vector<32x400xf32>, vector<400x2048xf32>, vector<32x2048xf32> -> vector<32x2048xf32>
    %11 = vector.extract_strided_slice %10 {offsets = [0, 0], sizes = [32, 128], strides = [1, 1]} : vector<32x2048xf32> to vector<32x128xf32>
    %c0_10 = arith.constant 0 : index
    %c0_11 = arith.constant 0 : index
    %12 = vector.load %arg11[%c0_10, %c0_11] : memref<512x128xf32, #tpu.memory_space<vmem>>, vector<32x128xf32>
    tpu.vector_store %arg11[%c0_10, %c0_11], %11 {strides = array<i32>} : memref<512x128xf32, #tpu.memory_space<vmem>>, vector<32x128xf32>,
    %13 = vector.extract_strided_slice %10 {offsets = [0, 128], sizes = [32, 128], strides = [1, 1]} : vector<32x2048xf32> to vector<32x128xf32>
    %c32 = arith.constant 32 : index
    %c0_12 = arith.constant 0 : index
    %14 = vector.load %arg11[%c32, %c0_12] : memref<512x128xf32, #tpu.memory_space<vmem>>, vector<32x128xf32>
    tpu.vector_store %arg11[%c32, %c0_12], %13 {strides = array<i32>} : memref<512x128xf32, #tpu.memory_space<vmem>>, vector<32x128xf32>,
    %15 = vector.extract_strided_slice %10 {offsets = [0, 256], sizes = [32, 128], strides = [1, 1]} : vector<32x2048xf32> to vector<32x128xf32>
    %c64 = arith.constant 64 : index
    %c0_13 = arith.constant 0 : index
    %16 = vector.load %arg11[%c64, %c0_13] : memref<512x128xf32, #tpu.memory_space<vmem>>, vector<32x128xf32>
    tpu.vector_store %arg11[%c64, %c0_13], %15 {strides = array<i32>} : memref<512x128xf32, #tpu.memory_space<vmem>>, vector<32x128xf32>,
    %17 = vector.extract_strided_slice %10 {offsets = [0, 384], sizes = [32, 128], strides = [1, 1]} : vector<32x2048xf32> to vector<32x128xf32>
    %c96 = arith.constant 96 : index
    %c0_14 = arith.constant 0 : index
    %18 = vector.load %arg11[%c96, %c0_14] : memref<512x128xf32, #tpu.memory_space<vmem>>, vector<32x128xf32>
    tpu.vector_store %arg11[%c96, %c0_14], %17 {strides = array<i32>} : memref<512x128xf32, #tpu.memory_space<vmem>>, vector<32x128xf32>,
    %19 = vector.extract_strided_slice %10 {offsets = [0, 512], sizes = [32, 128], strides = [1, 1]} : vector<32x2048xf32> to vector<32x128xf32>
    %c128 = arith.constant 128 : index
    %c0_15 = arith.constant 0 : index
    %20 = vector.load %arg11[%c128, %c0_15] : memref<512x128xf32, #tpu.memory_space<vmem>>, vector<32x128xf32>
    tpu.vector_store %arg11[%c128, %c0_15], %19 {strides = array<i32>} : memref<512x128xf32, #tpu.memory_space<vmem>>, vector<32x128xf32>,
    %21 = vector.extract_strided_slice %10 {offsets = [0, 640], sizes = [32, 128], strides = [1, 1]} : vector<32x2048xf32> to vector<32x128xf32>
    %c160 = arith.constant 160 : index
    %c0_16 = arith.constant 0 : index
    %22 = vector.load %arg11[%c160, %c0_16] : memref<512x128xf32, #tpu.memory_space<vmem>>, vector<32x128xf32>
    tpu.vector_store %arg11[%c160, %c0_16], %21 {strides = array<i32>} : memref<512x128xf32, #tpu.memory_space<vmem>>, vector<32x128xf32>,
    %23 = vector.extract_strided_slice %10 {offsets = [0, 768], sizes = [32, 128], strides = [1, 1]} : vector<32x2048xf32> to vector<32x128xf32>
    %c192 = arith.constant 192 : index
    %c0_17 = arith.constant 0 : index
    %24 = vector.load %arg11[%c192, %c0_17] : memref<512x128xf32, #tpu.memory_space<vmem>>, vector<32x128xf32>
    tpu.vector_store %arg11[%c192, %c0_17], %23 {strides = array<i32>} : memref<512x128xf32, #tpu.memory_space<vmem>>, vector<32x128xf32>,
    %25 = vector.extract_strided_slice %10 {offsets = [0, 896], sizes = [32, 128], strides = [1, 1]} : vector<32x2048xf32> to vector<32x128xf32>
    %c224 = arith.constant 224 : index
    %c0_18 = arith.constant 0 : index
    %26 = vector.load %arg11[%c224, %c0_18] : memref<512x128xf32, #tpu.memory_space<vmem>>, vector<32x128xf32>
    tpu.vector_store %arg11[%c224, %c0_18], %25 {strides = array<i32>} : memref<512x128xf32, #tpu.memory_space<vmem>>, vector<32x128xf32>,
    %27 = vector.extract_strided_slice %10 {offsets = [0, 1024], sizes = [32, 128], strides = [1, 1]} : vector<32x2048xf32> to vector<32x128xf32>
    %c256 = arith.constant 256 : index
    %c0_19 = arith.constant 0 : index
    %28 = vector.load %arg11[%c256, %c0_19] : memref<512x128xf32, #tpu.memory_space<vmem>>, vector<32x128xf32>
    tpu.vector_store %arg11[%c256, %c0_19], %27 {strides = array<i32>} : memref<512x128xf32, #tpu.memory_space<vmem>>, vector<32x128xf32>,
    %29 = vector.extract_strided_slice %10 {offsets = [0, 1152], sizes = [32, 128], strides = [1, 1]} : vector<32x2048xf32> to vector<32x128xf32>
    %c288 = arith.constant 288 : index
    %c0_20 = arith.constant 0 : index
    %30 = vector.load %arg11[%c288, %c0_20] : memref<512x128xf32, #tpu.memory_space<vmem>>, vector<32x128xf32>
    tpu.vector_store %arg11[%c288, %c0_20], %29 {strides = array<i32>} : memref<512x128xf32, #tpu.memory_space<vmem>>, vector<32x128xf32>,
    %31 = vector.extract_strided_slice %10 {offsets = [0, 1280], sizes = [32, 128], strides = [1, 1]} : vector<32x2048xf32> to vector<32x128xf32>
    %c320 = arith.constant 320 : index
    %c0_21 = arith.constant 0 : index
    %32 = vector.load %arg11[%c320, %c0_21] : memref<512x128xf32, #tpu.memory_space<vmem>>, vector<32x128xf32>
    tpu.vector_store %arg11[%c320, %c0_21], %31 {strides = array<i32>} : memref<512x128xf32, #tpu.memory_space<vmem>>, vector<32x128xf32>,
    %33 = vector.extract_strided_slice %10 {offsets = [0, 1408], sizes = [32, 128], strides = [1, 1]} : vector<32x2048xf32> to vector<32x128xf32>
    %c352 = arith.constant 352 : index
    %c0_22 = arith.constant 0 : index
    %34 = vector.load %arg11[%c352, %c0_22] : memref<512x128xf32, #tpu.memory_space<vmem>>, vector<32x128xf32>
    tpu.vector_store %arg11[%c352, %c0_22], %33 {strides = array<i32>} : memref<512x128xf32, #tpu.memory_space<vmem>>, vector<32x128xf32>,
    %35 = vector.extract_strided_slice %10 {offsets = [0, 1536], sizes = [32, 128], strides = [1, 1]} : vector<32x2048xf32> to vector<32x128xf32>
    %c384 = arith.constant 384 : index
    %c0_23 = arith.constant 0 : index
    %36 = vector.load %arg11[%c384, %c0_23] : memref<512x128xf32, #tpu.memory_space<vmem>>, vector<32x128xf32>
    tpu.vector_store %arg11[%c384, %c0_23], %35 {strides = array<i32>} : memref<512x128xf32, #tpu.memory_space<vmem>>, vector<32x128xf32>,
    %37 = vector.extract_strided_slice %10 {offsets = [0, 1664], sizes = [32, 128], strides = [1, 1]} : vector<32x2048xf32> to vector<32x128xf32>
    %c416 = arith.constant 416 : index
    %c0_24 = arith.constant 0 : index
    %38 = vector.load %arg11[%c416, %c0_24] : memref<512x128xf32, #tpu.memory_space<vmem>>, vector<32x128xf32>
    tpu.vector_store %arg11[%c416, %c0_24], %37 {strides = array<i32>} : memref<512x128xf32, #tpu.memory_space<vmem>>, vector<32x128xf32>,
    %39 = vector.extract_strided_slice %10 {offsets = [0, 1792], sizes = [32, 128], strides = [1, 1]} : vector<32x2048xf32> to vector<32x128xf32>
    %c448 = arith.constant 448 : index
    %c0_25 = arith.constant 0 : index
    %40 = vector.load %arg11[%c448, %c0_25] : memref<512x128xf32, #tpu.memory_space<vmem>>, vector<32x128xf32>
    tpu.vector_store %arg11[%c448, %c0_25], %39 {strides = array<i32>} : memref<512x128xf32, #tpu.memory_space<vmem>>, vector<32x128xf32>,
    %41 = vector.extract_strided_slice %10 {offsets = [0, 1920], sizes = [32, 128], strides = [1, 1]} : vector<32x2048xf32> to vector<32x128xf32>
    %c480 = arith.constant 480 : index
    %c0_26 = arith.constant 0 : index
    %42 = vector.load %arg11[%c480, %c0_26] : memref<512x128xf32, #tpu.memory_space<vmem>>, vector<32x128xf32>
    tpu.vector_store %arg11[%c480, %c0_26], %41 {strides = array<i32>} : memref<512x128xf32, #tpu.memory_space<vmem>>, vector<32x128xf32>,
    %c0_27 = arith.constant 0 : index
    %c0_28 = arith.constant 0 : index
    %43 = vector.load %arg5[%c0_27, %c0_28] : memref<64x512xf32, #tpu.memory_space<vmem>>, vector<64x512xf32>
    %c0_29 = arith.constant 0 : index
    %c0_30 = arith.constant 0 : index
    %44 = vector.load %arg11[%c0_29, %c0_30] : memref<512x128xf32, #tpu.memory_space<vmem>>, vector<512x128xf32>
    %cst_31 = arith.constant dense<0.000000e+00> : vector<64x128xf32>
    %45 = tpu.matmul %43, %44, %cst_31 {dimension_numbers = #tpu.dot_dimension_numbers<[1], [0], [0], [1], [0, 0, 1, 1], [], []>} : vector<64x512xf32>, vector<512x128xf32>, vector<64x128xf32> -> vector<64x128xf32>
    %c0_32 = arith.constant 0 : index
    %c0_33 = arith.constant 0 : index
    %46 = vector.load %arg6[%c0_32, %c0_33] : memref<64x1xf32, #tpu.memory_space<vmem>>, vector<64x1xf32>
    %47 = vector.broadcast %46 : vector<64x1xf32> to vector<64x128xf32>
    %48 = arith.addf %45, %47 : vector<64x128xf32>
    %cst_34 = arith.constant 0.000000e+00 : f32
    %49 = vector.broadcast %cst_34 : f32 to vector<64x128xf32>
    %50 = arith.maximumf %48, %49 : vector<64x128xf32>
    %c0_35 = arith.constant 0 : index
    %c0_36 = arith.constant 0 : index
    %51 = vector.load %arg7[%c0_35, %c0_36] : memref<128x1152xf32, #tpu.memory_space<vmem>>, vector<128x1152xf32>
    %cst_37 = arith.constant dense<0.000000e+00> : vector<64x1152xf32>
    %52 = tpu.matmul %50, %51, %cst_37 {dimension_numbers = #tpu.dot_dimension_numbers<[1], [0], [0], [1], [0, 0, 1, 1], [], []>} : vector<64x128xf32>, vector<128x1152xf32>, vector<64x1152xf32> -> vector<64x1152xf32>
    %53 = vector.extract_strided_slice %52 {offsets = [0, 0], sizes = [64, 128], strides = [1, 1]} : vector<64x1152xf32> to vector<64x128xf32>
    %c0_38 = arith.constant 0 : index
    %c0_39 = arith.constant 0 : index
    %54 = vector.load %arg12[%c0_38, %c0_39] : memref<576x128xf32, #tpu.memory_space<vmem>>, vector<64x128xf32>
    tpu.vector_store %arg12[%c0_38, %c0_39], %53 {strides = array<i32>} : memref<576x128xf32, #tpu.memory_space<vmem>>, vector<64x128xf32>,
    %55 = vector.extract_strided_slice %52 {offsets = [0, 128], sizes = [64, 128], strides = [1, 1]} : vector<64x1152xf32> to vector<64x128xf32>
    %c64_40 = arith.constant 64 : index
    %c0_41 = arith.constant 0 : index
    %56 = vector.load %arg12[%c64_40, %c0_41] : memref<576x128xf32, #tpu.memory_space<vmem>>, vector<64x128xf32>
    tpu.vector_store %arg12[%c64_40, %c0_41], %55 {strides = array<i32>} : memref<576x128xf32, #tpu.memory_space<vmem>>, vector<64x128xf32>,
    %57 = vector.extract_strided_slice %52 {offsets = [0, 256], sizes = [64, 128], strides = [1, 1]} : vector<64x1152xf32> to vector<64x128xf32>
    %c128_42 = arith.constant 128 : index
    %c0_43 = arith.constant 0 : index
    %58 = vector.load %arg12[%c128_42, %c0_43] : memref<576x128xf32, #tpu.memory_space<vmem>>, vector<64x128xf32>
    tpu.vector_store %arg12[%c128_42, %c0_43], %57 {strides = array<i32>} : memref<576x128xf32, #tpu.memory_space<vmem>>, vector<64x128xf32>,
    %59 = vector.extract_strided_slice %52 {offsets = [0, 384], sizes = [64, 128], strides = [1, 1]} : vector<64x1152xf32> to vector<64x128xf32>
    %c192_44 = arith.constant 192 : index
    %c0_45 = arith.constant 0 : index
    %60 = vector.load %arg12[%c192_44, %c0_45] : memref<576x128xf32, #tpu.memory_space<vmem>>, vector<64x128xf32>
    tpu.vector_store %arg12[%c192_44, %c0_45], %59 {strides = array<i32>} : memref<576x128xf32, #tpu.memory_space<vmem>>, vector<64x128xf32>,
    %61 = vector.extract_strided_slice %52 {offsets = [0, 512], sizes = [64, 128], strides = [1, 1]} : vector<64x1152xf32> to vector<64x128xf32>
    %c256_46 = arith.constant 256 : index
    %c0_47 = arith.constant 0 : index
    %62 = vector.load %arg12[%c256_46, %c0_47] : memref<576x128xf32, #tpu.memory_space<vmem>>, vector<64x128xf32>
    tpu.vector_store %arg12[%c256_46, %c0_47], %61 {strides = array<i32>} : memref<576x128xf32, #tpu.memory_space<vmem>>, vector<64x128xf32>,
    %63 = vector.extract_strided_slice %52 {offsets = [0, 640], sizes = [64, 128], strides = [1, 1]} : vector<64x1152xf32> to vector<64x128xf32>
    %c320_48 = arith.constant 320 : index
    %c0_49 = arith.constant 0 : index
    %64 = vector.load %arg12[%c320_48, %c0_49] : memref<576x128xf32, #tpu.memory_space<vmem>>, vector<64x128xf32>
    tpu.vector_store %arg12[%c320_48, %c0_49], %63 {strides = array<i32>} : memref<576x128xf32, #tpu.memory_space<vmem>>, vector<64x128xf32>,
    %65 = vector.extract_strided_slice %52 {offsets = [0, 768], sizes = [64, 128], strides = [1, 1]} : vector<64x1152xf32> to vector<64x128xf32>
    %c384_50 = arith.constant 384 : index
    %c0_51 = arith.constant 0 : index
    %66 = vector.load %arg12[%c384_50, %c0_51] : memref<576x128xf32, #tpu.memory_space<vmem>>, vector<64x128xf32>
    tpu.vector_store %arg12[%c384_50, %c0_51], %65 {strides = array<i32>} : memref<576x128xf32, #tpu.memory_space<vmem>>, vector<64x128xf32>,
    %67 = vector.extract_strided_slice %52 {offsets = [0, 896], sizes = [64, 128], strides = [1, 1]} : vector<64x1152xf32> to vector<64x128xf32>
    %c448_52 = arith.constant 448 : index
    %c0_53 = arith.constant 0 : index
    %68 = vector.load %arg12[%c448_52, %c0_53] : memref<576x128xf32, #tpu.memory_space<vmem>>, vector<64x128xf32>
    tpu.vector_store %arg12[%c448_52, %c0_53], %67 {strides = array<i32>} : memref<576x128xf32, #tpu.memory_space<vmem>>, vector<64x128xf32>,
    %69 = vector.extract_strided_slice %52 {offsets = [0, 1024], sizes = [64, 128], strides = [1, 1]} : vector<64x1152xf32> to vector<64x128xf32>
    %c512 = arith.constant 512 : index
    %c0_54 = arith.constant 0 : index
    %70 = vector.load %arg12[%c512, %c0_54] : memref<576x128xf32, #tpu.memory_space<vmem>>, vector<64x128xf32>
    tpu.vector_store %arg12[%c512, %c0_54], %69 {strides = array<i32>} : memref<576x128xf32, #tpu.memory_space<vmem>>, vector<64x128xf32>,
    %c0_55 = arith.constant 0 : index
    %c0_56 = arith.constant 0 : index
    %71 = vector.load %arg8[%c0_55, %c0_56] : memref<64x576xf32, #tpu.memory_space<vmem>>, vector<64x576xf32>
    %c0_57 = arith.constant 0 : index
    %c0_58 = arith.constant 0 : index
    %72 = vector.load %arg12[%c0_57, %c0_58] : memref<576x128xf32, #tpu.memory_space<vmem>>, vector<576x128xf32>
    %cst_59 = arith.constant dense<0.000000e+00> : vector<64x128xf32>
    %73 = tpu.matmul %71, %72, %cst_59 {dimension_numbers = #tpu.dot_dimension_numbers<[1], [0], [0], [1], [0, 0, 1, 1], [], []>} : vector<64x576xf32>, vector<576x128xf32>, vector<64x128xf32> -> vector<64x128xf32>
    %c0_60 = arith.constant 0 : index
    %c0_61 = arith.constant 0 : index
    %74 = vector.load %arg9[%c0_60, %c0_61] : memref<64x1xf32, #tpu.memory_space<vmem>>, vector<64x1xf32>
    %75 = vector.broadcast %74 : vector<64x1xf32> to vector<64x128xf32>
    %76 = arith.addf %73, %75 : vector<64x128xf32>
    %cst_62 = arith.constant 0.000000e+00 : f32
    %77 = vector.broadcast %cst_62 : f32 to vector<64x128xf32>
    %78 = arith.maximumf %76, %77 : vector<64x128xf32>
    %79 = vector.extract_strided_slice %78 {offsets = [0, 0], sizes = [64, 49], strides = [1, 1]} : vector<64x128xf32> to vector<64x49xf32>
    %c0_63 = arith.constant 0 : index
    %c0_64 = arith.constant 0 : index
    %c0_65 = arith.constant 0 : index
    %80 = vector.load %arg10[%c0_63, %c0_64, %c0_65] : memref<1x64x49xf32, #tpu.memory_space<vmem>>, vector<1x64x49xf32>
    %81 = vector.shape_cast %80 : vector<1x64x49xf32> to vector<64x49xf32>
    %82 = vector.shape_cast %79 : vector<64x49xf32> to vector<1x64x49xf32>
    tpu.vector_store %arg10[%c0_63, %c0_64, %c0_65], %82 {strides = array<i32>} : memref<1x64x49xf32, #tpu.memory_space<vmem>>, vector<1x64x49xf32>,
    return
  }
  func.func @transform_0(%arg0: i32) -> (i32, i32, i32) {
    %c0_i32 = arith.constant 0 : i32
    %c0_i32_0 = arith.constant 0 : i32
    %c0_i32_1 = arith.constant 0 : i32
    return %arg0, %c0_i32, %c0_i32_0 : i32, i32, i32
  }
  func.func @transform_1(%arg0: i32) -> (i32, i32) {
    %c0_i32 = arith.constant 0 : i32
    %c0_i32_0 = arith.constant 0 : i32
    %c0_i32_1 = arith.constant 0 : i32
    return %c0_i32, %c0_i32_0 : i32, i32
  }
  func.func @transform_2(%arg0: i32) -> (i32, i32) {
    %c0_i32 = arith.constant 0 : i32
    %c0_i32_0 = arith.constant 0 : i32
    %c0_i32_1 = arith.constant 0 : i32
    return %c0_i32, %c0_i32_0 : i32, i32
  }
  func.func @transform_3(%arg0: i32) -> (i32, i32) {
    %c0_i32 = arith.constant 0 : i32
    %c0_i32_0 = arith.constant 0 : i32
    %c0_i32_1 = arith.constant 0 : i32
    return %c0_i32, %c0_i32_0 : i32, i32
  }
  func.func @transform_4(%arg0: i32) -> (i32, i32) {
    %c0_i32 = arith.constant 0 : i32
    %c0_i32_0 = arith.constant 0 : i32
    %c0_i32_1 = arith.constant 0 : i32
    return %c0_i32, %c0_i32_0 : i32, i32
  }
  func.func @transform_5(%arg0: i32) -> (i32, i32) {
    %c0_i32 = arith.constant 0 : i32
    %c0_i32_0 = arith.constant 0 : i32
    %c0_i32_1 = arith.constant 0 : i32
    return %c0_i32, %c0_i32_0 : i32, i32
  }
  func.func @transform_6(%arg0: i32) -> (i32, i32) {
    %c0_i32 = arith.constant 0 : i32
    %c0_i32_0 = arith.constant 0 : i32
    %c0_i32_1 = arith.constant 0 : i32
    return %c0_i32, %c0_i32_0 : i32, i32
  }
  func.func @transform_7(%arg0: i32) -> (i32, i32) {
    %c0_i32 = arith.constant 0 : i32
    %c0_i32_0 = arith.constant 0 : i32
    %c0_i32_1 = arith.constant 0 : i32
    return %c0_i32, %c0_i32_0 : i32, i32
  }
  func.func @transform_8(%arg0: i32) -> (i32, i32) {
    %c0_i32 = arith.constant 0 : i32
    %c0_i32_0 = arith.constant 0 : i32
    %c0_i32_1 = arith.constant 0 : i32
    return %c0_i32, %c0_i32_0 : i32, i32
  }
  func.func @transform_9(%arg0: i32) -> (i32, i32, i32) {
    %c0_i32 = arith.constant 0 : i32
    %c0_i32_0 = arith.constant 0 : i32
    %c0_i32_1 = arith.constant 0 : i32
    return %arg0, %c0_i32, %c0_i32_0 : i32, i32, i32
  }
}

module attributes {stable_mosaic.version = 11 : i64} {
  func.func @_fc_kernel(%arg0: i32, %arg1: memref<2x3136xf32, #tpu.memory_space<vmem>>, %arg2: memref<3136x512xf32, #tpu.memory_space<vmem>>, %arg3: memref<1x512xf32, #tpu.memory_space<vmem>>, %arg4: memref<512x6xf32, #tpu.memory_space<vmem>>, %arg5: memref<1x6xf32, #tpu.memory_space<vmem>>, %arg6: memref<2x6xf32, #tpu.memory_space<vmem>>) attributes {dimension_semantics = [#tpu.dimension_semantics<arbitrary>], iteration_bounds = array<i64: 1>, scalar_prefetch = 0 : i64, scratch_operands = 0 : i64, tpu.core_type = #tpu.core_type<tc>, window_params = [{pipeline_mode = #tpu.pipeline_mode<synchronous>, transform_indices = @transform_0, window_bounds = array<i64: 2, 3136>}, {pipeline_mode = #tpu.pipeline_mode<synchronous>, transform_indices = @transform_1, window_bounds = array<i64: 3136, 512>}, {pipeline_mode = #tpu.pipeline_mode<synchronous>, transform_indices = @transform_2, window_bounds = array<i64: 1, 512>}, {pipeline_mode = #tpu.pipeline_mode<synchronous>, transform_indices = @transform_3, window_bounds = array<i64: 512, 6>}, {pipeline_mode = #tpu.pipeline_mode<synchronous>, transform_indices = @transform_4, window_bounds = array<i64: 1, 6>}, {pipeline_mode = #tpu.pipeline_mode<synchronous>, transform_indices = @transform_5, window_bounds = array<i64: 2, 6>}]} {
    %c0 = arith.constant 0 : index
    %c0_0 = arith.constant 0 : index
    %0 = vector.load %arg1[%c0, %c0_0] : memref<2x3136xf32, #tpu.memory_space<vmem>>, vector<2x3136xf32>
    %c0_1 = arith.constant 0 : index
    %c0_2 = arith.constant 0 : index
    %1 = vector.load %arg2[%c0_1, %c0_2] : memref<3136x512xf32, #tpu.memory_space<vmem>>, vector<3136x512xf32>
    %cst = arith.constant dense<0.000000e+00> : vector<2x512xf32>
    %2 = tpu.matmul %0, %1, %cst {dimension_numbers = #tpu.dot_dimension_numbers<[1], [0], [0], [1], [0, 0, 1, 1], [], []>} : vector<2x3136xf32>, vector<3136x512xf32>, vector<2x512xf32> -> vector<2x512xf32>
    %c0_3 = arith.constant 0 : index
    %c0_4 = arith.constant 0 : index
    %3 = vector.load %arg3[%c0_3, %c0_4] : memref<1x512xf32, #tpu.memory_space<vmem>>, vector<1x512xf32>
    %4 = vector.broadcast %3 : vector<1x512xf32> to vector<2x512xf32>
    %5 = arith.addf %2, %4 : vector<2x512xf32>
    %cst_5 = arith.constant 0.000000e+00 : f32
    %6 = vector.broadcast %cst_5 : f32 to vector<2x512xf32>
    %7 = arith.maximumf %5, %6 : vector<2x512xf32>
    %c0_6 = arith.constant 0 : index
    %c0_7 = arith.constant 0 : index
    %8 = vector.load %arg4[%c0_6, %c0_7] : memref<512x6xf32, #tpu.memory_space<vmem>>, vector<512x6xf32>
    %cst_8 = arith.constant dense<0.000000e+00> : vector<2x6xf32>
    %9 = tpu.matmul %7, %8, %cst_8 {dimension_numbers = #tpu.dot_dimension_numbers<[1], [0], [0], [1], [0, 0, 1, 1], [], []>} : vector<2x512xf32>, vector<512x6xf32>, vector<2x6xf32> -> vector<2x6xf32>
    %c0_9 = arith.constant 0 : index
    %c0_10 = arith.constant 0 : index
    %10 = vector.load %arg5[%c0_9, %c0_10] : memref<1x6xf32, #tpu.memory_space<vmem>>, vector<1x6xf32>
    %11 = vector.broadcast %10 : vector<1x6xf32> to vector<2x6xf32>
    %12 = arith.addf %9, %11 : vector<2x6xf32>
    %c0_11 = arith.constant 0 : index
    %c0_12 = arith.constant 0 : index
    %13 = vector.load %arg6[%c0_11, %c0_12] : memref<2x6xf32, #tpu.memory_space<vmem>>, vector<2x6xf32>
    tpu.vector_store %arg6[%c0_11, %c0_12], %12 {strides = array<i32>} : memref<2x6xf32, #tpu.memory_space<vmem>>, vector<2x6xf32>,
    return
  }
  func.func @transform_0(%arg0: i32) -> (i32, i32) {
    %c0_i32 = arith.constant 0 : i32
    %c0_i32_0 = arith.constant 0 : i32
    %c0_i32_1 = arith.constant 0 : i32
    return %c0_i32, %c0_i32_0 : i32, i32
  }
  func.func @transform_1(%arg0: i32) -> (i32, i32) {
    %c0_i32 = arith.constant 0 : i32
    %c0_i32_0 = arith.constant 0 : i32
    %c0_i32_1 = arith.constant 0 : i32
    return %c0_i32, %c0_i32_0 : i32, i32
  }
  func.func @transform_2(%arg0: i32) -> (i32, i32) {
    %c0_i32 = arith.constant 0 : i32
    %c0_i32_0 = arith.constant 0 : i32
    %c0_i32_1 = arith.constant 0 : i32
    return %c0_i32, %c0_i32_0 : i32, i32
  }
  func.func @transform_3(%arg0: i32) -> (i32, i32) {
    %c0_i32 = arith.constant 0 : i32
    %c0_i32_0 = arith.constant 0 : i32
    %c0_i32_1 = arith.constant 0 : i32
    return %c0_i32, %c0_i32_0 : i32, i32
  }
  func.func @transform_4(%arg0: i32) -> (i32, i32) {
    %c0_i32 = arith.constant 0 : i32
    %c0_i32_0 = arith.constant 0 : i32
    %c0_i32_1 = arith.constant 0 : i32
    return %c0_i32, %c0_i32_0 : i32, i32
  }
  func.func @transform_5(%arg0: i32) -> (i32, i32) {
    %c0_i32 = arith.constant 0 : i32
    %c0_i32_0 = arith.constant 0 : i32
    %c0_i32_1 = arith.constant 0 : i32
    return %c0_i32, %c0_i32_0 : i32, i32
  }
}

</mosaic_0001>

<llo_original>
// kernel: atari_deep_net_forward.2
$region0: #{atari_deep_net_forward.2}
  #allocation0 [shape = 'u32[]', space=smem, size = 0x4, offset = 0x4, fixed_abs, tag = 'smem constant byte address 0x4 - core index']
  #allocation1 [shape = 'u32[144,128]{1,0:T(1,128)}', space=vmem, size = 0x12000, scoped, tag = 'internal scratch']
  #allocation2 [shape = 'f32[512,128]{1,0:T(8,128)}', space=vmem, size = 0x40000, scoped, tag = 'scratch operand']
  #allocation3 [shape = 'f32[576,128]{1,0:T(8,128)}', space=vmem, size = 0x48000, scoped, tag = 'scratch operand']
  %s0 = inlined_call_operand.vmem [shape: f32[2,256,400], index: 0, kind: input, shape index: {}]
  %s1 = inlined_call_operand.vmem [shape: f32[32,256], index: 1, kind: input, shape index: {}]
  %s2 = inlined_call_operand.vmem [shape: f32[32,1], index: 2, kind: input, shape index: {}]
  %s3 = inlined_call_operand.vmem [shape: f32[400,2048], index: 3, kind: input, shape index: {}]
  %s4 = inlined_call_operand.vmem [shape: f32[64,512], index: 4, kind: input, shape index: {}]
  %s5 = inlined_call_operand.vmem [shape: f32[64,1], index: 5, kind: input, shape index: {}]
  %s6 = inlined_call_operand.vmem [shape: f32[128,1152], index: 6, kind: input, shape index: {}]
  %s7 = inlined_call_operand.vmem [shape: f32[64,576], index: 7, kind: input, shape index: {}]
  %s8 = inlined_call_operand.vmem [shape: f32[64,1], index: 8, kind: input, shape index: {}]
  %s9 = inlined_call_operand.vmem [shape: f32[2,64,49], index: 9, kind: output, shape index: {}]
  %s10 = sld [smem:[#allocation0]]
  $region69: #{atari_deep_net_forward.2} parent=0
    _
  %s12 = ssub.s32 1, %s10
  %s13 = scalar_select 0, %s12, %s10
  loop: start=0, step=1, limit=4
  $region2: #{atari_deep_net_forward.2} parent=0 // loop_pre_header
    _
  $region3: #{atari_deep_net_forward.2} parent=0 // loop_header
    %s15 = sphi 0, %s19
    %p16 = scmp.ge.s32.totalorder %s15, 4
    %s25 = sphi 0, %s27
    %s28 = sphi 0, %s25
    %s29 = sphi 0, %s28
    %s45 = sphi 0, %s29
    %s49 = sphi 0, %s49
    %s51 = sphi 0, %s49
    %s52 = sphi 0, %s51
    %s66 = sphi 0, %s52
    %s70 = sphi 0, %s70
    %s72 = sphi 0, %s70
    %s73 = sphi 0, %s72
    %s87 = sphi 0, %s73
    %s91 = sphi 0, %s91
    %s93 = sphi 0, %s91
    %s94 = sphi 0, %s93
    %s108 = sphi 0, %s94
    %s112 = sphi 0, %s112
    %s114 = sphi 0, %s112
    %s115 = sphi 0, %s114
    %s129 = sphi 0, %s115
    %s133 = sphi 0, %s133
    %s135 = sphi 0, %s133
    %s136 = sphi 0, %s135
    %s150 = sphi 0, %s136
    %s154 = sphi 0, %s154
    %s156 = sphi 0, %s154
    %s157 = sphi 0, %s156
    %s171 = sphi 0, %s157
    %s175 = sphi 0, %s175
    %s177 = sphi 0, %s175
    %s178 = sphi 0, %s177
    %s192 = sphi 0, %s178
    %s196 = sphi 0, %s196
    %s198 = sphi 0, %s196
    %s199 = sphi 0, %s198
    %s213 = sphi 0, %s199
    %s219 = sphi 0, %s221
    %s222 = sphi 0, %s219
    %s223 = sphi 0, %s222
    %s239 = sphi 0, %s223
  $region4: #{atari_deep_net_forward.2} parent=0 // loop_header_branch
    %18 = sbr.rel (%p16) target = $region8
  $region5: #{atari_deep_net_forward.2} parent=0 // loop_body
    %s20 = ssub.s32 %s15, 1
    %s21 = ssub.s32 %s15, 2
    %s22 = sadd.s32 %s15, 1
    %s23 = ssub.s32 %s15, %s22
    %p24 = scmp.eq.s32.totalorder %s23, 0
    %s26 = sadd.s32 %s25, 1
    %s27 = scalar_select %p24, %s25, %s26
    %p30 = pneg %p24
    %p31 = scmp.eq.s32.totalorder %s15, 1
    %p32 = por %p30, %p31
    %p33 = scmp.ne.s32.totalorder %s25, %s28
    %p34 = scmp.eq.s32.totalorder %s15, 0
    %p35 = por %p33, %p34
    %p36 = scmp.ne.s32.totalorder %s25, %s28
    %p37 = scmp.eq.s32.totalorder %s20, 1
    %p38 = por %p36, %p37
    %p39 = scmp.ne.s32.totalorder %s28, %s29
    %p40 = scmp.eq.s32.totalorder %s20, 0
    %p41 = por %p39, %p40
    %p42 = scmp.ne.s32.totalorder %s28, %s29
    %p43 = scmp.eq.s32.totalorder %s21, 1
    %p44 = por %p42, %p43
    %p46 = scmp.ne.s32.totalorder %s29, %s45
    %p47 = scmp.eq.s32.totalorder %s21, 0
    %p48 = por %p46, %p47
    %s50 = sadd.s32 %s49, 1
    %p53 = scmp.eq.s32.totalorder %s15, 1
    %p54 = scmp.ne.s32.totalorder %s49, %s51
    %p55 = scmp.eq.s32.totalorder %s15, 0
    %p56 = por %p54, %p55
    %p57 = scmp.ne.s32.totalorder %s49, %s51
    %p58 = scmp.eq.s32.totalorder %s20, 1
    %p59 = por %p57, %p58
    %p60 = scmp.ne.s32.totalorder %s51, %s52
    %p61 = scmp.eq.s32.totalorder %s20, 0
    %p62 = por %p60, %p61
    %p63 = scmp.ne.s32.totalorder %s51, %s52
    %p64 = scmp.eq.s32.totalorder %s21, 1
    %p65 = por %p63, %p64
    %p67 = scmp.ne.s32.totalorder %s52, %s66
    %p68 = scmp.eq.s32.totalorder %s21, 0
    %p69 = por %p67, %p68
    %s71 = sadd.s32 %s70, 1
    %p74 = scmp.eq.s32.totalorder %s15, 1
    %p75 = scmp.ne.s32.totalorder %s70, %s72
    %p76 = scmp.eq.s32.totalorder %s15, 0
    %p77 = por %p75, %p76
    %p78 = scmp.ne.s32.totalorder %s70, %s72
    %p79 = scmp.eq.s32.totalorder %s20, 1
    %p80 = por %p78, %p79
    %p81 = scmp.ne.s32.totalorder %s72, %s73
    %p82 = scmp.eq.s32.totalorder %s20, 0
    %p83 = por %p81, %p82
    %p84 = scmp.ne.s32.totalorder %s72, %s73
    %p85 = scmp.eq.s32.totalorder %s21, 1
    %p86 = por %p84, %p85
    %p88 = scmp.ne.s32.totalorder %s73, %s87
    %p89 = scmp.eq.s32.totalorder %s21, 0
    %p90 = por %p88, %p89
    %s92 = sadd.s32 %s91, 1
    %p95 = scmp.eq.s32.totalorder %s15, 1
    %p96 = scmp.ne.s32.totalorder %s91, %s93
    %p97 = scmp.eq.s32.totalorder %s15, 0
    %p98 = por %p96, %p97
    %p99 = scmp.ne.s32.totalorder %s91, %s93
    %p100 = scmp.eq.s32.totalorder %s20, 1
    %p101 = por %p99, %p100
    %p102 = scmp.ne.s32.totalorder %s93, %s94
    %p103 = scmp.eq.s32.totalorder %s20, 0
    %p104 = por %p102, %p103
    %p105 = scmp.ne.s32.totalorder %s93, %s94
    %p106 = scmp.eq.s32.totalorder %s21, 1
    %p107 = por %p105, %p106
    %p109 = scmp.ne.s32.totalorder %s94, %s108
    %p110 = scmp.eq.s32.totalorder %s21, 0
    %p111 = por %p109, %p110
    %s113 = sadd.s32 %s112, 1
    %p116 = scmp.eq.s32.totalorder %s15, 1
    %p117 = scmp.ne.s32.totalorder %s112, %s114
    %p118 = scmp.eq.s32.totalorder %s15, 0
    %p119 = por %p117, %p118
    %p120 = scmp.ne.s32.totalorder %s112, %s114
    %p121 = scmp.eq.s32.totalorder %s20, 1
    %p122 = por %p120, %p121
    %p123 = scmp.ne.s32.totalorder %s114, %s115
    %p124 = scmp.eq.s32.totalorder %s20, 0
    %p125 = por %p123, %p124
    %p126 = scmp.ne.s32.totalorder %s114, %s115
    %p127 = scmp.eq.s32.totalorder %s21, 1
    %p128 = por %p126, %p127
    %p130 = scmp.ne.s32.totalorder %s115, %s129
    %p131 = scmp.eq.s32.totalorder %s21, 0
    %p132 = por %p130, %p131
    %s134 = sadd.s32 %s133, 1
    %p137 = scmp.eq.s32.totalorder %s15, 1
    %p138 = scmp.ne.s32.totalorder %s133, %s135
    %p139 = scmp.eq.s32.totalorder %s15, 0
    %p140 = por %p138, %p139
    %p141 = scmp.ne.s32.totalorder %s133, %s135
    %p142 = scmp.eq.s32.totalorder %s20, 1
    %p143 = por %p141, %p142
    %p144 = scmp.ne.s32.totalorder %s135, %s136
    %p145 = scmp.eq.s32.totalorder %s20, 0
    %p146 = por %p144, %p145
    %p147 = scmp.ne.s32.totalorder %s135, %s136
    %p148 = scmp.eq.s32.totalorder %s21, 1
    %p149 = por %p147, %p148
    %p151 = scmp.ne.s32.totalorder %s136, %s150
    %p152 = scmp.eq.s32.totalorder %s21, 0
    %p153 = por %p151, %p152
    %s155 = sadd.s32 %s154, 1
    %p158 = scmp.eq.s32.totalorder %s15, 1
    %p159 = scmp.ne.s32.totalorder %s154, %s156
    %p160 = scmp.eq.s32.totalorder %s15, 0
    %p161 = por %p159, %p160
    %p162 = scmp.ne.s32.totalorder %s154, %s156
    %p163 = scmp.eq.s32.totalorder %s20, 1
    %p164 = por %p162, %p163
    %p165 = scmp.ne.s32.totalorder %s156, %s157
    %p166 = scmp.eq.s32.totalorder %s20, 0
    %p167 = por %p165, %p166
    %p168 = scmp.ne.s32.totalorder %s156, %s157
    %p169 = scmp.eq.s32.totalorder %s21, 1
    %p170 = por %p168, %p169
    %p172 = scmp.ne.s32.totalorder %s157, %s171
    %p173 = scmp.eq.s32.totalorder %s21, 0
    %p174 = por %p172, %p173
    %s176 = sadd.s32 %s175, 1
    %p179 = scmp.eq.s32.totalorder %s15, 1
    %p180 = scmp.ne.s32.totalorder %s175, %s177
    %p181 = scmp.eq.s32.totalorder %s15, 0
    %p182 = por %p180, %p181
    %p183 = scmp.ne.s32.totalorder %s175, %s177
    %p184 = scmp.eq.s32.totalorder %s20, 1
    %p185 = por %p183, %p184
    %p186 = scmp.ne.s32.totalorder %s177, %s178
    %p187 = scmp.eq.s32.totalorder %s20, 0
    %p188 = por %p186, %p187
    %p189 = scmp.ne.s32.totalorder %s177, %s178
    %p190 = scmp.eq.s32.totalorder %s21, 1
    %p191 = por %p189, %p190
    %p193 = scmp.ne.s32.totalorder %s178, %s192
    %p194 = scmp.eq.s32.totalorder %s21, 0
    %p195 = por %p193, %p194
    %s197 = sadd.s32 %s196, 1
    %p200 = scmp.eq.s32.totalorder %s15, 1
    %p201 = scmp.ne.s32.totalorder %s196, %s198
    %p202 = scmp.eq.s32.totalorder %s15, 0
    %p203 = por %p201, %p202
    %p204 = scmp.ne.s32.totalorder %s196, %s198
    %p205 = scmp.eq.s32.totalorder %s20, 1
    %p206 = por %p204, %p205
    %p207 = scmp.ne.s32.totalorder %s198, %s199
    %p208 = scmp.eq.s32.totalorder %s20, 0
    %p209 = por %p207, %p208
    %p210 = scmp.ne.s32.totalorder %s198, %s199
    %p211 = scmp.eq.s32.totalorder %s21, 1
    %p212 = por %p210, %p211
    %p214 = scmp.ne.s32.totalorder %s199, %s213
    %p215 = scmp.eq.s32.totalorder %s21, 0
    %p216 = por %p214, %p215
    %s217 = ssub.s32 %s15, %s22
    %p218 = scmp.eq.s32.totalorder %s217, 0
    %s220 = sadd.s32 %s219, 1
    %s221 = scalar_select %p218, %s219, %s220
    %p224 = pneg %p218
    %p225 = scmp.eq.s32.totalorder %s15, 1
    %p226 = por %p224, %p225
    %p227 = scmp.ne.s32.totalorder %s219, %s222
    %p228 = scmp.eq.s32.totalorder %s15, 0
    %p229 = por %p227, %p228
    %p230 = scmp.ne.s32.totalorder %s219, %s222
    %p231 = scmp.eq.s32.totalorder %s20, 1
    %p232 = por %p230, %p231
    %p233 = scmp.ne.s32.totalorder %s222, %s223
    %p234 = scmp.eq.s32.totalorder %s20, 0
    %p235 = por %p233, %p234
    %p236 = scmp.ne.s32.totalorder %s222, %s223
    %p237 = scmp.eq.s32.totalorder %s21, 1
    %p238 = por %p236, %p237
    %p240 = scmp.ne.s32.totalorder %s223, %s239
    %p241 = scmp.eq.s32.totalorder %s21, 0
    %p242 = por %p240, %p241
    %p243 = scmp.le.s32.totalorder 1, %s15
    %p244 = scmp.lt.s32.totalorder %s15, 3
    %p245 = pnand %p243, %p244
    %p246 = pneg %p245
    // Predicated region
    $region9: #{atari_deep_net_forward.2} parent=5 // pred_check
      _
    $region10: #{atari_deep_net_forward.2} parent=5 // pred_check_branch
      %248 = sbr.rel (%p245) target = $region12
    $region11: #{atari_deep_net_forward.2} parent=5 // pred_region
      %s249 = ssub.s32 %s15, 1
      // Predicated region
      $region13: #{atari_deep_net_forward.2} parent=11 // pred_check
        %p250 = pneg %p62
      $region14: #{atari_deep_net_forward.2} parent=11 // pred_check_branch
        %252 = sbr.rel (%p250) target = $region16
      $region15: #{atari_deep_net_forward.2} parent=11 // pred_region
        _
      $region16: #{atari_deep_net_forward.2} parent=11 // pred_fallthru
        _
      // Predicated region
      $region17: #{atari_deep_net_forward.2} parent=11 // pred_check
        %p253 = pneg %p83
      $region18: #{atari_deep_net_forward.2} parent=11 // pred_check_branch
        %255 = sbr.rel (%p253) target = $region20
      $region19: #{atari_deep_net_forward.2} parent=11 // pred_region
        _
      $region20: #{atari_deep_net_forward.2} parent=11 // pred_fallthru
        _
      // Predicated region
      $region21: #{atari_deep_net_forward.2} parent=11 // pred_check
        %p256 = pneg %p104
      $region22: #{atari_deep_net_forward.2} parent=11 // pred_check_branch
        %258 = sbr.rel (%p256) target = $region24
      $region23: #{atari_deep_net_forward.2} parent=11 // pred_region
        _
      $region24: #{atari_deep_net_forward.2} parent=11 // pred_fallthru
        _
      // Predicated region
      $region25: #{atari_deep_net_forward.2} parent=11 // pred_check
        %p259 = pneg %p125
      $region26: #{atari_deep_net_forward.2} parent=11 // pred_check_branch
        %261 = sbr.rel (%p259) target = $region28
      $region27: #{atari_deep_net_forward.2} parent=11 // pred_region
        _
      $region28: #{atari_deep_net_forward.2} parent=11 // pred_fallthru
        _
      // Predicated region
      $region29: #{atari_deep_net_forward.2} parent=11 // pred_check
        %p262 = pneg %p146
      $region30: #{atari_deep_net_forward.2} parent=11 // pred_check_branch
        %264 = sbr.rel (%p262) target = $region32
      $region31: #{atari_deep_net_forward.2} parent=11 // pred_region
        _
      $region32: #{atari_deep_net_forward.2} parent=11 // pred_fallthru
        _
      // Predicated region
      $region33: #{atari_deep_net_forward.2} parent=11 // pred_check
        %p265 = pneg %p167
      $region34: #{atari_deep_net_forward.2} parent=11 // pred_check_branch
        %267 = sbr.rel (%p265) target = $region36
      $region35: #{atari_deep_net_forward.2} parent=11 // pred_region
        _
      $region36: #{atari_deep_net_forward.2} parent=11 // pred_fallthru
        _
      // Predicated region
      $region37: #{atari_deep_net_forward.2} parent=11 // pred_check
        %p268 = pneg %p188
      $region38: #{atari_deep_net_forward.2} parent=11 // pred_check_branch
        %270 = sbr.rel (%p268) target = $region40
      $region39: #{atari_deep_net_forward.2} parent=11 // pred_region
        _
      $region40: #{atari_deep_net_forward.2} parent=11 // pred_fallthru
        _
      // Predicated region
      $region41: #{atari_deep_net_forward.2} parent=11 // pred_check
        %p271 = pneg %p209
      $region42: #{atari_deep_net_forward.2} parent=11 // pred_check_branch
        %273 = sbr.rel (%p271) target = $region44
      $region43: #{atari_deep_net_forward.2} parent=11 // pred_region
        _
      $region44: #{atari_deep_net_forward.2} parent=11 // pred_fallthru
        _
    $region12: #{atari_deep_net_forward.2} parent=5 // pred_fallthru
      _
    %p274 = scmp.lt.s32.totalorder %s15, 2
    // Predicated region
    $region45: #{atari_deep_net_forward.2} parent=5 // pred_check
      %p275 = pneg %p274
    $region46: #{atari_deep_net_forward.2} parent=5 // pred_check_branch
      %277 = sbr.rel (%p275) target = $region48
    $region47: #{atari_deep_net_forward.2} parent=5 // pred_region
      // Predicated region
      $region49: #{atari_deep_net_forward.2} parent=47 // pred_check
        %p278 = pneg %p35
      $region50: #{atari_deep_net_forward.2} parent=47 // pred_check_branch
        %280 = sbr.rel (%p278) target = $region52
      $region51: #{atari_deep_net_forward.2} parent=47 // pred_region
        %p281 = scmp.lt.s32.totalorder %s15, 1
        %s282 = scalar_select %p281, %s15, 1
        %s283 = smul.addr %s282, 128
        %s284 = smul.addr %s283, 8
        %s285 = scalar_lea.vmem %s0, %s284
      $region52: #{atari_deep_net_forward.2} parent=47 // pred_fallthru
        _
    $region48: #{atari_deep_net_forward.2} parent=5 // pred_fallthru
      _
    %p286 = scmp.le.s32.totalorder 1, %s15
    %p287 = scmp.lt.s32.totalorder %s15, 3
    %p288 = pnand %p286, %p287
    %p289 = pneg %p288
    // Predicated region
    $region53: #{atari_deep_net_forward.2} parent=5 // pred_check
      _
    $region54: #{atari_deep_net_forward.2} parent=5 // pred_check_branch
      %291 = sbr.rel (%p288) target = $region56
    $region55: #{atari_deep_net_forward.2} parent=5 // pred_region
      %s292 = ssub.s32 %s15, 1
      %p293 = scmp.lt.s32.totalorder %s20, 1
      %s294 = scalar_select %p293, %s20, 1
      %s295 = smul.addr %s294, 128
      %s296 = smul.addr %s295, 8
      %s297 = scalar_lea.vmem %s0, %s296
      %p298 = pneg %p41
      %p299 = pneg %p38
      %p300 = pneg %p62
      %p301 = pneg %p59
      %p302 = pneg %p83
      %p303 = pneg %p80
      %p304 = pneg %p104
      %p305 = pneg %p101
      %p306 = pneg %p125
      %p307 = pneg %p122
      %p308 = pneg %p146
      %p309 = pneg %p143
      %p310 = pneg %p167
      %p311 = pneg %p164
      %p312 = pneg %p188
      %p313 = pneg %p185
      %p314 = pneg %p209
      %p315 = pneg %p206
      %p316 = pneg %p235
      %p317 = pneg %p232
      %p318 = scmp.lt.s32.totalorder %s20, 1
      %s319 = scalar_select %p318, %s20, 1
      %s320 = smul.addr %s319, 8
      %s321 = smul.addr %s320, 8
      %s322 = scalar_lea.vmem %s9, %s321
      %p323 = scmp.lt.s32.totalorder %s20, 1
      %s324 = scalar_select %p323, %s20, 1
      %s325 = smul.addr %s324, 128
      %s326 = smul.addr %s325, 8
      %s327 = scalar_lea.vmem %s0, %s326
      %p328 = scmp.lt.s32.totalorder %s20, 1
      %s329 = scalar_select %p328, %s20, 1
      %s330 = smul.addr %s329, 8
      %s331 = smul.addr %s330, 8
      %s332 = scalar_lea.vmem %s9, %s331
      %v333 = vld [vmem:[%s1] sm:$0xff]
      %v334 = vld [vmem:[%s1 + $0x8] sm:$0xff]
      %v335 = vld [vmem:[%s1 + $0x10] sm:$0xff]
      %v336 = vld [vmem:[%s1 + $0x18] sm:$0xff]
      %v337 = vld [vmem:[%s1 + $0x20] sm:$0xff]
      %v338 = vld [vmem:[%s1 + $0x28] sm:$0xff]
      %v339 = vld [vmem:[%s1 + $0x30] sm:$0xff]
      %v340 = vld [vmem:[%s1 + $0x38] sm:$0xff]
      %v341 = vld [vmem:[%s327] sm:$0xff]
      %v342 = vld [vmem:[%s327 + $0x8] sm:$0xff]
      %v343 = vld [vmem:[%s327 + $0x10] sm:$0xff]
      %v344 = vld [vmem:[%s327 + $0x18] sm:$0xff]
      %v345 = vld [vmem:[%s327 + $0x20] sm:$0xff]
      %v346 = vld [vmem:[%s327 + $0x28] sm:$0xff]
      %v347 = vld [vmem:[%s327 + $0x30] sm:$0xff]
      %v348 = vld [vmem:[%s327 + $0x38] sm:$0xff]
      %v349 = vld [vmem:[%s327 + $0x40] sm:$0xff]
      %v350 = vld [vmem:[%s327 + $0x48] sm:$0xff]
      %v351 = vld [vmem:[%s327 + $0x50] sm:$0xff]
      %v352 = vld [vmem:[%s327 + $0x58] sm:$0xff]
      %v353 = vld [vmem:[%s327 + $0x60] sm:$0xff]
      %v354 = vld [vmem:[%s327 + $0x68] sm:$0xff]
      %v355 = vld [vmem:[%s327 + $0x70] sm:$0xff]
      %v356 = vld [vmem:[%s327 + $0x78] sm:$0xff]
      %v357 = vld [vmem:[%s327 + $0x80] sm:$0xff]
      %v358 = vld [vmem:[%s327 + $0x88] sm:$0xff]
      %v359 = vld [vmem:[%s327 + $0x90] sm:$0xff]
      %v360 = vld [vmem:[%s327 + $0x98] sm:$0xff]
      %v361 = vld [vmem:[%s327 + $0xa0] sm:$0xff]
      %v362 = vld [vmem:[%s327 + $0xa8] sm:$0xff]
      %v363 = vld [vmem:[%s327 + $0xb0] sm:$0xff]
      %v364 = vld [vmem:[%s327 + $0xb8] sm:$0xff]
      %v365 = vld [vmem:[%s327 + $0xc0] sm:$0xff]
      %v366 = vld [vmem:[%s327 + $0xc8] sm:$0xff]
      %v367 = vld [vmem:[%s327 + $0xd0] sm:$0xff]
      %v368 = vld [vmem:[%s327 + $0xd8] sm:$0xff]
      %v369 = vld [vmem:[%s327 + $0xe0] sm:$0xff]
      %v370 = vld [vmem:[%s327 + $0xe8] sm:$0xff]
      %v371 = vld [vmem:[%s327 + $0xf0] sm:$0xff]
      %v372 = vld [vmem:[%s327 + $0xf8] sm:$0xff]
      %v373 = vld [vmem:[%s327 + $0x100] sm:$0xff]
      %v374 = vld [vmem:[%s327 + $0x108] sm:$0xff]
      %v375 = vld [vmem:[%s327 + $0x110] sm:$0xff]
      %v376 = vld [vmem:[%s327 + $0x118] sm:$0xff]
      %v377 = vld [vmem:[%s327 + $0x120] sm:$0xff]
      %v378 = vld [vmem:[%s327 + $0x128] sm:$0xff]
      %v379 = vld [vmem:[%s327 + $0x130] sm:$0xff]
      %v380 = vld [vmem:[%s327 + $0x138] sm:$0xff]
      %v381 = vld [vmem:[%s327 + $0x140] sm:$0xff]
      %v382 = vld [vmem:[%s327 + $0x148] sm:$0xff]
      %v383 = vld [vmem:[%s327 + $0x150] sm:$0xff]
      %v384 = vld [vmem:[%s327 + $0x158] sm:$0xff]
      %v385 = vld [vmem:[%s327 + $0x160] sm:$0xff]
      %v386 = vld [vmem:[%s327 + $0x168] sm:$0xff]
      %v387 = vld [vmem:[%s327 + $0x170] sm:$0xff]
      %v388 = vld [vmem:[%s327 + $0x178] sm:$0xff]
      %v389 = vld [vmem:[%s327 + $0x180] sm:$0xff]
      %v390 = vld [vmem:[%s327 + $0x188] sm:$0xff]
      %v391 = vld [vmem:[%s327 + $0x190] sm:$0xff]
      %v392 = vld [vmem:[%s327 + $0x198] sm:$0xff]
      %v393 = vld [vmem:[%s327 + $0x1a0] sm:$0xff]
      %v394 = vld [vmem:[%s327 + $0x1a8] sm:$0xff]
      %v395 = vld [vmem:[%s327 + $0x1b0] sm:$0xff]
      %v396 = vld [vmem:[%s327 + $0x1b8] sm:$0xff]
      %v397 = vld [vmem:[%s327 + $0x1c0] sm:$0xff]
      %v398 = vld [vmem:[%s327 + $0x1c8] sm:$0xff]
      %v399 = vld [vmem:[%s327 + $0x1d0] sm:$0xff]
      %v400 = vld [vmem:[%s327 + $0x1d8] sm:$0xff]
      %v401 = vld [vmem:[%s327 + $0x1e0] sm:$0xff]
      %v402 = vld [vmem:[%s327 + $0x1e8] sm:$0xff]
      %v403 = vld [vmem:[%s327 + $0x1f0] sm:$0xff]
      %v404 = vld [vmem:[%s327 + $0x1f8] sm:$0xff]
      %v405 = vld [vmem:[%s327 + $0x200] sm:$0xff]
      %v406 = vld [vmem:[%s327 + $0x208] sm:$0xff]
      %v407 = vld [vmem:[%s327 + $0x210] sm:$0xff]
      %v408 = vld [vmem:[%s327 + $0x218] sm:$0xff]
      %v409 = vld [vmem:[%s327 + $0x220] sm:$0xff]
      %v410 = vld [vmem:[%s327 + $0x228] sm:$0xff]
      %v411 = vld [vmem:[%s327 + $0x230] sm:$0xff]
      %v412 = vld [vmem:[%s327 + $0x238] sm:$0xff]
      %v413 = vld [vmem:[%s327 + $0x240] sm:$0xff]
      %v414 = vld [vmem:[%s327 + $0x248] sm:$0xff]
      %v415 = vld [vmem:[%s327 + $0x250] sm:$0xff]
      %v416 = vld [vmem:[%s327 + $0x258] sm:$0xff]
      %v417 = vld [vmem:[%s327 + $0x260] sm:$0xff]
      %v418 = vld [vmem:[%s327 + $0x268] sm:$0xff]
      %v419 = vld [vmem:[%s327 + $0x270] sm:$0xff]
      %v420 = vld [vmem:[%s327 + $0x278] sm:$0xff]
      %v421 = vld [vmem:[%s327 + $0x280] sm:$0xff]
      %v422 = vld [vmem:[%s327 + $0x288] sm:$0xff]
      %v423 = vld [vmem:[%s327 + $0x290] sm:$0xff]
      %v424 = vld [vmem:[%s327 + $0x298] sm:$0xff]
      %v425 = vld [vmem:[%s327 + $0x2a0] sm:$0xff]
      %v426 = vld [vmem:[%s327 + $0x2a8] sm:$0xff]
      %v427 = vld [vmem:[%s327 + $0x2b0] sm:$0xff]
      %v428 = vld [vmem:[%s327 + $0x2b8] sm:$0xff]
      %v429 = vld [vmem:[%s327 + $0x2c0] sm:$0xff]
      %v430 = vld [vmem:[%s327 + $0x2c8] sm:$0xff]
      %v431 = vld [vmem:[%s327 + $0x2d0] sm:$0xff]
      %v432 = vld [vmem:[%s327 + $0x2d8] sm:$0xff]
      %v433 = vld [vmem:[%s327 + $0x2e0] sm:$0xff]
      %v434 = vld [vmem:[%s327 + $0x2e8] sm:$0xff]
      %v435 = vld [vmem:[%s327 + $0x2f0] sm:$0xff]
      %v436 = vld [vmem:[%s327 + $0x2f8] sm:$0xff]
      %v437 = vld [vmem:[%s327 + $0x300] sm:$0xff]
      %v438 = vld [vmem:[%s327 + $0x308] sm:$0xff]
      %v439 = vld [vmem:[%s327 + $0x310] sm:$0xff]
      %v440 = vld [vmem:[%s327 + $0x318] sm:$0xff]
      %v441 = vld [vmem:[%s327 + $0x320] sm:$0xff]
      %v442 = vld [vmem:[%s327 + $0x328] sm:$0xff]
      %v443 = vld [vmem:[%s327 + $0x330] sm:$0xff]
      %v444 = vld [vmem:[%s327 + $0x338] sm:$0xff]
      %v445 = vld [vmem:[%s327 + $0x340] sm:$0xff]
      %v446 = vld [vmem:[%s327 + $0x348] sm:$0xff]
      %v447 = vld [vmem:[%s327 + $0x350] sm:$0xff]
      %v448 = vld [vmem:[%s327 + $0x358] sm:$0xff]
      %v449 = vld [vmem:[%s327 + $0x360] sm:$0xff]
      %v450 = vld [vmem:[%s327 + $0x368] sm:$0xff]
      %v451 = vld [vmem:[%s327 + $0x370] sm:$0xff]
      %v452 = vld [vmem:[%s327 + $0x378] sm:$0xff]
      %v453 = vld [vmem:[%s327 + $0x380] sm:$0xff]
      %v454 = vld [vmem:[%s327 + $0x388] sm:$0xff]
      %v455 = vld [vmem:[%s327 + $0x390] sm:$0xff]
      %v456 = vld [vmem:[%s327 + $0x398] sm:$0xff]
      %v457 = vld [vmem:[%s327 + $0x3a0] sm:$0xff]
      %v458 = vld [vmem:[%s327 + $0x3a8] sm:$0xff]
      %v459 = vld [vmem:[%s327 + $0x3b0] sm:$0xff]
      %v460 = vld [vmem:[%s327 + $0x3b8] sm:$0xff]
      %v461 = vld [vmem:[%s327 + $0x3c0] sm:$0xff]
      %v462 = vld [vmem:[%s327 + $0x3c8] sm:$0xff]
      %v463 = vld [vmem:[%s327 + $0x3d0] sm:$0xff]
      %v464 = vld [vmem:[%s327 + $0x3d8] sm:$0xff]
      %v465 = vld [vmem:[%s327 + $0x3e0] sm:$0xff]
      %v466 = vld [vmem:[%s327 + $0x3e8] sm:$0xff]
      %v467 = vld [vmem:[%s327 + $0x3f0] sm:$0xff]
      %v468 = vld [vmem:[%s327 + $0x3f8] sm:$0xff]
      %v469 = vld [vmem:[%s2] sm:$0xff]
      %v470 = vld [vmem:[%s2 + $0x8] sm:$0xff]
      %v471 = vld [vmem:[%s2 + $0x10] sm:$0xff]
      %v472 = vld [vmem:[%s2 + $0x18] sm:$0xff]
      %474 = vset.pattern.permute.xlu0 0
      %475 = vperm.xlu0 %474, %v469
      %v476 = vpop.permute.xlu0 %475
      %479 = vset.pattern.permute.xlu0 0
      %480 = vperm.xlu0 %479, %v470
      %v481 = vpop.permute.xlu0 %480
      %484 = vset.pattern.permute.xlu0 0
      %485 = vperm.xlu0 %484, %v471
      %v486 = vpop.permute.xlu0 %485
      %489 = vset.pattern.permute.xlu0 0
      %490 = vperm.xlu0 %489, %v472
      %v491 = vpop.permute.xlu0 %490
      %493 = vmatprep.subr.mxu0 %v402
      %494 = vmatpush1.msra.mxu0 %v401
      %495 = vmatprep.subr.mxu0 %v398
      %496 = vmatpush1.msra.mxu0 %v397
      %497 = vmatprep.subr.mxu0 %v394
      %498 = vmatpush1.msra.mxu0 %v393
      %499 = vmatprep.subr.mxu0 %v390
      %500 = vmatpush1.msra.mxu0 %v389
      %501 = vmatprep.subr.mxu0 %v386
      %502 = vmatpush1.msra.mxu0 %v385
      %503 = vmatprep.subr.mxu0 %v382
      %504 = vmatpush1.msra.mxu0 %v381
      %505 = vmatprep.subr.mxu0 %v378
      %506 = vmatpush1.msra.mxu0 %v377
      %507 = vmatprep.subr.mxu0 %v374
      %508 = vmatpush1.msra.mxu0 %v373
      %509 = vmatprep.subr.mxu0 %v370
      %510 = vmatpush1.msra.mxu0 %v369
      %511 = vmatprep.subr.mxu0 %v366
      %512 = vmatpush1.msra.mxu0 %v365
      %513 = vmatprep.subr.mxu0 %v362
      %514 = vmatpush1.msra.mxu0 %v361
      %515 = vmatprep.subr.mxu0 %v358
      %516 = vmatpush1.msra.mxu0 %v357
      %517 = vmatprep.subr.mxu0 %v354
      %518 = vmatpush1.msra.mxu0 %v353
      %519 = vmatprep.subr.mxu0 %v350
      %520 = vmatpush1.msra.mxu0 %v349
      %521 = vmatprep.subr.mxu0 %v346
      %522 = vmatpush1.msra.mxu0 %v345
      %523 = vmatprep.subr.mxu0 %v342
      %524 = vmatpush1.msra.mxu0 %v341
      %525 = vmatprep.subr.mxu0 %v466
      %526 = vmatpush2.msra.mxu0 %v465
      %527 = vmatprep.subr.mxu0 %v462
      %528 = vmatpush2.msra.mxu0 %v461
      %529 = vmatprep.subr.mxu0 %v458
      %530 = vmatpush2.msra.mxu0 %v457
      %531 = vmatprep.subr.mxu0 %v454
      %532 = vmatpush2.msra.mxu0 %v453
      %533 = vmatprep.subr.mxu0 %v450
      %534 = vmatpush2.msra.mxu0 %v449
      %535 = vmatprep.subr.mxu0 %v446
      %536 = vmatpush2.msra.mxu0 %v445
      %537 = vmatprep.subr.mxu0 %v442
      %538 = vmatpush2.msra.mxu0 %v441
      %539 = vmatprep.subr.mxu0 %v438
      %540 = vmatpush2.msra.mxu0 %v437
      %541 = vmatprep.subr.mxu0 %v434
      %542 = vmatpush2.msra.mxu0 %v433
      %543 = vmatprep.subr.mxu0 %v430
      %544 = vmatpush2.msra.mxu0 %v429
      %545 = vmatprep.subr.mxu0 %v426
      %546 = vmatpush2.msra.mxu0 %v425
      %547 = vmatprep.subr.mxu0 %v422
      %548 = vmatpush2.msra.mxu0 %v421
      %549 = vmatprep.subr.mxu0 %v418
      %550 = vmatpush2.msra.mxu0 %v417
      %551 = vmatprep.subr.mxu0 %v414
      %552 = vmatpush2.msra.mxu0 %v413
      %553 = vmatprep.subr.mxu0 %v410
      %554 = vmatpush2.msra.mxu0 %v409
      %555 = vmatprep.subr.mxu0 %v406
      %556 = vmatpush2.msra.mxu0 %v405
      %557 = vmatprep.mubr.f32.mxu0 %v334
      %558 = vmatmul.mubr.f32.gmra.mxu0 %v333
      %v559 = vpop.f32.mrf.mxu0
      %v560 = vadd.f32 %v476, %v559
      %v561 = vpop.f32.mrf.mxu0
      %v562 = vadd.f32 %v476, %v561
      %563 = vmatprep.mubr.f32.mxu0 %v336
      %564 = vmatmul.mubr.f32.gmra.mxu0 %v335
      %v565 = vpop.f32.mrf.mxu0
      %v566 = vadd.f32 %v481, %v565
      %v567 = vpop.f32.mrf.mxu0
      %v568 = vadd.f32 %v481, %v567
      %569 = vmatprep.mubr.f32.mxu0 %v338
      %570 = vmatmul.mubr.f32.gmra.mxu0 %v337
      %v571 = vpop.f32.mrf.mxu0
      %v572 = vadd.f32 %v486, %v571
      %v573 = vpop.f32.mrf.mxu0
      %v574 = vadd.f32 %v486, %v573
      %575 = vmatprep.mubr.f32.mxu0 %v340
      %576 = vmatmul.mubr.f32.gmra.mxu0 %v339
      %v577 = vpop.f32.mrf.mxu0
      %v578 = vadd.f32 %v491, %v577
      %v579 = vpop.f32.mrf.mxu0
      %v580 = vadd.f32 %v491, %v579
      %581 = vdwg.mxu0
      %582 = vmatprep.subr.mxu0 %v404
      %583 = vmatpush1.msra.mxu0 %v403
      %584 = vmatprep.subr.mxu0 %v400
      %585 = vmatpush1.msra.mxu0 %v399
      %586 = vmatprep.subr.mxu0 %v396
      %587 = vmatpush1.msra.mxu0 %v395
      %588 = vmatprep.subr.mxu0 %v392
      %589 = vmatpush1.msra.mxu0 %v391
      %590 = vmatprep.subr.mxu0 %v388
      %591 = vmatpush1.msra.mxu0 %v387
      %592 = vmatprep.subr.mxu0 %v384
      %593 = vmatpush1.msra.mxu0 %v383
      %594 = vmatprep.subr.mxu0 %v380
      %595 = vmatpush1.msra.mxu0 %v379
      %596 = vmatprep.subr.mxu0 %v376
      %597 = vmatpush1.msra.mxu0 %v375
      %598 = vmatprep.subr.mxu0 %v372
      %599 = vmatpush1.msra.mxu0 %v371
      %600 = vmatprep.subr.mxu0 %v368
      %601 = vmatpush1.msra.mxu0 %v367
      %602 = vmatprep.subr.mxu0 %v364
      %603 = vmatpush1.msra.mxu0 %v363
      %604 = vmatprep.subr.mxu0 %v360
      %605 = vmatpush1.msra.mxu0 %v359
      %606 = vmatprep.subr.mxu0 %v356
      %607 = vmatpush1.msra.mxu0 %v355
      %608 = vmatprep.subr.mxu0 %v352
      %609 = vmatpush1.msra.mxu0 %v351
      %610 = vmatprep.subr.mxu0 %v348
      %611 = vmatpush1.msra.mxu0 %v347
      %612 = vmatprep.subr.mxu0 %v344
      %613 = vmatpush1.msra.mxu0 %v343
      %614 = vmatprep.subr.mxu0 %v468
      %615 = vmatpush2.msra.mxu0 %v467
      %616 = vmatprep.subr.mxu0 %v464
      %617 = vmatpush2.msra.mxu0 %v463
      %618 = vmatprep.subr.mxu0 %v460
      %619 = vmatpush2.msra.mxu0 %v459
      %620 = vmatprep.subr.mxu0 %v456
      %621 = vmatpush2.msra.mxu0 %v455
      %622 = vmatprep.subr.mxu0 %v452
      %623 = vmatpush2.msra.mxu0 %v451
      %624 = vmatprep.subr.mxu0 %v448
      %625 = vmatpush2.msra.mxu0 %v447
      %626 = vmatprep.subr.mxu0 %v444
      %627 = vmatpush2.msra.mxu0 %v443
      %628 = vmatprep.subr.mxu0 %v440
      %629 = vmatpush2.msra.mxu0 %v439
      %630 = vmatprep.subr.mxu0 %v436
      %631 = vmatpush2.msra.mxu0 %v435
      %632 = vmatprep.subr.mxu0 %v432
      %633 = vmatpush2.msra.mxu0 %v431
      %634 = vmatprep.subr.mxu0 %v428
      %635 = vmatpush2.msra.mxu0 %v427
      %636 = vmatprep.subr.mxu0 %v424
      %637 = vmatpush2.msra.mxu0 %v423
      %638 = vmatprep.subr.mxu0 %v420
      %639 = vmatpush2.msra.mxu0 %v419
      %640 = vmatprep.subr.mxu0 %v416
      %641 = vmatpush2.msra.mxu0 %v415
      %642 = vmatprep.subr.mxu0 %v412
      %643 = vmatpush2.msra.mxu0 %v411
      %644 = vmatprep.subr.mxu0 %v408
      %645 = vmatpush2.msra.mxu0 %v407
      %646 = vmatprep.mubr.f32.mxu0 %v334
      %647 = vmatmul.mubr.f32.gmra.mxu0 %v333
      %v648 = vpop.f32.mrf.mxu0
      %v649 = vadd.f32 %v476, %v648
      %v650 = vpop.f32.mrf.mxu0
      %v651 = vadd.f32 %v476, %v650
      %652 = vmatprep.mubr.f32.mxu0 %v336
      %653 = vmatmul.mubr.f32.gmra.mxu0 %v335
      %v654 = vpop.f32.mrf.mxu0
      %v655 = vadd.f32 %v481, %v654
      %v656 = vpop.f32.mrf.mxu0
      %v657 = vadd.f32 %v481, %v656
      %658 = vmatprep.mubr.f32.mxu0 %v338
      %659 = vmatmul.mubr.f32.gmra.mxu0 %v337
      %v660 = vpop.f32.mrf.mxu0
      %v661 = vadd.f32 %v486, %v660
      %v662 = vpop.f32.mrf.mxu0
      %v663 = vadd.f32 %v486, %v662
      %664 = vmatprep.mubr.f32.mxu0 %v340
      %665 = vmatmul.mubr.f32.gmra.mxu0 %v339
      %v666 = vpop.f32.mrf.mxu0
      %v667 = vadd.f32 %v491, %v666
      %v668 = vpop.f32.mrf.mxu0
      %v669 = vadd.f32 %v491, %v668
      %670 = vdwg.mxu0
      %v671 = vmax.f32 %v560, 0.0
      %v672 = vmax.f32 %v562, 0.0
      %v673 = vmax.f32 %v649, 0.0
      %v674 = vmax.f32 %v651, 0.0
      %v675 = vmax.f32 %v566, 0.0
      %v676 = vmax.f32 %v568, 0.0
      %v677 = vmax.f32 %v655, 0.0
      %v678 = vmax.f32 %v657, 0.0
      %v679 = vmax.f32 %v572, 0.0
      %v680 = vmax.f32 %v574, 0.0
      %v681 = vmax.f32 %v661, 0.0
      %v682 = vmax.f32 %v663, 0.0
      %v683 = vmax.f32 %v578, 0.0
      %v684 = vmax.f32 %v580, 0.0
      %v685 = vmax.f32 %v667, 0.0
      %v686 = vmax.f32 %v669, 0.0
      %v687 = vld [vmem:[%s3] sm:$0xff]
      %v688 = vld [vmem:[%s3 + $0x8] sm:$0xff]
      %v689 = vld [vmem:[%s3 + $0x10] sm:$0xff]
      %v690 = vld [vmem:[%s3 + $0x18] sm:$0xff]
      %v691 = vld [vmem:[%s3 + $0x20] sm:$0xff]
      %v692 = vld [vmem:[%s3 + $0x28] sm:$0xff]
      %v693 = vld [vmem:[%s3 + $0x30] sm:$0xff]
      %v694 = vld [vmem:[%s3 + $0x38] sm:$0xff]
      %v695 = vld [vmem:[%s3 + $0x40] sm:$0xff]
      %v696 = vld [vmem:[%s3 + $0x48] sm:$0xff]
      %v697 = vld [vmem:[%s3 + $0x50] sm:$0xff]
      %v698 = vld [vmem:[%s3 + $0x58] sm:$0xff]
      %v699 = vld [vmem:[%s3 + $0x60] sm:$0xff]
      %v700 = vld [vmem:[%s3 + $0x68] sm:$0xff]
      %v701 = vld [vmem:[%s3 + $0x70] sm:$0xff]
      %v702 = vld [vmem:[%s3 + $0x78] sm:$0xff]
      %v703 = vld [vmem:[%s3 + $0x80] sm:$0xff]
      %v704 = vld [vmem:[%s3 + $0x88] sm:$0xff]
      %v705 = vld [vmem:[%s3 + $0x90] sm:$0xff]
      %v706 = vld [vmem:[%s3 + $0x98] sm:$0xff]
      %v707 = vld [vmem:[%s3 + $0xa0] sm:$0xff]
      %v708 = vld [vmem:[%s3 + $0xa8] sm:$0xff]
      %v709 = vld [vmem:[%s3 + $0xb0] sm:$0xff]
      %v710 = vld [vmem:[%s3 + $0xb8] sm:$0xff]
      %v711 = vld [vmem:[%s3 + $0xc0] sm:$0xff]
      %v712 = vld [vmem:[%s3 + $0xc8] sm:$0xff]
      %v713 = vld [vmem:[%s3 + $0xd0] sm:$0xff]
      %v714 = vld [vmem:[%s3 + $0xd8] sm:$0xff]
      %v715 = vld [vmem:[%s3 + $0xe0] sm:$0xff]
      %v716 = vld [vmem:[%s3 + $0xe8] sm:$0xff]
      %v717 = vld [vmem:[%s3 + $0xf0] sm:$0xff]
      %v718 = vld [vmem:[%s3 + $0xf8] sm:$0xff]
      %v719 = vld [vmem:[%s3 + $0x100] sm:$0xff]
      %v720 = vld [vmem:[%s3 + $0x108] sm:$0xff]
      %v721 = vld [vmem:[%s3 + $0x110] sm:$0xff]
      %v722 = vld [vmem:[%s3 + $0x118] sm:$0xff]
      %v723 = vld [vmem:[%s3 + $0x120] sm:$0xff]
      %v724 = vld [vmem:[%s3 + $0x128] sm:$0xff]
      %v725 = vld [vmem:[%s3 + $0x130] sm:$0xff]
      %v726 = vld [vmem:[%s3 + $0x138] sm:$0xff]
      %v727 = vld [vmem:[%s3 + $0x140] sm:$0xff]
      %v728 = vld [vmem:[%s3 + $0x148] sm:$0xff]
      %v729 = vld [vmem:[%s3 + $0x150] sm:$0xff]
      %v730 = vld [vmem:[%s3 + $0x158] sm:$0xff]
      %v731 = vld [vmem:[%s3 + $0x160] sm:$0xff]
      %v732 = vld [vmem:[%s3 + $0x168] sm:$0xff]
      %v733 = vld [vmem:[%s3 + $0x170] sm:$0xff]
      %v734 = vld [vmem:[%s3 + $0x178] sm:$0xff]
      %v735 = vld [vmem:[%s3 + $0x180] sm:$0xff]
      %v736 = vld [vmem:[%s3 + $0x188] sm:$0xff]
      %v737 = vld [vmem:[%s3 + $0x190] sm:$0xff]
      %v738 = vld [vmem:[%s3 + $0x198] sm:$0xff]
      %v739 = vld [vmem:[%s3 + $0x1a0] sm:$0xff]
      %v740 = vld [vmem:[%s3 + $0x1a8] sm:$0xff]
      %v741 = vld [vmem:[%s3 + $0x1b0] sm:$0xff]
      %v742 = vld [vmem:[%s3 + $0x1b8] sm:$0xff]
      %v743 = vld [vmem:[%s3 + $0x1c0] sm:$0xff]
      %v744 = vld [vmem:[%s3 + $0x1c8] sm:$0xff]
      %v745 = vld [vmem:[%s3 + $0x1d0] sm:$0xff]
      %v746 = vld [vmem:[%s3 + $0x1d8] sm:$0xff]
      %v747 = vld [vmem:[%s3 + $0x1e0] sm:$0xff]
      %v748 = vld [vmem:[%s3 + $0x1e8] sm:$0xff]
      %v749 = vld [vmem:[%s3 + $0x1f0] sm:$0xff]
      %v750 = vld [vmem:[%s3 + $0x1f8] sm:$0xff]
      %v751 = vld [vmem:[%s3 + $0x200] sm:$0xff]
      %v752 = vld [vmem:[%s3 + $0x208] sm:$0xff]
      %v753 = vld [vmem:[%s3 + $0x210] sm:$0xff]
      %v754 = vld [vmem:[%s3 + $0x218] sm:$0xff]
      %v755 = vld [vmem:[%s3 + $0x220] sm:$0xff]
      %v756 = vld [vmem:[%s3 + $0x228] sm:$0xff]
      %v757 = vld [vmem:[%s3 + $0x230] sm:$0xff]
      %v758 = vld [vmem:[%s3 + $0x238] sm:$0xff]
      %v759 = vld [vmem:[%s3 + $0x240] sm:$0xff]
      %v760 = vld [vmem:[%s3 + $0x248] sm:$0xff]
      %v761 = vld [vmem:[%s3 + $0x250] sm:$0xff]
      %v762 = vld [vmem:[%s3 + $0x258] sm:$0xff]
      %v763 = vld [vmem:[%s3 + $0x260] sm:$0xff]
      %v764 = vld [vmem:[%s3 + $0x268] sm:$0xff]
      %v765 = vld [vmem:[%s3 + $0x270] sm:$0xff]
      %v766 = vld [vmem:[%s3 + $0x278] sm:$0xff]
      %v767 = vld [vmem:[%s3 + $0x280] sm:$0xff]
      %v768 = vld [vmem:[%s3 + $0x288] sm:$0xff]
      %v769 = vld [vmem:[%s3 + $0x290] sm:$0xff]
      %v770 = vld [vmem:[%s3 + $0x298] sm:$0xff]
      %v771 = vld [vmem:[%s3 + $0x2a0] sm:$0xff]
      %v772 = vld [vmem:[%s3 + $0x2a8] sm:$0xff]
      %v773 = vld [vmem:[%s3 + $0x2b0] sm:$0xff]
      %v774 = vld [vmem:[%s3 + $0x2b8] sm:$0xff]
      %v775 = vld [vmem:[%s3 + $0x2c0] sm:$0xff]
      %v776 = vld [vmem:[%s3 + $0x2c8] sm:$0xff]
      %v777 = vld [vmem:[%s3 + $0x2d0] sm:$0xff]
      %v778 = vld [vmem:[%s3 + $0x2d8] sm:$0xff]
      %v779 = vld [vmem:[%s3 + $0x2e0] sm:$0xff]
      %v780 = vld [vmem:[%s3 + $0x2e8] sm:$0xff]
      %v781 = vld [vmem:[%s3 + $0x2f0] sm:$0xff]
      %v782 = vld [vmem:[%s3 + $0x2f8] sm:$0xff]
      %v783 = vld [vmem:[%s3 + $0x300] sm:$0xff]
      %v784 = vld [vmem:[%s3 + $0x308] sm:$0xff]
      %v785 = vld [vmem:[%s3 + $0x310] sm:$0xff]
      %v786 = vld [vmem:[%s3 + $0x318] sm:$0xff]
      %v787 = vld [vmem:[%s3 + $0x320] sm:$0xff]
      %v788 = vld [vmem:[%s3 + $0x328] sm:$0xff]
      %v789 = vld [vmem:[%s3 + $0x330] sm:$0xff]
      %v790 = vld [vmem:[%s3 + $0x338] sm:$0xff]
      %v791 = vld [vmem:[%s3 + $0x340] sm:$0xff]
      %v792 = vld [vmem:[%s3 + $0x348] sm:$0xff]
      %v793 = vld [vmem:[%s3 + $0x350] sm:$0xff]
      %v794 = vld [vmem:[%s3 + $0x358] sm:$0xff]
      %v795 = vld [vmem:[%s3 + $0x360] sm:$0xff]
      %v796 = vld [vmem:[%s3 + $0x368] sm:$0xff]
      %v797 = vld [vmem:[%s3 + $0x370] sm:$0xff]
      %v798 = vld [vmem:[%s3 + $0x378] sm:$0xff]
      %v799 = vld [vmem:[%s3 + $0x380] sm:$0xff]
      %v800 = vld [vmem:[%s3 + $0x388] sm:$0xff]
      %v801 = vld [vmem:[%s3 + $0x390] sm:$0xff]
      %v802 = vld [vmem:[%s3 + $0x398] sm:$0xff]
      %v803 = vld [vmem:[%s3 + $0x3a0] sm:$0xff]
      %v804 = vld [vmem:[%s3 + $0x3a8] sm:$0xff]
      %v805 = vld [vmem:[%s3 + $0x3b0] sm:$0xff]
      %v806 = vld [vmem:[%s3 + $0x3b8] sm:$0xff]
      %v807 = vld [vmem:[%s3 + $0x3c0] sm:$0xff]
      %v808 = vld [vmem:[%s3 + $0x3c8] sm:$0xff]
      %v809 = vld [vmem:[%s3 + $0x3d0] sm:$0xff]
      %v810 = vld [vmem:[%s3 + $0x3d8] sm:$0xff]
      %v811 = vld [vmem:[%s3 + $0x3e0] sm:$0xff]
      %v812 = vld [vmem:[%s3 + $0x3e8] sm:$0xff]
      %v813 = vld [vmem:[%s3 + $0x3f0] sm:$0xff]
      %v814 = vld [vmem:[%s3 + $0x3f8] sm:$0xff]
      %v815 = vld [vmem:[%s3 + $0x400] sm:$0xff]
      %v816 = vld [vmem:[%s3 + $0x408] sm:$0xff]
      %v817 = vld [vmem:[%s3 + $0x410] sm:$0xff]
      %v818 = vld [vmem:[%s3 + $0x418] sm:$0xff]
      %v819 = vld [vmem:[%s3 + $0x420] sm:$0xff]
      %v820 = vld [vmem:[%s3 + $0x428] sm:$0xff]
      %v821 = vld [vmem:[%s3 + $0x430] sm:$0xff]
      %v822 = vld [vmem:[%s3 + $0x438] sm:$0xff]
      %v823 = vld [vmem:[%s3 + $0x440] sm:$0xff]
      %v824 = vld [vmem:[%s3 + $0x448] sm:$0xff]
      %v825 = vld [vmem:[%s3 + $0x450] sm:$0xff]
      %v826 = vld [vmem:[%s3 + $0x458] sm:$0xff]
      %v827 = vld [vmem:[%s3 + $0x460] sm:$0xff]
      %v828 = vld [vmem:[%s3 + $0x468] sm:$0xff]
      %v829 = vld [vmem:[%s3 + $0x470] sm:$0xff]
      %v830 = vld [vmem:[%s3 + $0x478] sm:$0xff]
      %v831 = vld [vmem:[%s3 + $0x480] sm:$0xff]
      %v832 = vld [vmem:[%s3 + $0x488] sm:$0xff]
      %v833 = vld [vmem:[%s3 + $0x490] sm:$0xff]
      %v834 = vld [vmem:[%s3 + $0x498] sm:$0xff]
      %v835 = vld [vmem:[%s3 + $0x4a0] sm:$0xff]
      %v836 = vld [vmem:[%s3 + $0x4a8] sm:$0xff]
      %v837 = vld [vmem:[%s3 + $0x4b0] sm:$0xff]
      %v838 = vld [vmem:[%s3 + $0x4b8] sm:$0xff]
      %v839 = vld [vmem:[%s3 + $0x4c0] sm:$0xff]
      %v840 = vld [vmem:[%s3 + $0x4c8] sm:$0xff]
      %v841 = vld [vmem:[%s3 + $0x4d0] sm:$0xff]
      %v842 = vld [vmem:[%s3 + $0x4d8] sm:$0xff]
      %v843 = vld [vmem:[%s3 + $0x4e0] sm:$0xff]
      %v844 = vld [vmem:[%s3 + $0x4e8] sm:$0xff]
      %v845 = vld [vmem:[%s3 + $0x4f0] sm:$0xff]
      %v846 = vld [vmem:[%s3 + $0x4f8] sm:$0xff]
      %v847 = vld [vmem:[%s3 + $0x500] sm:$0xff]
      %v848 = vld [vmem:[%s3 + $0x508] sm:$0xff]
      %v849 = vld [vmem:[%s3 + $0x510] sm:$0xff]
      %v850 = vld [vmem:[%s3 + $0x518] sm:$0xff]
      %v851 = vld [vmem:[%s3 + $0x520] sm:$0xff]
      %v852 = vld [vmem:[%s3 + $0x528] sm:$0xff]
      %v853 = vld [vmem:[%s3 + $0x530] sm:$0xff]
      %v854 = vld [vmem:[%s3 + $0x538] sm:$0xff]
      %v855 = vld [vmem:[%s3 + $0x540] sm:$0xff]
      %v856 = vld [vmem:[%s3 + $0x548] sm:$0xff]
      %v857 = vld [vmem:[%s3 + $0x550] sm:$0xff]
      %v858 = vld [vmem:[%s3 + $0x558] sm:$0xff]
      %v859 = vld [vmem:[%s3 + $0x560] sm:$0xff]
      %v860 = vld [vmem:[%s3 + $0x568] sm:$0xff]
      %v861 = vld [vmem:[%s3 + $0x570] sm:$0xff]
      %v862 = vld [vmem:[%s3 + $0x578] sm:$0xff]
      %v863 = vld [vmem:[%s3 + $0x580] sm:$0xff]
      %v864 = vld [vmem:[%s3 + $0x588] sm:$0xff]
      %v865 = vld [vmem:[%s3 + $0x590] sm:$0xff]
      %v866 = vld [vmem:[%s3 + $0x598] sm:$0xff]
      %v867 = vld [vmem:[%s3 + $0x5a0] sm:$0xff]
      %v868 = vld [vmem:[%s3 + $0x5a8] sm:$0xff]
      %v869 = vld [vmem:[%s3 + $0x5b0] sm:$0xff]
      %v870 = vld [vmem:[%s3 + $0x5b8] sm:$0xff]
      %v871 = vld [vmem:[%s3 + $0x5c0] sm:$0xff]
      %v872 = vld [vmem:[%s3 + $0x5c8] sm:$0xff]
      %v873 = vld [vmem:[%s3 + $0x5d0] sm:$0xff]
      %v874 = vld [vmem:[%s3 + $0x5d8] sm:$0xff]
      %v875 = vld [vmem:[%s3 + $0x5e0] sm:$0xff]
      %v876 = vld [vmem:[%s3 + $0x5e8] sm:$0xff]
      %v877 = vld [vmem:[%s3 + $0x5f0] sm:$0xff]
      %v878 = vld [vmem:[%s3 + $0x5f8] sm:$0xff]
      %v879 = vld [vmem:[%s3 + $0x600] sm:$0xff]
      %v880 = vld [vmem:[%s3 + $0x608] sm:$0xff]
      %v881 = vld [vmem:[%s3 + $0x610] sm:$0xff]
      %v882 = vld [vmem:[%s3 + $0x618] sm:$0xff]
      %v883 = vld [vmem:[%s3 + $0x620] sm:$0xff]
      %v884 = vld [vmem:[%s3 + $0x628] sm:$0xff]
      %v885 = vld [vmem:[%s3 + $0x630] sm:$0xff]
      %v886 = vld [vmem:[%s3 + $0x638] sm:$0xff]
      %v887 = vld [vmem:[%s3 + $0x640] sm:$0xff]
      %v888 = vld [vmem:[%s3 + $0x648] sm:$0xff]
      %v889 = vld [vmem:[%s3 + $0x650] sm:$0xff]
      %v890 = vld [vmem:[%s3 + $0x658] sm:$0xff]
      %v891 = vld [vmem:[%s3 + $0x660] sm:$0xff]
      %v892 = vld [vmem:[%s3 + $0x668] sm:$0xff]
      %v893 = vld [vmem:[%s3 + $0x670] sm:$0xff]
      %v894 = vld [vmem:[%s3 + $0x678] sm:$0xff]
      %v895 = vld [vmem:[%s3 + $0x680] sm:$0xff]
      %v896 = vld [vmem:[%s3 + $0x688] sm:$0xff]
      %v897 = vld [vmem:[%s3 + $0x690] sm:$0xff]
      %v898 = vld [vmem:[%s3 + $0x698] sm:$0xff]
      %v899 = vld [vmem:[%s3 + $0x6a0] sm:$0xff]
      %v900 = vld [vmem:[%s3 + $0x6a8] sm:$0xff]
      %v901 = vld [vmem:[%s3 + $0x6b0] sm:$0xff]
      %v902 = vld [vmem:[%s3 + $0x6b8] sm:$0xff]
      %v903 = vld [vmem:[%s3 + $0x6c0] sm:$0xff]
      %v904 = vld [vmem:[%s3 + $0x6c8] sm:$0xff]
      %v905 = vld [vmem:[%s3 + $0x6d0] sm:$0xff]
      %v906 = vld [vmem:[%s3 + $0x6d8] sm:$0xff]
      %v907 = vld [vmem:[%s3 + $0x6e0] sm:$0xff]
      %v908 = vld [vmem:[%s3 + $0x6e8] sm:$0xff]
      %v909 = vld [vmem:[%s3 + $0x6f0] sm:$0xff]
      %v910 = vld [vmem:[%s3 + $0x6f8] sm:$0xff]
      %v911 = vld [vmem:[%s3 + $0x700] sm:$0xff]
      %v912 = vld [vmem:[%s3 + $0x708] sm:$0xff]
      %v913 = vld [vmem:[%s3 + $0x710] sm:$0xff]
      %v914 = vld [vmem:[%s3 + $0x718] sm:$0xff]
      %v915 = vld [vmem:[%s3 + $0x720] sm:$0xff]
      %v916 = vld [vmem:[%s3 + $0x728] sm:$0xff]
      %v917 = vld [vmem:[%s3 + $0x730] sm:$0xff]
      %v918 = vld [vmem:[%s3 + $0x738] sm:$0xff]
      %v919 = vld [vmem:[%s3 + $0x740] sm:$0xff]
      %v920 = vld [vmem:[%s3 + $0x748] sm:$0xff]
      %v921 = vld [vmem:[%s3 + $0x750] sm:$0xff]
      %v922 = vld [vmem:[%s3 + $0x758] sm:$0xff]
      %v923 = vld [vmem:[%s3 + $0x760] sm:$0xff]
      %v924 = vld [vmem:[%s3 + $0x768] sm:$0xff]
      %v925 = vld [vmem:[%s3 + $0x770] sm:$0xff]
      %v926 = vld [vmem:[%s3 + $0x778] sm:$0xff]
      %v927 = vld [vmem:[%s3 + $0x780] sm:$0xff]
      %v928 = vld [vmem:[%s3 + $0x788] sm:$0xff]
      %v929 = vld [vmem:[%s3 + $0x790] sm:$0xff]
      %v930 = vld [vmem:[%s3 + $0x798] sm:$0xff]
      %v931 = vld [vmem:[%s3 + $0x7a0] sm:$0xff]
      %v932 = vld [vmem:[%s3 + $0x7a8] sm:$0xff]
      %v933 = vld [vmem:[%s3 + $0x7b0] sm:$0xff]
      %v934 = vld [vmem:[%s3 + $0x7b8] sm:$0xff]
      %v935 = vld [vmem:[%s3 + $0x7c0] sm:$0xff]
      %v936 = vld [vmem:[%s3 + $0x7c8] sm:$0xff]
      %v937 = vld [vmem:[%s3 + $0x7d0] sm:$0xff]
      %v938 = vld [vmem:[%s3 + $0x7d8] sm:$0xff]
      %v939 = vld [vmem:[%s3 + $0x7e0] sm:$0xff]
      %v940 = vld [vmem:[%s3 + $0x7e8] sm:$0xff]
      %v941 = vld [vmem:[%s3 + $0x7f0] sm:$0xff]
      %v942 = vld [vmem:[%s3 + $0x7f8] sm:$0xff]
      %v943 = vld [vmem:[%s3 + $0x800] sm:$0xff]
      %v944 = vld [vmem:[%s3 + $0x808] sm:$0xff]
      %v945 = vld [vmem:[%s3 + $0x810] sm:$0xff]
      %v946 = vld [vmem:[%s3 + $0x818] sm:$0xff]
      %v947 = vld [vmem:[%s3 + $0x820] sm:$0xff]
      %v948 = vld [vmem:[%s3 + $0x828] sm:$0xff]
      %v949 = vld [vmem:[%s3 + $0x830] sm:$0xff]
      %v950 = vld [vmem:[%s3 + $0x838] sm:$0xff]
      %v951 = vld [vmem:[%s3 + $0x840] sm:$0xff]
      %v952 = vld [vmem:[%s3 + $0x848] sm:$0xff]
      %v953 = vld [vmem:[%s3 + $0x850] sm:$0xff]
      %v954 = vld [vmem:[%s3 + $0x858] sm:$0xff]
      %v955 = vld [vmem:[%s3 + $0x860] sm:$0xff]
      %v956 = vld [vmem:[%s3 + $0x868] sm:$0xff]
      %v957 = vld [vmem:[%s3 + $0x870] sm:$0xff]
      %v958 = vld [vmem:[%s3 + $0x878] sm:$0xff]
      %v959 = vld [vmem:[%s3 + $0x880] sm:$0xff]
      %v960 = vld [vmem:[%s3 + $0x888] sm:$0xff]
      %v961 = vld [vmem:[%s3 + $0x890] sm:$0xff]
      %v962 = vld [vmem:[%s3 + $0x898] sm:$0xff]
      %v963 = vld [vmem:[%s3 + $0x8a0] sm:$0xff]
      %v964 = vld [vmem:[%s3 + $0x8a8] sm:$0xff]
      %v965 = vld [vmem:[%s3 + $0x8b0] sm:$0xff]
      %v966 = vld [vmem:[%s3 + $0x8b8] sm:$0xff]
      %v967 = vld [vmem:[%s3 + $0x8c0] sm:$0xff]
      %v968 = vld [vmem:[%s3 + $0x8c8] sm:$0xff]
      %v969 = vld [vmem:[%s3 + $0x8d0] sm:$0xff]
      %v970 = vld [vmem:[%s3 + $0x8d8] sm:$0xff]
      %v971 = vld [vmem:[%s3 + $0x8e0] sm:$0xff]
      %v972 = vld [vmem:[%s3 + $0x8e8] sm:$0xff]
      %v973 = vld [vmem:[%s3 + $0x8f0] sm:$0xff]
      %v974 = vld [vmem:[%s3 + $0x8f8] sm:$0xff]
      %v975 = vld [vmem:[%s3 + $0x900] sm:$0xff]
      %v976 = vld [vmem:[%s3 + $0x908] sm:$0xff]
      %v977 = vld [vmem:[%s3 + $0x910] sm:$0xff]
      %v978 = vld [vmem:[%s3 + $0x918] sm:$0xff]
      %v979 = vld [vmem:[%s3 + $0x920] sm:$0xff]
      %v980 = vld [vmem:[%s3 + $0x928] sm:$0xff]
      %v981 = vld [vmem:[%s3 + $0x930] sm:$0xff]
      %v982 = vld [vmem:[%s3 + $0x938] sm:$0xff]
      %v983 = vld [vmem:[%s3 + $0x940] sm:$0xff]
      %v984 = vld [vmem:[%s3 + $0x948] sm:$0xff]
      %v985 = vld [vmem:[%s3 + $0x950] sm:$0xff]
      %v986 = vld [vmem:[%s3 + $0x958] sm:$0xff]
      %v987 = vld [vmem:[%s3 + $0x960] sm:$0xff]
      %v988 = vld [vmem:[%s3 + $0x968] sm:$0xff]
      %v989 = vld [vmem:[%s3 + $0x970] sm:$0xff]
      %v990 = vld [vmem:[%s3 + $0x978] sm:$0xff]
      %v991 = vld [vmem:[%s3 + $0x980] sm:$0xff]
      %v992 = vld [vmem:[%s3 + $0x988] sm:$0xff]
      %v993 = vld [vmem:[%s3 + $0x990] sm:$0xff]
      %v994 = vld [vmem:[%s3 + $0x998] sm:$0xff]
      %v995 = vld [vmem:[%s3 + $0x9a0] sm:$0xff]
      %v996 = vld [vmem:[%s3 + $0x9a8] sm:$0xff]
      %v997 = vld [vmem:[%s3 + $0x9b0] sm:$0xff]
      %v998 = vld [vmem:[%s3 + $0x9b8] sm:$0xff]
      %v999 = vld [vmem:[%s3 + $0x9c0] sm:$0xff]
      %v1000 = vld [vmem:[%s3 + $0x9c8] sm:$0xff]
      %v1001 = vld [vmem:[%s3 + $0x9d0] sm:$0xff]
      %v1002 = vld [vmem:[%s3 + $0x9d8] sm:$0xff]
      %v1003 = vld [vmem:[%s3 + $0x9e0] sm:$0xff]
      %v1004 = vld [vmem:[%s3 + $0x9e8] sm:$0xff]
      %v1005 = vld [vmem:[%s3 + $0x9f0] sm:$0xff]
      %v1006 = vld [vmem:[%s3 + $0x9f8] sm:$0xff]
      %v1007 = vld [vmem:[%s3 + $0xa00] sm:$0xff]
      %v1008 = vld [vmem:[%s3 + $0xa08] sm:$0xff]
      %v1009 = vld [vmem:[%s3 + $0xa10] sm:$0xff]
      %v1010 = vld [vmem:[%s3 + $0xa18] sm:$0xff]
      %v1011 = vld [vmem:[%s3 + $0xa20] sm:$0xff]
      %v1012 = vld [vmem:[%s3 + $0xa28] sm:$0xff]
      %v1013 = vld [vmem:[%s3 + $0xa30] sm:$0xff]
      %v1014 = vld [vmem:[%s3 + $0xa38] sm:$0xff]
      %v1015 = vld [vmem:[%s3 + $0xa40] sm:$0xff]
      %v1016 = vld [vmem:[%s3 + $0xa48] sm:$0xff]
      %v1017 = vld [vmem:[%s3 + $0xa50] sm:$0xff]
      %v1018 = vld [vmem:[%s3 + $0xa58] sm:$0xff]
      %v1019 = vld [vmem:[%s3 + $0xa60] sm:$0xff]
      %v1020 = vld [vmem:[%s3 + $0xa68] sm:$0xff]
      %v1021 = vld [vmem:[%s3 + $0xa70] sm:$0xff]
      %v1022 = vld [vmem:[%s3 + $0xa78] sm:$0xff]
      %v1023 = vld [vmem:[%s3 + $0xa80] sm:$0xff]
      %v1024 = vld [vmem:[%s3 + $0xa88] sm:$0xff]
      %v1025 = vld [vmem:[%s3 + $0xa90] sm:$0xff]
      %v1026 = vld [vmem:[%s3 + $0xa98] sm:$0xff]
      %v1027 = vld [vmem:[%s3 + $0xaa0] sm:$0xff]
      %v1028 = vld [vmem:[%s3 + $0xaa8] sm:$0xff]
      %v1029 = vld [vmem:[%s3 + $0xab0] sm:$0xff]
      %v1030 = vld [vmem:[%s3 + $0xab8] sm:$0xff]
      %v1031 = vld [vmem:[%s3 + $0xac0] sm:$0xff]
      %v1032 = vld [vmem:[%s3 + $0xac8] sm:$0xff]
      %v1033 = vld [vmem:[%s3 + $0xad0] sm:$0xff]
      %v1034 = vld [vmem:[%s3 + $0xad8] sm:$0xff]
      %v1035 = vld [vmem:[%s3 + $0xae0] sm:$0xff]
      %v1036 = vld [vmem:[%s3 + $0xae8] sm:$0xff]
      %v1037 = vld [vmem:[%s3 + $0xaf0] sm:$0xff]
      %v1038 = vld [vmem:[%s3 + $0xaf8] sm:$0xff]
      %v1039 = vld [vmem:[%s3 + $0xb00] sm:$0xff]
      %v1040 = vld [vmem:[%s3 + $0xb08] sm:$0xff]
      %v1041 = vld [vmem:[%s3 + $0xb10] sm:$0xff]
      %v1042 = vld [vmem:[%s3 + $0xb18] sm:$0xff]
      %v1043 = vld [vmem:[%s3 + $0xb20] sm:$0xff]
      %v1044 = vld [vmem:[%s3 + $0xb28] sm:$0xff]
      %v1045 = vld [vmem:[%s3 + $0xb30] sm:$0xff]
      %v1046 = vld [vmem:[%s3 + $0xb38] sm:$0xff]
      %v1047 = vld [vmem:[%s3 + $0xb40] sm:$0xff]
      %v1048 = vld [vmem:[%s3 + $0xb48] sm:$0xff]
      %v1049 = vld [vmem:[%s3 + $0xb50] sm:$0xff]
      %v1050 = vld [vmem:[%s3 + $0xb58] sm:$0xff]
      %v1051 = vld [vmem:[%s3 + $0xb60] sm:$0xff]
      %v1052 = vld [vmem:[%s3 + $0xb68] sm:$0xff]
      %v1053 = vld [vmem:[%s3 + $0xb70] sm:$0xff]
      %v1054 = vld [vmem:[%s3 + $0xb78] sm:$0xff]
      %v1055 = vld [vmem:[%s3 + $0xb80] sm:$0xff]
      %v1056 = vld [vmem:[%s3 + $0xb88] sm:$0xff]
      %v1057 = vld [vmem:[%s3 + $0xb90] sm:$0xff]
      %v1058 = vld [vmem:[%s3 + $0xb98] sm:$0xff]
      %v1059 = vld [vmem:[%s3 + $0xba0] sm:$0xff]
      %v1060 = vld [vmem:[%s3 + $0xba8] sm:$0xff]
      %v1061 = vld [vmem:[%s3 + $0xbb0] sm:$0xff]
      %v1062 = vld [vmem:[%s3 + $0xbb8] sm:$0xff]
      %v1063 = vld [vmem:[%s3 + $0xbc0] sm:$0xff]
      %v1064 = vld [vmem:[%s3 + $0xbc8] sm:$0xff]
      %v1065 = vld [vmem:[%s3 + $0xbd0] sm:$0xff]
      %v1066 = vld [vmem:[%s3 + $0xbd8] sm:$0xff]
      %v1067 = vld [vmem:[%s3 + $0xbe0] sm:$0xff]
      %v1068 = vld [vmem:[%s3 + $0xbe8] sm:$0xff]
      %v1069 = vld [vmem:[%s3 + $0xbf0] sm:$0xff]
      %v1070 = vld [vmem:[%s3 + $0xbf8] sm:$0xff]
      %v1071 = vld [vmem:[%s3 + $0xc00] sm:$0xff]
      %v1072 = vld [vmem:[%s3 + $0xc08] sm:$0xff]
      %v1073 = vld [vmem:[%s3 + $0xc10] sm:$0xff]
      %v1074 = vld [vmem:[%s3 + $0xc18] sm:$0xff]
      %v1075 = vld [vmem:[%s3 + $0xc20] sm:$0xff]
      %v1076 = vld [vmem:[%s3 + $0xc28] sm:$0xff]
      %v1077 = vld [vmem:[%s3 + $0xc30] sm:$0xff]
      %v1078 = vld [vmem:[%s3 + $0xc38] sm:$0xff]
      %v1079 = vld [vmem:[%s3 + $0xc40] sm:$0xff]
      %v1080 = vld [vmem:[%s3 + $0xc48] sm:$0xff]
      %v1081 = vld [vmem:[%s3 + $0xc50] sm:$0xff]
      %v1082 = vld [vmem:[%s3 + $0xc58] sm:$0xff]
      %v1083 = vld [vmem:[%s3 + $0xc60] sm:$0xff]
      %v1084 = vld [vmem:[%s3 + $0xc68] sm:$0xff]
      %v1085 = vld [vmem:[%s3 + $0xc70] sm:$0xff]
      %v1086 = vld [vmem:[%s3 + $0xc78] sm:$0xff]
      %v1087 = vld [vmem:[%s3 + $0xc80] sm:$0xff]
      %v1088 = vld [vmem:[%s3 + $0xc88] sm:$0xff]
      %v1089 = vld [vmem:[%s3 + $0xc90] sm:$0xff]
      %v1090 = vld [vmem:[%s3 + $0xc98] sm:$0xff]
      %v1091 = vld [vmem:[%s3 + $0xca0] sm:$0xff]
      %v1092 = vld [vmem:[%s3 + $0xca8] sm:$0xff]
      %v1093 = vld [vmem:[%s3 + $0xcb0] sm:$0xff]
      %v1094 = vld [vmem:[%s3 + $0xcb8] sm:$0xff]
      %v1095 = vld [vmem:[%s3 + $0xcc0] sm:$0xff]
      %v1096 = vld [vmem:[%s3 + $0xcc8] sm:$0xff]
      %v1097 = vld [vmem:[%s3 + $0xcd0] sm:$0xff]
      %v1098 = vld [vmem:[%s3 + $0xcd8] sm:$0xff]
      %v1099 = vld [vmem:[%s3 + $0xce0] sm:$0xff]
      %v1100 = vld [vmem:[%s3 + $0xce8] sm:$0xff]
      %v1101 = vld [vmem:[%s3 + $0xcf0] sm:$0xff]
      %v1102 = vld [vmem:[%s3 + $0xcf8] sm:$0xff]
      %v1103 = vld [vmem:[%s3 + $0xd00] sm:$0xff]
      %v1104 = vld [vmem:[%s3 + $0xd08] sm:$0xff]
      %v1105 = vld [vmem:[%s3 + $0xd10] sm:$0xff]
      %v1106 = vld [vmem:[%s3 + $0xd18] sm:$0xff]
      %v1107 = vld [vmem:[%s3 + $0xd20] sm:$0xff]
      %v1108 = vld [vmem:[%s3 + $0xd28] sm:$0xff]
      %v1109 = vld [vmem:[%s3 + $0xd30] sm:$0xff]
      %v1110 = vld [vmem:[%s3 + $0xd38] sm:$0xff]
      %v1111 = vld [vmem:[%s3 + $0xd40] sm:$0xff]
      %v1112 = vld [vmem:[%s3 + $0xd48] sm:$0xff]
      %v1113 = vld [vmem:[%s3 + $0xd50] sm:$0xff]
      %v1114 = vld [vmem:[%s3 + $0xd58] sm:$0xff]
      %v1115 = vld [vmem:[%s3 + $0xd60] sm:$0xff]
      %v1116 = vld [vmem:[%s3 + $0xd68] sm:$0xff]
      %v1117 = vld [vmem:[%s3 + $0xd70] sm:$0xff]
      %v1118 = vld [vmem:[%s3 + $0xd78] sm:$0xff]
      %v1119 = vld [vmem:[%s3 + $0xd80] sm:$0xff]
      %v1120 = vld [vmem:[%s3 + $0xd88] sm:$0xff]
      %v1121 = vld [vmem:[%s3 + $0xd90] sm:$0xff]
      %v1122 = vld [vmem:[%s3 + $0xd98] sm:$0xff]
      %v1123 = vld [vmem:[%s3 + $0xda0] sm:$0xff]
      %v1124 = vld [vmem:[%s3 + $0xda8] sm:$0xff]
      %v1125 = vld [vmem:[%s3 + $0xdb0] sm:$0xff]
      %v1126 = vld [vmem:[%s3 + $0xdb8] sm:$0xff]
      %v1127 = vld [vmem:[%s3 + $0xdc0] sm:$0xff]
      %v1128 = vld [vmem:[%s3 + $0xdc8] sm:$0xff]
      %v1129 = vld [vmem:[%s3 + $0xdd0] sm:$0xff]
      %v1130 = vld [vmem:[%s3 + $0xdd8] sm:$0xff]
      %v1131 = vld [vmem:[%s3 + $0xde0] sm:$0xff]
      %v1132 = vld [vmem:[%s3 + $0xde8] sm:$0xff]
      %v1133 = vld [vmem:[%s3 + $0xdf0] sm:$0xff]
      %v1134 = vld [vmem:[%s3 + $0xdf8] sm:$0xff]
      %v1135 = vld [vmem:[%s3 + $0xe00] sm:$0xff]
      %v1136 = vld [vmem:[%s3 + $0xe08] sm:$0xff]
      %v1137 = vld [vmem:[%s3 + $0xe10] sm:$0xff]
      %v1138 = vld [vmem:[%s3 + $0xe18] sm:$0xff]
      %v1139 = vld [vmem:[%s3 + $0xe20] sm:$0xff]
      %v1140 = vld [vmem:[%s3 + $0xe28] sm:$0xff]
      %v1141 = vld [vmem:[%s3 + $0xe30] sm:$0xff]
      %v1142 = vld [vmem:[%s3 + $0xe38] sm:$0xff]
      %v1143 = vld [vmem:[%s3 + $0xe40] sm:$0xff]
      %v1144 = vld [vmem:[%s3 + $0xe48] sm:$0xff]
      %v1145 = vld [vmem:[%s3 + $0xe50] sm:$0xff]
      %v1146 = vld [vmem:[%s3 + $0xe58] sm:$0xff]
      %v1147 = vld [vmem:[%s3 + $0xe60] sm:$0xff]
      %v1148 = vld [vmem:[%s3 + $0xe68] sm:$0xff]
      %v1149 = vld [vmem:[%s3 + $0xe70] sm:$0xff]
      %v1150 = vld [vmem:[%s3 + $0xe78] sm:$0xff]
      %v1151 = vld [vmem:[%s3 + $0xe80] sm:$0xff]
      %v1152 = vld [vmem:[%s3 + $0xe88] sm:$0xff]
      %v1153 = vld [vmem:[%s3 + $0xe90] sm:$0xff]
      %v1154 = vld [vmem:[%s3 + $0xe98] sm:$0xff]
      %v1155 = vld [vmem:[%s3 + $0xea0] sm:$0xff]
      %v1156 = vld [vmem:[%s3 + $0xea8] sm:$0xff]
      %v1157 = vld [vmem:[%s3 + $0xeb0] sm:$0xff]
      %v1158 = vld [vmem:[%s3 + $0xeb8] sm:$0xff]
      %v1159 = vld [vmem:[%s3 + $0xec0] sm:$0xff]
      %v1160 = vld [vmem:[%s3 + $0xec8] sm:$0xff]
      %v1161 = vld [vmem:[%s3 + $0xed0] sm:$0xff]
      %v1162 = vld [vmem:[%s3 + $0xed8] sm:$0xff]
      %v1163 = vld [vmem:[%s3 + $0xee0] sm:$0xff]
      %v1164 = vld [vmem:[%s3 + $0xee8] sm:$0xff]
      %v1165 = vld [vmem:[%s3 + $0xef0] sm:$0xff]
      %v1166 = vld [vmem:[%s3 + $0xef8] sm:$0xff]
      %v1167 = vld [vmem:[%s3 + $0xf00] sm:$0xff]
      %v1168 = vld [vmem:[%s3 + $0xf08] sm:$0xff]
      %v1169 = vld [vmem:[%s3 + $0xf10] sm:$0xff]
      %v1170 = vld [vmem:[%s3 + $0xf18] sm:$0xff]
      %v1171 = vld [vmem:[%s3 + $0xf20] sm:$0xff]
      %v1172 = vld [vmem:[%s3 + $0xf28] sm:$0xff]
      %v1173 = vld [vmem:[%s3 + $0xf30] sm:$0xff]
      %v1174 = vld [vmem:[%s3 + $0xf38] sm:$0xff]
      %v1175 = vld [vmem:[%s3 + $0xf40] sm:$0xff]
      %v1176 = vld [vmem:[%s3 + $0xf48] sm:$0xff]
      %v1177 = vld [vmem:[%s3 + $0xf50] sm:$0xff]
      %v1178 = vld [vmem:[%s3 + $0xf58] sm:$0xff]
      %v1179 = vld [vmem:[%s3 + $0xf60] sm:$0xff]
      %v1180 = vld [vmem:[%s3 + $0xf68] sm:$0xff]
      %v1181 = vld [vmem:[%s3 + $0xf70] sm:$0xff]
      %v1182 = vld [vmem:[%s3 + $0xf78] sm:$0xff]
      %v1183 = vld [vmem:[%s3 + $0xf80] sm:$0xff]
      %v1184 = vld [vmem:[%s3 + $0xf88] sm:$0xff]
      %v1185 = vld [vmem:[%s3 + $0xf90] sm:$0xff]
      %v1186 = vld [vmem:[%s3 + $0xf98] sm:$0xff]
      %v1187 = vld [vmem:[%s3 + $0xfa0] sm:$0xff]
      %v1188 = vld [vmem:[%s3 + $0xfa8] sm:$0xff]
      %v1189 = vld [vmem:[%s3 + $0xfb0] sm:$0xff]
      %v1190 = vld [vmem:[%s3 + $0xfb8] sm:$0xff]
      %v1191 = vld [vmem:[%s3 + $0xfc0] sm:$0xff]
      %v1192 = vld [vmem:[%s3 + $0xfc8] sm:$0xff]
      %v1193 = vld [vmem:[%s3 + $0xfd0] sm:$0xff]
      %v1194 = vld [vmem:[%s3 + $0xfd8] sm:$0xff]
      %v1195 = vld [vmem:[%s3 + $0xfe0] sm:$0xff]
      %v1196 = vld [vmem:[%s3 + $0xfe8] sm:$0xff]
      %v1197 = vld [vmem:[%s3 + $0xff0] sm:$0xff]
      %v1198 = vld [vmem:[%s3 + $0xff8] sm:$0xff]
      %v1199 = vld [vmem:[%s3 + $0x1000] sm:$0xff]
      %v1200 = vld [vmem:[%s3 + $0x1008] sm:$0xff]
      %v1201 = vld [vmem:[%s3 + $0x1010] sm:$0xff]
      %v1202 = vld [vmem:[%s3 + $0x1018] sm:$0xff]
      %v1203 = vld [vmem:[%s3 + $0x1020] sm:$0xff]
      %v1204 = vld [vmem:[%s3 + $0x1028] sm:$0xff]
      %v1205 = vld [vmem:[%s3 + $0x1030] sm:$0xff]
      %v1206 = vld [vmem:[%s3 + $0x1038] sm:$0xff]
      %v1207 = vld [vmem:[%s3 + $0x1040] sm:$0xff]
      %v1208 = vld [vmem:[%s3 + $0x1048] sm:$0xff]
      %v1209 = vld [vmem:[%s3 + $0x1050] sm:$0xff]
      %v1210 = vld [vmem:[%s3 + $0x1058] sm:$0xff]
      %v1211 = vld [vmem:[%s3 + $0x1060] sm:$0xff]
      %v1212 = vld [vmem:[%s3 + $0x1068] sm:$0xff]
      %v1213 = vld [vmem:[%s3 + $0x1070] sm:$0xff]
      %v1214 = vld [vmem:[%s3 + $0x1078] sm:$0xff]
      %v1215 = vld [vmem:[%s3 + $0x1080] sm:$0xff]
      %v1216 = vld [vmem:[%s3 + $0x1088] sm:$0xff]
      %v1217 = vld [vmem:[%s3 + $0x1090] sm:$0xff]
      %v1218 = vld [vmem:[%s3 + $0x1098] sm:$0xff]
      %v1219 = vld [vmem:[%s3 + $0x10a0] sm:$0xff]
      %v1220 = vld [vmem:[%s3 + $0x10a8] sm:$0xff]
      %v1221 = vld [vmem:[%s3 + $0x10b0] sm:$0xff]
      %v1222 = vld [vmem:[%s3 + $0x10b8] sm:$0xff]
      %v1223 = vld [vmem:[%s3 + $0x10c0] sm:$0xff]
      %v1224 = vld [vmem:[%s3 + $0x10c8] sm:$0xff]
      %v1225 = vld [vmem:[%s3 + $0x10d0] sm:$0xff]
      %v1226 = vld [vmem:[%s3 + $0x10d8] sm:$0xff]
      %v1227 = vld [vmem:[%s3 + $0x10e0] sm:$0xff]
      %v1228 = vld [vmem:[%s3 + $0x10e8] sm:$0xff]
      %v1229 = vld [vmem:[%s3 + $0x10f0] sm:$0xff]
      %v1230 = vld [vmem:[%s3 + $0x10f8] sm:$0xff]
      %v1231 = vld [vmem:[%s3 + $0x1100] sm:$0xff]
      %v1232 = vld [vmem:[%s3 + $0x1108] sm:$0xff]
      %v1233 = vld [vmem:[%s3 + $0x1110] sm:$0xff]
      %v1234 = vld [vmem:[%s3 + $0x1118] sm:$0xff]
      %v1235 = vld [vmem:[%s3 + $0x1120] sm:$0xff]
      %v1236 = vld [vmem:[%s3 + $0x1128] sm:$0xff]
      %v1237 = vld [vmem:[%s3 + $0x1130] sm:$0xff]
      %v1238 = vld [vmem:[%s3 + $0x1138] sm:$0xff]
      %v1239 = vld [vmem:[%s3 + $0x1140] sm:$0xff]
      %v1240 = vld [vmem:[%s3 + $0x1148] sm:$0xff]
      %v1241 = vld [vmem:[%s3 + $0x1150] sm:$0xff]
      %v1242 = vld [vmem:[%s3 + $0x1158] sm:$0xff]
      %v1243 = vld [vmem:[%s3 + $0x1160] sm:$0xff]
      %v1244 = vld [vmem:[%s3 + $0x1168] sm:$0xff]
      %v1245 = vld [vmem:[%s3 + $0x1170] sm:$0xff]
      %v1246 = vld [vmem:[%s3 + $0x1178] sm:$0xff]
      %v1247 = vld [vmem:[%s3 + $0x1180] sm:$0xff]
      %v1248 = vld [vmem:[%s3 + $0x1188] sm:$0xff]
      %v1249 = vld [vmem:[%s3 + $0x1190] sm:$0xff]
      %v1250 = vld [vmem:[%s3 + $0x1198] sm:$0xff]
      %v1251 = vld [vmem:[%s3 + $0x11a0] sm:$0xff]
      %v1252 = vld [vmem:[%s3 + $0x11a8] sm:$0xff]
      %v1253 = vld [vmem:[%s3 + $0x11b0] sm:$0xff]
      %v1254 = vld [vmem:[%s3 + $0x11b8] sm:$0xff]
      %v1255 = vld [vmem:[%s3 + $0x11c0] sm:$0xff]
      %v1256 = vld [vmem:[%s3 + $0x11c8] sm:$0xff]
      %v1257 = vld [vmem:[%s3 + $0x11d0] sm:$0xff]
      %v1258 = vld [vmem:[%s3 + $0x11d8] sm:$0xff]
      %v1259 = vld [vmem:[%s3 + $0x11e0] sm:$0xff]
      %v1260 = vld [vmem:[%s3 + $0x11e8] sm:$0xff]
      %v1261 = vld [vmem:[%s3 + $0x11f0] sm:$0xff]
      %v1262 = vld [vmem:[%s3 + $0x11f8] sm:$0xff]
      %v1263 = vld [vmem:[%s3 + $0x1200] sm:$0xff]
      %v1264 = vld [vmem:[%s3 + $0x1208] sm:$0xff]
      %v1265 = vld [vmem:[%s3 + $0x1210] sm:$0xff]
      %v1266 = vld [vmem:[%s3 + $0x1218] sm:$0xff]
      %v1267 = vld [vmem:[%s3 + $0x1220] sm:$0xff]
      %v1268 = vld [vmem:[%s3 + $0x1228] sm:$0xff]
      %v1269 = vld [vmem:[%s3 + $0x1230] sm:$0xff]
      %v1270 = vld [vmem:[%s3 + $0x1238] sm:$0xff]
      %v1271 = vld [vmem:[%s3 + $0x1240] sm:$0xff]
      %v1272 = vld [vmem:[%s3 + $0x1248] sm:$0xff]
      %v1273 = vld [vmem:[%s3 + $0x1250] sm:$0xff]
      %v1274 = vld [vmem:[%s3 + $0x1258] sm:$0xff]
      %v1275 = vld [vmem:[%s3 + $0x1260] sm:$0xff]
      %v1276 = vld [vmem:[%s3 + $0x1268] sm:$0xff]
      %v1277 = vld [vmem:[%s3 + $0x1270] sm:$0xff]
      %v1278 = vld [vmem:[%s3 + $0x1278] sm:$0xff]
      %v1279 = vld [vmem:[%s3 + $0x1280] sm:$0xff]
      %v1280 = vld [vmem:[%s3 + $0x1288] sm:$0xff]
      %v1281 = vld [vmem:[%s3 + $0x1290] sm:$0xff]
      %v1282 = vld [vmem:[%s3 + $0x1298] sm:$0xff]
      %v1283 = vld [vmem:[%s3 + $0x12a0] sm:$0xff]
      %v1284 = vld [vmem:[%s3 + $0x12a8] sm:$0xff]
      %v1285 = vld [vmem:[%s3 + $0x12b0] sm:$0xff]
      %v1286 = vld [vmem:[%s3 + $0x12b8] sm:$0xff]
      %v1287 = vld [vmem:[%s3 + $0x12c0] sm:$0xff]
      %v1288 = vld [vmem:[%s3 + $0x12c8] sm:$0xff]
      %v1289 = vld [vmem:[%s3 + $0x12d0] sm:$0xff]
      %v1290 = vld [vmem:[%s3 + $0x12d8] sm:$0xff]
      %v1291 = vld [vmem:[%s3 + $0x12e0] sm:$0xff]
      %v1292 = vld [vmem:[%s3 + $0x12e8] sm:$0xff]
      %v1293 = vld [vmem:[%s3 + $0x12f0] sm:$0xff]
      %v1294 = vld [vmem:[%s3 + $0x12f8] sm:$0xff]
      %v1295 = vld [vmem:[%s3 + $0x1300] sm:$0xff]
      %v1296 = vld [vmem:[%s3 + $0x1308] sm:$0xff]
      %v1297 = vld [vmem:[%s3 + $0x1310] sm:$0xff]
      %v1298 = vld [vmem:[%s3 + $0x1318] sm:$0xff]
      %v1299 = vld [vmem:[%s3 + $0x1320] sm:$0xff]
      %v1300 = vld [vmem:[%s3 + $0x1328] sm:$0xff]
      %v1301 = vld [vmem:[%s3 + $0x1330] sm:$0xff]
      %v1302 = vld [vmem:[%s3 + $0x1338] sm:$0xff]
      %v1303 = vld [vmem:[%s3 + $0x1340] sm:$0xff]
      %v1304 = vld [vmem:[%s3 + $0x1348] sm:$0xff]
      %v1305 = vld [vmem:[%s3 + $0x1350] sm:$0xff]
      %v1306 = vld [vmem:[%s3 + $0x1358] sm:$0xff]
      %v1307 = vld [vmem:[%s3 + $0x1360] sm:$0xff]
      %v1308 = vld [vmem:[%s3 + $0x1368] sm:$0xff]
      %v1309 = vld [vmem:[%s3 + $0x1370] sm:$0xff]
      %v1310 = vld [vmem:[%s3 + $0x1378] sm:$0xff]
      %v1311 = vld [vmem:[%s3 + $0x1380] sm:$0xff]
      %v1312 = vld [vmem:[%s3 + $0x1388] sm:$0xff]
      %v1313 = vld [vmem:[%s3 + $0x1390] sm:$0xff]
      %v1314 = vld [vmem:[%s3 + $0x1398] sm:$0xff]
      %v1315 = vld [vmem:[%s3 + $0x13a0] sm:$0xff]
      %v1316 = vld [vmem:[%s3 + $0x13a8] sm:$0xff]
      %v1317 = vld [vmem:[%s3 + $0x13b0] sm:$0xff]
      %v1318 = vld [vmem:[%s3 + $0x13b8] sm:$0xff]
      %v1319 = vld [vmem:[%s3 + $0x13c0] sm:$0xff]
      %v1320 = vld [vmem:[%s3 + $0x13c8] sm:$0xff]
      %v1321 = vld [vmem:[%s3 + $0x13d0] sm:$0xff]
      %v1322 = vld [vmem:[%s3 + $0x13d8] sm:$0xff]
      %v1323 = vld [vmem:[%s3 + $0x13e0] sm:$0xff]
      %v1324 = vld [vmem:[%s3 + $0x13e8] sm:$0xff]
      %v1325 = vld [vmem:[%s3 + $0x13f0] sm:$0xff]
      %v1326 = vld [vmem:[%s3 + $0x13f8] sm:$0xff]
      %v1327 = vld [vmem:[%s3 + $0x1400] sm:$0xff]
      %v1328 = vld [vmem:[%s3 + $0x1408] sm:$0xff]
      %v1329 = vld [vmem:[%s3 + $0x1410] sm:$0xff]
      %v1330 = vld [vmem:[%s3 + $0x1418] sm:$0xff]
      %v1331 = vld [vmem:[%s3 + $0x1420] sm:$0xff]
      %v1332 = vld [vmem:[%s3 + $0x1428] sm:$0xff]
      %v1333 = vld [vmem:[%s3 + $0x1430] sm:$0xff]
      %v1334 = vld [vmem:[%s3 + $0x1438] sm:$0xff]
      %v1335 = vld [vmem:[%s3 + $0x1440] sm:$0xff]
      %v1336 = vld [vmem:[%s3 + $0x1448] sm:$0xff]
      %v1337 = vld [vmem:[%s3 + $0x1450] sm:$0xff]
      %v1338 = vld [vmem:[%s3 + $0x1458] sm:$0xff]
      %v1339 = vld [vmem:[%s3 + $0x1460] sm:$0xff]
      %v1340 = vld [vmem:[%s3 + $0x1468] sm:$0xff]
      %v1341 = vld [vmem:[%s3 + $0x1470] sm:$0xff]
      %v1342 = vld [vmem:[%s3 + $0x1478] sm:$0xff]
      %v1343 = vld [vmem:[%s3 + $0x1480] sm:$0xff]
      %v1344 = vld [vmem:[%s3 + $0x1488] sm:$0xff]
      %v1345 = vld [vmem:[%s3 + $0x1490] sm:$0xff]
      %v1346 = vld [vmem:[%s3 + $0x1498] sm:$0xff]
      %v1347 = vld [vmem:[%s3 + $0x14a0] sm:$0xff]
      %v1348 = vld [vmem:[%s3 + $0x14a8] sm:$0xff]
      %v1349 = vld [vmem:[%s3 + $0x14b0] sm:$0xff]
      %v1350 = vld [vmem:[%s3 + $0x14b8] sm:$0xff]
      %v1351 = vld [vmem:[%s3 + $0x14c0] sm:$0xff]
      %v1352 = vld [vmem:[%s3 + $0x14c8] sm:$0xff]
      %v1353 = vld [vmem:[%s3 + $0x14d0] sm:$0xff]
      %v1354 = vld [vmem:[%s3 + $0x14d8] sm:$0xff]
      %v1355 = vld [vmem:[%s3 + $0x14e0] sm:$0xff]
      %v1356 = vld [vmem:[%s3 + $0x14e8] sm:$0xff]
      %v1357 = vld [vmem:[%s3 + $0x14f0] sm:$0xff]
      %v1358 = vld [vmem:[%s3 + $0x14f8] sm:$0xff]
      %v1359 = vld [vmem:[%s3 + $0x1500] sm:$0xff]
      %v1360 = vld [vmem:[%s3 + $0x1508] sm:$0xff]
      %v1361 = vld [vmem:[%s3 + $0x1510] sm:$0xff]
      %v1362 = vld [vmem:[%s3 + $0x1518] sm:$0xff]
      %v1363 = vld [vmem:[%s3 + $0x1520] sm:$0xff]
      %v1364 = vld [vmem:[%s3 + $0x1528] sm:$0xff]
      %v1365 = vld [vmem:[%s3 + $0x1530] sm:$0xff]
      %v1366 = vld [vmem:[%s3 + $0x1538] sm:$0xff]
      %v1367 = vld [vmem:[%s3 + $0x1540] sm:$0xff]
      %v1368 = vld [vmem:[%s3 + $0x1548] sm:$0xff]
      %v1369 = vld [vmem:[%s3 + $0x1550] sm:$0xff]
      %v1370 = vld [vmem:[%s3 + $0x1558] sm:$0xff]
      %v1371 = vld [vmem:[%s3 + $0x1560] sm:$0xff]
      %v1372 = vld [vmem:[%s3 + $0x1568] sm:$0xff]
      %v1373 = vld [vmem:[%s3 + $0x1570] sm:$0xff]
      %v1374 = vld [vmem:[%s3 + $0x1578] sm:$0xff]
      %v1375 = vld [vmem:[%s3 + $0x1580] sm:$0xff]
      %v1376 = vld [vmem:[%s3 + $0x1588] sm:$0xff]
      %v1377 = vld [vmem:[%s3 + $0x1590] sm:$0xff]
      %v1378 = vld [vmem:[%s3 + $0x1598] sm:$0xff]
      %v1379 = vld [vmem:[%s3 + $0x15a0] sm:$0xff]
      %v1380 = vld [vmem:[%s3 + $0x15a8] sm:$0xff]
      %v1381 = vld [vmem:[%s3 + $0x15b0] sm:$0xff]
      %v1382 = vld [vmem:[%s3 + $0x15b8] sm:$0xff]
      %v1383 = vld [vmem:[%s3 + $0x15c0] sm:$0xff]
      %v1384 = vld [vmem:[%s3 + $0x15c8] sm:$0xff]
      %v1385 = vld [vmem:[%s3 + $0x15d0] sm:$0xff]
      %v1386 = vld [vmem:[%s3 + $0x15d8] sm:$0xff]
      %v1387 = vld [vmem:[%s3 + $0x15e0] sm:$0xff]
      %v1388 = vld [vmem:[%s3 + $0x15e8] sm:$0xff]
      %v1389 = vld [vmem:[%s3 + $0x15f0] sm:$0xff]
      %v1390 = vld [vmem:[%s3 + $0x15f8] sm:$0xff]
      %v1391 = vld [vmem:[%s3 + $0x1600] sm:$0xff]
      %v1392 = vld [vmem:[%s3 + $0x1608] sm:$0xff]
      %v1393 = vld [vmem:[%s3 + $0x1610] sm:$0xff]
      %v1394 = vld [vmem:[%s3 + $0x1618] sm:$0xff]
      %v1395 = vld [vmem:[%s3 + $0x1620] sm:$0xff]
      %v1396 = vld [vmem:[%s3 + $0x1628] sm:$0xff]
      %v1397 = vld [vmem:[%s3 + $0x1630] sm:$0xff]
      %v1398 = vld [vmem:[%s3 + $0x1638] sm:$0xff]
      %v1399 = vld [vmem:[%s3 + $0x1640] sm:$0xff]
      %v1400 = vld [vmem:[%s3 + $0x1648] sm:$0xff]
      %v1401 = vld [vmem:[%s3 + $0x1650] sm:$0xff]
      %v1402 = vld [vmem:[%s3 + $0x1658] sm:$0xff]
      %v1403 = vld [vmem:[%s3 + $0x1660] sm:$0xff]
      %v1404 = vld [vmem:[%s3 + $0x1668] sm:$0xff]
      %v1405 = vld [vmem:[%s3 + $0x1670] sm:$0xff]
      %v1406 = vld [vmem:[%s3 + $0x1678] sm:$0xff]
      %v1407 = vld [vmem:[%s3 + $0x1680] sm:$0xff]
      %v1408 = vld [vmem:[%s3 + $0x1688] sm:$0xff]
      %v1409 = vld [vmem:[%s3 + $0x1690] sm:$0xff]
      %v1410 = vld [vmem:[%s3 + $0x1698] sm:$0xff]
      %v1411 = vld [vmem:[%s3 + $0x16a0] sm:$0xff]
      %v1412 = vld [vmem:[%s3 + $0x16a8] sm:$0xff]
      %v1413 = vld [vmem:[%s3 + $0x16b0] sm:$0xff]
      %v1414 = vld [vmem:[%s3 + $0x16b8] sm:$0xff]
      %v1415 = vld [vmem:[%s3 + $0x16c0] sm:$0xff]
      %v1416 = vld [vmem:[%s3 + $0x16c8] sm:$0xff]
      %v1417 = vld [vmem:[%s3 + $0x16d0] sm:$0xff]
      %v1418 = vld [vmem:[%s3 + $0x16d8] sm:$0xff]
      %v1419 = vld [vmem:[%s3 + $0x16e0] sm:$0xff]
      %v1420 = vld [vmem:[%s3 + $0x16e8] sm:$0xff]
      %v1421 = vld [vmem:[%s3 + $0x16f0] sm:$0xff]
      %v1422 = vld [vmem:[%s3 + $0x16f8] sm:$0xff]
      %v1423 = vld [vmem:[%s3 + $0x1700] sm:$0xff]
      %v1424 = vld [vmem:[%s3 + $0x1708] sm:$0xff]
      %v1425 = vld [vmem:[%s3 + $0x1710] sm:$0xff]
      %v1426 = vld [vmem:[%s3 + $0x1718] sm:$0xff]
      %v1427 = vld [vmem:[%s3 + $0x1720] sm:$0xff]
      %v1428 = vld [vmem:[%s3 + $0x1728] sm:$0xff]
      %v1429 = vld [vmem:[%s3 + $0x1730] sm:$0xff]
      %v1430 = vld [vmem:[%s3 + $0x1738] sm:$0xff]
      %v1431 = vld [vmem:[%s3 + $0x1740] sm:$0xff]
      %v1432 = vld [vmem:[%s3 + $0x1748] sm:$0xff]
      %v1433 = vld [vmem:[%s3 + $0x1750] sm:$0xff]
      %v1434 = vld [vmem:[%s3 + $0x1758] sm:$0xff]
      %v1435 = vld [vmem:[%s3 + $0x1760] sm:$0xff]
      %v1436 = vld [vmem:[%s3 + $0x1768] sm:$0xff]
      %v1437 = vld [vmem:[%s3 + $0x1770] sm:$0xff]
      %v1438 = vld [vmem:[%s3 + $0x1778] sm:$0xff]
      %v1439 = vld [vmem:[%s3 + $0x1780] sm:$0xff]
      %v1440 = vld [vmem:[%s3 + $0x1788] sm:$0xff]
      %v1441 = vld [vmem:[%s3 + $0x1790] sm:$0xff]
      %v1442 = vld [vmem:[%s3 + $0x1798] sm:$0xff]
      %v1443 = vld [vmem:[%s3 + $0x17a0] sm:$0xff]
      %v1444 = vld [vmem:[%s3 + $0x17a8] sm:$0xff]
      %v1445 = vld [vmem:[%s3 + $0x17b0] sm:$0xff]
      %v1446 = vld [vmem:[%s3 + $0x17b8] sm:$0xff]
      %v1447 = vld [vmem:[%s3 + $0x17c0] sm:$0xff]
      %v1448 = vld [vmem:[%s3 + $0x17c8] sm:$0xff]
      %v1449 = vld [vmem:[%s3 + $0x17d0] sm:$0xff]
      %v1450 = vld [vmem:[%s3 + $0x17d8] sm:$0xff]
      %v1451 = vld [vmem:[%s3 + $0x17e0] sm:$0xff]
      %v1452 = vld [vmem:[%s3 + $0x17e8] sm:$0xff]
      %v1453 = vld [vmem:[%s3 + $0x17f0] sm:$0xff]
      %v1454 = vld [vmem:[%s3 + $0x17f8] sm:$0xff]
      %v1455 = vld [vmem:[%s3 + $0x1800] sm:$0xff]
      %v1456 = vld [vmem:[%s3 + $0x1808] sm:$0xff]
      %v1457 = vld [vmem:[%s3 + $0x1810] sm:$0xff]
      %v1458 = vld [vmem:[%s3 + $0x1818] sm:$0xff]
      %v1459 = vld [vmem:[%s3 + $0x1820] sm:$0xff]
      %v1460 = vld [vmem:[%s3 + $0x1828] sm:$0xff]
      %v1461 = vld [vmem:[%s3 + $0x1830] sm:$0xff]
      %v1462 = vld [vmem:[%s3 + $0x1838] sm:$0xff]
      %v1463 = vld [vmem:[%s3 + $0x1840] sm:$0xff]
      %v1464 = vld [vmem:[%s3 + $0x1848] sm:$0xff]
      %v1465 = vld [vmem:[%s3 + $0x1850] sm:$0xff]
      %v1466 = vld [vmem:[%s3 + $0x1858] sm:$0xff]
      %v1467 = vld [vmem:[%s3 + $0x1860] sm:$0xff]
      %v1468 = vld [vmem:[%s3 + $0x1868] sm:$0xff]
      %v1469 = vld [vmem:[%s3 + $0x1870] sm:$0xff]
      %v1470 = vld [vmem:[%s3 + $0x1878] sm:$0xff]
      %v1471 = vld [vmem:[%s3 + $0x1880] sm:$0xff]
      %v1472 = vld [vmem:[%s3 + $0x1888] sm:$0xff]
      %v1473 = vld [vmem:[%s3 + $0x1890] sm:$0xff]
      %v1474 = vld [vmem:[%s3 + $0x1898] sm:$0xff]
      %v1475 = vld [vmem:[%s3 + $0x18a0] sm:$0xff]
      %v1476 = vld [vmem:[%s3 + $0x18a8] sm:$0xff]
      %v1477 = vld [vmem:[%s3 + $0x18b0] sm:$0xff]
      %v1478 = vld [vmem:[%s3 + $0x18b8] sm:$0xff]
      %v1479 = vld [vmem:[%s3 + $0x18c0] sm:$0xff]
      %v1480 = vld [vmem:[%s3 + $0x18c8] sm:$0xff]
      %v1481 = vld [vmem:[%s3 + $0x18d0] sm:$0xff]
      %v1482 = vld [vmem:[%s3 + $0x18d8] sm:$0xff]
      %v1483 = vld [vmem:[%s3 + $0x18e0] sm:$0xff]
      %v1484 = vld [vmem:[%s3 + $0x18e8] sm:$0xff]
      %v1485 = vld [vmem:[%s3 + $0x18f0] sm:$0xff]
      %v1486 = vld [vmem:[%s3 + $0x18f8] sm:$0xff]
      %vm1487 = vcmask 130048
      %v1489 = vsel %vm1487, %v674, 0
      %v1492 = vsel %vm1487, %v678, 0
      %v1495 = vsel %vm1487, %v682, 0
      %v1498 = vsel %vm1487, %v686, 0
      %1500 = vmatprep.subr.mxu0 %v928
      %1501 = vmatpush1.msra.mxu0 %v927
      %1502 = vmatprep.subr.mxu0 %v912
      %1503 = vmatpush1.msra.mxu0 %v911
      %1504 = vmatprep.subr.mxu0 %v896
      %1505 = vmatpush1.msra.mxu0 %v895
      %1506 = vmatprep.subr.mxu0 %v880
      %1507 = vmatpush1.msra.mxu0 %v879
      %1508 = vmatprep.subr.mxu0 %v864
      %1509 = vmatpush1.msra.mxu0 %v863
      %1510 = vmatprep.subr.mxu0 %v848
      %1511 = vmatpush1.msra.mxu0 %v847
      %1512 = vmatprep.subr.mxu0 %v832
      %1513 = vmatpush1.msra.mxu0 %v831
      %1514 = vmatprep.subr.mxu0 %v816
      %1515 = vmatpush1.msra.mxu0 %v815
      %1516 = vmatprep.subr.mxu0 %v800
      %1517 = vmatpush1.msra.mxu0 %v799
      %1518 = vmatprep.subr.mxu0 %v784
      %1519 = vmatpush1.msra.mxu0 %v783
      %1520 = vmatprep.subr.mxu0 %v768
      %1521 = vmatpush1.msra.mxu0 %v767
      %1522 = vmatprep.subr.mxu0 %v752
      %1523 = vmatpush1.msra.mxu0 %v751
      %1524 = vmatprep.subr.mxu0 %v736
      %1525 = vmatpush1.msra.mxu0 %v735
      %1526 = vmatprep.subr.mxu0 %v720
      %1527 = vmatpush1.msra.mxu0 %v719
      %1528 = vmatprep.subr.mxu0 %v704
      %1529 = vmatpush1.msra.mxu0 %v703
      %1530 = vmatprep.subr.mxu0 %v688
      %1531 = vmatpush1.msra.mxu0 %v687
      %1532 = vmatprep.subr.mxu0 %v1184
      %1533 = vmatpush2.msra.mxu0 %v1183
      %1534 = vmatprep.subr.mxu0 %v1168
      %1535 = vmatpush2.msra.mxu0 %v1167
      %1536 = vmatprep.subr.mxu0 %v1152
      %1537 = vmatpush2.msra.mxu0 %v1151
      %1538 = vmatprep.subr.mxu0 %v1136
      %1539 = vmatpush2.msra.mxu0 %v1135
      %1540 = vmatprep.subr.mxu0 %v1120
      %1541 = vmatpush2.msra.mxu0 %v1119
      %1542 = vmatprep.subr.mxu0 %v1104
      %1543 = vmatpush2.msra.mxu0 %v1103
      %1544 = vmatprep.subr.mxu0 %v1088
      %1545 = vmatpush2.msra.mxu0 %v1087
      %1546 = vmatprep.subr.mxu0 %v1072
      %1547 = vmatpush2.msra.mxu0 %v1071
      %1548 = vmatprep.subr.mxu0 %v1056
      %1549 = vmatpush2.msra.mxu0 %v1055
      %1550 = vmatprep.subr.mxu0 %v1040
      %1551 = vmatpush2.msra.mxu0 %v1039
      %1552 = vmatprep.subr.mxu0 %v1024
      %1553 = vmatpush2.msra.mxu0 %v1023
      %1554 = vmatprep.subr.mxu0 %v1008
      %1555 = vmatpush2.msra.mxu0 %v1007
      %1556 = vmatprep.subr.mxu0 %v992
      %1557 = vmatpush2.msra.mxu0 %v991
      %1558 = vmatprep.subr.mxu0 %v976
      %1559 = vmatpush2.msra.mxu0 %v975
      %1560 = vmatprep.subr.mxu0 %v960
      %1561 = vmatpush2.msra.mxu0 %v959
      %1562 = vmatprep.subr.mxu0 %v944
      %1563 = vmatpush2.msra.mxu0 %v943
      %1564 = vmatprep.mubr.f32.mxu0 %v672
      %1565 = vmatmul.mubr.f32.gmra.mxu0 %v671
      %v1566 = vpop.f32.mrf.mxu0
      %v1567 = vadd.f32 0.0, %v1566
      %v1568 = vpop.f32.mrf.mxu0
      %v1569 = vadd.f32 0.0, %v1568
      %1570 = vmatprep.mubr.f32.mxu0 %v676
      %1571 = vmatmul.mubr.f32.gmra.mxu0 %v675
      %v1572 = vpop.f32.mrf.mxu0
      %v1573 = vadd.f32 0.0, %v1572
      %v1574 = vpop.f32.mrf.mxu0
      %v1575 = vadd.f32 0.0, %v1574
      %1576 = vmatprep.mubr.f32.mxu0 %v680
      %1577 = vmatmul.mubr.f32.gmra.mxu0 %v679
      %v1578 = vpop.f32.mrf.mxu0
      %v1579 = vadd.f32 0.0, %v1578
      %v1580 = vpop.f32.mrf.mxu0
      %v1581 = vadd.f32 0.0, %v1580
      %1582 = vmatprep.mubr.f32.mxu0 %v684
      %1583 = vmatmul.mubr.f32.gmra.mxu0 %v683
      %v1584 = vpop.f32.mrf.mxu0
      %v1585 = vadd.f32 0.0, %v1584
      %v1586 = vpop.f32.mrf.mxu0
      %v1587 = vadd.f32 0.0, %v1586
      %1588 = vdwg.mxu0
      %1589 = vmatprep.subr.mxu0 %v1440
      %1590 = vmatpush1.msra.mxu0 %v1439
      %1591 = vmatprep.subr.mxu0 %v1424
      %1592 = vmatpush1.msra.mxu0 %v1423
      %1593 = vmatprep.subr.mxu0 %v1408
      %1594 = vmatpush1.msra.mxu0 %v1407
      %1595 = vmatprep.subr.mxu0 %v1392
      %1596 = vmatpush1.msra.mxu0 %v1391
      %1597 = vmatprep.subr.mxu0 %v1376
      %1598 = vmatpush1.msra.mxu0 %v1375
      %1599 = vmatprep.subr.mxu0 %v1360
      %1600 = vmatpush1.msra.mxu0 %v1359
      %1601 = vmatprep.subr.mxu0 %v1344
      %1602 = vmatpush1.msra.mxu0 %v1343
      %1603 = vmatprep.subr.mxu0 %v1328
      %1604 = vmatpush1.msra.mxu0 %v1327
      %1605 = vmatprep.subr.mxu0 %v1312
      %1606 = vmatpush1.msra.mxu0 %v1311
      %1607 = vmatprep.subr.mxu0 %v1296
      %1608 = vmatpush1.msra.mxu0 %v1295
      %1609 = vmatprep.subr.mxu0 %v1280
      %1610 = vmatpush1.msra.mxu0 %v1279
      %1611 = vmatprep.subr.mxu0 %v1264
      %1612 = vmatpush1.msra.mxu0 %v1263
      %1613 = vmatprep.subr.mxu0 %v1248
      %1614 = vmatpush1.msra.mxu0 %v1247
      %1615 = vmatprep.subr.mxu0 %v1232
      %1616 = vmatpush1.msra.mxu0 %v1231
      %1617 = vmatprep.subr.mxu0 %v1216
      %1618 = vmatpush1.msra.mxu0 %v1215
      %1619 = vmatprep.subr.mxu0 %v1200
      %1620 = vmatpush1.msra.mxu0 %v1199
      %1621 = vmatprep.subr.mxu0 0.0
      %1622 = vmatpush2.msra.mxu0 0.0
      %1623 = vmatprep.subr.mxu0 0.0
      %1624 = vmatpush2.msra.mxu0 0.0
      %1625 = vmatprep.subr.mxu0 0.0
      %1626 = vmatpush2.msra.mxu0 0.0
      %1627 = vmatprep.subr.mxu0 0.0
      %1628 = vmatpush2.msra.mxu0 0.0
      %1629 = vmatprep.subr.mxu0 0.0
      %1630 = vmatpush2.msra.mxu0 0.0
      %1631 = vmatprep.subr.mxu0 0.0
      %1632 = vmatpush2.msra.mxu0 0.0
      %1633 = vmatprep.subr.mxu0 0.0
      %1634 = vmatpush2.msra.mxu0 0.0
      %1635 = vmatprep.subr.mxu0 0.0
      %1636 = vmatpush2.msra.mxu0 0.0
      %1637 = vmatprep.subr.mxu0 0.0
      %1638 = vmatpush2.msra.mxu0 0.0
      %1639 = vmatprep.subr.mxu0 0.0
      %1640 = vmatpush2.msra.mxu0 0.0
      %1641 = vmatprep.subr.mxu0 0.0
      %1642 = vmatpush2.msra.mxu0 0.0
      %1643 = vmatprep.subr.mxu0 0.0
      %1644 = vmatpush2.msra.mxu0 0.0
      %1645 = vmatprep.subr.mxu0 0.0
      %1646 = vmatpush2.msra.mxu0 0.0
      %1647 = vmatprep.subr.mxu0 0.0
      %1648 = vmatpush2.msra.mxu0 0.0
      %1649 = vmatprep.subr.mxu0 %v1472
      %1650 = vmatpush2.msra.mxu0 %v1471
      %1651 = vmatprep.subr.mxu0 %v1456
      %1652 = vmatpush2.msra.mxu0 %v1455
      %1653 = vmatprep.mubr.f32.mxu0 %v1489
      %1654 = vmatmul.mubr.f32.gmra.mxu0 %v673
      %v1655 = vpop.f32.mrf.mxu0
      %v1656 = vadd.f32 %v1567, %v1655
      %v1657 = vpop.f32.mrf.mxu0
      %v1658 = vadd.f32 %v1569, %v1657
      %1659 = vmatprep.mubr.f32.mxu0 %v1492
      %1660 = vmatmul.mubr.f32.gmra.mxu0 %v677
      %v1661 = vpop.f32.mrf.mxu0
      %v1662 = vadd.f32 %v1573, %v1661
      %v1663 = vpop.f32.mrf.mxu0
      %v1664 = vadd.f32 %v1575, %v1663
      %1665 = vmatprep.mubr.f32.mxu0 %v1495
      %1666 = vmatmul.mubr.f32.gmra.mxu0 %v681
      %v1667 = vpop.f32.mrf.mxu0
      %v1668 = vadd.f32 %v1579, %v1667
      %v1669 = vpop.f32.mrf.mxu0
      %v1670 = vadd.f32 %v1581, %v1669
      %1671 = vmatprep.mubr.f32.mxu0 %v1498
      %1672 = vmatmul.mubr.f32.gmra.mxu0 %v685
      %v1673 = vpop.f32.mrf.mxu0
      %v1674 = vadd.f32 %v1585, %v1673
      %v1675 = vpop.f32.mrf.mxu0
      %v1676 = vadd.f32 %v1587, %v1675
      %1677 = vdwg.mxu0
      %1678 = vmatprep.subr.mxu0 %v930
      %1679 = vmatpush1.msra.mxu0 %v929
      %1680 = vmatprep.subr.mxu0 %v914
      %1681 = vmatpush1.msra.mxu0 %v913
      %1682 = vmatprep.subr.mxu0 %v898
      %1683 = vmatpush1.msra.mxu0 %v897
      %1684 = vmatprep.subr.mxu0 %v882
      %1685 = vmatpush1.msra.mxu0 %v881
      %1686 = vmatprep.subr.mxu0 %v866
      %1687 = vmatpush1.msra.mxu0 %v865
      %1688 = vmatprep.subr.mxu0 %v850
      %1689 = vmatpush1.msra.mxu0 %v849
      %1690 = vmatprep.subr.mxu0 %v834
      %1691 = vmatpush1.msra.mxu0 %v833
      %1692 = vmatprep.subr.mxu0 %v818
      %1693 = vmatpush1.msra.mxu0 %v817
      %1694 = vmatprep.subr.mxu0 %v802
      %1695 = vmatpush1.msra.mxu0 %v801
      %1696 = vmatprep.subr.mxu0 %v786
      %1697 = vmatpush1.msra.mxu0 %v785
      %1698 = vmatprep.subr.mxu0 %v770
      %1699 = vmatpush1.msra.mxu0 %v769
      %1700 = vmatprep.subr.mxu0 %v754
      %1701 = vmatpush1.msra.mxu0 %v753
      %1702 = vmatprep.subr.mxu0 %v738
      %1703 = vmatpush1.msra.mxu0 %v737
      %1704 = vmatprep.subr.mxu0 %v722
      %1705 = vmatpush1.msra.mxu0 %v721
      %1706 = vmatprep.subr.mxu0 %v706
      %1707 = vmatpush1.msra.mxu0 %v705
      %1708 = vmatprep.subr.mxu0 %v690
      %1709 = vmatpush1.msra.mxu0 %v689
      %1710 = vmatprep.subr.mxu0 %v1186
      %1711 = vmatpush2.msra.mxu0 %v1185
      %1712 = vmatprep.subr.mxu0 %v1170
      %1713 = vmatpush2.msra.mxu0 %v1169
      %1714 = vmatprep.subr.mxu0 %v1154
      %1715 = vmatpush2.msra.mxu0 %v1153
      %1716 = vmatprep.subr.mxu0 %v1138
      %1717 = vmatpush2.msra.mxu0 %v1137
      %1718 = vmatprep.subr.mxu0 %v1122
      %1719 = vmatpush2.msra.mxu0 %v1121
      %1720 = vmatprep.subr.mxu0 %v1106
      %1721 = vmatpush2.msra.mxu0 %v1105
      %1722 = vmatprep.subr.mxu0 %v1090
      %1723 = vmatpush2.msra.mxu0 %v1089
      %1724 = vmatprep.subr.mxu0 %v1074
      %1725 = vmatpush2.msra.mxu0 %v1073
      %1726 = vmatprep.subr.mxu0 %v1058
      %1727 = vmatpush2.msra.mxu0 %v1057
      %1728 = vmatprep.subr.mxu0 %v1042
      %1729 = vmatpush2.msra.mxu0 %v1041
      %1730 = vmatprep.subr.mxu0 %v1026
      %1731 = vmatpush2.msra.mxu0 %v1025
      %1732 = vmatprep.subr.mxu0 %v1010
      %1733 = vmatpush2.msra.mxu0 %v1009
      %1734 = vmatprep.subr.mxu0 %v994
      %1735 = vmatpush2.msra.mxu0 %v993
      %1736 = vmatprep.subr.mxu0 %v978
      %1737 = vmatpush2.msra.mxu0 %v977
      %1738 = vmatprep.subr.mxu0 %v962
      %1739 = vmatpush2.msra.mxu0 %v961
      %1740 = vmatprep.subr.mxu0 %v946
      %1741 = vmatpush2.msra.mxu0 %v945
      %1742 = vmatprep.mubr.f32.mxu0 %v672
      %1743 = vmatmul.mubr.f32.gmra.mxu0 %v671
      %v1744 = vpop.f32.mrf.mxu0
      %v1745 = vadd.f32 0.0, %v1744
      %v1746 = vpop.f32.mrf.mxu0
      %v1747 = vadd.f32 0.0, %v1746
      %1748 = vmatprep.mubr.f32.mxu0 %v676
      %1749 = vmatmul.mubr.f32.gmra.mxu0 %v675
      %v1750 = vpop.f32.mrf.mxu0
      %v1751 = vadd.f32 0.0, %v1750
      %v1752 = vpop.f32.mrf.mxu0
      %v1753 = vadd.f32 0.0, %v1752
      %1754 = vmatprep.mubr.f32.mxu0 %v680
      %1755 = vmatmul.mubr.f32.gmra.mxu0 %v679
      %v1756 = vpop.f32.mrf.mxu0
      %v1757 = vadd.f32 0.0, %v1756
      %v1758 = vpop.f32.mrf.mxu0
      %v1759 = vadd.f32 0.0, %v1758
      %1760 = vmatprep.mubr.f32.mxu0 %v684
      %1761 = vmatmul.mubr.f32.gmra.mxu0 %v683
      %v1762 = vpop.f32.mrf.mxu0
      %v1763 = vadd.f32 0.0, %v1762
      %v1764 = vpop.f32.mrf.mxu0
      %v1765 = vadd.f32 0.0, %v1764
      %1766 = vdwg.mxu0
      %1767 = vmatprep.subr.mxu0 %v1442
      %1768 = vmatpush1.msra.mxu0 %v1441
      %1769 = vmatprep.subr.mxu0 %v1426
      %1770 = vmatpush1.msra.mxu0 %v1425
      %1771 = vmatprep.subr.mxu0 %v1410
      %1772 = vmatpush1.msra.mxu0 %v1409
      %1773 = vmatprep.subr.mxu0 %v1394
      %1774 = vmatpush1.msra.mxu0 %v1393
      %1775 = vmatprep.subr.mxu0 %v1378
      %1776 = vmatpush1.msra.mxu0 %v1377
      %1777 = vmatprep.subr.mxu0 %v1362
      %1778 = vmatpush1.msra.mxu0 %v1361
      %1779 = vmatprep.subr.mxu0 %v1346
      %1780 = vmatpush1.msra.mxu0 %v1345
      %1781 = vmatprep.subr.mxu0 %v1330
      %1782 = vmatpush1.msra.mxu0 %v1329
      %1783 = vmatprep.subr.mxu0 %v1314
      %1784 = vmatpush1.msra.mxu0 %v1313
      %1785 = vmatprep.subr.mxu0 %v1298
      %1786 = vmatpush1.msra.mxu0 %v1297
      %1787 = vmatprep.subr.mxu0 %v1282
      %1788 = vmatpush1.msra.mxu0 %v1281
      %1789 = vmatprep.subr.mxu0 %v1266
      %1790 = vmatpush1.msra.mxu0 %v1265
      %1791 = vmatprep.subr.mxu0 %v1250
      %1792 = vmatpush1.msra.mxu0 %v1249
      %1793 = vmatprep.subr.mxu0 %v1234
      %1794 = vmatpush1.msra.mxu0 %v1233
      %1795 = vmatprep.subr.mxu0 %v1218
      %1796 = vmatpush1.msra.mxu0 %v1217
      %1797 = vmatprep.subr.mxu0 %v1202
      %1798 = vmatpush1.msra.mxu0 %v1201
      %1799 = vmatprep.subr.mxu0 0.0
      %1800 = vmatpush2.msra.mxu0 0.0
      %1801 = vmatprep.subr.mxu0 0.0
      %1802 = vmatpush2.msra.mxu0 0.0
      %1803 = vmatprep.subr.mxu0 0.0
      %1804 = vmatpush2.msra.mxu0 0.0
      %1805 = vmatprep.subr.mxu0 0.0
      %1806 = vmatpush2.msra.mxu0 0.0
      %1807 = vmatprep.subr.mxu0 0.0
      %1808 = vmatpush2.msra.mxu0 0.0
      %1809 = vmatprep.subr.mxu0 0.0
      %1810 = vmatpush2.msra.mxu0 0.0
      %1811 = vmatprep.subr.mxu0 0.0
      %1812 = vmatpush2.msra.mxu0 0.0
      %1813 = vmatprep.subr.mxu0 0.0
      %1814 = vmatpush2.msra.mxu0 0.0
      %1815 = vmatprep.subr.mxu0 0.0
      %1816 = vmatpush2.msra.mxu0 0.0
      %1817 = vmatprep.subr.mxu0 0.0
      %1818 = vmatpush2.msra.mxu0 0.0
      %1819 = vmatprep.subr.mxu0 0.0
      %1820 = vmatpush2.msra.mxu0 0.0
      %1821 = vmatprep.subr.mxu0 0.0
      %1822 = vmatpush2.msra.mxu0 0.0
      %1823 = vmatprep.subr.mxu0 0.0
      %1824 = vmatpush2.msra.mxu0 0.0
      %1825 = vmatprep.subr.mxu0 0.0
      %1826 = vmatpush2.msra.mxu0 0.0
      %1827 = vmatprep.subr.mxu0 %v1474
      %1828 = vmatpush2.msra.mxu0 %v1473
      %1829 = vmatprep.subr.mxu0 %v1458
      %1830 = vmatpush2.msra.mxu0 %v1457
      %1831 = vmatprep.mubr.f32.mxu0 %v1489
      %1832 = vmatmul.mubr.f32.gmra.mxu0 %v673
      %v1833 = vpop.f32.mrf.mxu0
      %v1834 = vadd.f32 %v1745, %v1833
      %v1835 = vpop.f32.mrf.mxu0
      %v1836 = vadd.f32 %v1747, %v1835
      %1837 = vmatprep.mubr.f32.mxu0 %v1492
      %1838 = vmatmul.mubr.f32.gmra.mxu0 %v677
      %v1839 = vpop.f32.mrf.mxu0
      %v1840 = vadd.f32 %v1751, %v1839
      %v1841 = vpop.f32.mrf.mxu0
      %v1842 = vadd.f32 %v1753, %v1841
      %1843 = vmatprep.mubr.f32.mxu0 %v1495
      %1844 = vmatmul.mubr.f32.gmra.mxu0 %v681
      %v1845 = vpop.f32.mrf.mxu0
      %v1846 = vadd.f32 %v1757, %v1845
      %v1847 = vpop.f32.mrf.mxu0
      %v1848 = vadd.f32 %v1759, %v1847
      %1849 = vmatprep.mubr.f32.mxu0 %v1498
      %1850 = vmatmul.mubr.f32.gmra.mxu0 %v685
      %v1851 = vpop.f32.mrf.mxu0
      %v1852 = vadd.f32 %v1763, %v1851
      %v1853 = vpop.f32.mrf.mxu0
      %v1854 = vadd.f32 %v1765, %v1853
      %1855 = vdwg.mxu0
      %1856 = vmatprep.subr.mxu0 %v932
      %1857 = vmatpush1.msra.mxu0 %v931
      %1858 = vmatprep.subr.mxu0 %v916
      %1859 = vmatpush1.msra.mxu0 %v915
      %1860 = vmatprep.subr.mxu0 %v900
      %1861 = vmatpush1.msra.mxu0 %v899
      %1862 = vmatprep.subr.mxu0 %v884
      %1863 = vmatpush1.msra.mxu0 %v883
      %1864 = vmatprep.subr.mxu0 %v868
      %1865 = vmatpush1.msra.mxu0 %v867
      %1866 = vmatprep.subr.mxu0 %v852
      %1867 = vmatpush1.msra.mxu0 %v851
      %1868 = vmatprep.subr.mxu0 %v836
      %1869 = vmatpush1.msra.mxu0 %v835
      %1870 = vmatprep.subr.mxu0 %v820
      %1871 = vmatpush1.msra.mxu0 %v819
      %1872 = vmatprep.subr.mxu0 %v804
      %1873 = vmatpush1.msra.mxu0 %v803
      %1874 = vmatprep.subr.mxu0 %v788
      %1875 = vmatpush1.msra.mxu0 %v787
      %1876 = vmatprep.subr.mxu0 %v772
      %1877 = vmatpush1.msra.mxu0 %v771
      %1878 = vmatprep.subr.mxu0 %v756
      %1879 = vmatpush1.msra.mxu0 %v755
      %1880 = vmatprep.subr.mxu0 %v740
      %1881 = vmatpush1.msra.mxu0 %v739
      %1882 = vmatprep.subr.mxu0 %v724
      %1883 = vmatpush1.msra.mxu0 %v723
      %1884 = vmatprep.subr.mxu0 %v708
      %1885 = vmatpush1.msra.mxu0 %v707
      %1886 = vmatprep.subr.mxu0 %v692
      %1887 = vmatpush1.msra.mxu0 %v691
      %1888 = vmatprep.subr.mxu0 %v1188
      %1889 = vmatpush2.msra.mxu0 %v1187
      %1890 = vmatprep.subr.mxu0 %v1172
      %1891 = vmatpush2.msra.mxu0 %v1171
      %1892 = vmatprep.subr.mxu0 %v1156
      %1893 = vmatpush2.msra.mxu0 %v1155
      %1894 = vmatprep.subr.mxu0 %v1140
      %1895 = vmatpush2.msra.mxu0 %v1139
      %1896 = vmatprep.subr.mxu0 %v1124
      %1897 = vmatpush2.msra.mxu0 %v1123
      %1898 = vmatprep.subr.mxu0 %v1108
      %1899 = vmatpush2.msra.mxu0 %v1107
      %1900 = vmatprep.subr.mxu0 %v1092
      %1901 = vmatpush2.msra.mxu0 %v1091
      %1902 = vmatprep.subr.mxu0 %v1076
      %1903 = vmatpush2.msra.mxu0 %v1075
      %1904 = vmatprep.subr.mxu0 %v1060
      %1905 = vmatpush2.msra.mxu0 %v1059
      %1906 = vmatprep.subr.mxu0 %v1044
      %1907 = vmatpush2.msra.mxu0 %v1043
      %1908 = vmatprep.subr.mxu0 %v1028
      %1909 = vmatpush2.msra.mxu0 %v1027
      %1910 = vmatprep.subr.mxu0 %v1012
      %1911 = vmatpush2.msra.mxu0 %v1011
      %1912 = vmatprep.subr.mxu0 %v996
      %1913 = vmatpush2.msra.mxu0 %v995
      %1914 = vmatprep.subr.mxu0 %v980
      %1915 = vmatpush2.msra.mxu0 %v979
      %1916 = vmatprep.subr.mxu0 %v964
      %1917 = vmatpush2.msra.mxu0 %v963
      %1918 = vmatprep.subr.mxu0 %v948
      %1919 = vmatpush2.msra.mxu0 %v947
      %1920 = vmatprep.mubr.f32.mxu0 %v672
      %1921 = vmatmul.mubr.f32.gmra.mxu0 %v671
      %v1922 = vpop.f32.mrf.mxu0
      %v1923 = vadd.f32 0.0, %v1922
      %v1924 = vpop.f32.mrf.mxu0
      %v1925 = vadd.f32 0.0, %v1924
      %1926 = vmatprep.mubr.f32.mxu0 %v676
      %1927 = vmatmul.mubr.f32.gmra.mxu0 %v675
      %v1928 = vpop.f32.mrf.mxu0
      %v1929 = vadd.f32 0.0, %v1928
      %v1930 = vpop.f32.mrf.mxu0
      %v1931 = vadd.f32 0.0, %v1930
      %1932 = vmatprep.mubr.f32.mxu0 %v680
      %1933 = vmatmul.mubr.f32.gmra.mxu0 %v679
      %v1934 = vpop.f32.mrf.mxu0
      %v1935 = vadd.f32 0.0, %v1934
      %v1936 = vpop.f32.mrf.mxu0
      %v1937 = vadd.f32 0.0, %v1936
      %1938 = vmatprep.mubr.f32.mxu0 %v684
      %1939 = vmatmul.mubr.f32.gmra.mxu0 %v683
      %v1940 = vpop.f32.mrf.mxu0
      %v1941 = vadd.f32 0.0, %v1940
      %v1942 = vpop.f32.mrf.mxu0
      %v1943 = vadd.f32 0.0, %v1942
      %1944 = vdwg.mxu0
      %1945 = vmatprep.subr.mxu0 %v1444
      %1946 = vmatpush1.msra.mxu0 %v1443
      %1947 = vmatprep.subr.mxu0 %v1428
      %1948 = vmatpush1.msra.mxu0 %v1427
      %1949 = vmatprep.subr.mxu0 %v1412
      %1950 = vmatpush1.msra.mxu0 %v1411
      %1951 = vmatprep.subr.mxu0 %v1396
      %1952 = vmatpush1.msra.mxu0 %v1395
      %1953 = vmatprep.subr.mxu0 %v1380
      %1954 = vmatpush1.msra.mxu0 %v1379
      %1955 = vmatprep.subr.mxu0 %v1364
      %1956 = vmatpush1.msra.mxu0 %v1363
      %1957 = vmatprep.subr.mxu0 %v1348
      %1958 = vmatpush1.msra.mxu0 %v1347
      %1959 = vmatprep.subr.mxu0 %v1332
      %1960 = vmatpush1.msra.mxu0 %v1331
      %1961 = vmatprep.subr.mxu0 %v1316
      %1962 = vmatpush1.msra.mxu0 %v1315
      %1963 = vmatprep.subr.mxu0 %v1300
      %1964 = vmatpush1.msra.mxu0 %v1299
      %1965 = vmatprep.subr.mxu0 %v1284
      %1966 = vmatpush1.msra.mxu0 %v1283
      %1967 = vmatprep.subr.mxu0 %v1268
      %1968 = vmatpush1.msra.mxu0 %v1267
      %1969 = vmatprep.subr.mxu0 %v1252
      %1970 = vmatpush1.msra.mxu0 %v1251
      %1971 = vmatprep.subr.mxu0 %v1236
      %1972 = vmatpush1.msra.mxu0 %v1235
      %1973 = vmatprep.subr.mxu0 %v1220
      %1974 = vmatpush1.msra.mxu0 %v1219
      %1975 = vmatprep.subr.mxu0 %v1204
      %1976 = vmatpush1.msra.mxu0 %v1203
      %1977 = vmatprep.subr.mxu0 0.0
      %1978 = vmatpush2.msra.mxu0 0.0
      %1979 = vmatprep.subr.mxu0 0.0
      %1980 = vmatpush2.msra.mxu0 0.0
      %1981 = vmatprep.subr.mxu0 0.0
      %1982 = vmatpush2.msra.mxu0 0.0
      %1983 = vmatprep.subr.mxu0 0.0
      %1984 = vmatpush2.msra.mxu0 0.0
      %1985 = vmatprep.subr.mxu0 0.0
      %1986 = vmatpush2.msra.mxu0 0.0
      %1987 = vmatprep.subr.mxu0 0.0
      %1988 = vmatpush2.msra.mxu0 0.0
      %1989 = vmatprep.subr.mxu0 0.0
      %1990 = vmatpush2.msra.mxu0 0.0
      %1991 = vmatprep.subr.mxu0 0.0
      %1992 = vmatpush2.msra.mxu0 0.0
      %1993 = vmatprep.subr.mxu0 0.0
      %1994 = vmatpush2.msra.mxu0 0.0
      %1995 = vmatprep.subr.mxu0 0.0
      %1996 = vmatpush2.msra.mxu0 0.0
      %1997 = vmatprep.subr.mxu0 0.0
      %1998 = vmatpush2.msra.mxu0 0.0
      %1999 = vmatprep.subr.mxu0 0.0
      %2000 = vmatpush2.msra.mxu0 0.0
      %2001 = vmatprep.subr.mxu0 0.0
      %2002 = vmatpush2.msra.mxu0 0.0
      %2003 = vmatprep.subr.mxu0 0.0
      %2004 = vmatpush2.msra.mxu0 0.0
      %2005 = vmatprep.subr.mxu0 %v1476
      %2006 = vmatpush2.msra.mxu0 %v1475
      %2007 = vmatprep.subr.mxu0 %v1460
      %2008 = vmatpush2.msra.mxu0 %v1459
      %2009 = vmatprep.mubr.f32.mxu0 %v1489
      %2010 = vmatmul.mubr.f32.gmra.mxu0 %v673
      %v2011 = vpop.f32.mrf.mxu0
      %v2012 = vadd.f32 %v1923, %v2011
      %v2013 = vpop.f32.mrf.mxu0
      %v2014 = vadd.f32 %v1925, %v2013
      %2015 = vmatprep.mubr.f32.mxu0 %v1492
      %2016 = vmatmul.mubr.f32.gmra.mxu0 %v677
      %v2017 = vpop.f32.mrf.mxu0
      %v2018 = vadd.f32 %v1929, %v2017
      %v2019 = vpop.f32.mrf.mxu0
      %v2020 = vadd.f32 %v1931, %v2019
      %2021 = vmatprep.mubr.f32.mxu0 %v1495
      %2022 = vmatmul.mubr.f32.gmra.mxu0 %v681
      %v2023 = vpop.f32.mrf.mxu0
      %v2024 = vadd.f32 %v1935, %v2023
      %v2025 = vpop.f32.mrf.mxu0
      %v2026 = vadd.f32 %v1937, %v2025
      %2027 = vmatprep.mubr.f32.mxu0 %v1498
      %2028 = vmatmul.mubr.f32.gmra.mxu0 %v685
      %v2029 = vpop.f32.mrf.mxu0
      %v2030 = vadd.f32 %v1941, %v2029
      %v2031 = vpop.f32.mrf.mxu0
      %v2032 = vadd.f32 %v1943, %v2031
      %2033 = vdwg.mxu0
      %2034 = vmatprep.subr.mxu0 %v934
      %2035 = vmatpush1.msra.mxu0 %v933
      %2036 = vmatprep.subr.mxu0 %v918
      %2037 = vmatpush1.msra.mxu0 %v917
      %2038 = vmatprep.subr.mxu0 %v902
      %2039 = vmatpush1.msra.mxu0 %v901
      %2040 = vmatprep.subr.mxu0 %v886
      %2041 = vmatpush1.msra.mxu0 %v885
      %2042 = vmatprep.subr.mxu0 %v870
      %2043 = vmatpush1.msra.mxu0 %v869
      %2044 = vmatprep.subr.mxu0 %v854
      %2045 = vmatpush1.msra.mxu0 %v853
      %2046 = vmatprep.subr.mxu0 %v838
      %2047 = vmatpush1.msra.mxu0 %v837
      %2048 = vmatprep.subr.mxu0 %v822
      %2049 = vmatpush1.msra.mxu0 %v821
      %2050 = vmatprep.subr.mxu0 %v806
      %2051 = vmatpush1.msra.mxu0 %v805
      %2052 = vmatprep.subr.mxu0 %v790
      %2053 = vmatpush1.msra.mxu0 %v789
      %2054 = vmatprep.subr.mxu0 %v774
      %2055 = vmatpush1.msra.mxu0 %v773
      %2056 = vmatprep.subr.mxu0 %v758
      %2057 = vmatpush1.msra.mxu0 %v757
      %2058 = vmatprep.subr.mxu0 %v742
      %2059 = vmatpush1.msra.mxu0 %v741
      %2060 = vmatprep.subr.mxu0 %v726
      %2061 = vmatpush1.msra.mxu0 %v725
      %2062 = vmatprep.subr.mxu0 %v710
      %2063 = vmatpush1.msra.mxu0 %v709
      %2064 = vmatprep.subr.mxu0 %v694
      %2065 = vmatpush1.msra.mxu0 %v693
      %2066 = vmatprep.subr.mxu0 %v1190
      %2067 = vmatpush2.msra.mxu0 %v1189
      %2068 = vmatprep.subr.mxu0 %v1174
      %2069 = vmatpush2.msra.mxu0 %v1173
      %2070 = vmatprep.subr.mxu0 %v1158
      %2071 = vmatpush2.msra.mxu0 %v1157
      %2072 = vmatprep.subr.mxu0 %v1142
      %2073 = vmatpush2.msra.mxu0 %v1141
      %2074 = vmatprep.subr.mxu0 %v1126
      %2075 = vmatpush2.msra.mxu0 %v1125
      %2076 = vmatprep.subr.mxu0 %v1110
      %2077 = vmatpush2.msra.mxu0 %v1109
      %2078 = vmatprep.subr.mxu0 %v1094
      %2079 = vmatpush2.msra.mxu0 %v1093
      %2080 = vmatprep.subr.mxu0 %v1078
      %2081 = vmatpush2.msra.mxu0 %v1077
      %2082 = vmatprep.subr.mxu0 %v1062
      %2083 = vmatpush2.msra.mxu0 %v1061
      %2084 = vmatprep.subr.mxu0 %v1046
      %2085 = vmatpush2.msra.mxu0 %v1045
      %2086 = vmatprep.subr.mxu0 %v1030
      %2087 = vmatpush2.msra.mxu0 %v1029
      %2088 = vmatprep.subr.mxu0 %v1014
      %2089 = vmatpush2.msra.mxu0 %v1013
      %2090 = vmatprep.subr.mxu0 %v998
      %2091 = vmatpush2.msra.mxu0 %v997
      %2092 = vmatprep.subr.mxu0 %v982
      %2093 = vmatpush2.msra.mxu0 %v981
      %2094 = vmatprep.subr.mxu0 %v966
      %2095 = vmatpush2.msra.mxu0 %v965
      %2096 = vmatprep.subr.mxu0 %v950
      %2097 = vmatpush2.msra.mxu0 %v949
      %2098 = vmatprep.mubr.f32.mxu0 %v672
      %2099 = vmatmul.mubr.f32.gmra.mxu0 %v671
      %v2100 = vpop.f32.mrf.mxu0
      %v2101 = vadd.f32 0.0, %v2100
      %v2102 = vpop.f32.mrf.mxu0
      %v2103 = vadd.f32 0.0, %v2102
      %2104 = vmatprep.mubr.f32.mxu0 %v676
      %2105 = vmatmul.mubr.f32.gmra.mxu0 %v675
      %v2106 = vpop.f32.mrf.mxu0
      %v2107 = vadd.f32 0.0, %v2106
      %v2108 = vpop.f32.mrf.mxu0
      %v2109 = vadd.f32 0.0, %v2108
      %2110 = vmatprep.mubr.f32.mxu0 %v680
      %2111 = vmatmul.mubr.f32.gmra.mxu0 %v679
      %v2112 = vpop.f32.mrf.mxu0
      %v2113 = vadd.f32 0.0, %v2112
      %v2114 = vpop.f32.mrf.mxu0
      %v2115 = vadd.f32 0.0, %v2114
      %2116 = vmatprep.mubr.f32.mxu0 %v684
      %2117 = vmatmul.mubr.f32.gmra.mxu0 %v683
      %v2118 = vpop.f32.mrf.mxu0
      %v2119 = vadd.f32 0.0, %v2118
      %v2120 = vpop.f32.mrf.mxu0
      %v2121 = vadd.f32 0.0, %v2120
      %2122 = vdwg.mxu0
      %2123 = vmatprep.subr.mxu0 %v1446
      %2124 = vmatpush1.msra.mxu0 %v1445
      %2125 = vmatprep.subr.mxu0 %v1430
      %2126 = vmatpush1.msra.mxu0 %v1429
      %2127 = vmatprep.subr.mxu0 %v1414
      %2128 = vmatpush1.msra.mxu0 %v1413
      %2129 = vmatprep.subr.mxu0 %v1398
      %2130 = vmatpush1.msra.mxu0 %v1397
      %2131 = vmatprep.subr.mxu0 %v1382
      %2132 = vmatpush1.msra.mxu0 %v1381
      %2133 = vmatprep.subr.mxu0 %v1366
      %2134 = vmatpush1.msra.mxu0 %v1365
      %2135 = vmatprep.subr.mxu0 %v1350
      %2136 = vmatpush1.msra.mxu0 %v1349
      %2137 = vmatprep.subr.mxu0 %v1334
      %2138 = vmatpush1.msra.mxu0 %v1333
      %2139 = vmatprep.subr.mxu0 %v1318
      %2140 = vmatpush1.msra.mxu0 %v1317
      %2141 = vmatprep.subr.mxu0 %v1302
      %2142 = vmatpush1.msra.mxu0 %v1301
      %2143 = vmatprep.subr.mxu0 %v1286
      %2144 = vmatpush1.msra.mxu0 %v1285
      %2145 = vmatprep.subr.mxu0 %v1270
      %2146 = vmatpush1.msra.mxu0 %v1269
      %2147 = vmatprep.subr.mxu0 %v1254
      %2148 = vmatpush1.msra.mxu0 %v1253
      %2149 = vmatprep.subr.mxu0 %v1238
      %2150 = vmatpush1.msra.mxu0 %v1237
      %2151 = vmatprep.subr.mxu0 %v1222
      %2152 = vmatpush1.msra.mxu0 %v1221
      %2153 = vmatprep.subr.mxu0 %v1206
      %2154 = vmatpush1.msra.mxu0 %v1205
      %2155 = vmatprep.subr.mxu0 0.0
      %2156 = vmatpush2.msra.mxu0 0.0
      %2157 = vmatprep.subr.mxu0 0.0
      %2158 = vmatpush2.msra.mxu0 0.0
      %2159 = vmatprep.subr.mxu0 0.0
      %2160 = vmatpush2.msra.mxu0 0.0
      %2161 = vmatprep.subr.mxu0 0.0
      %2162 = vmatpush2.msra.mxu0 0.0
      %2163 = vmatprep.subr.mxu0 0.0
      %2164 = vmatpush2.msra.mxu0 0.0
      %2165 = vmatprep.subr.mxu0 0.0
      %2166 = vmatpush2.msra.mxu0 0.0
      %2167 = vmatprep.subr.mxu0 0.0
      %2168 = vmatpush2.msra.mxu0 0.0
      %2169 = vmatprep.subr.mxu0 0.0
      %2170 = vmatpush2.msra.mxu0 0.0
      %2171 = vmatprep.subr.mxu0 0.0
      %2172 = vmatpush2.msra.mxu0 0.0
      %2173 = vmatprep.subr.mxu0 0.0
      %2174 = vmatpush2.msra.mxu0 0.0
      %2175 = vmatprep.subr.mxu0 0.0
      %2176 = vmatpush2.msra.mxu0 0.0
      %2177 = vmatprep.subr.mxu0 0.0
      %2178 = vmatpush2.msra.mxu0 0.0
      %2179 = vmatprep.subr.mxu0 0.0
      %2180 = vmatpush2.msra.mxu0 0.0
      %2181 = vmatprep.subr.mxu0 0.0
      %2182 = vmatpush2.msra.mxu0 0.0
      %2183 = vmatprep.subr.mxu0 %v1478
      %2184 = vmatpush2.msra.mxu0 %v1477
      %2185 = vmatprep.subr.mxu0 %v1462
      %2186 = vmatpush2.msra.mxu0 %v1461
      %2187 = vmatprep.mubr.f32.mxu0 %v1489
      %2188 = vmatmul.mubr.f32.gmra.mxu0 %v673
      %v2189 = vpop.f32.mrf.mxu0
      %v2190 = vadd.f32 %v2101, %v2189
      %v2191 = vpop.f32.mrf.mxu0
      %v2192 = vadd.f32 %v2103, %v2191
      %2193 = vmatprep.mubr.f32.mxu0 %v1492
      %2194 = vmatmul.mubr.f32.gmra.mxu0 %v677
      %v2195 = vpop.f32.mrf.mxu0
      %v2196 = vadd.f32 %v2107, %v2195
      %v2197 = vpop.f32.mrf.mxu0
      %v2198 = vadd.f32 %v2109, %v2197
      %2199 = vmatprep.mubr.f32.mxu0 %v1495
      %2200 = vmatmul.mubr.f32.gmra.mxu0 %v681
      %v2201 = vpop.f32.mrf.mxu0
      %v2202 = vadd.f32 %v2113, %v2201
      %v2203 = vpop.f32.mrf.mxu0
      %v2204 = vadd.f32 %v2115, %v2203
      %2205 = vmatprep.mubr.f32.mxu0 %v1498
      %2206 = vmatmul.mubr.f32.gmra.mxu0 %v685
      %v2207 = vpop.f32.mrf.mxu0
      %v2208 = vadd.f32 %v2119, %v2207
      %v2209 = vpop.f32.mrf.mxu0
      %v2210 = vadd.f32 %v2121, %v2209
      %2211 = vdwg.mxu0
      %2212 = vmatprep.subr.mxu0 %v936
      %2213 = vmatpush1.msra.mxu0 %v935
      %2214 = vmatprep.subr.mxu0 %v920
      %2215 = vmatpush1.msra.mxu0 %v919
      %2216 = vmatprep.subr.mxu0 %v904
      %2217 = vmatpush1.msra.mxu0 %v903
      %2218 = vmatprep.subr.mxu0 %v888
      %2219 = vmatpush1.msra.mxu0 %v887
      %2220 = vmatprep.subr.mxu0 %v872
      %2221 = vmatpush1.msra.mxu0 %v871
      %2222 = vmatprep.subr.mxu0 %v856
      %2223 = vmatpush1.msra.mxu0 %v855
      %2224 = vmatprep.subr.mxu0 %v840
      %2225 = vmatpush1.msra.mxu0 %v839
      %2226 = vmatprep.subr.mxu0 %v824
      %2227 = vmatpush1.msra.mxu0 %v823
      %2228 = vmatprep.subr.mxu0 %v808
      %2229 = vmatpush1.msra.mxu0 %v807
      %2230 = vmatprep.subr.mxu0 %v792
      %2231 = vmatpush1.msra.mxu0 %v791
      %2232 = vmatprep.subr.mxu0 %v776
      %2233 = vmatpush1.msra.mxu0 %v775
      %2234 = vmatprep.subr.mxu0 %v760
      %2235 = vmatpush1.msra.mxu0 %v759
      %2236 = vmatprep.subr.mxu0 %v744
      %2237 = vmatpush1.msra.mxu0 %v743
      %2238 = vmatprep.subr.mxu0 %v728
      %2239 = vmatpush1.msra.mxu0 %v727
      %2240 = vmatprep.subr.mxu0 %v712
      %2241 = vmatpush1.msra.mxu0 %v711
      %2242 = vmatprep.subr.mxu0 %v696
      %2243 = vmatpush1.msra.mxu0 %v695
      %2244 = vmatprep.subr.mxu0 %v1192
      %2245 = vmatpush2.msra.mxu0 %v1191
      %2246 = vmatprep.subr.mxu0 %v1176
      %2247 = vmatpush2.msra.mxu0 %v1175
      %2248 = vmatprep.subr.mxu0 %v1160
      %2249 = vmatpush2.msra.mxu0 %v1159
      %2250 = vmatprep.subr.mxu0 %v1144
      %2251 = vmatpush2.msra.mxu0 %v1143
      %2252 = vmatprep.subr.mxu0 %v1128
      %2253 = vmatpush2.msra.mxu0 %v1127
      %2254 = vmatprep.subr.mxu0 %v1112
      %2255 = vmatpush2.msra.mxu0 %v1111
      %2256 = vmatprep.subr.mxu0 %v1096
      %2257 = vmatpush2.msra.mxu0 %v1095
      %2258 = vmatprep.subr.mxu0 %v1080
      %2259 = vmatpush2.msra.mxu0 %v1079
      %2260 = vmatprep.subr.mxu0 %v1064
      %2261 = vmatpush2.msra.mxu0 %v1063
      %2262 = vmatprep.subr.mxu0 %v1048
      %2263 = vmatpush2.msra.mxu0 %v1047
      %2264 = vmatprep.subr.mxu0 %v1032
      %2265 = vmatpush2.msra.mxu0 %v1031
      %2266 = vmatprep.subr.mxu0 %v1016
      %2267 = vmatpush2.msra.mxu0 %v1015
      %2268 = vmatprep.subr.mxu0 %v1000
      %2269 = vmatpush2.msra.mxu0 %v999
      %2270 = vmatprep.subr.mxu0 %v984
      %2271 = vmatpush2.msra.mxu0 %v983
      %2272 = vmatprep.subr.mxu0 %v968
      %2273 = vmatpush2.msra.mxu0 %v967
      %2274 = vmatprep.subr.mxu0 %v952
      %2275 = vmatpush2.msra.mxu0 %v951
      %2276 = vmatprep.mubr.f32.mxu0 %v672
      %2277 = vmatmul.mubr.f32.gmra.mxu0 %v671
      %v2278 = vpop.f32.mrf.mxu0
      %v2279 = vadd.f32 0.0, %v2278
      %v2280 = vpop.f32.mrf.mxu0
      %v2281 = vadd.f32 0.0, %v2280
      %2282 = vmatprep.mubr.f32.mxu0 %v676
      %2283 = vmatmul.mubr.f32.gmra.mxu0 %v675
      %v2284 = vpop.f32.mrf.mxu0
      %v2285 = vadd.f32 0.0, %v2284
      %v2286 = vpop.f32.mrf.mxu0
      %v2287 = vadd.f32 0.0, %v2286
      %2288 = vmatprep.mubr.f32.mxu0 %v680
      %2289 = vmatmul.mubr.f32.gmra.mxu0 %v679
      %v2290 = vpop.f32.mrf.mxu0
      %v2291 = vadd.f32 0.0, %v2290
      %v2292 = vpop.f32.mrf.mxu0
      %v2293 = vadd.f32 0.0, %v2292
      %2294 = vmatprep.mubr.f32.mxu0 %v684
      %2295 = vmatmul.mubr.f32.gmra.mxu0 %v683
      %v2296 = vpop.f32.mrf.mxu0
      %v2297 = vadd.f32 0.0, %v2296
      %v2298 = vpop.f32.mrf.mxu0
      %v2299 = vadd.f32 0.0, %v2298
      %2300 = vdwg.mxu0
      %2301 = vmatprep.subr.mxu0 %v1448
      %2302 = vmatpush1.msra.mxu0 %v1447
      %2303 = vmatprep.subr.mxu0 %v1432
      %2304 = vmatpush1.msra.mxu0 %v1431
      %2305 = vmatprep.subr.mxu0 %v1416
      %2306 = vmatpush1.msra.mxu0 %v1415
      %2307 = vmatprep.subr.mxu0 %v1400
      %2308 = vmatpush1.msra.mxu0 %v1399
      %2309 = vmatprep.subr.mxu0 %v1384
      %2310 = vmatpush1.msra.mxu0 %v1383
      %2311 = vmatprep.subr.mxu0 %v1368
      %2312 = vmatpush1.msra.mxu0 %v1367
      %2313 = vmatprep.subr.mxu0 %v1352
      %2314 = vmatpush1.msra.mxu0 %v1351
      %2315 = vmatprep.subr.mxu0 %v1336
      %2316 = vmatpush1.msra.mxu0 %v1335
      %2317 = vmatprep.subr.mxu0 %v1320
      %2318 = vmatpush1.msra.mxu0 %v1319
      %2319 = vmatprep.subr.mxu0 %v1304
      %2320 = vmatpush1.msra.mxu0 %v1303
      %2321 = vmatprep.subr.mxu0 %v1288
      %2322 = vmatpush1.msra.mxu0 %v1287
      %2323 = vmatprep.subr.mxu0 %v1272
      %2324 = vmatpush1.msra.mxu0 %v1271
      %2325 = vmatprep.subr.mxu0 %v1256
      %2326 = vmatpush1.msra.mxu0 %v1255
      %2327 = vmatprep.subr.mxu0 %v1240
      %2328 = vmatpush1.msra.mxu0 %v1239
      %2329 = vmatprep.subr.mxu0 %v1224
      %2330 = vmatpush1.msra.mxu0 %v1223
      %2331 = vmatprep.subr.mxu0 %v1208
      %2332 = vmatpush1.msra.mxu0 %v1207
      %2333 = vmatprep.subr.mxu0 0.0
      %2334 = vmatpush2.msra.mxu0 0.0
      %2335 = vmatprep.subr.mxu0 0.0
      %2336 = vmatpush2.msra.mxu0 0.0
      %2337 = vmatprep.subr.mxu0 0.0
      %2338 = vmatpush2.msra.mxu0 0.0
      %2339 = vmatprep.subr.mxu0 0.0
      %2340 = vmatpush2.msra.mxu0 0.0
      %2341 = vmatprep.subr.mxu0 0.0
      %2342 = vmatpush2.msra.mxu0 0.0
      %2343 = vmatprep.subr.mxu0 0.0
      %2344 = vmatpush2.msra.mxu0 0.0
      %2345 = vmatprep.subr.mxu0 0.0
      %2346 = vmatpush2.msra.mxu0 0.0
      %2347 = vmatprep.subr.mxu0 0.0
      %2348 = vmatpush2.msra.mxu0 0.0
      %2349 = vmatprep.subr.mxu0 0.0
      %2350 = vmatpush2.msra.mxu0 0.0
      %2351 = vmatprep.subr.mxu0 0.0
      %2352 = vmatpush2.msra.mxu0 0.0
      %2353 = vmatprep.subr.mxu0 0.0
      %2354 = vmatpush2.msra.mxu0 0.0
      %2355 = vmatprep.subr.mxu0 0.0
      %2356 = vmatpush2.msra.mxu0 0.0
      %2357 = vmatprep.subr.mxu0 0.0
      %2358 = vmatpush2.msra.mxu0 0.0
      %2359 = vmatprep.subr.mxu0 0.0
      %2360 = vmatpush2.msra.mxu0 0.0
      %2361 = vmatprep.subr.mxu0 %v1480
      %2362 = vmatpush2.msra.mxu0 %v1479
      %2363 = vmatprep.subr.mxu0 %v1464
      %2364 = vmatpush2.msra.mxu0 %v1463
      %2365 = vmatprep.mubr.f32.mxu0 %v1489
      %2366 = vmatmul.mubr.f32.gmra.mxu0 %v673
      %v2367 = vpop.f32.mrf.mxu0
      %v2368 = vadd.f32 %v2279, %v2367
      %v2369 = vpop.f32.mrf.mxu0
      %v2370 = vadd.f32 %v2281, %v2369
      %2371 = vmatprep.mubr.f32.mxu0 %v1492
      %2372 = vmatmul.mubr.f32.gmra.mxu0 %v677
      %v2373 = vpop.f32.mrf.mxu0
      %v2374 = vadd.f32 %v2285, %v2373
      %v2375 = vpop.f32.mrf.mxu0
      %v2376 = vadd.f32 %v2287, %v2375
      %2377 = vmatprep.mubr.f32.mxu0 %v1495
      %2378 = vmatmul.mubr.f32.gmra.mxu0 %v681
      %v2379 = vpop.f32.mrf.mxu0
      %v2380 = vadd.f32 %v2291, %v2379
      %v2381 = vpop.f32.mrf.mxu0
      %v2382 = vadd.f32 %v2293, %v2381
      %2383 = vmatprep.mubr.f32.mxu0 %v1498
      %2384 = vmatmul.mubr.f32.gmra.mxu0 %v685
      %v2385 = vpop.f32.mrf.mxu0
      %v2386 = vadd.f32 %v2297, %v2385
      %v2387 = vpop.f32.mrf.mxu0
      %v2388 = vadd.f32 %v2299, %v2387
      %2389 = vdwg.mxu0
      %2390 = vmatprep.subr.mxu0 %v938
      %2391 = vmatpush1.msra.mxu0 %v937
      %2392 = vmatprep.subr.mxu0 %v922
      %2393 = vmatpush1.msra.mxu0 %v921
      %2394 = vmatprep.subr.mxu0 %v906
      %2395 = vmatpush1.msra.mxu0 %v905
      %2396 = vmatprep.subr.mxu0 %v890
      %2397 = vmatpush1.msra.mxu0 %v889
      %2398 = vmatprep.subr.mxu0 %v874
      %2399 = vmatpush1.msra.mxu0 %v873
      %2400 = vmatprep.subr.mxu0 %v858
      %2401 = vmatpush1.msra.mxu0 %v857
      %2402 = vmatprep.subr.mxu0 %v842
      %2403 = vmatpush1.msra.mxu0 %v841
      %2404 = vmatprep.subr.mxu0 %v826
      %2405 = vmatpush1.msra.mxu0 %v825
      %2406 = vmatprep.subr.mxu0 %v810
      %2407 = vmatpush1.msra.mxu0 %v809
      %2408 = vmatprep.subr.mxu0 %v794
      %2409 = vmatpush1.msra.mxu0 %v793
      %2410 = vmatprep.subr.mxu0 %v778
      %2411 = vmatpush1.msra.mxu0 %v777
      %2412 = vmatprep.subr.mxu0 %v762
      %2413 = vmatpush1.msra.mxu0 %v761
      %2414 = vmatprep.subr.mxu0 %v746
      %2415 = vmatpush1.msra.mxu0 %v745
      %2416 = vmatprep.subr.mxu0 %v730
      %2417 = vmatpush1.msra.mxu0 %v729
      %2418 = vmatprep.subr.mxu0 %v714
      %2419 = vmatpush1.msra.mxu0 %v713
      %2420 = vmatprep.subr.mxu0 %v698
      %2421 = vmatpush1.msra.mxu0 %v697
      %2422 = vmatprep.subr.mxu0 %v1194
      %2423 = vmatpush2.msra.mxu0 %v1193
      %2424 = vmatprep.subr.mxu0 %v1178
      %2425 = vmatpush2.msra.mxu0 %v1177
      %2426 = vmatprep.subr.mxu0 %v1162
      %2427 = vmatpush2.msra.mxu0 %v1161
      %2428 = vmatprep.subr.mxu0 %v1146
      %2429 = vmatpush2.msra.mxu0 %v1145
      %2430 = vmatprep.subr.mxu0 %v1130
      %2431 = vmatpush2.msra.mxu0 %v1129
      %2432 = vmatprep.subr.mxu0 %v1114
      %2433 = vmatpush2.msra.mxu0 %v1113
      %2434 = vmatprep.subr.mxu0 %v1098
      %2435 = vmatpush2.msra.mxu0 %v1097
      %2436 = vmatprep.subr.mxu0 %v1082
      %2437 = vmatpush2.msra.mxu0 %v1081
      %2438 = vmatprep.subr.mxu0 %v1066
      %2439 = vmatpush2.msra.mxu0 %v1065
      %2440 = vmatprep.subr.mxu0 %v1050
      %2441 = vmatpush2.msra.mxu0 %v1049
      %2442 = vmatprep.subr.mxu0 %v1034
      %2443 = vmatpush2.msra.mxu0 %v1033
      %2444 = vmatprep.subr.mxu0 %v1018
      %2445 = vmatpush2.msra.mxu0 %v1017
      %2446 = vmatprep.subr.mxu0 %v1002
      %2447 = vmatpush2.msra.mxu0 %v1001
      %2448 = vmatprep.subr.mxu0 %v986
      %2449 = vmatpush2.msra.mxu0 %v985
      %2450 = vmatprep.subr.mxu0 %v970
      %2451 = vmatpush2.msra.mxu0 %v969
      %2452 = vmatprep.subr.mxu0 %v954
      %2453 = vmatpush2.msra.mxu0 %v953
      %2454 = vmatprep.mubr.f32.mxu0 %v672
      %2455 = vmatmul.mubr.f32.gmra.mxu0 %v671
      %v2456 = vpop.f32.mrf.mxu0
      %v2457 = vadd.f32 0.0, %v2456
      %v2458 = vpop.f32.mrf.mxu0
      %v2459 = vadd.f32 0.0, %v2458
      %2460 = vmatprep.mubr.f32.mxu0 %v676
      %2461 = vmatmul.mubr.f32.gmra.mxu0 %v675
      %v2462 = vpop.f32.mrf.mxu0
      %v2463 = vadd.f32 0.0, %v2462
      %v2464 = vpop.f32.mrf.mxu0
      %v2465 = vadd.f32 0.0, %v2464
      %2466 = vmatprep.mubr.f32.mxu0 %v680
      %2467 = vmatmul.mubr.f32.gmra.mxu0 %v679
      %v2468 = vpop.f32.mrf.mxu0
      %v2469 = vadd.f32 0.0, %v2468
      %v2470 = vpop.f32.mrf.mxu0
      %v2471 = vadd.f32 0.0, %v2470
      %2472 = vmatprep.mubr.f32.mxu0 %v684
      %2473 = vmatmul.mubr.f32.gmra.mxu0 %v683
      %v2474 = vpop.f32.mrf.mxu0
      %v2475 = vadd.f32 0.0, %v2474
      %v2476 = vpop.f32.mrf.mxu0
      %v2477 = vadd.f32 0.0, %v2476
      %2478 = vdwg.mxu0
      %2479 = vmatprep.subr.mxu0 %v1450
      %2480 = vmatpush1.msra.mxu0 %v1449
      %2481 = vmatprep.subr.mxu0 %v1434
      %2482 = vmatpush1.msra.mxu0 %v1433
      %2483 = vmatprep.subr.mxu0 %v1418
      %2484 = vmatpush1.msra.mxu0 %v1417
      %2485 = vmatprep.subr.mxu0 %v1402
      %2486 = vmatpush1.msra.mxu0 %v1401
      %2487 = vmatprep.subr.mxu0 %v1386
      %2488 = vmatpush1.msra.mxu0 %v1385
      %2489 = vmatprep.subr.mxu0 %v1370
      %2490 = vmatpush1.msra.mxu0 %v1369
      %2491 = vmatprep.subr.mxu0 %v1354
      %2492 = vmatpush1.msra.mxu0 %v1353
      %2493 = vmatprep.subr.mxu0 %v1338
      %2494 = vmatpush1.msra.mxu0 %v1337
      %2495 = vmatprep.subr.mxu0 %v1322
      %2496 = vmatpush1.msra.mxu0 %v1321
      %2497 = vmatprep.subr.mxu0 %v1306
      %2498 = vmatpush1.msra.mxu0 %v1305
      %2499 = vmatprep.subr.mxu0 %v1290
      %2500 = vmatpush1.msra.mxu0 %v1289
      %2501 = vmatprep.subr.mxu0 %v1274
      %2502 = vmatpush1.msra.mxu0 %v1273
      %2503 = vmatprep.subr.mxu0 %v1258
      %2504 = vmatpush1.msra.mxu0 %v1257
      %2505 = vmatprep.subr.mxu0 %v1242
      %2506 = vmatpush1.msra.mxu0 %v1241
      %2507 = vmatprep.subr.mxu0 %v1226
      %2508 = vmatpush1.msra.mxu0 %v1225
      %2509 = vmatprep.subr.mxu0 %v1210
      %2510 = vmatpush1.msra.mxu0 %v1209
      %2511 = vmatprep.subr.mxu0 0.0
      %2512 = vmatpush2.msra.mxu0 0.0
      %2513 = vmatprep.subr.mxu0 0.0
      %2514 = vmatpush2.msra.mxu0 0.0
      %2515 = vmatprep.subr.mxu0 0.0
      %2516 = vmatpush2.msra.mxu0 0.0
      %2517 = vmatprep.subr.mxu0 0.0
      %2518 = vmatpush2.msra.mxu0 0.0
      %2519 = vmatprep.subr.mxu0 0.0
      %2520 = vmatpush2.msra.mxu0 0.0
      %2521 = vmatprep.subr.mxu0 0.0
      %2522 = vmatpush2.msra.mxu0 0.0
      %2523 = vmatprep.subr.mxu0 0.0
      %2524 = vmatpush2.msra.mxu0 0.0
      %2525 = vmatprep.subr.mxu0 0.0
      %2526 = vmatpush2.msra.mxu0 0.0
      %2527 = vmatprep.subr.mxu0 0.0
      %2528 = vmatpush2.msra.mxu0 0.0
      %2529 = vmatprep.subr.mxu0 0.0
      %2530 = vmatpush2.msra.mxu0 0.0
      %2531 = vmatprep.subr.mxu0 0.0
      %2532 = vmatpush2.msra.mxu0 0.0
      %2533 = vmatprep.subr.mxu0 0.0
      %2534 = vmatpush2.msra.mxu0 0.0
      %2535 = vmatprep.subr.mxu0 0.0
      %2536 = vmatpush2.msra.mxu0 0.0
      %2537 = vmatprep.subr.mxu0 0.0
      %2538 = vmatpush2.msra.mxu0 0.0
      %2539 = vmatprep.subr.mxu0 %v1482
      %2540 = vmatpush2.msra.mxu0 %v1481
      %2541 = vmatprep.subr.mxu0 %v1466
      %2542 = vmatpush2.msra.mxu0 %v1465
      %2543 = vmatprep.mubr.f32.mxu0 %v1489
      %2544 = vmatmul.mubr.f32.gmra.mxu0 %v673
      %v2545 = vpop.f32.mrf.mxu0
      %v2546 = vadd.f32 %v2457, %v2545
      %v2547 = vpop.f32.mrf.mxu0
      %v2548 = vadd.f32 %v2459, %v2547
      %2549 = vmatprep.mubr.f32.mxu0 %v1492
      %2550 = vmatmul.mubr.f32.gmra.mxu0 %v677
      %v2551 = vpop.f32.mrf.mxu0
      %v2552 = vadd.f32 %v2463, %v2551
      %v2553 = vpop.f32.mrf.mxu0
      %v2554 = vadd.f32 %v2465, %v2553
      %2555 = vmatprep.mubr.f32.mxu0 %v1495
      %2556 = vmatmul.mubr.f32.gmra.mxu0 %v681
      %v2557 = vpop.f32.mrf.mxu0
      %v2558 = vadd.f32 %v2469, %v2557
      %v2559 = vpop.f32.mrf.mxu0
      %v2560 = vadd.f32 %v2471, %v2559
      %2561 = vmatprep.mubr.f32.mxu0 %v1498
      %2562 = vmatmul.mubr.f32.gmra.mxu0 %v685
      %v2563 = vpop.f32.mrf.mxu0
      %v2564 = vadd.f32 %v2475, %v2563
      %v2565 = vpop.f32.mrf.mxu0
      %v2566 = vadd.f32 %v2477, %v2565
      %2567 = vdwg.mxu0
      %2568 = vmatprep.subr.mxu0 %v940
      %2569 = vmatpush1.msra.mxu0 %v939
      %2570 = vmatprep.subr.mxu0 %v924
      %2571 = vmatpush1.msra.mxu0 %v923
      %2572 = vmatprep.subr.mxu0 %v908
      %2573 = vmatpush1.msra.mxu0 %v907
      %2574 = vmatprep.subr.mxu0 %v892
      %2575 = vmatpush1.msra.mxu0 %v891
      %2576 = vmatprep.subr.mxu0 %v876
      %2577 = vmatpush1.msra.mxu0 %v875
      %2578 = vmatprep.subr.mxu0 %v860
      %2579 = vmatpush1.msra.mxu0 %v859
      %2580 = vmatprep.subr.mxu0 %v844
      %2581 = vmatpush1.msra.mxu0 %v843
      %2582 = vmatprep.subr.mxu0 %v828
      %2583 = vmatpush1.msra.mxu0 %v827
      %2584 = vmatprep.subr.mxu0 %v812
      %2585 = vmatpush1.msra.mxu0 %v811
      %2586 = vmatprep.subr.mxu0 %v796
      %2587 = vmatpush1.msra.mxu0 %v795
      %2588 = vmatprep.subr.mxu0 %v780
      %2589 = vmatpush1.msra.mxu0 %v779
      %2590 = vmatprep.subr.mxu0 %v764
      %2591 = vmatpush1.msra.mxu0 %v763
      %2592 = vmatprep.subr.mxu0 %v748
      %2593 = vmatpush1.msra.mxu0 %v747
      %2594 = vmatprep.subr.mxu0 %v732
      %2595 = vmatpush1.msra.mxu0 %v731
      %2596 = vmatprep.subr.mxu0 %v716
      %2597 = vmatpush1.msra.mxu0 %v715
      %2598 = vmatprep.subr.mxu0 %v700
      %2599 = vmatpush1.msra.mxu0 %v699
      %2600 = vmatprep.subr.mxu0 %v1196
      %2601 = vmatpush2.msra.mxu0 %v1195
      %2602 = vmatprep.subr.mxu0 %v1180
      %2603 = vmatpush2.msra.mxu0 %v1179
      %2604 = vmatprep.subr.mxu0 %v1164
      %2605 = vmatpush2.msra.mxu0 %v1163
      %2606 = vmatprep.subr.mxu0 %v1148
      %2607 = vmatpush2.msra.mxu0 %v1147
      %2608 = vmatprep.subr.mxu0 %v1132
      %2609 = vmatpush2.msra.mxu0 %v1131
      %2610 = vmatprep.subr.mxu0 %v1116
      %2611 = vmatpush2.msra.mxu0 %v1115
      %2612 = vmatprep.subr.mxu0 %v1100
      %2613 = vmatpush2.msra.mxu0 %v1099
      %2614 = vmatprep.subr.mxu0 %v1084
      %2615 = vmatpush2.msra.mxu0 %v1083
      %2616 = vmatprep.subr.mxu0 %v1068
      %2617 = vmatpush2.msra.mxu0 %v1067
      %2618 = vmatprep.subr.mxu0 %v1052
      %2619 = vmatpush2.msra.mxu0 %v1051
      %2620 = vmatprep.subr.mxu0 %v1036
      %2621 = vmatpush2.msra.mxu0 %v1035
      %2622 = vmatprep.subr.mxu0 %v1020
      %2623 = vmatpush2.msra.mxu0 %v1019
      %2624 = vmatprep.subr.mxu0 %v1004
      %2625 = vmatpush2.msra.mxu0 %v1003
      %2626 = vmatprep.subr.mxu0 %v988
      %2627 = vmatpush2.msra.mxu0 %v987
      %2628 = vmatprep.subr.mxu0 %v972
      %2629 = vmatpush2.msra.mxu0 %v971
      %2630 = vmatprep.subr.mxu0 %v956
      %2631 = vmatpush2.msra.mxu0 %v955
      %2632 = vmatprep.mubr.f32.mxu0 %v672
      %2633 = vmatmul.mubr.f32.gmra.mxu0 %v671
      %v2634 = vpop.f32.mrf.mxu0
      %v2635 = vadd.f32 0.0, %v2634
      %v2636 = vpop.f32.mrf.mxu0
      %v2637 = vadd.f32 0.0, %v2636
      %2638 = vmatprep.mubr.f32.mxu0 %v676
      %2639 = vmatmul.mubr.f32.gmra.mxu0 %v675
      %v2640 = vpop.f32.mrf.mxu0
      %v2641 = vadd.f32 0.0, %v2640
      %v2642 = vpop.f32.mrf.mxu0
      %v2643 = vadd.f32 0.0, %v2642
      %2644 = vmatprep.mubr.f32.mxu0 %v680
      %2645 = vmatmul.mubr.f32.gmra.mxu0 %v679
      %v2646 = vpop.f32.mrf.mxu0
      %v2647 = vadd.f32 0.0, %v2646
      %v2648 = vpop.f32.mrf.mxu0
      %v2649 = vadd.f32 0.0, %v2648
      %2650 = vmatprep.mubr.f32.mxu0 %v684
      %2651 = vmatmul.mubr.f32.gmra.mxu0 %v683
      %v2652 = vpop.f32.mrf.mxu0
      %v2653 = vadd.f32 0.0, %v2652
      %v2654 = vpop.f32.mrf.mxu0
      %v2655 = vadd.f32 0.0, %v2654
      %2656 = vdwg.mxu0
      %2657 = vmatprep.subr.mxu0 %v1452
      %2658 = vmatpush1.msra.mxu0 %v1451
      %2659 = vmatprep.subr.mxu0 %v1436
      %2660 = vmatpush1.msra.mxu0 %v1435
      %2661 = vmatprep.subr.mxu0 %v1420
      %2662 = vmatpush1.msra.mxu0 %v1419
      %2663 = vmatprep.subr.mxu0 %v1404
      %2664 = vmatpush1.msra.mxu0 %v1403
      %2665 = vmatprep.subr.mxu0 %v1388
      %2666 = vmatpush1.msra.mxu0 %v1387
      %2667 = vmatprep.subr.mxu0 %v1372
      %2668 = vmatpush1.msra.mxu0 %v1371
      %2669 = vmatprep.subr.mxu0 %v1356
      %2670 = vmatpush1.msra.mxu0 %v1355
      %2671 = vmatprep.subr.mxu0 %v1340
      %2672 = vmatpush1.msra.mxu0 %v1339
      %2673 = vmatprep.subr.mxu0 %v1324
      %2674 = vmatpush1.msra.mxu0 %v1323
      %2675 = vmatprep.subr.mxu0 %v1308
      %2676 = vmatpush1.msra.mxu0 %v1307
      %2677 = vmatprep.subr.mxu0 %v1292
      %2678 = vmatpush1.msra.mxu0 %v1291
      %2679 = vmatprep.subr.mxu0 %v1276
      %2680 = vmatpush1.msra.mxu0 %v1275
      %2681 = vmatprep.subr.mxu0 %v1260
      %2682 = vmatpush1.msra.mxu0 %v1259
      %2683 = vmatprep.subr.mxu0 %v1244
      %2684 = vmatpush1.msra.mxu0 %v1243
      %2685 = vmatprep.subr.mxu0 %v1228
      %2686 = vmatpush1.msra.mxu0 %v1227
      %2687 = vmatprep.subr.mxu0 %v1212
      %2688 = vmatpush1.msra.mxu0 %v1211
      %2689 = vmatprep.subr.mxu0 0.0
      %2690 = vmatpush2.msra.mxu0 0.0
      %2691 = vmatprep.subr.mxu0 0.0
      %2692 = vmatpush2.msra.mxu0 0.0
      %2693 = vmatprep.subr.mxu0 0.0
      %2694 = vmatpush2.msra.mxu0 0.0
      %2695 = vmatprep.subr.mxu0 0.0
      %2696 = vmatpush2.msra.mxu0 0.0
      %2697 = vmatprep.subr.mxu0 0.0
      %2698 = vmatpush2.msra.mxu0 0.0
      %2699 = vmatprep.subr.mxu0 0.0
      %2700 = vmatpush2.msra.mxu0 0.0
      %2701 = vmatprep.subr.mxu0 0.0
      %2702 = vmatpush2.msra.mxu0 0.0
      %2703 = vmatprep.subr.mxu0 0.0
      %2704 = vmatpush2.msra.mxu0 0.0
      %2705 = vmatprep.subr.mxu0 0.0
      %2706 = vmatpush2.msra.mxu0 0.0
      %2707 = vmatprep.subr.mxu0 0.0
      %2708 = vmatpush2.msra.mxu0 0.0
      %2709 = vmatprep.subr.mxu0 0.0
      %2710 = vmatpush2.msra.mxu0 0.0
      %2711 = vmatprep.subr.mxu0 0.0
      %2712 = vmatpush2.msra.mxu0 0.0
      %2713 = vmatprep.subr.mxu0 0.0
      %2714 = vmatpush2.msra.mxu0 0.0
      %2715 = vmatprep.subr.mxu0 0.0
      %2716 = vmatpush2.msra.mxu0 0.0
      %2717 = vmatprep.subr.mxu0 %v1484
      %2718 = vmatpush2.msra.mxu0 %v1483
      %2719 = vmatprep.subr.mxu0 %v1468
      %2720 = vmatpush2.msra.mxu0 %v1467
      %2721 = vmatprep.mubr.f32.mxu0 %v1489
      %2722 = vmatmul.mubr.f32.gmra.mxu0 %v673
      %v2723 = vpop.f32.mrf.mxu0
      %v2724 = vadd.f32 %v2635, %v2723
      %v2725 = vpop.f32.mrf.mxu0
      %v2726 = vadd.f32 %v2637, %v2725
      %2727 = vmatprep.mubr.f32.mxu0 %v1492
      %2728 = vmatmul.mubr.f32.gmra.mxu0 %v677
      %v2729 = vpop.f32.mrf.mxu0
      %v2730 = vadd.f32 %v2641, %v2729
      %v2731 = vpop.f32.mrf.mxu0
      %v2732 = vadd.f32 %v2643, %v2731
      %2733 = vmatprep.mubr.f32.mxu0 %v1495
      %2734 = vmatmul.mubr.f32.gmra.mxu0 %v681
      %v2735 = vpop.f32.mrf.mxu0
      %v2736 = vadd.f32 %v2647, %v2735
      %v2737 = vpop.f32.mrf.mxu0
      %v2738 = vadd.f32 %v2649, %v2737
      %2739 = vmatprep.mubr.f32.mxu0 %v1498
      %2740 = vmatmul.mubr.f32.gmra.mxu0 %v685
      %v2741 = vpop.f32.mrf.mxu0
      %v2742 = vadd.f32 %v2653, %v2741
      %v2743 = vpop.f32.mrf.mxu0
      %v2744 = vadd.f32 %v2655, %v2743
      %2745 = vdwg.mxu0
      %2746 = vmatprep.subr.mxu0 %v942
      %2747 = vmatpush1.msra.mxu0 %v941
      %2748 = vmatprep.subr.mxu0 %v926
      %2749 = vmatpush1.msra.mxu0 %v925
      %2750 = vmatprep.subr.mxu0 %v910
      %2751 = vmatpush1.msra.mxu0 %v909
      %2752 = vmatprep.subr.mxu0 %v894
      %2753 = vmatpush1.msra.mxu0 %v893
      %2754 = vmatprep.subr.mxu0 %v878
      %2755 = vmatpush1.msra.mxu0 %v877
      %2756 = vmatprep.subr.mxu0 %v862
      %2757 = vmatpush1.msra.mxu0 %v861
      %2758 = vmatprep.subr.mxu0 %v846
      %2759 = vmatpush1.msra.mxu0 %v845
      %2760 = vmatprep.subr.mxu0 %v830
      %2761 = vmatpush1.msra.mxu0 %v829
      %2762 = vmatprep.subr.mxu0 %v814
      %2763 = vmatpush1.msra.mxu0 %v813
      %2764 = vmatprep.subr.mxu0 %v798
      %2765 = vmatpush1.msra.mxu0 %v797
      %2766 = vmatprep.subr.mxu0 %v782
      %2767 = vmatpush1.msra.mxu0 %v781
      %2768 = vmatprep.subr.mxu0 %v766
      %2769 = vmatpush1.msra.mxu0 %v765
      %2770 = vmatprep.subr.mxu0 %v750
      %2771 = vmatpush1.msra.mxu0 %v749
      %2772 = vmatprep.subr.mxu0 %v734
      %2773 = vmatpush1.msra.mxu0 %v733
      %2774 = vmatprep.subr.mxu0 %v718
      %2775 = vmatpush1.msra.mxu0 %v717
      %2776 = vmatprep.subr.mxu0 %v702
      %2777 = vmatpush1.msra.mxu0 %v701
      %2778 = vmatprep.subr.mxu0 %v1198
      %2779 = vmatpush2.msra.mxu0 %v1197
      %2780 = vmatprep.subr.mxu0 %v1182
      %2781 = vmatpush2.msra.mxu0 %v1181
      %2782 = vmatprep.subr.mxu0 %v1166
      %2783 = vmatpush2.msra.mxu0 %v1165
      %2784 = vmatprep.subr.mxu0 %v1150
      %2785 = vmatpush2.msra.mxu0 %v1149
      %2786 = vmatprep.subr.mxu0 %v1134
      %2787 = vmatpush2.msra.mxu0 %v1133
      %2788 = vmatprep.subr.mxu0 %v1118
      %2789 = vmatpush2.msra.mxu0 %v1117
      %2790 = vmatprep.subr.mxu0 %v1102
      %2791 = vmatpush2.msra.mxu0 %v1101
      %2792 = vmatprep.subr.mxu0 %v1086
      %2793 = vmatpush2.msra.mxu0 %v1085
      %2794 = vmatprep.subr.mxu0 %v1070
      %2795 = vmatpush2.msra.mxu0 %v1069
      %2796 = vmatprep.subr.mxu0 %v1054
      %2797 = vmatpush2.msra.mxu0 %v1053
      %2798 = vmatprep.subr.mxu0 %v1038
      %2799 = vmatpush2.msra.mxu0 %v1037
      %2800 = vmatprep.subr.mxu0 %v1022
      %2801 = vmatpush2.msra.mxu0 %v1021
      %2802 = vmatprep.subr.mxu0 %v1006
      %2803 = vmatpush2.msra.mxu0 %v1005
      %2804 = vmatprep.subr.mxu0 %v990
      %2805 = vmatpush2.msra.mxu0 %v989
      %2806 = vmatprep.subr.mxu0 %v974
      %2807 = vmatpush2.msra.mxu0 %v973
      %2808 = vmatprep.subr.mxu0 %v958
      %2809 = vmatpush2.msra.mxu0 %v957
      %2810 = vmatprep.mubr.f32.mxu0 %v672
      %2811 = vmatmul.mubr.f32.gmra.mxu0 %v671
      %v2812 = vpop.f32.mrf.mxu0
      %v2813 = vadd.f32 0.0, %v2812
      %v2814 = vpop.f32.mrf.mxu0
      %v2815 = vadd.f32 0.0, %v2814
      %2816 = vmatprep.mubr.f32.mxu0 %v676
      %2817 = vmatmul.mubr.f32.gmra.mxu0 %v675
      %v2818 = vpop.f32.mrf.mxu0
      %v2819 = vadd.f32 0.0, %v2818
      %v2820 = vpop.f32.mrf.mxu0
      %v2821 = vadd.f32 0.0, %v2820
      %2822 = vmatprep.mubr.f32.mxu0 %v680
      %2823 = vmatmul.mubr.f32.gmra.mxu0 %v679
      %v2824 = vpop.f32.mrf.mxu0
      %v2825 = vadd.f32 0.0, %v2824
      %v2826 = vpop.f32.mrf.mxu0
      %v2827 = vadd.f32 0.0, %v2826
      %2828 = vmatprep.mubr.f32.mxu0 %v684
      %2829 = vmatmul.mubr.f32.gmra.mxu0 %v683
      %v2830 = vpop.f32.mrf.mxu0
      %v2831 = vadd.f32 0.0, %v2830
      %v2832 = vpop.f32.mrf.mxu0
      %v2833 = vadd.f32 0.0, %v2832
      %2834 = vdwg.mxu0
      %2835 = vmatprep.subr.mxu0 %v1454
      %2836 = vmatpush1.msra.mxu0 %v1453
      %2837 = vmatprep.subr.mxu0 %v1438
      %2838 = vmatpush1.msra.mxu0 %v1437
      %2839 = vmatprep.subr.mxu0 %v1422
      %2840 = vmatpush1.msra.mxu0 %v1421
      %2841 = vmatprep.subr.mxu0 %v1406
      %2842 = vmatpush1.msra.mxu0 %v1405
      %2843 = vmatprep.subr.mxu0 %v1390
      %2844 = vmatpush1.msra.mxu0 %v1389
      %2845 = vmatprep.subr.mxu0 %v1374
      %2846 = vmatpush1.msra.mxu0 %v1373
      %2847 = vmatprep.subr.mxu0 %v1358
      %2848 = vmatpush1.msra.mxu0 %v1357
      %2849 = vmatprep.subr.mxu0 %v1342
      %2850 = vmatpush1.msra.mxu0 %v1341
      %2851 = vmatprep.subr.mxu0 %v1326
      %2852 = vmatpush1.msra.mxu0 %v1325
      %2853 = vmatprep.subr.mxu0 %v1310
      %2854 = vmatpush1.msra.mxu0 %v1309
      %2855 = vmatprep.subr.mxu0 %v1294
      %2856 = vmatpush1.msra.mxu0 %v1293
      %2857 = vmatprep.subr.mxu0 %v1278
      %2858 = vmatpush1.msra.mxu0 %v1277
      %2859 = vmatprep.subr.mxu0 %v1262
      %2860 = vmatpush1.msra.mxu0 %v1261
      %2861 = vmatprep.subr.mxu0 %v1246
      %2862 = vmatpush1.msra.mxu0 %v1245
      %2863 = vmatprep.subr.mxu0 %v1230
      %2864 = vmatpush1.msra.mxu0 %v1229
      %2865 = vmatprep.subr.mxu0 %v1214
      %2866 = vmatpush1.msra.mxu0 %v1213
      %2867 = vmatprep.subr.mxu0 0.0
      %2868 = vmatpush2.msra.mxu0 0.0
      %2869 = vmatprep.subr.mxu0 0.0
      %2870 = vmatpush2.msra.mxu0 0.0
      %2871 = vmatprep.subr.mxu0 0.0
      %2872 = vmatpush2.msra.mxu0 0.0
      %2873 = vmatprep.subr.mxu0 0.0
      %2874 = vmatpush2.msra.mxu0 0.0
      %2875 = vmatprep.subr.mxu0 0.0
      %2876 = vmatpush2.msra.mxu0 0.0
      %2877 = vmatprep.subr.mxu0 0.0
      %2878 = vmatpush2.msra.mxu0 0.0
      %2879 = vmatprep.subr.mxu0 0.0
      %2880 = vmatpush2.msra.mxu0 0.0
      %2881 = vmatprep.subr.mxu0 0.0
      %2882 = vmatpush2.msra.mxu0 0.0
      %2883 = vmatprep.subr.mxu0 0.0
      %2884 = vmatpush2.msra.mxu0 0.0
      %2885 = vmatprep.subr.mxu0 0.0
      %2886 = vmatpush2.msra.mxu0 0.0
      %2887 = vmatprep.subr.mxu0 0.0
      %2888 = vmatpush2.msra.mxu0 0.0
      %2889 = vmatprep.subr.mxu0 0.0
      %2890 = vmatpush2.msra.mxu0 0.0
      %2891 = vmatprep.subr.mxu0 0.0
      %2892 = vmatpush2.msra.mxu0 0.0
      %2893 = vmatprep.subr.mxu0 0.0
      %2894 = vmatpush2.msra.mxu0 0.0
      %2895 = vmatprep.subr.mxu0 %v1486
      %2896 = vmatpush2.msra.mxu0 %v1485
      %2897 = vmatprep.subr.mxu0 %v1470
      %2898 = vmatpush2.msra.mxu0 %v1469
      %2899 = vmatprep.mubr.f32.mxu0 %v1489
      %2900 = vmatmul.mubr.f32.gmra.mxu0 %v673
      %v2901 = vpop.f32.mrf.mxu0
      %v2902 = vadd.f32 %v2813, %v2901
      %v2903 = vpop.f32.mrf.mxu0
      %v2904 = vadd.f32 %v2815, %v2903
      %2905 = vmatprep.mubr.f32.mxu0 %v1492
      %2906 = vmatmul.mubr.f32.gmra.mxu0 %v677
      %v2907 = vpop.f32.mrf.mxu0
      %v2908 = vadd.f32 %v2819, %v2907
      %v2909 = vpop.f32.mrf.mxu0
      %v2910 = vadd.f32 %v2821, %v2909
      %2911 = vmatprep.mubr.f32.mxu0 %v1495
      %2912 = vmatmul.mubr.f32.gmra.mxu0 %v681
      %v2913 = vpop.f32.mrf.mxu0
      %v2914 = vadd.f32 %v2825, %v2913
      %v2915 = vpop.f32.mrf.mxu0
      %v2916 = vadd.f32 %v2827, %v2915
      %2917 = vmatprep.mubr.f32.mxu0 %v1498
      %2918 = vmatmul.mubr.f32.gmra.mxu0 %v685
      %v2919 = vpop.f32.mrf.mxu0
      %v2920 = vadd.f32 %v2831, %v2919
      %v2921 = vpop.f32.mrf.mxu0
      %v2922 = vadd.f32 %v2833, %v2921
      %2923 = vdwg.mxu0
      %2924 = vst [vmem:[#allocation2] sm:$0xff] %v1656
      %2925 = vst [vmem:[#allocation2 + $0x8] sm:$0xff] %v1662
      %2926 = vst [vmem:[#allocation2 + $0x10] sm:$0xff] %v1668
      %2927 = vst [vmem:[#allocation2 + $0x18] sm:$0xff] %v1674
      %2928 = vst [vmem:[#allocation2 + $0x20] sm:$0xff] %v1658
      %2929 = vst [vmem:[#allocation2 + $0x28] sm:$0xff] %v1664
      %2930 = vst [vmem:[#allocation2 + $0x30] sm:$0xff] %v1670
      %2931 = vst [vmem:[#allocation2 + $0x38] sm:$0xff] %v1676
      %2932 = vst [vmem:[#allocation2 + $0x40] sm:$0xff] %v1834
      %2933 = vst [vmem:[#allocation2 + $0x48] sm:$0xff] %v1840
      %2934 = vst [vmem:[#allocation2 + $0x50] sm:$0xff] %v1846
      %2935 = vst [vmem:[#allocation2 + $0x58] sm:$0xff] %v1852
      %2936 = vst [vmem:[#allocation2 + $0x60] sm:$0xff] %v1836
      %2937 = vst [vmem:[#allocation2 + $0x68] sm:$0xff] %v1842
      %2938 = vst [vmem:[#allocation2 + $0x70] sm:$0xff] %v1848
      %2939 = vst [vmem:[#allocation2 + $0x78] sm:$0xff] %v1854
      %2940 = vst [vmem:[#allocation2 + $0x80] sm:$0xff] %v2012
      %2941 = vst [vmem:[#allocation2 + $0x88] sm:$0xff] %v2018
      %2942 = vst [vmem:[#allocation2 + $0x90] sm:$0xff] %v2024
      %2943 = vst [vmem:[#allocation2 + $0x98] sm:$0xff] %v2030
      %2944 = vst [vmem:[#allocation2 + $0xa0] sm:$0xff] %v2014
      %2945 = vst [vmem:[#allocation2 + $0xa8] sm:$0xff] %v2020
      %2946 = vst [vmem:[#allocation2 + $0xb0] sm:$0xff] %v2026
      %2947 = vst [vmem:[#allocation2 + $0xb8] sm:$0xff] %v2032
      %2948 = vst [vmem:[#allocation2 + $0xc0] sm:$0xff] %v2190
      %2949 = vst [vmem:[#allocation2 + $0xc8] sm:$0xff] %v2196
      %2950 = vst [vmem:[#allocation2 + $0xd0] sm:$0xff] %v2202
      %2951 = vst [vmem:[#allocation2 + $0xd8] sm:$0xff] %v2208
      %2952 = vst [vmem:[#allocation2 + $0xe0] sm:$0xff] %v2192
      %2953 = vst [vmem:[#allocation2 + $0xe8] sm:$0xff] %v2198
      %2954 = vst [vmem:[#allocation2 + $0xf0] sm:$0xff] %v2204
      %2955 = vst [vmem:[#allocation2 + $0xf8] sm:$0xff] %v2210
      %2956 = vst [vmem:[#allocation2 + $0x100] sm:$0xff] %v2368
      %2957 = vst [vmem:[#allocation2 + $0x108] sm:$0xff] %v2374
      %2958 = vst [vmem:[#allocation2 + $0x110] sm:$0xff] %v2380
      %2959 = vst [vmem:[#allocation2 + $0x118] sm:$0xff] %v2386
      %2960 = vst [vmem:[#allocation2 + $0x120] sm:$0xff] %v2370
      %2961 = vst [vmem:[#allocation2 + $0x128] sm:$0xff] %v2376
      %2962 = vst [vmem:[#allocation2 + $0x130] sm:$0xff] %v2382
      %2963 = vst [vmem:[#allocation2 + $0x138] sm:$0xff] %v2388
      %2964 = vst [vmem:[#allocation2 + $0x140] sm:$0xff] %v2546
      %2965 = vst [vmem:[#allocation2 + $0x148] sm:$0xff] %v2552
      %2966 = vst [vmem:[#allocation2 + $0x150] sm:$0xff] %v2558
      %2967 = vst [vmem:[#allocation2 + $0x158] sm:$0xff] %v2564
      %2968 = vst [vmem:[#allocation2 + $0x160] sm:$0xff] %v2548
      %2969 = vst [vmem:[#allocation2 + $0x168] sm:$0xff] %v2554
      %2970 = vst [vmem:[#allocation2 + $0x170] sm:$0xff] %v2560
      %2971 = vst [vmem:[#allocation2 + $0x178] sm:$0xff] %v2566
      %2972 = vst [vmem:[#allocation2 + $0x180] sm:$0xff] %v2724
      %2973 = vst [vmem:[#allocation2 + $0x188] sm:$0xff] %v2730
      %2974 = vst [vmem:[#allocation2 + $0x190] sm:$0xff] %v2736
      %2975 = vst [vmem:[#allocation2 + $0x198] sm:$0xff] %v2742
      %2976 = vst [vmem:[#allocation2 + $0x1a0] sm:$0xff] %v2726
      %2977 = vst [vmem:[#allocation2 + $0x1a8] sm:$0xff] %v2732
      %2978 = vst [vmem:[#allocation2 + $0x1b0] sm:$0xff] %v2738
      %2979 = vst [vmem:[#allocation2 + $0x1b8] sm:$0xff] %v2744
      %2980 = vst [vmem:[#allocation2 + $0x1c0] sm:$0xff] %v2902
      %2981 = vst [vmem:[#allocation2 + $0x1c8] sm:$0xff] %v2908
      %2982 = vst [vmem:[#allocation2 + $0x1d0] sm:$0xff] %v2914
      %2983 = vst [vmem:[#allocation2 + $0x1d8] sm:$0xff] %v2920
      %2984 = vst [vmem:[#allocation2 + $0x1e0] sm:$0xff] %v2904
      %2985 = vst [vmem:[#allocation2 + $0x1e8] sm:$0xff] %v2910
      %2986 = vst [vmem:[#allocation2 + $0x1f0] sm:$0xff] %v2916
      %2987 = vst [vmem:[#allocation2 + $0x1f8] sm:$0xff] %v2922
      %v2988 = vld [vmem:[%s4] sm:$0xff]
      %v2989 = vld [vmem:[%s4 + $0x8] sm:$0xff]
      %v2990 = vld [vmem:[%s4 + $0x10] sm:$0xff]
      %v2991 = vld [vmem:[%s4 + $0x18] sm:$0xff]
      %v2992 = vld [vmem:[%s4 + $0x20] sm:$0xff]
      %v2993 = vld [vmem:[%s4 + $0x28] sm:$0xff]
      %v2994 = vld [vmem:[%s4 + $0x30] sm:$0xff]
      %v2995 = vld [vmem:[%s4 + $0x38] sm:$0xff]
      %v2996 = vld [vmem:[%s4 + $0x40] sm:$0xff]
      %v2997 = vld [vmem:[%s4 + $0x48] sm:$0xff]
      %v2998 = vld [vmem:[%s4 + $0x50] sm:$0xff]
      %v2999 = vld [vmem:[%s4 + $0x58] sm:$0xff]
      %v3000 = vld [vmem:[%s4 + $0x60] sm:$0xff]
      %v3001 = vld [vmem:[%s4 + $0x68] sm:$0xff]
      %v3002 = vld [vmem:[%s4 + $0x70] sm:$0xff]
      %v3003 = vld [vmem:[%s4 + $0x78] sm:$0xff]
      %v3004 = vld [vmem:[%s4 + $0x80] sm:$0xff]
      %v3005 = vld [vmem:[%s4 + $0x88] sm:$0xff]
      %v3006 = vld [vmem:[%s4 + $0x90] sm:$0xff]
      %v3007 = vld [vmem:[%s4 + $0x98] sm:$0xff]
      %v3008 = vld [vmem:[%s4 + $0xa0] sm:$0xff]
      %v3009 = vld [vmem:[%s4 + $0xa8] sm:$0xff]
      %v3010 = vld [vmem:[%s4 + $0xb0] sm:$0xff]
      %v3011 = vld [vmem:[%s4 + $0xb8] sm:$0xff]
      %v3012 = vld [vmem:[%s4 + $0xc0] sm:$0xff]
      %v3013 = vld [vmem:[%s4 + $0xc8] sm:$0xff]
      %v3014 = vld [vmem:[%s4 + $0xd0] sm:$0xff]
      %v3015 = vld [vmem:[%s4 + $0xd8] sm:$0xff]
      %v3016 = vld [vmem:[%s4 + $0xe0] sm:$0xff]
      %v3017 = vld [vmem:[%s4 + $0xe8] sm:$0xff]
      %v3018 = vld [vmem:[%s4 + $0xf0] sm:$0xff]
      %v3019 = vld [vmem:[%s4 + $0xf8] sm:$0xff]
      %v3020 = vld [vmem:[#allocation2] sm:$0xff]
      %v3021 = vld [vmem:[#allocation2 + $0x8] sm:$0xff]
      %v3022 = vld [vmem:[#allocation2 + $0x10] sm:$0xff]
      %v3023 = vld [vmem:[#allocation2 + $0x18] sm:$0xff]
      %v3024 = vld [vmem:[#allocation2 + $0x20] sm:$0xff]
      %v3025 = vld [vmem:[#allocation2 + $0x28] sm:$0xff]
      %v3026 = vld [vmem:[#allocation2 + $0x30] sm:$0xff]
      %v3027 = vld [vmem:[#allocation2 + $0x38] sm:$0xff]
      %v3028 = vld [vmem:[#allocation2 + $0x40] sm:$0xff]
      %v3029 = vld [vmem:[#allocation2 + $0x48] sm:$0xff]
      %v3030 = vld [vmem:[#allocation2 + $0x50] sm:$0xff]
      %v3031 = vld [vmem:[#allocation2 + $0x58] sm:$0xff]
      %v3032 = vld [vmem:[#allocation2 + $0x60] sm:$0xff]
      %v3033 = vld [vmem:[#allocation2 + $0x68] sm:$0xff]
      %v3034 = vld [vmem:[#allocation2 + $0x70] sm:$0xff]
      %v3035 = vld [vmem:[#allocation2 + $0x78] sm:$0xff]
      %v3036 = vld [vmem:[#allocation2 + $0x80] sm:$0xff]
      %v3037 = vld [vmem:[#allocation2 + $0x88] sm:$0xff]
      %v3038 = vld [vmem:[#allocation2 + $0x90] sm:$0xff]
      %v3039 = vld [vmem:[#allocation2 + $0x98] sm:$0xff]
      %v3040 = vld [vmem:[#allocation2 + $0xa0] sm:$0xff]
      %v3041 = vld [vmem:[#allocation2 + $0xa8] sm:$0xff]
      %v3042 = vld [vmem:[#allocation2 + $0xb0] sm:$0xff]
      %v3043 = vld [vmem:[#allocation2 + $0xb8] sm:$0xff]
      %v3044 = vld [vmem:[#allocation2 + $0xc0] sm:$0xff]
      %v3045 = vld [vmem:[#allocation2 + $0xc8] sm:$0xff]
      %v3046 = vld [vmem:[#allocation2 + $0xd0] sm:$0xff]
      %v3047 = vld [vmem:[#allocation2 + $0xd8] sm:$0xff]
      %v3048 = vld [vmem:[#allocation2 + $0xe0] sm:$0xff]
      %v3049 = vld [vmem:[#allocation2 + $0xe8] sm:$0xff]
      %v3050 = vld [vmem:[#allocation2 + $0xf0] sm:$0xff]
      %v3051 = vld [vmem:[#allocation2 + $0xf8] sm:$0xff]
      %v3052 = vld [vmem:[#allocation2 + $0x100] sm:$0xff]
      %v3053 = vld [vmem:[#allocation2 + $0x108] sm:$0xff]
      %v3054 = vld [vmem:[#allocation2 + $0x110] sm:$0xff]
      %v3055 = vld [vmem:[#allocation2 + $0x118] sm:$0xff]
      %v3056 = vld [vmem:[#allocation2 + $0x120] sm:$0xff]
      %v3057 = vld [vmem:[#allocation2 + $0x128] sm:$0xff]
      %v3058 = vld [vmem:[#allocation2 + $0x130] sm:$0xff]
      %v3059 = vld [vmem:[#allocation2 + $0x138] sm:$0xff]
      %v3060 = vld [vmem:[#allocation2 + $0x140] sm:$0xff]
      %v3061 = vld [vmem:[#allocation2 + $0x148] sm:$0xff]
      %v3062 = vld [vmem:[#allocation2 + $0x150] sm:$0xff]
      %v3063 = vld [vmem:[#allocation2 + $0x158] sm:$0xff]
      %v3064 = vld [vmem:[#allocation2 + $0x160] sm:$0xff]
      %v3065 = vld [vmem:[#allocation2 + $0x168] sm:$0xff]
      %v3066 = vld [vmem:[#allocation2 + $0x170] sm:$0xff]
      %v3067 = vld [vmem:[#allocation2 + $0x178] sm:$0xff]
      %v3068 = vld [vmem:[#allocation2 + $0x180] sm:$0xff]
      %v3069 = vld [vmem:[#allocation2 + $0x188] sm:$0xff]
      %v3070 = vld [vmem:[#allocation2 + $0x190] sm:$0xff]
      %v3071 = vld [vmem:[#allocation2 + $0x198] sm:$0xff]
      %v3072 = vld [vmem:[#allocation2 + $0x1a0] sm:$0xff]
      %v3073 = vld [vmem:[#allocation2 + $0x1a8] sm:$0xff]
      %v3074 = vld [vmem:[#allocation2 + $0x1b0] sm:$0xff]
      %v3075 = vld [vmem:[#allocation2 + $0x1b8] sm:$0xff]
      %v3076 = vld [vmem:[#allocation2 + $0x1c0] sm:$0xff]
      %v3077 = vld [vmem:[#allocation2 + $0x1c8] sm:$0xff]
      %v3078 = vld [vmem:[#allocation2 + $0x1d0] sm:$0xff]
      %v3079 = vld [vmem:[#allocation2 + $0x1d8] sm:$0xff]
      %v3080 = vld [vmem:[#allocation2 + $0x1e0] sm:$0xff]
      %v3081 = vld [vmem:[#allocation2 + $0x1e8] sm:$0xff]
      %v3082 = vld [vmem:[#allocation2 + $0x1f0] sm:$0xff]
      %v3083 = vld [vmem:[#allocation2 + $0x1f8] sm:$0xff]
      %v3084 = vld [vmem:[%s5] sm:$0xff]
      %v3085 = vld [vmem:[%s5 + $0x8] sm:$0xff]
      %v3086 = vld [vmem:[%s5 + $0x10] sm:$0xff]
      %v3087 = vld [vmem:[%s5 + $0x18] sm:$0xff]
      %v3088 = vld [vmem:[%s5 + $0x20] sm:$0xff]
      %v3089 = vld [vmem:[%s5 + $0x28] sm:$0xff]
      %v3090 = vld [vmem:[%s5 + $0x30] sm:$0xff]
      %v3091 = vld [vmem:[%s5 + $0x38] sm:$0xff]
      %3093 = vset.pattern.permute.xlu0 0
      %3094 = vperm.xlu0 %3093, %v3084
      %v3095 = vpop.permute.xlu0 %3094
      %3098 = vset.pattern.permute.xlu0 0
      %3099 = vperm.xlu0 %3098, %v3085
      %v3100 = vpop.permute.xlu0 %3099
      %3103 = vset.pattern.permute.xlu0 0
      %3104 = vperm.xlu0 %3103, %v3086
      %v3105 = vpop.permute.xlu0 %3104
      %3108 = vset.pattern.permute.xlu0 0
      %3109 = vperm.xlu0 %3108, %v3087
      %v3110 = vpop.permute.xlu0 %3109
      %3113 = vset.pattern.permute.xlu0 0
      %3114 = vperm.xlu0 %3113, %v3088
      %v3115 = vpop.permute.xlu0 %3114
      %3118 = vset.pattern.permute.xlu0 0
      %3119 = vperm.xlu0 %3118, %v3089
      %v3120 = vpop.permute.xlu0 %3119
      %3123 = vset.pattern.permute.xlu0 0
      %3124 = vperm.xlu0 %3123, %v3090
      %v3125 = vpop.permute.xlu0 %3124
      %3128 = vset.pattern.permute.xlu0 0
      %3129 = vperm.xlu0 %3128, %v3091
      %v3130 = vpop.permute.xlu0 %3129
      %3132 = vmatprep.subr.mxu0 0.0
      %3133 = vmatpush1.msra.mxu0 %v3035
      %3134 = vmatprep.subr.mxu0 0.0
      %3135 = vmatpush1.msra.mxu0 %v3034
      %3136 = vmatprep.subr.mxu0 0.0
      %3137 = vmatpush1.msra.mxu0 %v3033
      %3138 = vmatprep.subr.mxu0 0.0
      %3139 = vmatpush1.msra.mxu0 %v3032
      %3140 = vmatprep.subr.mxu0 0.0
      %3141 = vmatpush1.msra.mxu0 %v3031
      %3142 = vmatprep.subr.mxu0 0.0
      %3143 = vmatpush1.msra.mxu0 %v3030
      %3144 = vmatprep.subr.mxu0 0.0
      %3145 = vmatpush1.msra.mxu0 %v3029
      %3146 = vmatprep.subr.mxu0 0.0
      %3147 = vmatpush1.msra.mxu0 %v3028
      %3148 = vmatprep.subr.mxu0 0.0
      %3149 = vmatpush1.msra.mxu0 %v3027
      %3150 = vmatprep.subr.mxu0 0.0
      %3151 = vmatpush1.msra.mxu0 %v3026
      %3152 = vmatprep.subr.mxu0 0.0
      %3153 = vmatpush1.msra.mxu0 %v3025
      %3154 = vmatprep.subr.mxu0 0.0
      %3155 = vmatpush1.msra.mxu0 %v3024
      %3156 = vmatprep.subr.mxu0 0.0
      %3157 = vmatpush1.msra.mxu0 %v3023
      %3158 = vmatprep.subr.mxu0 0.0
      %3159 = vmatpush1.msra.mxu0 %v3022
      %3160 = vmatprep.subr.mxu0 0.0
      %3161 = vmatpush1.msra.mxu0 %v3021
      %3162 = vmatprep.subr.mxu0 0.0
      %3163 = vmatpush1.msra.mxu0 %v3020
      %3164 = vmatprep.subr.mxu0 0.0
      %3165 = vmatpush2.msra.mxu0 %v3051
      %3166 = vmatprep.subr.mxu0 0.0
      %3167 = vmatpush2.msra.mxu0 %v3050
      %3168 = vmatprep.subr.mxu0 0.0
      %3169 = vmatpush2.msra.mxu0 %v3049
      %3170 = vmatprep.subr.mxu0 0.0
      %3171 = vmatpush2.msra.mxu0 %v3048
      %3172 = vmatprep.subr.mxu0 0.0
      %3173 = vmatpush2.msra.mxu0 %v3047
      %3174 = vmatprep.subr.mxu0 0.0
      %3175 = vmatpush2.msra.mxu0 %v3046
      %3176 = vmatprep.subr.mxu0 0.0
      %3177 = vmatpush2.msra.mxu0 %v3045
      %3178 = vmatprep.subr.mxu0 0.0
      %3179 = vmatpush2.msra.mxu0 %v3044
      %3180 = vmatprep.subr.mxu0 0.0
      %3181 = vmatpush2.msra.mxu0 %v3043
      %3182 = vmatprep.subr.mxu0 0.0
      %3183 = vmatpush2.msra.mxu0 %v3042
      %3184 = vmatprep.subr.mxu0 0.0
      %3185 = vmatpush2.msra.mxu0 %v3041
      %3186 = vmatprep.subr.mxu0 0.0
      %3187 = vmatpush2.msra.mxu0 %v3040
      %3188 = vmatprep.subr.mxu0 0.0
      %3189 = vmatpush2.msra.mxu0 %v3039
      %3190 = vmatprep.subr.mxu0 0.0
      %3191 = vmatpush2.msra.mxu0 %v3038
      %3192 = vmatprep.subr.mxu0 0.0
      %3193 = vmatpush2.msra.mxu0 %v3037
      %3194 = vmatprep.subr.mxu0 0.0
      %3195 = vmatpush2.msra.mxu0 %v3036
      %3196 = vmatprep.mubr.f32.mxu0 %v2989
      %3197 = vmatmul.mubr.f32.gmra.mxu0 %v2988
      %v3198 = vpop.f32.mrf.mxu0
      %v3199 = vadd.f32 %v3095, %v3198
      %v3200 = vpop.f32.mrf.mxu0
      %3201 = vmatprep.mubr.f32.mxu0 %v2993
      %3202 = vmatmul.mubr.f32.gmra.mxu0 %v2992
      %v3203 = vpop.f32.mrf.mxu0
      %v3204 = vadd.f32 %v3100, %v3203
      %v3205 = vpop.f32.mrf.mxu0
      %3206 = vmatprep.mubr.f32.mxu0 %v2997
      %3207 = vmatmul.mubr.f32.gmra.mxu0 %v2996
      %v3208 = vpop.f32.mrf.mxu0
      %v3209 = vadd.f32 %v3105, %v3208
      %v3210 = vpop.f32.mrf.mxu0
      %3211 = vmatprep.mubr.f32.mxu0 %v3001
      %3212 = vmatmul.mubr.f32.gmra.mxu0 %v3000
      %v3213 = vpop.f32.mrf.mxu0
      %v3214 = vadd.f32 %v3110, %v3213
      %v3215 = vpop.f32.mrf.mxu0
      %3216 = vmatprep.mubr.f32.mxu0 %v3005
      %3217 = vmatmul.mubr.f32.gmra.mxu0 %v3004
      %v3218 = vpop.f32.mrf.mxu0
      %v3219 = vadd.f32 %v3115, %v3218
      %v3220 = vpop.f32.mrf.mxu0
      %3221 = vmatprep.mubr.f32.mxu0 %v3009
      %3222 = vmatmul.mubr.f32.gmra.mxu0 %v3008
      %v3223 = vpop.f32.mrf.mxu0
      %v3224 = vadd.f32 %v3120, %v3223
      %v3225 = vpop.f32.mrf.mxu0
      %3226 = vmatprep.mubr.f32.mxu0 %v3013
      %3227 = vmatmul.mubr.f32.gmra.mxu0 %v3012
      %v3228 = vpop.f32.mrf.mxu0
      %v3229 = vadd.f32 %v3125, %v3228
      %v3230 = vpop.f32.mrf.mxu0
      %3231 = vmatprep.mubr.f32.mxu0 %v3017
      %3232 = vmatmul.mubr.f32.gmra.mxu0 %v3016
      %v3233 = vpop.f32.mrf.mxu0
      %v3234 = vadd.f32 %v3130, %v3233
      %v3235 = vpop.f32.mrf.mxu0
      %3236 = vdwg.mxu0
      %3237 = vmatprep.subr.mxu0 0.0
      %3238 = vmatpush1.msra.mxu0 %v3067
      %3239 = vmatprep.subr.mxu0 0.0
      %3240 = vmatpush1.msra.mxu0 %v3066
      %3241 = vmatprep.subr.mxu0 0.0
      %3242 = vmatpush1.msra.mxu0 %v3065
      %3243 = vmatprep.subr.mxu0 0.0
      %3244 = vmatpush1.msra.mxu0 %v3064
      %3245 = vmatprep.subr.mxu0 0.0
      %3246 = vmatpush1.msra.mxu0 %v3063
      %3247 = vmatprep.subr.mxu0 0.0
      %3248 = vmatpush1.msra.mxu0 %v3062
      %3249 = vmatprep.subr.mxu0 0.0
      %3250 = vmatpush1.msra.mxu0 %v3061
      %3251 = vmatprep.subr.mxu0 0.0
      %3252 = vmatpush1.msra.mxu0 %v3060
      %3253 = vmatprep.subr.mxu0 0.0
      %3254 = vmatpush1.msra.mxu0 %v3059
      %3255 = vmatprep.subr.mxu0 0.0
      %3256 = vmatpush1.msra.mxu0 %v3058
      %3257 = vmatprep.subr.mxu0 0.0
      %3258 = vmatpush1.msra.mxu0 %v3057
      %3259 = vmatprep.subr.mxu0 0.0
      %3260 = vmatpush1.msra.mxu0 %v3056
      %3261 = vmatprep.subr.mxu0 0.0
      %3262 = vmatpush1.msra.mxu0 %v3055
      %3263 = vmatprep.subr.mxu0 0.0
      %3264 = vmatpush1.msra.mxu0 %v3054
      %3265 = vmatprep.subr.mxu0 0.0
      %3266 = vmatpush1.msra.mxu0 %v3053
      %3267 = vmatprep.subr.mxu0 0.0
      %3268 = vmatpush1.msra.mxu0 %v3052
      %3269 = vmatprep.subr.mxu0 0.0
      %3270 = vmatpush2.msra.mxu0 %v3083
      %3271 = vmatprep.subr.mxu0 0.0
      %3272 = vmatpush2.msra.mxu0 %v3082
      %3273 = vmatprep.subr.mxu0 0.0
      %3274 = vmatpush2.msra.mxu0 %v3081
      %3275 = vmatprep.subr.mxu0 0.0
      %3276 = vmatpush2.msra.mxu0 %v3080
      %3277 = vmatprep.subr.mxu0 0.0
      %3278 = vmatpush2.msra.mxu0 %v3079
      %3279 = vmatprep.subr.mxu0 0.0
      %3280 = vmatpush2.msra.mxu0 %v3078
      %3281 = vmatprep.subr.mxu0 0.0
      %3282 = vmatpush2.msra.mxu0 %v3077
      %3283 = vmatprep.subr.mxu0 0.0
      %3284 = vmatpush2.msra.mxu0 %v3076
      %3285 = vmatprep.subr.mxu0 0.0
      %3286 = vmatpush2.msra.mxu0 %v3075
      %3287 = vmatprep.subr.mxu0 0.0
      %3288 = vmatpush2.msra.mxu0 %v3074
      %3289 = vmatprep.subr.mxu0 0.0
      %3290 = vmatpush2.msra.mxu0 %v3073
      %3291 = vmatprep.subr.mxu0 0.0
      %3292 = vmatpush2.msra.mxu0 %v3072
      %3293 = vmatprep.subr.mxu0 0.0
      %3294 = vmatpush2.msra.mxu0 %v3071
      %3295 = vmatprep.subr.mxu0 0.0
      %3296 = vmatpush2.msra.mxu0 %v3070
      %3297 = vmatprep.subr.mxu0 0.0
      %3298 = vmatpush2.msra.mxu0 %v3069
      %3299 = vmatprep.subr.mxu0 0.0
      %3300 = vmatpush2.msra.mxu0 %v3068
      %3301 = vmatprep.mubr.f32.mxu0 %v2991
      %3302 = vmatmul.mubr.f32.gmra.mxu0 %v2990
      %v3303 = vpop.f32.mrf.mxu0
      %v3304 = vadd.f32 %v3199, %v3303
      %v3305 = vpop.f32.mrf.mxu0
      %3306 = vmatprep.mubr.f32.mxu0 %v2995
      %3307 = vmatmul.mubr.f32.gmra.mxu0 %v2994
      %v3308 = vpop.f32.mrf.mxu0
      %v3309 = vadd.f32 %v3204, %v3308
      %v3310 = vpop.f32.mrf.mxu0
      %3311 = vmatprep.mubr.f32.mxu0 %v2999
      %3312 = vmatmul.mubr.f32.gmra.mxu0 %v2998
      %v3313 = vpop.f32.mrf.mxu0
      %v3314 = vadd.f32 %v3209, %v3313
      %v3315 = vpop.f32.mrf.mxu0
      %3316 = vmatprep.mubr.f32.mxu0 %v3003
      %3317 = vmatmul.mubr.f32.gmra.mxu0 %v3002
      %v3318 = vpop.f32.mrf.mxu0
      %v3319 = vadd.f32 %v3214, %v3318
      %v3320 = vpop.f32.mrf.mxu0
      %3321 = vmatprep.mubr.f32.mxu0 %v3007
      %3322 = vmatmul.mubr.f32.gmra.mxu0 %v3006
      %v3323 = vpop.f32.mrf.mxu0
      %v3324 = vadd.f32 %v3219, %v3323
      %v3325 = vpop.f32.mrf.mxu0
      %3326 = vmatprep.mubr.f32.mxu0 %v3011
      %3327 = vmatmul.mubr.f32.gmra.mxu0 %v3010
      %v3328 = vpop.f32.mrf.mxu0
      %v3329 = vadd.f32 %v3224, %v3328
      %v3330 = vpop.f32.mrf.mxu0
      %3331 = vmatprep.mubr.f32.mxu0 %v3015
      %3332 = vmatmul.mubr.f32.gmra.mxu0 %v3014
      %v3333 = vpop.f32.mrf.mxu0
      %v3334 = vadd.f32 %v3229, %v3333
      %v3335 = vpop.f32.mrf.mxu0
      %3336 = vmatprep.mubr.f32.mxu0 %v3019
      %3337 = vmatmul.mubr.f32.gmra.mxu0 %v3018
      %v3338 = vpop.f32.mrf.mxu0
      %v3339 = vadd.f32 %v3234, %v3338
      %v3340 = vpop.f32.mrf.mxu0
      %3341 = vdwg.mxu0
      %v3342 = vmax.f32 %v3304, 0.0
      %v3343 = vmax.f32 %v3309, 0.0
      %v3344 = vmax.f32 %v3314, 0.0
      %v3345 = vmax.f32 %v3319, 0.0
      %v3346 = vmax.f32 %v3324, 0.0
      %v3347 = vmax.f32 %v3329, 0.0
      %v3348 = vmax.f32 %v3334, 0.0
      %v3349 = vmax.f32 %v3339, 0.0
      %v3350 = vld [vmem:[%s6] sm:$0xff]
      %v3351 = vld [vmem:[%s6 + $0x8] sm:$0xff]
      %v3352 = vld [vmem:[%s6 + $0x10] sm:$0xff]
      %v3353 = vld [vmem:[%s6 + $0x18] sm:$0xff]
      %v3354 = vld [vmem:[%s6 + $0x20] sm:$0xff]
      %v3355 = vld [vmem:[%s6 + $0x28] sm:$0xff]
      %v3356 = vld [vmem:[%s6 + $0x30] sm:$0xff]
      %v3357 = vld [vmem:[%s6 + $0x38] sm:$0xff]
      %v3358 = vld [vmem:[%s6 + $0x40] sm:$0xff]
      %v3359 = vld [vmem:[%s6 + $0x48] sm:$0xff]
      %v3360 = vld [vmem:[%s6 + $0x50] sm:$0xff]
      %v3361 = vld [vmem:[%s6 + $0x58] sm:$0xff]
      %v3362 = vld [vmem:[%s6 + $0x60] sm:$0xff]
      %v3363 = vld [vmem:[%s6 + $0x68] sm:$0xff]
      %v3364 = vld [vmem:[%s6 + $0x70] sm:$0xff]
      %v3365 = vld [vmem:[%s6 + $0x78] sm:$0xff]
      %v3366 = vld [vmem:[%s6 + $0x80] sm:$0xff]
      %v3367 = vld [vmem:[%s6 + $0x88] sm:$0xff]
      %v3368 = vld [vmem:[%s6 + $0x90] sm:$0xff]
      %v3369 = vld [vmem:[%s6 + $0x98] sm:$0xff]
      %v3370 = vld [vmem:[%s6 + $0xa0] sm:$0xff]
      %v3371 = vld [vmem:[%s6 + $0xa8] sm:$0xff]
      %v3372 = vld [vmem:[%s6 + $0xb0] sm:$0xff]
      %v3373 = vld [vmem:[%s6 + $0xb8] sm:$0xff]
      %v3374 = vld [vmem:[%s6 + $0xc0] sm:$0xff]
      %v3375 = vld [vmem:[%s6 + $0xc8] sm:$0xff]
      %v3376 = vld [vmem:[%s6 + $0xd0] sm:$0xff]
      %v3377 = vld [vmem:[%s6 + $0xd8] sm:$0xff]
      %v3378 = vld [vmem:[%s6 + $0xe0] sm:$0xff]
      %v3379 = vld [vmem:[%s6 + $0xe8] sm:$0xff]
      %v3380 = vld [vmem:[%s6 + $0xf0] sm:$0xff]
      %v3381 = vld [vmem:[%s6 + $0xf8] sm:$0xff]
      %v3382 = vld [vmem:[%s6 + $0x100] sm:$0xff]
      %v3383 = vld [vmem:[%s6 + $0x108] sm:$0xff]
      %v3384 = vld [vmem:[%s6 + $0x110] sm:$0xff]
      %v3385 = vld [vmem:[%s6 + $0x118] sm:$0xff]
      %v3386 = vld [vmem:[%s6 + $0x120] sm:$0xff]
      %v3387 = vld [vmem:[%s6 + $0x128] sm:$0xff]
      %v3388 = vld [vmem:[%s6 + $0x130] sm:$0xff]
      %v3389 = vld [vmem:[%s6 + $0x138] sm:$0xff]
      %v3390 = vld [vmem:[%s6 + $0x140] sm:$0xff]
      %v3391 = vld [vmem:[%s6 + $0x148] sm:$0xff]
      %v3392 = vld [vmem:[%s6 + $0x150] sm:$0xff]
      %v3393 = vld [vmem:[%s6 + $0x158] sm:$0xff]
      %v3394 = vld [vmem:[%s6 + $0x160] sm:$0xff]
      %v3395 = vld [vmem:[%s6 + $0x168] sm:$0xff]
      %v3396 = vld [vmem:[%s6 + $0x170] sm:$0xff]
      %v3397 = vld [vmem:[%s6 + $0x178] sm:$0xff]
      %v3398 = vld [vmem:[%s6 + $0x180] sm:$0xff]
      %v3399 = vld [vmem:[%s6 + $0x188] sm:$0xff]
      %v3400 = vld [vmem:[%s6 + $0x190] sm:$0xff]
      %v3401 = vld [vmem:[%s6 + $0x198] sm:$0xff]
      %v3402 = vld [vmem:[%s6 + $0x1a0] sm:$0xff]
      %v3403 = vld [vmem:[%s6 + $0x1a8] sm:$0xff]
      %v3404 = vld [vmem:[%s6 + $0x1b0] sm:$0xff]
      %v3405 = vld [vmem:[%s6 + $0x1b8] sm:$0xff]
      %v3406 = vld [vmem:[%s6 + $0x1c0] sm:$0xff]
      %v3407 = vld [vmem:[%s6 + $0x1c8] sm:$0xff]
      %v3408 = vld [vmem:[%s6 + $0x1d0] sm:$0xff]
      %v3409 = vld [vmem:[%s6 + $0x1d8] sm:$0xff]
      %v3410 = vld [vmem:[%s6 + $0x1e0] sm:$0xff]
      %v3411 = vld [vmem:[%s6 + $0x1e8] sm:$0xff]
      %v3412 = vld [vmem:[%s6 + $0x1f0] sm:$0xff]
      %v3413 = vld [vmem:[%s6 + $0x1f8] sm:$0xff]
      %v3414 = vld [vmem:[%s6 + $0x200] sm:$0xff]
      %v3415 = vld [vmem:[%s6 + $0x208] sm:$0xff]
      %v3416 = vld [vmem:[%s6 + $0x210] sm:$0xff]
      %v3417 = vld [vmem:[%s6 + $0x218] sm:$0xff]
      %v3418 = vld [vmem:[%s6 + $0x220] sm:$0xff]
      %v3419 = vld [vmem:[%s6 + $0x228] sm:$0xff]
      %v3420 = vld [vmem:[%s6 + $0x230] sm:$0xff]
      %v3421 = vld [vmem:[%s6 + $0x238] sm:$0xff]
      %v3422 = vld [vmem:[%s6 + $0x240] sm:$0xff]
      %v3423 = vld [vmem:[%s6 + $0x248] sm:$0xff]
      %v3424 = vld [vmem:[%s6 + $0x250] sm:$0xff]
      %v3425 = vld [vmem:[%s6 + $0x258] sm:$0xff]
      %v3426 = vld [vmem:[%s6 + $0x260] sm:$0xff]
      %v3427 = vld [vmem:[%s6 + $0x268] sm:$0xff]
      %v3428 = vld [vmem:[%s6 + $0x270] sm:$0xff]
      %v3429 = vld [vmem:[%s6 + $0x278] sm:$0xff]
      %v3430 = vld [vmem:[%s6 + $0x280] sm:$0xff]
      %v3431 = vld [vmem:[%s6 + $0x288] sm:$0xff]
      %v3432 = vld [vmem:[%s6 + $0x290] sm:$0xff]
      %v3433 = vld [vmem:[%s6 + $0x298] sm:$0xff]
      %v3434 = vld [vmem:[%s6 + $0x2a0] sm:$0xff]
      %v3435 = vld [vmem:[%s6 + $0x2a8] sm:$0xff]
      %v3436 = vld [vmem:[%s6 + $0x2b0] sm:$0xff]
      %v3437 = vld [vmem:[%s6 + $0x2b8] sm:$0xff]
      %v3438 = vld [vmem:[%s6 + $0x2c0] sm:$0xff]
      %v3439 = vld [vmem:[%s6 + $0x2c8] sm:$0xff]
      %v3440 = vld [vmem:[%s6 + $0x2d0] sm:$0xff]
      %v3441 = vld [vmem:[%s6 + $0x2d8] sm:$0xff]
      %v3442 = vld [vmem:[%s6 + $0x2e0] sm:$0xff]
      %v3443 = vld [vmem:[%s6 + $0x2e8] sm:$0xff]
      %v3444 = vld [vmem:[%s6 + $0x2f0] sm:$0xff]
      %v3445 = vld [vmem:[%s6 + $0x2f8] sm:$0xff]
      %v3446 = vld [vmem:[%s6 + $0x300] sm:$0xff]
      %v3447 = vld [vmem:[%s6 + $0x308] sm:$0xff]
      %v3448 = vld [vmem:[%s6 + $0x310] sm:$0xff]
      %v3449 = vld [vmem:[%s6 + $0x318] sm:$0xff]
      %v3450 = vld [vmem:[%s6 + $0x320] sm:$0xff]
      %v3451 = vld [vmem:[%s6 + $0x328] sm:$0xff]
      %v3452 = vld [vmem:[%s6 + $0x330] sm:$0xff]
      %v3453 = vld [vmem:[%s6 + $0x338] sm:$0xff]
      %v3454 = vld [vmem:[%s6 + $0x340] sm:$0xff]
      %v3455 = vld [vmem:[%s6 + $0x348] sm:$0xff]
      %v3456 = vld [vmem:[%s6 + $0x350] sm:$0xff]
      %v3457 = vld [vmem:[%s6 + $0x358] sm:$0xff]
      %v3458 = vld [vmem:[%s6 + $0x360] sm:$0xff]
      %v3459 = vld [vmem:[%s6 + $0x368] sm:$0xff]
      %v3460 = vld [vmem:[%s6 + $0x370] sm:$0xff]
      %v3461 = vld [vmem:[%s6 + $0x378] sm:$0xff]
      %v3462 = vld [vmem:[%s6 + $0x380] sm:$0xff]
      %v3463 = vld [vmem:[%s6 + $0x388] sm:$0xff]
      %v3464 = vld [vmem:[%s6 + $0x390] sm:$0xff]
      %v3465 = vld [vmem:[%s6 + $0x398] sm:$0xff]
      %v3466 = vld [vmem:[%s6 + $0x3a0] sm:$0xff]
      %v3467 = vld [vmem:[%s6 + $0x3a8] sm:$0xff]
      %v3468 = vld [vmem:[%s6 + $0x3b0] sm:$0xff]
      %v3469 = vld [vmem:[%s6 + $0x3b8] sm:$0xff]
      %v3470 = vld [vmem:[%s6 + $0x3c0] sm:$0xff]
      %v3471 = vld [vmem:[%s6 + $0x3c8] sm:$0xff]
      %v3472 = vld [vmem:[%s6 + $0x3d0] sm:$0xff]
      %v3473 = vld [vmem:[%s6 + $0x3d8] sm:$0xff]
      %v3474 = vld [vmem:[%s6 + $0x3e0] sm:$0xff]
      %v3475 = vld [vmem:[%s6 + $0x3e8] sm:$0xff]
      %v3476 = vld [vmem:[%s6 + $0x3f0] sm:$0xff]
      %v3477 = vld [vmem:[%s6 + $0x3f8] sm:$0xff]
      %v3478 = vld [vmem:[%s6 + $0x400] sm:$0xff]
      %v3479 = vld [vmem:[%s6 + $0x408] sm:$0xff]
      %v3480 = vld [vmem:[%s6 + $0x410] sm:$0xff]
      %v3481 = vld [vmem:[%s6 + $0x418] sm:$0xff]
      %v3482 = vld [vmem:[%s6 + $0x420] sm:$0xff]
      %v3483 = vld [vmem:[%s6 + $0x428] sm:$0xff]
      %v3484 = vld [vmem:[%s6 + $0x430] sm:$0xff]
      %v3485 = vld [vmem:[%s6 + $0x438] sm:$0xff]
      %v3486 = vld [vmem:[%s6 + $0x440] sm:$0xff]
      %v3487 = vld [vmem:[%s6 + $0x448] sm:$0xff]
      %v3488 = vld [vmem:[%s6 + $0x450] sm:$0xff]
      %v3489 = vld [vmem:[%s6 + $0x458] sm:$0xff]
      %v3490 = vld [vmem:[%s6 + $0x460] sm:$0xff]
      %v3491 = vld [vmem:[%s6 + $0x468] sm:$0xff]
      %v3492 = vld [vmem:[%s6 + $0x470] sm:$0xff]
      %v3493 = vld [vmem:[%s6 + $0x478] sm:$0xff]
      %3494 = vmatprep.subr.mxu0 %v3486
      %3495 = vmatpush1.msra.mxu0 %v3485
      %3496 = vmatprep.subr.mxu0 %v3477
      %3497 = vmatpush1.msra.mxu0 %v3476
      %3498 = vmatprep.subr.mxu0 %v3468
      %3499 = vmatpush1.msra.mxu0 %v3467
      %3500 = vmatprep.subr.mxu0 %v3459
      %3501 = vmatpush1.msra.mxu0 %v3458
      %3502 = vmatprep.subr.mxu0 %v3450
      %3503 = vmatpush1.msra.mxu0 %v3449
      %3504 = vmatprep.subr.mxu0 %v3441
      %3505 = vmatpush1.msra.mxu0 %v3440
      %3506 = vmatprep.subr.mxu0 %v3432
      %3507 = vmatpush1.msra.mxu0 %v3431
      %3508 = vmatprep.subr.mxu0 %v3423
      %3509 = vmatpush1.msra.mxu0 %v3422
      %3510 = vmatprep.subr.mxu0 %v3414
      %3511 = vmatpush1.msra.mxu0 %v3413
      %3512 = vmatprep.subr.mxu0 %v3405
      %3513 = vmatpush1.msra.mxu0 %v3404
      %3514 = vmatprep.subr.mxu0 %v3396
      %3515 = vmatpush1.msra.mxu0 %v3395
      %3516 = vmatprep.subr.mxu0 %v3387
      %3517 = vmatpush1.msra.mxu0 %v3386
      %3518 = vmatprep.subr.mxu0 %v3378
      %3519 = vmatpush1.msra.mxu0 %v3377
      %3520 = vmatprep.subr.mxu0 %v3369
      %3521 = vmatpush1.msra.mxu0 %v3368
      %3522 = vmatprep.subr.mxu0 %v3360
      %3523 = vmatpush1.msra.mxu0 %v3359
      %3524 = vmatprep.subr.mxu0 %v3351
      %3525 = vmatpush1.msra.mxu0 %v3350
      %3526 = vmatprep.subr.mxu0 0.0
      %3527 = vmatpush2.msra.mxu0 0.0
      %3528 = vmatprep.subr.mxu0 0.0
      %3529 = vmatpush2.msra.mxu0 0.0
      %3530 = vmatprep.subr.mxu0 0.0
      %3531 = vmatpush2.msra.mxu0 0.0
      %3532 = vmatprep.subr.mxu0 0.0
      %3533 = vmatpush2.msra.mxu0 0.0
      %3534 = vmatprep.subr.mxu0 0.0
      %3535 = vmatpush2.msra.mxu0 0.0
      %3536 = vmatprep.subr.mxu0 0.0
      %3537 = vmatpush2.msra.mxu0 0.0
      %3538 = vmatprep.subr.mxu0 0.0
      %3539 = vmatpush2.msra.mxu0 0.0
      %3540 = vmatprep.subr.mxu0 0.0
      %3541 = vmatpush2.msra.mxu0 0.0
      %3542 = vmatprep.subr.mxu0 0.0
      %3543 = vmatpush2.msra.mxu0 0.0
      %3544 = vmatprep.subr.mxu0 0.0
      %3545 = vmatpush2.msra.mxu0 0.0
      %3546 = vmatprep.subr.mxu0 0.0
      %3547 = vmatpush2.msra.mxu0 0.0
      %3548 = vmatprep.subr.mxu0 0.0
      %3549 = vmatpush2.msra.mxu0 0.0
      %3550 = vmatprep.subr.mxu0 0.0
      %3551 = vmatpush2.msra.mxu0 0.0
      %3552 = vmatprep.subr.mxu0 0.0
      %3553 = vmatpush2.msra.mxu0 0.0
      %3554 = vmatprep.subr.mxu0 0.0
      %3555 = vmatpush2.msra.mxu0 0.0
      %3556 = vmatprep.subr.mxu0 0.0
      %3557 = vmatpush2.msra.mxu0 0.0
      %3558 = vmatprep.mubr.f32.mxu0 0.0
      %3559 = vmatmul.mubr.f32.gmra.mxu0 %v3342
      %v3560 = vpop.f32.mrf.mxu0
      %v3561 = vadd.f32 0.0, %v3560
      %v3562 = vpop.f32.mrf.mxu0
      %v3563 = vadd.f32 0.0, %v3562
      %3564 = vmatprep.mubr.f32.mxu0 0.0
      %3565 = vmatmul.mubr.f32.gmra.mxu0 %v3343
      %v3566 = vpop.f32.mrf.mxu0
      %v3567 = vadd.f32 0.0, %v3566
      %v3568 = vpop.f32.mrf.mxu0
      %v3569 = vadd.f32 0.0, %v3568
      %3570 = vmatprep.mubr.f32.mxu0 0.0
      %3571 = vmatmul.mubr.f32.gmra.mxu0 %v3344
      %v3572 = vpop.f32.mrf.mxu0
      %v3573 = vadd.f32 0.0, %v3572
      %v3574 = vpop.f32.mrf.mxu0
      %v3575 = vadd.f32 0.0, %v3574
      %3576 = vmatprep.mubr.f32.mxu0 0.0
      %3577 = vmatmul.mubr.f32.gmra.mxu0 %v3345
      %v3578 = vpop.f32.mrf.mxu0
      %v3579 = vadd.f32 0.0, %v3578
      %v3580 = vpop.f32.mrf.mxu0
      %v3581 = vadd.f32 0.0, %v3580
      %3582 = vmatprep.mubr.f32.mxu0 0.0
      %3583 = vmatmul.mubr.f32.gmra.mxu0 %v3346
      %v3584 = vpop.f32.mrf.mxu0
      %v3585 = vadd.f32 0.0, %v3584
      %v3586 = vpop.f32.mrf.mxu0
      %v3587 = vadd.f32 0.0, %v3586
      %3588 = vmatprep.mubr.f32.mxu0 0.0
      %3589 = vmatmul.mubr.f32.gmra.mxu0 %v3347
      %v3590 = vpop.f32.mrf.mxu0
      %v3591 = vadd.f32 0.0, %v3590
      %v3592 = vpop.f32.mrf.mxu0
      %v3593 = vadd.f32 0.0, %v3592
      %3594 = vmatprep.mubr.f32.mxu0 0.0
      %3595 = vmatmul.mubr.f32.gmra.mxu0 %v3348
      %v3596 = vpop.f32.mrf.mxu0
      %v3597 = vadd.f32 0.0, %v3596
      %v3598 = vpop.f32.mrf.mxu0
      %v3599 = vadd.f32 0.0, %v3598
      %3600 = vmatprep.mubr.f32.mxu0 0.0
      %3601 = vmatmul.mubr.f32.gmra.mxu0 %v3349
      %v3602 = vpop.f32.mrf.mxu0
      %v3603 = vadd.f32 0.0, %v3602
      %v3604 = vpop.f32.mrf.mxu0
      %v3605 = vadd.f32 0.0, %v3604
      %3606 = vdwg.mxu0
      %3607 = vmatprep.subr.mxu0 %v3488
      %3608 = vmatpush1.msra.mxu0 %v3487
      %3609 = vmatprep.subr.mxu0 %v3479
      %3610 = vmatpush1.msra.mxu0 %v3478
      %3611 = vmatprep.subr.mxu0 %v3470
      %3612 = vmatpush1.msra.mxu0 %v3469
      %3613 = vmatprep.subr.mxu0 %v3461
      %3614 = vmatpush1.msra.mxu0 %v3460
      %3615 = vmatprep.subr.mxu0 %v3452
      %3616 = vmatpush1.msra.mxu0 %v3451
      %3617 = vmatprep.subr.mxu0 %v3443
      %3618 = vmatpush1.msra.mxu0 %v3442
      %3619 = vmatprep.subr.mxu0 %v3434
      %3620 = vmatpush1.msra.mxu0 %v3433
      %3621 = vmatprep.subr.mxu0 %v3425
      %3622 = vmatpush1.msra.mxu0 %v3424
      %3623 = vmatprep.subr.mxu0 %v3416
      %3624 = vmatpush1.msra.mxu0 %v3415
      %3625 = vmatprep.subr.mxu0 %v3407
      %3626 = vmatpush1.msra.mxu0 %v3406
      %3627 = vmatprep.subr.mxu0 %v3398
      %3628 = vmatpush1.msra.mxu0 %v3397
      %3629 = vmatprep.subr.mxu0 %v3389
      %3630 = vmatpush1.msra.mxu0 %v3388
      %3631 = vmatprep.subr.mxu0 %v3380
      %3632 = vmatpush1.msra.mxu0 %v3379
      %3633 = vmatprep.subr.mxu0 %v3371
      %3634 = vmatpush1.msra.mxu0 %v3370
      %3635 = vmatprep.subr.mxu0 %v3362
      %3636 = vmatpush1.msra.mxu0 %v3361
      %3637 = vmatprep.subr.mxu0 %v3353
      %3638 = vmatpush1.msra.mxu0 %v3352
      %3639 = vmatprep.subr.mxu0 0.0
      %3640 = vmatpush2.msra.mxu0 0.0
      %3641 = vmatprep.subr.mxu0 0.0
      %3642 = vmatpush2.msra.mxu0 0.0
      %3643 = vmatprep.subr.mxu0 0.0
      %3644 = vmatpush2.msra.mxu0 0.0
      %3645 = vmatprep.subr.mxu0 0.0
      %3646 = vmatpush2.msra.mxu0 0.0
      %3647 = vmatprep.subr.mxu0 0.0
      %3648 = vmatpush2.msra.mxu0 0.0
      %3649 = vmatprep.subr.mxu0 0.0
      %3650 = vmatpush2.msra.mxu0 0.0
      %3651 = vmatprep.subr.mxu0 0.0
      %3652 = vmatpush2.msra.mxu0 0.0
      %3653 = vmatprep.subr.mxu0 0.0
      %3654 = vmatpush2.msra.mxu0 0.0
      %3655 = vmatprep.subr.mxu0 0.0
      %3656 = vmatpush2.msra.mxu0 0.0
      %3657 = vmatprep.subr.mxu0 0.0
      %3658 = vmatpush2.msra.mxu0 0.0
      %3659 = vmatprep.subr.mxu0 0.0
      %3660 = vmatpush2.msra.mxu0 0.0
      %3661 = vmatprep.subr.mxu0 0.0
      %3662 = vmatpush2.msra.mxu0 0.0
      %3663 = vmatprep.subr.mxu0 0.0
      %3664 = vmatpush2.msra.mxu0 0.0
      %3665 = vmatprep.subr.mxu0 0.0
      %3666 = vmatpush2.msra.mxu0 0.0
      %3667 = vmatprep.subr.mxu0 0.0
      %3668 = vmatpush2.msra.mxu0 0.0
      %3669 = vmatprep.subr.mxu0 0.0
      %3670 = vmatpush2.msra.mxu0 0.0
      %3671 = vmatprep.mubr.f32.mxu0 0.0
      %3672 = vmatmul.mubr.f32.gmra.mxu0 %v3342
      %v3673 = vpop.f32.mrf.mxu0
      %v3674 = vadd.f32 0.0, %v3673
      %v3675 = vpop.f32.mrf.mxu0
      %v3676 = vadd.f32 0.0, %v3675
      %3677 = vmatprep.mubr.f32.mxu0 0.0
      %3678 = vmatmul.mubr.f32.gmra.mxu0 %v3343
      %v3679 = vpop.f32.mrf.mxu0
      %v3680 = vadd.f32 0.0, %v3679
      %v3681 = vpop.f32.mrf.mxu0
      %v3682 = vadd.f32 0.0, %v3681
      %3683 = vmatprep.mubr.f32.mxu0 0.0
      %3684 = vmatmul.mubr.f32.gmra.mxu0 %v3344
      %v3685 = vpop.f32.mrf.mxu0
      %v3686 = vadd.f32 0.0, %v3685
      %v3687 = vpop.f32.mrf.mxu0
      %v3688 = vadd.f32 0.0, %v3687
      %3689 = vmatprep.mubr.f32.mxu0 0.0
      %3690 = vmatmul.mubr.f32.gmra.mxu0 %v3345
      %v3691 = vpop.f32.mrf.mxu0
      %v3692 = vadd.f32 0.0, %v3691
      %v3693 = vpop.f32.mrf.mxu0
      %v3694 = vadd.f32 0.0, %v3693
      %3695 = vmatprep.mubr.f32.mxu0 0.0
      %3696 = vmatmul.mubr.f32.gmra.mxu0 %v3346
      %v3697 = vpop.f32.mrf.mxu0
      %v3698 = vadd.f32 0.0, %v3697
      %v3699 = vpop.f32.mrf.mxu0
      %v3700 = vadd.f32 0.0, %v3699
      %3701 = vmatprep.mubr.f32.mxu0 0.0
      %3702 = vmatmul.mubr.f32.gmra.mxu0 %v3347
      %v3703 = vpop.f32.mrf.mxu0
      %v3704 = vadd.f32 0.0, %v3703
      %v3705 = vpop.f32.mrf.mxu0
      %v3706 = vadd.f32 0.0, %v3705
      %3707 = vmatprep.mubr.f32.mxu0 0.0
      %3708 = vmatmul.mubr.f32.gmra.mxu0 %v3348
      %v3709 = vpop.f32.mrf.mxu0
      %v3710 = vadd.f32 0.0, %v3709
      %v3711 = vpop.f32.mrf.mxu0
      %v3712 = vadd.f32 0.0, %v3711
      %3713 = vmatprep.mubr.f32.mxu0 0.0
      %3714 = vmatmul.mubr.f32.gmra.mxu0 %v3349
      %v3715 = vpop.f32.mrf.mxu0
      %v3716 = vadd.f32 0.0, %v3715
      %v3717 = vpop.f32.mrf.mxu0
      %v3718 = vadd.f32 0.0, %v3717
      %3719 = vdwg.mxu0
      %3720 = vmatprep.subr.mxu0 %v3490
      %3721 = vmatpush1.msra.mxu0 %v3489
      %3722 = vmatprep.subr.mxu0 %v3481
      %3723 = vmatpush1.msra.mxu0 %v3480
      %3724 = vmatprep.subr.mxu0 %v3472
      %3725 = vmatpush1.msra.mxu0 %v3471
      %3726 = vmatprep.subr.mxu0 %v3463
      %3727 = vmatpush1.msra.mxu0 %v3462
      %3728 = vmatprep.subr.mxu0 %v3454
      %3729 = vmatpush1.msra.mxu0 %v3453
      %3730 = vmatprep.subr.mxu0 %v3445
      %3731 = vmatpush1.msra.mxu0 %v3444
      %3732 = vmatprep.subr.mxu0 %v3436
      %3733 = vmatpush1.msra.mxu0 %v3435
      %3734 = vmatprep.subr.mxu0 %v3427
      %3735 = vmatpush1.msra.mxu0 %v3426
      %3736 = vmatprep.subr.mxu0 %v3418
      %3737 = vmatpush1.msra.mxu0 %v3417
      %3738 = vmatprep.subr.mxu0 %v3409
      %3739 = vmatpush1.msra.mxu0 %v3408
      %3740 = vmatprep.subr.mxu0 %v3400
      %3741 = vmatpush1.msra.mxu0 %v3399
      %3742 = vmatprep.subr.mxu0 %v3391
      %3743 = vmatpush1.msra.mxu0 %v3390
      %3744 = vmatprep.subr.mxu0 %v3382
      %3745 = vmatpush1.msra.mxu0 %v3381
      %3746 = vmatprep.subr.mxu0 %v3373
      %3747 = vmatpush1.msra.mxu0 %v3372
      %3748 = vmatprep.subr.mxu0 %v3364
      %3749 = vmatpush1.msra.mxu0 %v3363
      %3750 = vmatprep.subr.mxu0 %v3355
      %3751 = vmatpush1.msra.mxu0 %v3354
      %3752 = vmatprep.subr.mxu0 0.0
      %3753 = vmatpush2.msra.mxu0 0.0
      %3754 = vmatprep.subr.mxu0 0.0
      %3755 = vmatpush2.msra.mxu0 0.0
      %3756 = vmatprep.subr.mxu0 0.0
      %3757 = vmatpush2.msra.mxu0 0.0
      %3758 = vmatprep.subr.mxu0 0.0
      %3759 = vmatpush2.msra.mxu0 0.0
      %3760 = vmatprep.subr.mxu0 0.0
      %3761 = vmatpush2.msra.mxu0 0.0
      %3762 = vmatprep.subr.mxu0 0.0
      %3763 = vmatpush2.msra.mxu0 0.0
      %3764 = vmatprep.subr.mxu0 0.0
      %3765 = vmatpush2.msra.mxu0 0.0
      %3766 = vmatprep.subr.mxu0 0.0
      %3767 = vmatpush2.msra.mxu0 0.0
      %3768 = vmatprep.subr.mxu0 0.0
      %3769 = vmatpush2.msra.mxu0 0.0
      %3770 = vmatprep.subr.mxu0 0.0
      %3771 = vmatpush2.msra.mxu0 0.0
      %3772 = vmatprep.subr.mxu0 0.0
      %3773 = vmatpush2.msra.mxu0 0.0
      %3774 = vmatprep.subr.mxu0 0.0
      %3775 = vmatpush2.msra.mxu0 0.0
      %3776 = vmatprep.subr.mxu0 0.0
      %3777 = vmatpush2.msra.mxu0 0.0
      %3778 = vmatprep.subr.mxu0 0.0
      %3779 = vmatpush2.msra.mxu0 0.0
      %3780 = vmatprep.subr.mxu0 0.0
      %3781 = vmatpush2.msra.mxu0 0.0
      %3782 = vmatprep.subr.mxu0 0.0
      %3783 = vmatpush2.msra.mxu0 0.0
      %3784 = vmatprep.mubr.f32.mxu0 0.0
      %3785 = vmatmul.mubr.f32.gmra.mxu0 %v3342
      %v3786 = vpop.f32.mrf.mxu0
      %v3787 = vadd.f32 0.0, %v3786
      %v3788 = vpop.f32.mrf.mxu0
      %v3789 = vadd.f32 0.0, %v3788
      %3790 = vmatprep.mubr.f32.mxu0 0.0
      %3791 = vmatmul.mubr.f32.gmra.mxu0 %v3343
      %v3792 = vpop.f32.mrf.mxu0
      %v3793 = vadd.f32 0.0, %v3792
      %v3794 = vpop.f32.mrf.mxu0
      %v3795 = vadd.f32 0.0, %v3794
      %3796 = vmatprep.mubr.f32.mxu0 0.0
      %3797 = vmatmul.mubr.f32.gmra.mxu0 %v3344
      %v3798 = vpop.f32.mrf.mxu0
      %v3799 = vadd.f32 0.0, %v3798
      %v3800 = vpop.f32.mrf.mxu0
      %v3801 = vadd.f32 0.0, %v3800
      %3802 = vmatprep.mubr.f32.mxu0 0.0
      %3803 = vmatmul.mubr.f32.gmra.mxu0 %v3345
      %v3804 = vpop.f32.mrf.mxu0
      %v3805 = vadd.f32 0.0, %v3804
      %v3806 = vpop.f32.mrf.mxu0
      %v3807 = vadd.f32 0.0, %v3806
      %3808 = vmatprep.mubr.f32.mxu0 0.0
      %3809 = vmatmul.mubr.f32.gmra.mxu0 %v3346
      %v3810 = vpop.f32.mrf.mxu0
      %v3811 = vadd.f32 0.0, %v3810
      %v3812 = vpop.f32.mrf.mxu0
      %v3813 = vadd.f32 0.0, %v3812
      %3814 = vmatprep.mubr.f32.mxu0 0.0
      %3815 = vmatmul.mubr.f32.gmra.mxu0 %v3347
      %v3816 = vpop.f32.mrf.mxu0
      %v3817 = vadd.f32 0.0, %v3816
      %v3818 = vpop.f32.mrf.mxu0
      %v3819 = vadd.f32 0.0, %v3818
      %3820 = vmatprep.mubr.f32.mxu0 0.0
      %3821 = vmatmul.mubr.f32.gmra.mxu0 %v3348
      %v3822 = vpop.f32.mrf.mxu0
      %v3823 = vadd.f32 0.0, %v3822
      %v3824 = vpop.f32.mrf.mxu0
      %v3825 = vadd.f32 0.0, %v3824
      %3826 = vmatprep.mubr.f32.mxu0 0.0
      %3827 = vmatmul.mubr.f32.gmra.mxu0 %v3349
      %v3828 = vpop.f32.mrf.mxu0
      %v3829 = vadd.f32 0.0, %v3828
      %v3830 = vpop.f32.mrf.mxu0
      %v3831 = vadd.f32 0.0, %v3830
      %3832 = vdwg.mxu0
      %3833 = vmatprep.subr.mxu0 %v3492
      %3834 = vmatpush1.msra.mxu0 %v3491
      %3835 = vmatprep.subr.mxu0 %v3483
      %3836 = vmatpush1.msra.mxu0 %v3482
      %3837 = vmatprep.subr.mxu0 %v3474
      %3838 = vmatpush1.msra.mxu0 %v3473
      %3839 = vmatprep.subr.mxu0 %v3465
      %3840 = vmatpush1.msra.mxu0 %v3464
      %3841 = vmatprep.subr.mxu0 %v3456
      %3842 = vmatpush1.msra.mxu0 %v3455
      %3843 = vmatprep.subr.mxu0 %v3447
      %3844 = vmatpush1.msra.mxu0 %v3446
      %3845 = vmatprep.subr.mxu0 %v3438
      %3846 = vmatpush1.msra.mxu0 %v3437
      %3847 = vmatprep.subr.mxu0 %v3429
      %3848 = vmatpush1.msra.mxu0 %v3428
      %3849 = vmatprep.subr.mxu0 %v3420
      %3850 = vmatpush1.msra.mxu0 %v3419
      %3851 = vmatprep.subr.mxu0 %v3411
      %3852 = vmatpush1.msra.mxu0 %v3410
      %3853 = vmatprep.subr.mxu0 %v3402
      %3854 = vmatpush1.msra.mxu0 %v3401
      %3855 = vmatprep.subr.mxu0 %v3393
      %3856 = vmatpush1.msra.mxu0 %v3392
      %3857 = vmatprep.subr.mxu0 %v3384
      %3858 = vmatpush1.msra.mxu0 %v3383
      %3859 = vmatprep.subr.mxu0 %v3375
      %3860 = vmatpush1.msra.mxu0 %v3374
      %3861 = vmatprep.subr.mxu0 %v3366
      %3862 = vmatpush1.msra.mxu0 %v3365
      %3863 = vmatprep.subr.mxu0 %v3357
      %3864 = vmatpush1.msra.mxu0 %v3356
      %3865 = vmatprep.subr.mxu0 0.0
      %3866 = vmatpush2.msra.mxu0 0.0
      %3867 = vmatprep.subr.mxu0 0.0
      %3868 = vmatpush2.msra.mxu0 0.0
      %3869 = vmatprep.subr.mxu0 0.0
      %3870 = vmatpush2.msra.mxu0 0.0
      %3871 = vmatprep.subr.mxu0 0.0
      %3872 = vmatpush2.msra.mxu0 0.0
      %3873 = vmatprep.subr.mxu0 0.0
      %3874 = vmatpush2.msra.mxu0 0.0
      %3875 = vmatprep.subr.mxu0 0.0
      %3876 = vmatpush2.msra.mxu0 0.0
      %3877 = vmatprep.subr.mxu0 0.0
      %3878 = vmatpush2.msra.mxu0 0.0
      %3879 = vmatprep.subr.mxu0 0.0
      %3880 = vmatpush2.msra.mxu0 0.0
      %3881 = vmatprep.subr.mxu0 0.0
      %3882 = vmatpush2.msra.mxu0 0.0
      %3883 = vmatprep.subr.mxu0 0.0
      %3884 = vmatpush2.msra.mxu0 0.0
      %3885 = vmatprep.subr.mxu0 0.0
      %3886 = vmatpush2.msra.mxu0 0.0
      %3887 = vmatprep.subr.mxu0 0.0
      %3888 = vmatpush2.msra.mxu0 0.0
      %3889 = vmatprep.subr.mxu0 0.0
      %3890 = vmatpush2.msra.mxu0 0.0
      %3891 = vmatprep.subr.mxu0 0.0
      %3892 = vmatpush2.msra.mxu0 0.0
      %3893 = vmatprep.subr.mxu0 0.0
      %3894 = vmatpush2.msra.mxu0 0.0
      %3895 = vmatprep.subr.mxu0 0.0
      %3896 = vmatpush2.msra.mxu0 0.0
      %3897 = vmatprep.mubr.f32.mxu0 0.0
      %3898 = vmatmul.mubr.f32.gmra.mxu0 %v3342
      %v3899 = vpop.f32.mrf.mxu0
      %v3900 = vadd.f32 0.0, %v3899
      %v3901 = vpop.f32.mrf.mxu0
      %v3902 = vadd.f32 0.0, %v3901
      %3903 = vmatprep.mubr.f32.mxu0 0.0
      %3904 = vmatmul.mubr.f32.gmra.mxu0 %v3343
      %v3905 = vpop.f32.mrf.mxu0
      %v3906 = vadd.f32 0.0, %v3905
      %v3907 = vpop.f32.mrf.mxu0
      %v3908 = vadd.f32 0.0, %v3907
      %3909 = vmatprep.mubr.f32.mxu0 0.0
      %3910 = vmatmul.mubr.f32.gmra.mxu0 %v3344
      %v3911 = vpop.f32.mrf.mxu0
      %v3912 = vadd.f32 0.0, %v3911
      %v3913 = vpop.f32.mrf.mxu0
      %v3914 = vadd.f32 0.0, %v3913
      %3915 = vmatprep.mubr.f32.mxu0 0.0
      %3916 = vmatmul.mubr.f32.gmra.mxu0 %v3345
      %v3917 = vpop.f32.mrf.mxu0
      %v3918 = vadd.f32 0.0, %v3917
      %v3919 = vpop.f32.mrf.mxu0
      %v3920 = vadd.f32 0.0, %v3919
      %3921 = vmatprep.mubr.f32.mxu0 0.0
      %3922 = vmatmul.mubr.f32.gmra.mxu0 %v3346
      %v3923 = vpop.f32.mrf.mxu0
      %v3924 = vadd.f32 0.0, %v3923
      %v3925 = vpop.f32.mrf.mxu0
      %v3926 = vadd.f32 0.0, %v3925
      %3927 = vmatprep.mubr.f32.mxu0 0.0
      %3928 = vmatmul.mubr.f32.gmra.mxu0 %v3347
      %v3929 = vpop.f32.mrf.mxu0
      %v3930 = vadd.f32 0.0, %v3929
      %v3931 = vpop.f32.mrf.mxu0
      %v3932 = vadd.f32 0.0, %v3931
      %3933 = vmatprep.mubr.f32.mxu0 0.0
      %3934 = vmatmul.mubr.f32.gmra.mxu0 %v3348
      %v3935 = vpop.f32.mrf.mxu0
      %v3936 = vadd.f32 0.0, %v3935
      %v3937 = vpop.f32.mrf.mxu0
      %v3938 = vadd.f32 0.0, %v3937
      %3939 = vmatprep.mubr.f32.mxu0 0.0
      %3940 = vmatmul.mubr.f32.gmra.mxu0 %v3349
      %v3941 = vpop.f32.mrf.mxu0
      %v3942 = vadd.f32 0.0, %v3941
      %v3943 = vpop.f32.mrf.mxu0
      %v3944 = vadd.f32 0.0, %v3943
      %3945 = vdwg.mxu0
      %3946 = vmatprep.subr.mxu0 0.0
      %3947 = vmatpush1.msra.mxu0 %v3493
      %3948 = vmatprep.subr.mxu0 0.0
      %3949 = vmatpush1.msra.mxu0 %v3484
      %3950 = vmatprep.subr.mxu0 0.0
      %3951 = vmatpush1.msra.mxu0 %v3475
      %3952 = vmatprep.subr.mxu0 0.0
      %3953 = vmatpush1.msra.mxu0 %v3466
      %3954 = vmatprep.subr.mxu0 0.0
      %3955 = vmatpush1.msra.mxu0 %v3457
      %3956 = vmatprep.subr.mxu0 0.0
      %3957 = vmatpush1.msra.mxu0 %v3448
      %3958 = vmatprep.subr.mxu0 0.0
      %3959 = vmatpush1.msra.mxu0 %v3439
      %3960 = vmatprep.subr.mxu0 0.0
      %3961 = vmatpush1.msra.mxu0 %v3430
      %3962 = vmatprep.subr.mxu0 0.0
      %3963 = vmatpush1.msra.mxu0 %v3421
      %3964 = vmatprep.subr.mxu0 0.0
      %3965 = vmatpush1.msra.mxu0 %v3412
      %3966 = vmatprep.subr.mxu0 0.0
      %3967 = vmatpush1.msra.mxu0 %v3403
      %3968 = vmatprep.subr.mxu0 0.0
      %3969 = vmatpush1.msra.mxu0 %v3394
      %3970 = vmatprep.subr.mxu0 0.0
      %3971 = vmatpush1.msra.mxu0 %v3385
      %3972 = vmatprep.subr.mxu0 0.0
      %3973 = vmatpush1.msra.mxu0 %v3376
      %3974 = vmatprep.subr.mxu0 0.0
      %3975 = vmatpush1.msra.mxu0 %v3367
      %3976 = vmatprep.subr.mxu0 0.0
      %3977 = vmatpush1.msra.mxu0 %v3358
      %3978 = vmatprep.subr.mxu0 0.0
      %3979 = vmatpush2.msra.mxu0 0.0
      %3980 = vmatprep.subr.mxu0 0.0
      %3981 = vmatpush2.msra.mxu0 0.0
      %3982 = vmatprep.subr.mxu0 0.0
      %3983 = vmatpush2.msra.mxu0 0.0
      %3984 = vmatprep.subr.mxu0 0.0
      %3985 = vmatpush2.msra.mxu0 0.0
      %3986 = vmatprep.subr.mxu0 0.0
      %3987 = vmatpush2.msra.mxu0 0.0
      %3988 = vmatprep.subr.mxu0 0.0
      %3989 = vmatpush2.msra.mxu0 0.0
      %3990 = vmatprep.subr.mxu0 0.0
      %3991 = vmatpush2.msra.mxu0 0.0
      %3992 = vmatprep.subr.mxu0 0.0
      %3993 = vmatpush2.msra.mxu0 0.0
      %3994 = vmatprep.subr.mxu0 0.0
      %3995 = vmatpush2.msra.mxu0 0.0
      %3996 = vmatprep.subr.mxu0 0.0
      %3997 = vmatpush2.msra.mxu0 0.0
      %3998 = vmatprep.subr.mxu0 0.0
      %3999 = vmatpush2.msra.mxu0 0.0
      %4000 = vmatprep.subr.mxu0 0.0
      %4001 = vmatpush2.msra.mxu0 0.0
      %4002 = vmatprep.subr.mxu0 0.0
      %4003 = vmatpush2.msra.mxu0 0.0
      %4004 = vmatprep.subr.mxu0 0.0
      %4005 = vmatpush2.msra.mxu0 0.0
      %4006 = vmatprep.subr.mxu0 0.0
      %4007 = vmatpush2.msra.mxu0 0.0
      %4008 = vmatprep.subr.mxu0 0.0
      %4009 = vmatpush2.msra.mxu0 0.0
      %4010 = vmatprep.mubr.f32.mxu0 0.0
      %4011 = vmatmul.mubr.f32.gmra.mxu0 %v3342
      %v4012 = vpop.f32.mrf.mxu0
      %v4013 = vadd.f32 0.0, %v4012
      %v4014 = vpop.f32.mrf.mxu0
      %4015 = vmatprep.mubr.f32.mxu0 0.0
      %4016 = vmatmul.mubr.f32.gmra.mxu0 %v3343
      %v4017 = vpop.f32.mrf.mxu0
      %v4018 = vadd.f32 0.0, %v4017
      %v4019 = vpop.f32.mrf.mxu0
      %4020 = vmatprep.mubr.f32.mxu0 0.0
      %4021 = vmatmul.mubr.f32.gmra.mxu0 %v3344
      %v4022 = vpop.f32.mrf.mxu0
      %v4023 = vadd.f32 0.0, %v4022
      %v4024 = vpop.f32.mrf.mxu0
      %4025 = vmatprep.mubr.f32.mxu0 0.0
      %4026 = vmatmul.mubr.f32.gmra.mxu0 %v3345
      %v4027 = vpop.f32.mrf.mxu0
      %v4028 = vadd.f32 0.0, %v4027
      %v4029 = vpop.f32.mrf.mxu0
      %4030 = vmatprep.mubr.f32.mxu0 0.0
      %4031 = vmatmul.mubr.f32.gmra.mxu0 %v3346
      %v4032 = vpop.f32.mrf.mxu0
      %v4033 = vadd.f32 0.0, %v4032
      %v4034 = vpop.f32.mrf.mxu0
      %4035 = vmatprep.mubr.f32.mxu0 0.0
      %4036 = vmatmul.mubr.f32.gmra.mxu0 %v3347
      %v4037 = vpop.f32.mrf.mxu0
      %v4038 = vadd.f32 0.0, %v4037
      %v4039 = vpop.f32.mrf.mxu0
      %4040 = vmatprep.mubr.f32.mxu0 0.0
      %4041 = vmatmul.mubr.f32.gmra.mxu0 %v3348
      %v4042 = vpop.f32.mrf.mxu0
      %v4043 = vadd.f32 0.0, %v4042
      %v4044 = vpop.f32.mrf.mxu0
      %4045 = vmatprep.mubr.f32.mxu0 0.0
      %4046 = vmatmul.mubr.f32.gmra.mxu0 %v3349
      %v4047 = vpop.f32.mrf.mxu0
      %v4048 = vadd.f32 0.0, %v4047
      %v4049 = vpop.f32.mrf.mxu0
      %4050 = vdwg.mxu0
      %4051 = vst [vmem:[#allocation3] sm:$0xff] %v3561
      %4052 = vst [vmem:[#allocation3 + $0x8] sm:$0xff] %v3567
      %4053 = vst [vmem:[#allocation3 + $0x10] sm:$0xff] %v3573
      %4054 = vst [vmem:[#allocation3 + $0x18] sm:$0xff] %v3579
      %4055 = vst [vmem:[#allocation3 + $0x20] sm:$0xff] %v3585
      %4056 = vst [vmem:[#allocation3 + $0x28] sm:$0xff] %v3591
      %4057 = vst [vmem:[#allocation3 + $0x30] sm:$0xff] %v3597
      %4058 = vst [vmem:[#allocation3 + $0x38] sm:$0xff] %v3603
      %4059 = vst [vmem:[#allocation3 + $0x40] sm:$0xff] %v3563
      %4060 = vst [vmem:[#allocation3 + $0x48] sm:$0xff] %v3569
      %4061 = vst [vmem:[#allocation3 + $0x50] sm:$0xff] %v3575
      %4062 = vst [vmem:[#allocation3 + $0x58] sm:$0xff] %v3581
      %4063 = vst [vmem:[#allocation3 + $0x60] sm:$0xff] %v3587
      %4064 = vst [vmem:[#allocation3 + $0x68] sm:$0xff] %v3593
      %4065 = vst [vmem:[#allocation3 + $0x70] sm:$0xff] %v3599
      %4066 = vst [vmem:[#allocation3 + $0x78] sm:$0xff] %v3605
      %4067 = vst [vmem:[#allocation3 + $0x80] sm:$0xff] %v3674
      %4068 = vst [vmem:[#allocation3 + $0x88] sm:$0xff] %v3680
      %4069 = vst [vmem:[#allocation3 + $0x90] sm:$0xff] %v3686
      %4070 = vst [vmem:[#allocation3 + $0x98] sm:$0xff] %v3692
      %4071 = vst [vmem:[#allocation3 + $0xa0] sm:$0xff] %v3698
      %4072 = vst [vmem:[#allocation3 + $0xa8] sm:$0xff] %v3704
      %4073 = vst [vmem:[#allocation3 + $0xb0] sm:$0xff] %v3710
      %4074 = vst [vmem:[#allocation3 + $0xb8] sm:$0xff] %v3716
      %4075 = vst [vmem:[#allocation3 + $0xc0] sm:$0xff] %v3676
      %4076 = vst [vmem:[#allocation3 + $0xc8] sm:$0xff] %v3682
      %4077 = vst [vmem:[#allocation3 + $0xd0] sm:$0xff] %v3688
      %4078 = vst [vmem:[#allocation3 + $0xd8] sm:$0xff] %v3694
      %4079 = vst [vmem:[#allocation3 + $0xe0] sm:$0xff] %v3700
      %4080 = vst [vmem:[#allocation3 + $0xe8] sm:$0xff] %v3706
      %4081 = vst [vmem:[#allocation3 + $0xf0] sm:$0xff] %v3712
      %4082 = vst [vmem:[#allocation3 + $0xf8] sm:$0xff] %v3718
      %4083 = vst [vmem:[#allocation3 + $0x100] sm:$0xff] %v3787
      %4084 = vst [vmem:[#allocation3 + $0x108] sm:$0xff] %v3793
      %4085 = vst [vmem:[#allocation3 + $0x110] sm:$0xff] %v3799
      %4086 = vst [vmem:[#allocation3 + $0x118] sm:$0xff] %v3805
      %4087 = vst [vmem:[#allocation3 + $0x120] sm:$0xff] %v3811
      %4088 = vst [vmem:[#allocation3 + $0x128] sm:$0xff] %v3817
      %4089 = vst [vmem:[#allocation3 + $0x130] sm:$0xff] %v3823
      %4090 = vst [vmem:[#allocation3 + $0x138] sm:$0xff] %v3829
      %4091 = vst [vmem:[#allocation3 + $0x140] sm:$0xff] %v3789
      %4092 = vst [vmem:[#allocation3 + $0x148] sm:$0xff] %v3795
      %4093 = vst [vmem:[#allocation3 + $0x150] sm:$0xff] %v3801
      %4094 = vst [vmem:[#allocation3 + $0x158] sm:$0xff] %v3807
      %4095 = vst [vmem:[#allocation3 + $0x160] sm:$0xff] %v3813
      %4096 = vst [vmem:[#allocation3 + $0x168] sm:$0xff] %v3819
      %4097 = vst [vmem:[#allocation3 + $0x170] sm:$0xff] %v3825
      %4098 = vst [vmem:[#allocation3 + $0x178] sm:$0xff] %v3831
      %4099 = vst [vmem:[#allocation3 + $0x180] sm:$0xff] %v3900
      %4100 = vst [vmem:[#allocation3 + $0x188] sm:$0xff] %v3906
      %4101 = vst [vmem:[#allocation3 + $0x190] sm:$0xff] %v3912
      %4102 = vst [vmem:[#allocation3 + $0x198] sm:$0xff] %v3918
      %4103 = vst [vmem:[#allocation3 + $0x1a0] sm:$0xff] %v3924
      %4104 = vst [vmem:[#allocation3 + $0x1a8] sm:$0xff] %v3930
      %4105 = vst [vmem:[#allocation3 + $0x1b0] sm:$0xff] %v3936
      %4106 = vst [vmem:[#allocation3 + $0x1b8] sm:$0xff] %v3942
      %4107 = vst [vmem:[#allocation3 + $0x1c0] sm:$0xff] %v3902
      %4108 = vst [vmem:[#allocation3 + $0x1c8] sm:$0xff] %v3908
      %4109 = vst [vmem:[#allocation3 + $0x1d0] sm:$0xff] %v3914
      %4110 = vst [vmem:[#allocation3 + $0x1d8] sm:$0xff] %v3920
      %4111 = vst [vmem:[#allocation3 + $0x1e0] sm:$0xff] %v3926
      %4112 = vst [vmem:[#allocation3 + $0x1e8] sm:$0xff] %v3932
      %4113 = vst [vmem:[#allocation3 + $0x1f0] sm:$0xff] %v3938
      %4114 = vst [vmem:[#allocation3 + $0x1f8] sm:$0xff] %v3944
      %4115 = vst [vmem:[#allocation3 + $0x200] sm:$0xff] %v4013
      %4116 = vst [vmem:[#allocation3 + $0x208] sm:$0xff] %v4018
      %4117 = vst [vmem:[#allocation3 + $0x210] sm:$0xff] %v4023
      %4118 = vst [vmem:[#allocation3 + $0x218] sm:$0xff] %v4028
      %4119 = vst [vmem:[#allocation3 + $0x220] sm:$0xff] %v4033
      %4120 = vst [vmem:[#allocation3 + $0x228] sm:$0xff] %v4038
      %4121 = vst [vmem:[#allocation3 + $0x230] sm:$0xff] %v4043
      %4122 = vst [vmem:[#allocation3 + $0x238] sm:$0xff] %v4048
      %v4123 = vld [vmem:[%s7] sm:$0xff]
      %v4124 = vld [vmem:[%s7 + $0x8] sm:$0xff]
      %v4125 = vld [vmem:[%s7 + $0x10] sm:$0xff]
      %v4126 = vld [vmem:[%s7 + $0x18] sm:$0xff]
      %v4127 = vld [vmem:[%s7 + $0x20] sm:$0xff]
      %v4128 = vld [vmem:[%s7 + $0x28] sm:$0xff]
      %v4129 = vld [vmem:[%s7 + $0x30] sm:$0xff]
      %v4130 = vld [vmem:[%s7 + $0x38] sm:$0xff]
      %v4131 = vld [vmem:[%s7 + $0x40] sm:$0xff]
      %v4132 = vld [vmem:[%s7 + $0x48] sm:$0xff]
      %v4133 = vld [vmem:[%s7 + $0x50] sm:$0xff]
      %v4134 = vld [vmem:[%s7 + $0x58] sm:$0xff]
      %v4135 = vld [vmem:[%s7 + $0x60] sm:$0xff]
      %v4136 = vld [vmem:[%s7 + $0x68] sm:$0xff]
      %v4137 = vld [vmem:[%s7 + $0x70] sm:$0xff]
      %v4138 = vld [vmem:[%s7 + $0x78] sm:$0xff]
      %v4139 = vld [vmem:[%s7 + $0x80] sm:$0xff]
      %v4140 = vld [vmem:[%s7 + $0x88] sm:$0xff]
      %v4141 = vld [vmem:[%s7 + $0x90] sm:$0xff]
      %v4142 = vld [vmem:[%s7 + $0x98] sm:$0xff]
      %v4143 = vld [vmem:[%s7 + $0xa0] sm:$0xff]
      %v4144 = vld [vmem:[%s7 + $0xa8] sm:$0xff]
      %v4145 = vld [vmem:[%s7 + $0xb0] sm:$0xff]
      %v4146 = vld [vmem:[%s7 + $0xb8] sm:$0xff]
      %v4147 = vld [vmem:[%s7 + $0xc0] sm:$0xff]
      %v4148 = vld [vmem:[%s7 + $0xc8] sm:$0xff]
      %v4149 = vld [vmem:[%s7 + $0xd0] sm:$0xff]
      %v4150 = vld [vmem:[%s7 + $0xd8] sm:$0xff]
      %v4151 = vld [vmem:[%s7 + $0xe0] sm:$0xff]
      %v4152 = vld [vmem:[%s7 + $0xe8] sm:$0xff]
      %v4153 = vld [vmem:[%s7 + $0xf0] sm:$0xff]
      %v4154 = vld [vmem:[%s7 + $0xf8] sm:$0xff]
      %v4155 = vld [vmem:[%s7 + $0x100] sm:$0xff]
      %v4156 = vld [vmem:[%s7 + $0x108] sm:$0xff]
      %v4157 = vld [vmem:[%s7 + $0x110] sm:$0xff]
      %v4158 = vld [vmem:[%s7 + $0x118] sm:$0xff]
      %v4159 = vld [vmem:[%s7 + $0x120] sm:$0xff]
      %v4160 = vld [vmem:[%s7 + $0x128] sm:$0xff]
      %v4161 = vld [vmem:[%s7 + $0x130] sm:$0xff]
      %v4162 = vld [vmem:[%s7 + $0x138] sm:$0xff]
      %v4163 = vld [vmem:[#allocation3] sm:$0xff]
      %v4164 = vld [vmem:[#allocation3 + $0x8] sm:$0xff]
      %v4165 = vld [vmem:[#allocation3 + $0x10] sm:$0xff]
      %v4166 = vld [vmem:[#allocation3 + $0x18] sm:$0xff]
      %v4167 = vld [vmem:[#allocation3 + $0x20] sm:$0xff]
      %v4168 = vld [vmem:[#allocation3 + $0x28] sm:$0xff]
      %v4169 = vld [vmem:[#allocation3 + $0x30] sm:$0xff]
      %v4170 = vld [vmem:[#allocation3 + $0x38] sm:$0xff]
      %v4171 = vld [vmem:[#allocation3 + $0x40] sm:$0xff]
      %v4172 = vld [vmem:[#allocation3 + $0x48] sm:$0xff]
      %v4173 = vld [vmem:[#allocation3 + $0x50] sm:$0xff]
      %v4174 = vld [vmem:[#allocation3 + $0x58] sm:$0xff]
      %v4175 = vld [vmem:[#allocation3 + $0x60] sm:$0xff]
      %v4176 = vld [vmem:[#allocation3 + $0x68] sm:$0xff]
      %v4177 = vld [vmem:[#allocation3 + $0x70] sm:$0xff]
      %v4178 = vld [vmem:[#allocation3 + $0x78] sm:$0xff]
      %v4179 = vld [vmem:[#allocation3 + $0x80] sm:$0xff]
      %v4180 = vld [vmem:[#allocation3 + $0x88] sm:$0xff]
      %v4181 = vld [vmem:[#allocation3 + $0x90] sm:$0xff]
      %v4182 = vld [vmem:[#allocation3 + $0x98] sm:$0xff]
      %v4183 = vld [vmem:[#allocation3 + $0xa0] sm:$0xff]
      %v4184 = vld [vmem:[#allocation3 + $0xa8] sm:$0xff]
      %v4185 = vld [vmem:[#allocation3 + $0xb0] sm:$0xff]
      %v4186 = vld [vmem:[#allocation3 + $0xb8] sm:$0xff]
      %v4187 = vld [vmem:[#allocation3 + $0xc0] sm:$0xff]
      %v4188 = vld [vmem:[#allocation3 + $0xc8] sm:$0xff]
      %v4189 = vld [vmem:[#allocation3 + $0xd0] sm:$0xff]
      %v4190 = vld [vmem:[#allocation3 + $0xd8] sm:$0xff]
      %v4191 = vld [vmem:[#allocation3 + $0xe0] sm:$0xff]
      %v4192 = vld [vmem:[#allocation3 + $0xe8] sm:$0xff]
      %v4193 = vld [vmem:[#allocation3 + $0xf0] sm:$0xff]
      %v4194 = vld [vmem:[#allocation3 + $0xf8] sm:$0xff]
      %v4195 = vld [vmem:[#allocation3 + $0x100] sm:$0xff]
      %v4196 = vld [vmem:[#allocation3 + $0x108] sm:$0xff]
      %v4197 = vld [vmem:[#allocation3 + $0x110] sm:$0xff]
      %v4198 = vld [vmem:[#allocation3 + $0x118] sm:$0xff]
      %v4199 = vld [vmem:[#allocation3 + $0x120] sm:$0xff]
      %v4200 = vld [vmem:[#allocation3 + $0x128] sm:$0xff]
      %v4201 = vld [vmem:[#allocation3 + $0x130] sm:$0xff]
      %v4202 = vld [vmem:[#allocation3 + $0x138] sm:$0xff]
      %v4203 = vld [vmem:[#allocation3 + $0x140] sm:$0xff]
      %v4204 = vld [vmem:[#allocation3 + $0x148] sm:$0xff]
      %v4205 = vld [vmem:[#allocation3 + $0x150] sm:$0xff]
      %v4206 = vld [vmem:[#allocation3 + $0x158] sm:$0xff]
      %v4207 = vld [vmem:[#allocation3 + $0x160] sm:$0xff]
      %v4208 = vld [vmem:[#allocation3 + $0x168] sm:$0xff]
      %v4209 = vld [vmem:[#allocation3 + $0x170] sm:$0xff]
      %v4210 = vld [vmem:[#allocation3 + $0x178] sm:$0xff]
      %v4211 = vld [vmem:[#allocation3 + $0x180] sm:$0xff]
      %v4212 = vld [vmem:[#allocation3 + $0x188] sm:$0xff]
      %v4213 = vld [vmem:[#allocation3 + $0x190] sm:$0xff]
      %v4214 = vld [vmem:[#allocation3 + $0x198] sm:$0xff]
      %v4215 = vld [vmem:[#allocation3 + $0x1a0] sm:$0xff]
      %v4216 = vld [vmem:[#allocation3 + $0x1a8] sm:$0xff]
      %v4217 = vld [vmem:[#allocation3 + $0x1b0] sm:$0xff]
      %v4218 = vld [vmem:[#allocation3 + $0x1b8] sm:$0xff]
      %v4219 = vld [vmem:[#allocation3 + $0x1c0] sm:$0xff]
      %v4220 = vld [vmem:[#allocation3 + $0x1c8] sm:$0xff]
      %v4221 = vld [vmem:[#allocation3 + $0x1d0] sm:$0xff]
      %v4222 = vld [vmem:[#allocation3 + $0x1d8] sm:$0xff]
      %v4223 = vld [vmem:[#allocation3 + $0x1e0] sm:$0xff]
      %v4224 = vld [vmem:[#allocation3 + $0x1e8] sm:$0xff]
      %v4225 = vld [vmem:[#allocation3 + $0x1f0] sm:$0xff]
      %v4226 = vld [vmem:[#allocation3 + $0x1f8] sm:$0xff]
      %v4227 = vld [vmem:[#allocation3 + $0x200] sm:$0xff]
      %v4228 = vld [vmem:[#allocation3 + $0x208] sm:$0xff]
      %v4229 = vld [vmem:[#allocation3 + $0x210] sm:$0xff]
      %v4230 = vld [vmem:[#allocation3 + $0x218] sm:$0xff]
      %v4231 = vld [vmem:[#allocation3 + $0x220] sm:$0xff]
      %v4232 = vld [vmem:[#allocation3 + $0x228] sm:$0xff]
      %v4233 = vld [vmem:[#allocation3 + $0x230] sm:$0xff]
      %v4234 = vld [vmem:[#allocation3 + $0x238] sm:$0xff]
      %v4235 = vld [vmem:[%s8] sm:$0xff]
      %v4236 = vld [vmem:[%s8 + $0x8] sm:$0xff]
      %v4237 = vld [vmem:[%s8 + $0x10] sm:$0xff]
      %v4238 = vld [vmem:[%s8 + $0x18] sm:$0xff]
      %v4239 = vld [vmem:[%s8 + $0x20] sm:$0xff]
      %v4240 = vld [vmem:[%s8 + $0x28] sm:$0xff]
      %v4241 = vld [vmem:[%s8 + $0x30] sm:$0xff]
      %v4242 = vld [vmem:[%s8 + $0x38] sm:$0xff]
      %4244 = vset.pattern.permute.xlu0 0
      %4245 = vperm.xlu0 %4244, %v4235
      %v4246 = vpop.permute.xlu0 %4245
      %4249 = vset.pattern.permute.xlu0 0
      %4250 = vperm.xlu0 %4249, %v4236
      %v4251 = vpop.permute.xlu0 %4250
      %4254 = vset.pattern.permute.xlu0 0
      %4255 = vperm.xlu0 %4254, %v4237
      %v4256 = vpop.permute.xlu0 %4255
      %4259 = vset.pattern.permute.xlu0 0
      %4260 = vperm.xlu0 %4259, %v4238
      %v4261 = vpop.permute.xlu0 %4260
      %4264 = vset.pattern.permute.xlu0 0
      %4265 = vperm.xlu0 %4264, %v4239
      %v4266 = vpop.permute.xlu0 %4265
      %4269 = vset.pattern.permute.xlu0 0
      %4270 = vperm.xlu0 %4269, %v4240
      %v4271 = vpop.permute.xlu0 %4270
      %4274 = vset.pattern.permute.xlu0 0
      %4275 = vperm.xlu0 %4274, %v4241
      %v4276 = vpop.permute.xlu0 %4275
      %4279 = vset.pattern.permute.xlu0 0
      %4280 = vperm.xlu0 %4279, %v4242
      %v4281 = vpop.permute.xlu0 %4280
      %vm4283 = vcmask 523264
      %v4285 = vsel %vm4283, %v4127, 0
      %v4288 = vsel %vm4283, %v4132, 0
      %v4291 = vsel %vm4283, %v4137, 0
      %v4294 = vsel %vm4283, %v4142, 0
      %v4297 = vsel %vm4283, %v4147, 0
      %v4300 = vsel %vm4283, %v4152, 0
      %v4303 = vsel %vm4283, %v4157, 0
      %v4306 = vsel %vm4283, %v4162, 0
      %4308 = vmatprep.subr.mxu0 0.0
      %4309 = vmatpush1.msra.mxu0 %v4178
      %4310 = vmatprep.subr.mxu0 0.0
      %4311 = vmatpush1.msra.mxu0 %v4177
      %4312 = vmatprep.subr.mxu0 0.0
      %4313 = vmatpush1.msra.mxu0 %v4176
      %4314 = vmatprep.subr.mxu0 0.0
      %4315 = vmatpush1.msra.mxu0 %v4175
      %4316 = vmatprep.subr.mxu0 0.0
      %4317 = vmatpush1.msra.mxu0 %v4174
      %4318 = vmatprep.subr.mxu0 0.0
      %4319 = vmatpush1.msra.mxu0 %v4173
      %4320 = vmatprep.subr.mxu0 0.0
      %4321 = vmatpush1.msra.mxu0 %v4172
      %4322 = vmatprep.subr.mxu0 0.0
      %4323 = vmatpush1.msra.mxu0 %v4171
      %4324 = vmatprep.subr.mxu0 0.0
      %4325 = vmatpush1.msra.mxu0 %v4170
      %4326 = vmatprep.subr.mxu0 0.0
      %4327 = vmatpush1.msra.mxu0 %v4169
      %4328 = vmatprep.subr.mxu0 0.0
      %4329 = vmatpush1.msra.mxu0 %v4168
      %4330 = vmatprep.subr.mxu0 0.0
      %4331 = vmatpush1.msra.mxu0 %v4167
      %4332 = vmatprep.subr.mxu0 0.0
      %4333 = vmatpush1.msra.mxu0 %v4166
      %4334 = vmatprep.subr.mxu0 0.0
      %4335 = vmatpush1.msra.mxu0 %v4165
      %4336 = vmatprep.subr.mxu0 0.0
      %4337 = vmatpush1.msra.mxu0 %v4164
      %4338 = vmatprep.subr.mxu0 0.0
      %4339 = vmatpush1.msra.mxu0 %v4163
      %4340 = vmatprep.subr.mxu0 0.0
      %4341 = vmatpush2.msra.mxu0 %v4194
      %4342 = vmatprep.subr.mxu0 0.0
      %4343 = vmatpush2.msra.mxu0 %v4193
      %4344 = vmatprep.subr.mxu0 0.0
      %4345 = vmatpush2.msra.mxu0 %v4192
      %4346 = vmatprep.subr.mxu0 0.0
      %4347 = vmatpush2.msra.mxu0 %v4191
      %4348 = vmatprep.subr.mxu0 0.0
      %4349 = vmatpush2.msra.mxu0 %v4190
      %4350 = vmatprep.subr.mxu0 0.0
      %4351 = vmatpush2.msra.mxu0 %v4189
      %4352 = vmatprep.subr.mxu0 0.0
      %4353 = vmatpush2.msra.mxu0 %v4188
      %4354 = vmatprep.subr.mxu0 0.0
      %4355 = vmatpush2.msra.mxu0 %v4187
      %4356 = vmatprep.subr.mxu0 0.0
      %4357 = vmatpush2.msra.mxu0 %v4186
      %4358 = vmatprep.subr.mxu0 0.0
      %4359 = vmatpush2.msra.mxu0 %v4185
      %4360 = vmatprep.subr.mxu0 0.0
      %4361 = vmatpush2.msra.mxu0 %v4184
      %4362 = vmatprep.subr.mxu0 0.0
      %4363 = vmatpush2.msra.mxu0 %v4183
      %4364 = vmatprep.subr.mxu0 0.0
      %4365 = vmatpush2.msra.mxu0 %v4182
      %4366 = vmatprep.subr.mxu0 0.0
      %4367 = vmatpush2.msra.mxu0 %v4181
      %4368 = vmatprep.subr.mxu0 0.0
      %4369 = vmatpush2.msra.mxu0 %v4180
      %4370 = vmatprep.subr.mxu0 0.0
      %4371 = vmatpush2.msra.mxu0 %v4179
      %4372 = vmatprep.mubr.f32.mxu0 %v4124
      %4373 = vmatmul.mubr.f32.gmra.mxu0 %v4123
      %v4374 = vpop.f32.mrf.mxu0
      %v4375 = vadd.f32 %v4246, %v4374
      %v4376 = vpop.f32.mrf.mxu0
      %4377 = vmatprep.mubr.f32.mxu0 %v4129
      %4378 = vmatmul.mubr.f32.gmra.mxu0 %v4128
      %v4379 = vpop.f32.mrf.mxu0
      %v4380 = vadd.f32 %v4251, %v4379
      %v4381 = vpop.f32.mrf.mxu0
      %4382 = vmatprep.mubr.f32.mxu0 %v4134
      %4383 = vmatmul.mubr.f32.gmra.mxu0 %v4133
      %v4384 = vpop.f32.mrf.mxu0
      %v4385 = vadd.f32 %v4256, %v4384
      %v4386 = vpop.f32.mrf.mxu0
      %4387 = vmatprep.mubr.f32.mxu0 %v4139
      %4388 = vmatmul.mubr.f32.gmra.mxu0 %v4138
      %v4389 = vpop.f32.mrf.mxu0
      %v4390 = vadd.f32 %v4261, %v4389
      %v4391 = vpop.f32.mrf.mxu0
      %4392 = vmatprep.mubr.f32.mxu0 %v4144
      %4393 = vmatmul.mubr.f32.gmra.mxu0 %v4143
      %v4394 = vpop.f32.mrf.mxu0
      %v4395 = vadd.f32 %v4266, %v4394
      %v4396 = vpop.f32.mrf.mxu0
      %4397 = vmatprep.mubr.f32.mxu0 %v4149
      %4398 = vmatmul.mubr.f32.gmra.mxu0 %v4148
      %v4399 = vpop.f32.mrf.mxu0
      %v4400 = vadd.f32 %v4271, %v4399
      %v4401 = vpop.f32.mrf.mxu0
      %4402 = vmatprep.mubr.f32.mxu0 %v4154
      %4403 = vmatmul.mubr.f32.gmra.mxu0 %v4153
      %v4404 = vpop.f32.mrf.mxu0
      %v4405 = vadd.f32 %v4276, %v4404
      %v4406 = vpop.f32.mrf.mxu0
      %4407 = vmatprep.mubr.f32.mxu0 %v4159
      %4408 = vmatmul.mubr.f32.gmra.mxu0 %v4158
      %v4409 = vpop.f32.mrf.mxu0
      %v4410 = vadd.f32 %v4281, %v4409
      %v4411 = vpop.f32.mrf.mxu0
      %4412 = vdwg.mxu0
      %4413 = vmatprep.subr.mxu0 0.0
      %4414 = vmatpush1.msra.mxu0 %v4210
      %4415 = vmatprep.subr.mxu0 0.0
      %4416 = vmatpush1.msra.mxu0 %v4209
      %4417 = vmatprep.subr.mxu0 0.0
      %4418 = vmatpush1.msra.mxu0 %v4208
      %4419 = vmatprep.subr.mxu0 0.0
      %4420 = vmatpush1.msra.mxu0 %v4207
      %4421 = vmatprep.subr.mxu0 0.0
      %4422 = vmatpush1.msra.mxu0 %v4206
      %4423 = vmatprep.subr.mxu0 0.0
      %4424 = vmatpush1.msra.mxu0 %v4205
      %4425 = vmatprep.subr.mxu0 0.0
      %4426 = vmatpush1.msra.mxu0 %v4204
      %4427 = vmatprep.subr.mxu0 0.0
      %4428 = vmatpush1.msra.mxu0 %v4203
      %4429 = vmatprep.subr.mxu0 0.0
      %4430 = vmatpush1.msra.mxu0 %v4202
      %4431 = vmatprep.subr.mxu0 0.0
      %4432 = vmatpush1.msra.mxu0 %v4201
      %4433 = vmatprep.subr.mxu0 0.0
      %4434 = vmatpush1.msra.mxu0 %v4200
      %4435 = vmatprep.subr.mxu0 0.0
      %4436 = vmatpush1.msra.mxu0 %v4199
      %4437 = vmatprep.subr.mxu0 0.0
      %4438 = vmatpush1.msra.mxu0 %v4198
      %4439 = vmatprep.subr.mxu0 0.0
      %4440 = vmatpush1.msra.mxu0 %v4197
      %4441 = vmatprep.subr.mxu0 0.0
      %4442 = vmatpush1.msra.mxu0 %v4196
      %4443 = vmatprep.subr.mxu0 0.0
      %4444 = vmatpush1.msra.mxu0 %v4195
      %4445 = vmatprep.subr.mxu0 0.0
      %4446 = vmatpush2.msra.mxu0 %v4226
      %4447 = vmatprep.subr.mxu0 0.0
      %4448 = vmatpush2.msra.mxu0 %v4225
      %4449 = vmatprep.subr.mxu0 0.0
      %4450 = vmatpush2.msra.mxu0 %v4224
      %4451 = vmatprep.subr.mxu0 0.0
      %4452 = vmatpush2.msra.mxu0 %v4223
      %4453 = vmatprep.subr.mxu0 0.0
      %4454 = vmatpush2.msra.mxu0 %v4222
      %4455 = vmatprep.subr.mxu0 0.0
      %4456 = vmatpush2.msra.mxu0 %v4221
      %4457 = vmatprep.subr.mxu0 0.0
      %4458 = vmatpush2.msra.mxu0 %v4220
      %4459 = vmatprep.subr.mxu0 0.0
      %4460 = vmatpush2.msra.mxu0 %v4219
      %4461 = vmatprep.subr.mxu0 0.0
      %4462 = vmatpush2.msra.mxu0 %v4218
      %4463 = vmatprep.subr.mxu0 0.0
      %4464 = vmatpush2.msra.mxu0 %v4217
      %4465 = vmatprep.subr.mxu0 0.0
      %4466 = vmatpush2.msra.mxu0 %v4216
      %4467 = vmatprep.subr.mxu0 0.0
      %4468 = vmatpush2.msra.mxu0 %v4215
      %4469 = vmatprep.subr.mxu0 0.0
      %4470 = vmatpush2.msra.mxu0 %v4214
      %4471 = vmatprep.subr.mxu0 0.0
      %4472 = vmatpush2.msra.mxu0 %v4213
      %4473 = vmatprep.subr.mxu0 0.0
      %4474 = vmatpush2.msra.mxu0 %v4212
      %4475 = vmatprep.subr.mxu0 0.0
      %4476 = vmatpush2.msra.mxu0 %v4211
      %4477 = vmatprep.mubr.f32.mxu0 %v4126
      %4478 = vmatmul.mubr.f32.gmra.mxu0 %v4125
      %v4479 = vpop.f32.mrf.mxu0
      %v4480 = vadd.f32 %v4375, %v4479
      %v4481 = vpop.f32.mrf.mxu0
      %4482 = vmatprep.mubr.f32.mxu0 %v4131
      %4483 = vmatmul.mubr.f32.gmra.mxu0 %v4130
      %v4484 = vpop.f32.mrf.mxu0
      %v4485 = vadd.f32 %v4380, %v4484
      %v4486 = vpop.f32.mrf.mxu0
      %4487 = vmatprep.mubr.f32.mxu0 %v4136
      %4488 = vmatmul.mubr.f32.gmra.mxu0 %v4135
      %v4489 = vpop.f32.mrf.mxu0
      %v4490 = vadd.f32 %v4385, %v4489
      %v4491 = vpop.f32.mrf.mxu0
      %4492 = vmatprep.mubr.f32.mxu0 %v4141
      %4493 = vmatmul.mubr.f32.gmra.mxu0 %v4140
      %v4494 = vpop.f32.mrf.mxu0
      %v4495 = vadd.f32 %v4390, %v4494
      %v4496 = vpop.f32.mrf.mxu0
      %4497 = vmatprep.mubr.f32.mxu0 %v4146
      %4498 = vmatmul.mubr.f32.gmra.mxu0 %v4145
      %v4499 = vpop.f32.mrf.mxu0
      %v4500 = vadd.f32 %v4395, %v4499
      %v4501 = vpop.f32.mrf.mxu0
      %4502 = vmatprep.mubr.f32.mxu0 %v4151
      %4503 = vmatmul.mubr.f32.gmra.mxu0 %v4150
      %v4504 = vpop.f32.mrf.mxu0
      %v4505 = vadd.f32 %v4400, %v4504
      %v4506 = vpop.f32.mrf.mxu0
      %4507 = vmatprep.mubr.f32.mxu0 %v4156
      %4508 = vmatmul.mubr.f32.gmra.mxu0 %v4155
      %v4509 = vpop.f32.mrf.mxu0
      %v4510 = vadd.f32 %v4405, %v4509
      %v4511 = vpop.f32.mrf.mxu0
      %4512 = vmatprep.mubr.f32.mxu0 %v4161
      %4513 = vmatmul.mubr.f32.gmra.mxu0 %v4160
      %v4514 = vpop.f32.mrf.mxu0
      %v4515 = vadd.f32 %v4410, %v4514
      %v4516 = vpop.f32.mrf.mxu0
      %4517 = vdwg.mxu0
      %4518 = vmatprep.subr.mxu0 0.0
      %4519 = vmatpush1.msra.mxu0 0.0
      %4520 = vmatprep.subr.mxu0 0.0
      %4521 = vmatpush1.msra.mxu0 0.0
      %4522 = vmatprep.subr.mxu0 0.0
      %4523 = vmatpush1.msra.mxu0 0.0
      %4524 = vmatprep.subr.mxu0 0.0
      %4525 = vmatpush1.msra.mxu0 0.0
      %4526 = vmatprep.subr.mxu0 0.0
      %4527 = vmatpush1.msra.mxu0 0.0
      %4528 = vmatprep.subr.mxu0 0.0
      %4529 = vmatpush1.msra.mxu0 0.0
      %4530 = vmatprep.subr.mxu0 0.0
      %4531 = vmatpush1.msra.mxu0 0.0
      %4532 = vmatprep.subr.mxu0 0.0
      %4533 = vmatpush1.msra.mxu0 0.0
      %4534 = vmatprep.subr.mxu0 0.0
      %4535 = vmatpush1.msra.mxu0 %v4234
      %4536 = vmatprep.subr.mxu0 0.0
      %4537 = vmatpush1.msra.mxu0 %v4233
      %4538 = vmatprep.subr.mxu0 0.0
      %4539 = vmatpush1.msra.mxu0 %v4232
      %4540 = vmatprep.subr.mxu0 0.0
      %4541 = vmatpush1.msra.mxu0 %v4231
      %4542 = vmatprep.subr.mxu0 0.0
      %4543 = vmatpush1.msra.mxu0 %v4230
      %4544 = vmatprep.subr.mxu0 0.0
      %4545 = vmatpush1.msra.mxu0 %v4229
      %4546 = vmatprep.subr.mxu0 0.0
      %4547 = vmatpush1.msra.mxu0 %v4228
      %4548 = vmatprep.subr.mxu0 0.0
      %4549 = vmatpush1.msra.mxu0 %v4227
      %4550 = vmatprep.subr.mxu0 0.0
      %4551 = vmatpush2.msra.mxu0 0.0
      %4552 = vmatprep.subr.mxu0 0.0
      %4553 = vmatpush2.msra.mxu0 0.0
      %4554 = vmatprep.subr.mxu0 0.0
      %4555 = vmatpush2.msra.mxu0 0.0
      %4556 = vmatprep.subr.mxu0 0.0
      %4557 = vmatpush2.msra.mxu0 0.0
      %4558 = vmatprep.subr.mxu0 0.0
      %4559 = vmatpush2.msra.mxu0 0.0
      %4560 = vmatprep.subr.mxu0 0.0
      %4561 = vmatpush2.msra.mxu0 0.0
      %4562 = vmatprep.subr.mxu0 0.0
      %4563 = vmatpush2.msra.mxu0 0.0
      %4564 = vmatprep.subr.mxu0 0.0
      %4565 = vmatpush2.msra.mxu0 0.0
      %4566 = vmatprep.subr.mxu0 0.0
      %4567 = vmatpush2.msra.mxu0 0.0
      %4568 = vmatprep.subr.mxu0 0.0
      %4569 = vmatpush2.msra.mxu0 0.0
      %4570 = vmatprep.subr.mxu0 0.0
      %4571 = vmatpush2.msra.mxu0 0.0
      %4572 = vmatprep.subr.mxu0 0.0
      %4573 = vmatpush2.msra.mxu0 0.0
      %4574 = vmatprep.subr.mxu0 0.0
      %4575 = vmatpush2.msra.mxu0 0.0
      %4576 = vmatprep.subr.mxu0 0.0
      %4577 = vmatpush2.msra.mxu0 0.0
      %4578 = vmatprep.subr.mxu0 0.0
      %4579 = vmatpush2.msra.mxu0 0.0
      %4580 = vmatprep.subr.mxu0 0.0
      %4581 = vmatpush2.msra.mxu0 0.0
      %4582 = vmatprep.mubr.f32.mxu0 0.0
      %4583 = vmatmul.mubr.f32.gmra.mxu0 %v4285
      %v4584 = vpop.f32.mrf.mxu0
      %v4585 = vadd.f32 %v4480, %v4584
      %v4586 = vpop.f32.mrf.mxu0
      %4587 = vmatprep.mubr.f32.mxu0 0.0
      %4588 = vmatmul.mubr.f32.gmra.mxu0 %v4288
      %v4589 = vpop.f32.mrf.mxu0
      %v4590 = vadd.f32 %v4485, %v4589
      %v4591 = vpop.f32.mrf.mxu0
      %4592 = vmatprep.mubr.f32.mxu0 0.0
      %4593 = vmatmul.mubr.f32.gmra.mxu0 %v4291
      %v4594 = vpop.f32.mrf.mxu0
      %v4595 = vadd.f32 %v4490, %v4594
      %v4596 = vpop.f32.mrf.mxu0
      %4597 = vmatprep.mubr.f32.mxu0 0.0
      %4598 = vmatmul.mubr.f32.gmra.mxu0 %v4294
      %v4599 = vpop.f32.mrf.mxu0
      %v4600 = vadd.f32 %v4495, %v4599
      %v4601 = vpop.f32.mrf.mxu0
      %4602 = vmatprep.mubr.f32.mxu0 0.0
      %4603 = vmatmul.mubr.f32.gmra.mxu0 %v4297
      %v4604 = vpop.f32.mrf.mxu0
      %v4605 = vadd.f32 %v4500, %v4604
      %v4606 = vpop.f32.mrf.mxu0
      %4607 = vmatprep.mubr.f32.mxu0 0.0
      %4608 = vmatmul.mubr.f32.gmra.mxu0 %v4300
      %v4609 = vpop.f32.mrf.mxu0
      %v4610 = vadd.f32 %v4505, %v4609
      %v4611 = vpop.f32.mrf.mxu0
      %4612 = vmatprep.mubr.f32.mxu0 0.0
      %4613 = vmatmul.mubr.f32.gmra.mxu0 %v4303
      %v4614 = vpop.f32.mrf.mxu0
      %v4615 = vadd.f32 %v4510, %v4614
      %v4616 = vpop.f32.mrf.mxu0
      %4617 = vmatprep.mubr.f32.mxu0 0.0
      %4618 = vmatmul.mubr.f32.gmra.mxu0 %v4306
      %v4619 = vpop.f32.mrf.mxu0
      %v4620 = vadd.f32 %v4515, %v4619
      %v4621 = vpop.f32.mrf.mxu0
      %4622 = vdwg.mxu0
      %v4623 = vmax.f32 %v4585, 0.0
      %v4624 = vmax.f32 %v4590, 0.0
      %v4625 = vmax.f32 %v4595, 0.0
      %v4626 = vmax.f32 %v4600, 0.0
      %v4627 = vmax.f32 %v4605, 0.0
      %v4628 = vmax.f32 %v4610, 0.0
      %v4629 = vmax.f32 %v4615, 0.0
      %v4630 = vmax.f32 %v4620, 0.0
      %vm4631 = vcmask 400384
      %4632 = vst.msk [vmem:[%s332] sm:$0xff] %vm4631, %v4623
      %4633 = vst.msk [vmem:[%s332 + $0x8] sm:$0xff] %vm4631, %v4624
      %4634 = vst.msk [vmem:[%s332 + $0x10] sm:$0xff] %vm4631, %v4625
      %4635 = vst.msk [vmem:[%s332 + $0x18] sm:$0xff] %vm4631, %v4626
      %4636 = vst.msk [vmem:[%s332 + $0x20] sm:$0xff] %vm4631, %v4627
      %4637 = vst.msk [vmem:[%s332 + $0x28] sm:$0xff] %vm4631, %v4628
      %4638 = vst.msk [vmem:[%s332 + $0x30] sm:$0xff] %vm4631, %v4629
      %4639 = vst.msk [vmem:[%s332 + $0x38] sm:$0xff] %vm4631, %v4630
      %p4640 = scmp.lt.s32.totalorder %s20, 1
      %s4641 = scalar_select %p4640, %s20, 1
      %s4642 = smul.addr %s4641, 8
      %s4643 = smul.addr %s4642, 8
      %s4644 = scalar_lea.vmem %s9, %s4643
      // Predicated region
      $region57: #{atari_deep_net_forward.2} parent=55 // pred_check
        %p4645 = pneg %p232
      $region58: #{atari_deep_net_forward.2} parent=55 // pred_check_branch
        %4647 = sbr.rel (%p4645) target = $region60
      $region59: #{atari_deep_net_forward.2} parent=55 // pred_region
        _
      $region60: #{atari_deep_net_forward.2} parent=55 // pred_fallthru
        _
    $region56: #{atari_deep_net_forward.2} parent=5 // pred_fallthru
      _
    %p4648 = scmp.le.s32.totalorder 2, %s15
    // Predicated region
    $region61: #{atari_deep_net_forward.2} parent=5 // pred_check
      %p4649 = pneg %p4648
    $region62: #{atari_deep_net_forward.2} parent=5 // pred_check_branch
      %4651 = sbr.rel (%p4649) target = $region64
    $region63: #{atari_deep_net_forward.2} parent=5 // pred_region
      %s4652 = ssub.s32 %s15, 2
      // Predicated region
      $region65: #{atari_deep_net_forward.2} parent=63 // pred_check
        %p4653 = pneg %p238
      $region66: #{atari_deep_net_forward.2} parent=63 // pred_check_branch
        %4655 = sbr.rel (%p4653) target = $region68
      $region67: #{atari_deep_net_forward.2} parent=63 // pred_region
        %p4656 = scmp.lt.s32.totalorder %s21, 1
        %s4657 = scalar_select %p4656, %s21, 1
        %s4658 = smul.addr %s4657, 8
        %s4659 = smul.addr %s4658, 8
        %s4660 = scalar_lea.vmem %s9, %s4659
      $region68: #{atari_deep_net_forward.2} parent=63 // pred_fallthru
        _
    $region64: #{atari_deep_net_forward.2} parent=5 // pred_fallthru
      _
  $region6: #{atari_deep_net_forward.2} parent=0 // loop_footer
    %s19 = sadd.s32 1, %s15
  $region7: #{atari_deep_net_forward.2} parent=0 // loop_footer_branch
    %14 = sbr.rel target = $region3
  $region8: #{atari_deep_net_forward.2} parent=0 // loop_exit
    _

// kernel: atari_deep_net_forward.3
$region0: #{atari_deep_net_forward.3}
  #allocation0 [shape = 'u32[]', space=smem, size = 0x4, offset = 0x4, fixed_abs, tag = 'smem constant byte address 0x4 - core index']
  #allocation1 [shape = 'u32[144,128]{1,0:T(1,128)}', space=vmem, size = 0x12000, scoped, tag = 'internal scratch']
  %s0 = inlined_call_operand.vmem [shape: f32[2,3136], index: 0, kind: input, shape index: {}]
  %s1 = inlined_call_operand.vmem [shape: f32[3136,512], index: 1, kind: input, shape index: {}]
  %s2 = inlined_call_operand.vmem [shape: f32[1,512], index: 2, kind: input, shape index: {}]
  %s3 = inlined_call_operand.vmem [shape: f32[512,6], index: 3, kind: input, shape index: {}]
  %s4 = inlined_call_operand.vmem [shape: f32[1,6], index: 4, kind: input, shape index: {}]
  %s5 = inlined_call_operand.hbm [shape: f32[2,6], index: 5, kind: output, shape index: {}]
  %s6 = sld [smem:[#allocation0]]
  $region30: #{atari_deep_net_forward.3} parent=0
    _
  %s8 = ssub.s32 1, %s6
  %s9 = scalar_select 0, %s8, %s6
  $region1: #{atari_deep_net_forward.3} parent=0
    #allocation2 [shape = 'u8[1024]{0}', space=vmem, size = 0x400, scoped, tag = 'output window, operand 0, single buffered']
    #allocation3 [shape = 's32[1]{0}', space=sflag, size = 0x4, scoped, tag = 'scoped memory for atari_deep_net_forward.3']
    %10 = vsyncpa [#allocation3], 0
    // Predicated region
    $region2: #{atari_deep_net_forward.3} parent=1 // pred_check
      _
    $region3: #{atari_deep_net_forward.3} parent=1 // pred_check_branch
      %12 = sbr.rel (0) target = $region5
    $region4: #{atari_deep_net_forward.3} parent=1 // pred_region
      _
    $region5: #{atari_deep_net_forward.3} parent=1 // pred_fallthru
      _
    // Predicated region
    $region6: #{atari_deep_net_forward.3} parent=1 // pred_check
      _
    $region7: #{atari_deep_net_forward.3} parent=1 // pred_check_branch
      %14 = sbr.rel (0) target = $region9
    $region8: #{atari_deep_net_forward.3} parent=1 // pred_region
      _
    $region9: #{atari_deep_net_forward.3} parent=1 // pred_fallthru
      _
    // Predicated region
    $region10: #{atari_deep_net_forward.3} parent=1 // pred_check
      _
    $region11: #{atari_deep_net_forward.3} parent=1 // pred_check_branch
      %16 = sbr.rel (0) target = $region13
    $region12: #{atari_deep_net_forward.3} parent=1 // pred_region
      _
    $region13: #{atari_deep_net_forward.3} parent=1 // pred_fallthru
      _
    // Predicated region
    $region14: #{atari_deep_net_forward.3} parent=1 // pred_check
      _
    $region15: #{atari_deep_net_forward.3} parent=1 // pred_check_branch
      %18 = sbr.rel (0) target = $region17
    $region16: #{atari_deep_net_forward.3} parent=1 // pred_region
      _
    $region17: #{atari_deep_net_forward.3} parent=1 // pred_fallthru
      _
    // Predicated region
    $region18: #{atari_deep_net_forward.3} parent=1 // pred_check
      _
    $region19: #{atari_deep_net_forward.3} parent=1 // pred_check_branch
      %20 = sbr.rel (0) target = $region21
    $region20: #{atari_deep_net_forward.3} parent=1 // pred_region
      _
    $region21: #{atari_deep_net_forward.3} parent=1 // pred_fallthru
      _
    %v21 = vld [vmem:[%s0] sm:$0xff]
    %v22 = vld [vmem:[%s0 + $0x8] sm:$0xff]
    %v23 = vld [vmem:[%s0 + $0x10] sm:$0xff]
    %v24 = vld [vmem:[%s0 + $0x18] sm:$0xff]
    %v25 = vld [vmem:[%s0 + $0x20] sm:$0xff]
    %v26 = vld [vmem:[%s0 + $0x28] sm:$0xff]
    %v27 = vld [vmem:[%s0 + $0x30] sm:$0x3]
    %v28 = vld [vmem:[%s1] sm:$0xff]
    %v29 = vld [vmem:[%s1 + $0x8] sm:$0xff]
    %v30 = vld [vmem:[%s1 + $0x10] sm:$0xff]
    %v31 = vld [vmem:[%s1 + $0x18] sm:$0xff]
    %v32 = vld [vmem:[%s1 + $0x20] sm:$0xff]
    %v33 = vld [vmem:[%s1 + $0x28] sm:$0xff]
    %v34 = vld [vmem:[%s1 + $0x30] sm:$0xff]
    %v35 = vld [vmem:[%s1 + $0x38] sm:$0xff]
    %v36 = vld [vmem:[%s1 + $0x40] sm:$0xff]
    %v37 = vld [vmem:[%s1 + $0x48] sm:$0xff]
    %v38 = vld [vmem:[%s1 + $0x50] sm:$0xff]
    %v39 = vld [vmem:[%s1 + $0x58] sm:$0xff]
    %v40 = vld [vmem:[%s1 + $0x60] sm:$0xff]
    %v41 = vld [vmem:[%s1 + $0x68] sm:$0xff]
    %v42 = vld [vmem:[%s1 + $0x70] sm:$0xff]
    %v43 = vld [vmem:[%s1 + $0x78] sm:$0xff]
    %v44 = vld [vmem:[%s1 + $0x80] sm:$0xff]
    %v45 = vld [vmem:[%s1 + $0x88] sm:$0xff]
    %v46 = vld [vmem:[%s1 + $0x90] sm:$0xff]
    %v47 = vld [vmem:[%s1 + $0x98] sm:$0xff]
    %v48 = vld [vmem:[%s1 + $0xa0] sm:$0xff]
    %v49 = vld [vmem:[%s1 + $0xa8] sm:$0xff]
    %v50 = vld [vmem:[%s1 + $0xb0] sm:$0xff]
    %v51 = vld [vmem:[%s1 + $0xb8] sm:$0xff]
    %v52 = vld [vmem:[%s1 + $0xc0] sm:$0xff]
    %v53 = vld [vmem:[%s1 + $0xc8] sm:$0xff]
    %v54 = vld [vmem:[%s1 + $0xd0] sm:$0xff]
    %v55 = vld [vmem:[%s1 + $0xd8] sm:$0xff]
    %v56 = vld [vmem:[%s1 + $0xe0] sm:$0xff]
    %v57 = vld [vmem:[%s1 + $0xe8] sm:$0xff]
    %v58 = vld [vmem:[%s1 + $0xf0] sm:$0xff]
    %v59 = vld [vmem:[%s1 + $0xf8] sm:$0xff]
    %v60 = vld [vmem:[%s1 + $0x100] sm:$0xff]
    %v61 = vld [vmem:[%s1 + $0x108] sm:$0xff]
    %v62 = vld [vmem:[%s1 + $0x110] sm:$0xff]
    %v63 = vld [vmem:[%s1 + $0x118] sm:$0xff]
    %v64 = vld [vmem:[%s1 + $0x120] sm:$0xff]
    %v65 = vld [vmem:[%s1 + $0x128] sm:$0xff]
    %v66 = vld [vmem:[%s1 + $0x130] sm:$0xff]
    %v67 = vld [vmem:[%s1 + $0x138] sm:$0xff]
    %v68 = vld [vmem:[%s1 + $0x140] sm:$0xff]
    %v69 = vld [vmem:[%s1 + $0x148] sm:$0xff]
    %v70 = vld [vmem:[%s1 + $0x150] sm:$0xff]
    %v71 = vld [vmem:[%s1 + $0x158] sm:$0xff]
    %v72 = vld [vmem:[%s1 + $0x160] sm:$0xff]
    %v73 = vld [vmem:[%s1 + $0x168] sm:$0xff]
    %v74 = vld [vmem:[%s1 + $0x170] sm:$0xff]
    %v75 = vld [vmem:[%s1 + $0x178] sm:$0xff]
    %v76 = vld [vmem:[%s1 + $0x180] sm:$0xff]
    %v77 = vld [vmem:[%s1 + $0x188] sm:$0xff]
    %v78 = vld [vmem:[%s1 + $0x190] sm:$0xff]
    %v79 = vld [vmem:[%s1 + $0x198] sm:$0xff]
    %v80 = vld [vmem:[%s1 + $0x1a0] sm:$0xff]
    %v81 = vld [vmem:[%s1 + $0x1a8] sm:$0xff]
    %v82 = vld [vmem:[%s1 + $0x1b0] sm:$0xff]
    %v83 = vld [vmem:[%s1 + $0x1b8] sm:$0xff]
    %v84 = vld [vmem:[%s1 + $0x1c0] sm:$0xff]
    %v85 = vld [vmem:[%s1 + $0x1c8] sm:$0xff]
    %v86 = vld [vmem:[%s1 + $0x1d0] sm:$0xff]
    %v87 = vld [vmem:[%s1 + $0x1d8] sm:$0xff]
    %v88 = vld [vmem:[%s1 + $0x1e0] sm:$0xff]
    %v89 = vld [vmem:[%s1 + $0x1e8] sm:$0xff]
    %v90 = vld [vmem:[%s1 + $0x1f0] sm:$0xff]
    %v91 = vld [vmem:[%s1 + $0x1f8] sm:$0xff]
    %v92 = vld [vmem:[%s1 + $0x200] sm:$0xff]
    %v93 = vld [vmem:[%s1 + $0x208] sm:$0xff]
    %v94 = vld [vmem:[%s1 + $0x210] sm:$0xff]
    %v95 = vld [vmem:[%s1 + $0x218] sm:$0xff]
    %v96 = vld [vmem:[%s1 + $0x220] sm:$0xff]
    %v97 = vld [vmem:[%s1 + $0x228] sm:$0xff]
    %v98 = vld [vmem:[%s1 + $0x230] sm:$0xff]
    %v99 = vld [vmem:[%s1 + $0x238] sm:$0xff]
    %v100 = vld [vmem:[%s1 + $0x240] sm:$0xff]
    %v101 = vld [vmem:[%s1 + $0x248] sm:$0xff]
    %v102 = vld [vmem:[%s1 + $0x250] sm:$0xff]
    %v103 = vld [vmem:[%s1 + $0x258] sm:$0xff]
    %v104 = vld [vmem:[%s1 + $0x260] sm:$0xff]
    %v105 = vld [vmem:[%s1 + $0x268] sm:$0xff]
    %v106 = vld [vmem:[%s1 + $0x270] sm:$0xff]
    %v107 = vld [vmem:[%s1 + $0x278] sm:$0xff]
    %v108 = vld [vmem:[%s1 + $0x280] sm:$0xff]
    %v109 = vld [vmem:[%s1 + $0x288] sm:$0xff]
    %v110 = vld [vmem:[%s1 + $0x290] sm:$0xff]
    %v111 = vld [vmem:[%s1 + $0x298] sm:$0xff]
    %v112 = vld [vmem:[%s1 + $0x2a0] sm:$0xff]
    %v113 = vld [vmem:[%s1 + $0x2a8] sm:$0xff]
    %v114 = vld [vmem:[%s1 + $0x2b0] sm:$0xff]
    %v115 = vld [vmem:[%s1 + $0x2b8] sm:$0xff]
    %v116 = vld [vmem:[%s1 + $0x2c0] sm:$0xff]
    %v117 = vld [vmem:[%s1 + $0x2c8] sm:$0xff]
    %v118 = vld [vmem:[%s1 + $0x2d0] sm:$0xff]
    %v119 = vld [vmem:[%s1 + $0x2d8] sm:$0xff]
    %v120 = vld [vmem:[%s1 + $0x2e0] sm:$0xff]
    %v121 = vld [vmem:[%s1 + $0x2e8] sm:$0xff]
    %v122 = vld [vmem:[%s1 + $0x2f0] sm:$0xff]
    %v123 = vld [vmem:[%s1 + $0x2f8] sm:$0xff]
    %v124 = vld [vmem:[%s1 + $0x300] sm:$0xff]
    %v125 = vld [vmem:[%s1 + $0x308] sm:$0xff]
    %v126 = vld [vmem:[%s1 + $0x310] sm:$0xff]
    %v127 = vld [vmem:[%s1 + $0x318] sm:$0xff]
    %v128 = vld [vmem:[%s1 + $0x320] sm:$0xff]
    %v129 = vld [vmem:[%s1 + $0x328] sm:$0xff]
    %v130 = vld [vmem:[%s1 + $0x330] sm:$0xff]
    %v131 = vld [vmem:[%s1 + $0x338] sm:$0xff]
    %v132 = vld [vmem:[%s1 + $0x340] sm:$0xff]
    %v133 = vld [vmem:[%s1 + $0x348] sm:$0xff]
    %v134 = vld [vmem:[%s1 + $0x350] sm:$0xff]
    %v135 = vld [vmem:[%s1 + $0x358] sm:$0xff]
    %v136 = vld [vmem:[%s1 + $0x360] sm:$0xff]
    %v137 = vld [vmem:[%s1 + $0x368] sm:$0xff]
    %v138 = vld [vmem:[%s1 + $0x370] sm:$0xff]
    %v139 = vld [vmem:[%s1 + $0x378] sm:$0xff]
    %v140 = vld [vmem:[%s1 + $0x380] sm:$0xff]
    %v141 = vld [vmem:[%s1 + $0x388] sm:$0xff]
    %v142 = vld [vmem:[%s1 + $0x390] sm:$0xff]
    %v143 = vld [vmem:[%s1 + $0x398] sm:$0xff]
    %v144 = vld [vmem:[%s1 + $0x3a0] sm:$0xff]
    %v145 = vld [vmem:[%s1 + $0x3a8] sm:$0xff]
    %v146 = vld [vmem:[%s1 + $0x3b0] sm:$0xff]
    %v147 = vld [vmem:[%s1 + $0x3b8] sm:$0xff]
    %v148 = vld [vmem:[%s1 + $0x3c0] sm:$0xff]
    %v149 = vld [vmem:[%s1 + $0x3c8] sm:$0xff]
    %v150 = vld [vmem:[%s1 + $0x3d0] sm:$0xff]
    %v151 = vld [vmem:[%s1 + $0x3d8] sm:$0xff]
    %v152 = vld [vmem:[%s1 + $0x3e0] sm:$0xff]
    %v153 = vld [vmem:[%s1 + $0x3e8] sm:$0xff]
    %v154 = vld [vmem:[%s1 + $0x3f0] sm:$0xff]
    %v155 = vld [vmem:[%s1 + $0x3f8] sm:$0xff]
    %v156 = vld [vmem:[%s1 + $0x400] sm:$0xff]
    %v157 = vld [vmem:[%s1 + $0x408] sm:$0xff]
    %v158 = vld [vmem:[%s1 + $0x410] sm:$0xff]
    %v159 = vld [vmem:[%s1 + $0x418] sm:$0xff]
    %v160 = vld [vmem:[%s1 + $0x420] sm:$0xff]
    %v161 = vld [vmem:[%s1 + $0x428] sm:$0xff]
    %v162 = vld [vmem:[%s1 + $0x430] sm:$0xff]
    %v163 = vld [vmem:[%s1 + $0x438] sm:$0xff]
    %v164 = vld [vmem:[%s1 + $0x440] sm:$0xff]
    %v165 = vld [vmem:[%s1 + $0x448] sm:$0xff]
    %v166 = vld [vmem:[%s1 + $0x450] sm:$0xff]
    %v167 = vld [vmem:[%s1 + $0x458] sm:$0xff]
    %v168 = vld [vmem:[%s1 + $0x460] sm:$0xff]
    %v169 = vld [vmem:[%s1 + $0x468] sm:$0xff]
    %v170 = vld [vmem:[%s1 + $0x470] sm:$0xff]
    %v171 = vld [vmem:[%s1 + $0x478] sm:$0xff]
    %v172 = vld [vmem:[%s1 + $0x480] sm:$0xff]
    %v173 = vld [vmem:[%s1 + $0x488] sm:$0xff]
    %v174 = vld [vmem:[%s1 + $0x490] sm:$0xff]
    %v175 = vld [vmem:[%s1 + $0x498] sm:$0xff]
    %v176 = vld [vmem:[%s1 + $0x4a0] sm:$0xff]
    %v177 = vld [vmem:[%s1 + $0x4a8] sm:$0xff]
    %v178 = vld [vmem:[%s1 + $0x4b0] sm:$0xff]
    %v179 = vld [vmem:[%s1 + $0x4b8] sm:$0xff]
    %v180 = vld [vmem:[%s1 + $0x4c0] sm:$0xff]
    %v181 = vld [vmem:[%s1 + $0x4c8] sm:$0xff]
    %v182 = vld [vmem:[%s1 + $0x4d0] sm:$0xff]
    %v183 = vld [vmem:[%s1 + $0x4d8] sm:$0xff]
    %v184 = vld [vmem:[%s1 + $0x4e0] sm:$0xff]
    %v185 = vld [vmem:[%s1 + $0x4e8] sm:$0xff]
    %v186 = vld [vmem:[%s1 + $0x4f0] sm:$0xff]
    %v187 = vld [vmem:[%s1 + $0x4f8] sm:$0xff]
    %v188 = vld [vmem:[%s1 + $0x500] sm:$0xff]
    %v189 = vld [vmem:[%s1 + $0x508] sm:$0xff]
    %v190 = vld [vmem:[%s1 + $0x510] sm:$0xff]
    %v191 = vld [vmem:[%s1 + $0x518] sm:$0xff]
    %v192 = vld [vmem:[%s1 + $0x520] sm:$0xff]
    %v193 = vld [vmem:[%s1 + $0x528] sm:$0xff]
    %v194 = vld [vmem:[%s1 + $0x530] sm:$0xff]
    %v195 = vld [vmem:[%s1 + $0x538] sm:$0xff]
    %v196 = vld [vmem:[%s1 + $0x540] sm:$0xff]
    %v197 = vld [vmem:[%s1 + $0x548] sm:$0xff]
    %v198 = vld [vmem:[%s1 + $0x550] sm:$0xff]
    %v199 = vld [vmem:[%s1 + $0x558] sm:$0xff]
    %v200 = vld [vmem:[%s1 + $0x560] sm:$0xff]
    %v201 = vld [vmem:[%s1 + $0x568] sm:$0xff]
    %v202 = vld [vmem:[%s1 + $0x570] sm:$0xff]
    %v203 = vld [vmem:[%s1 + $0x578] sm:$0xff]
    %v204 = vld [vmem:[%s1 + $0x580] sm:$0xff]
    %v205 = vld [vmem:[%s1 + $0x588] sm:$0xff]
    %v206 = vld [vmem:[%s1 + $0x590] sm:$0xff]
    %v207 = vld [vmem:[%s1 + $0x598] sm:$0xff]
    %v208 = vld [vmem:[%s1 + $0x5a0] sm:$0xff]
    %v209 = vld [vmem:[%s1 + $0x5a8] sm:$0xff]
    %v210 = vld [vmem:[%s1 + $0x5b0] sm:$0xff]
    %v211 = vld [vmem:[%s1 + $0x5b8] sm:$0xff]
    %v212 = vld [vmem:[%s1 + $0x5c0] sm:$0xff]
    %v213 = vld [vmem:[%s1 + $0x5c8] sm:$0xff]
    %v214 = vld [vmem:[%s1 + $0x5d0] sm:$0xff]
    %v215 = vld [vmem:[%s1 + $0x5d8] sm:$0xff]
    %v216 = vld [vmem:[%s1 + $0x5e0] sm:$0xff]
    %v217 = vld [vmem:[%s1 + $0x5e8] sm:$0xff]
    %v218 = vld [vmem:[%s1 + $0x5f0] sm:$0xff]
    %v219 = vld [vmem:[%s1 + $0x5f8] sm:$0xff]
    %v220 = vld [vmem:[%s1 + $0x600] sm:$0xff]
    %v221 = vld [vmem:[%s1 + $0x608] sm:$0xff]
    %v222 = vld [vmem:[%s1 + $0x610] sm:$0xff]
    %v223 = vld [vmem:[%s1 + $0x618] sm:$0xff]
    %v224 = vld [vmem:[%s1 + $0x620] sm:$0xff]
    %v225 = vld [vmem:[%s1 + $0x628] sm:$0xff]
    %v226 = vld [vmem:[%s1 + $0x630] sm:$0xff]
    %v227 = vld [vmem:[%s1 + $0x638] sm:$0xff]
    %v228 = vld [vmem:[%s1 + $0x640] sm:$0xff]
    %v229 = vld [vmem:[%s1 + $0x648] sm:$0xff]
    %v230 = vld [vmem:[%s1 + $0x650] sm:$0xff]
    %v231 = vld [vmem:[%s1 + $0x658] sm:$0xff]
    %v232 = vld [vmem:[%s1 + $0x660] sm:$0xff]
    %v233 = vld [vmem:[%s1 + $0x668] sm:$0xff]
    %v234 = vld [vmem:[%s1 + $0x670] sm:$0xff]
    %v235 = vld [vmem:[%s1 + $0x678] sm:$0xff]
    %v236 = vld [vmem:[%s1 + $0x680] sm:$0xff]
    %v237 = vld [vmem:[%s1 + $0x688] sm:$0xff]
    %v238 = vld [vmem:[%s1 + $0x690] sm:$0xff]
    %v239 = vld [vmem:[%s1 + $0x698] sm:$0xff]
    %v240 = vld [vmem:[%s1 + $0x6a0] sm:$0xff]
    %v241 = vld [vmem:[%s1 + $0x6a8] sm:$0xff]
    %v242 = vld [vmem:[%s1 + $0x6b0] sm:$0xff]
    %v243 = vld [vmem:[%s1 + $0x6b8] sm:$0xff]
    %v244 = vld [vmem:[%s1 + $0x6c0] sm:$0xff]
    %v245 = vld [vmem:[%s1 + $0x6c8] sm:$0xff]
    %v246 = vld [vmem:[%s1 + $0x6d0] sm:$0xff]
    %v247 = vld [vmem:[%s1 + $0x6d8] sm:$0xff]
    %v248 = vld [vmem:[%s1 + $0x6e0] sm:$0xff]
    %v249 = vld [vmem:[%s1 + $0x6e8] sm:$0xff]
    %v250 = vld [vmem:[%s1 + $0x6f0] sm:$0xff]
    %v251 = vld [vmem:[%s1 + $0x6f8] sm:$0xff]
    %v252 = vld [vmem:[%s1 + $0x700] sm:$0xff]
    %v253 = vld [vmem:[%s1 + $0x708] sm:$0xff]
    %v254 = vld [vmem:[%s1 + $0x710] sm:$0xff]
    %v255 = vld [vmem:[%s1 + $0x718] sm:$0xff]
    %v256 = vld [vmem:[%s1 + $0x720] sm:$0xff]
    %v257 = vld [vmem:[%s1 + $0x728] sm:$0xff]
    %v258 = vld [vmem:[%s1 + $0x730] sm:$0xff]
    %v259 = vld [vmem:[%s1 + $0x738] sm:$0xff]
    %v260 = vld [vmem:[%s1 + $0x740] sm:$0xff]
    %v261 = vld [vmem:[%s1 + $0x748] sm:$0xff]
    %v262 = vld [vmem:[%s1 + $0x750] sm:$0xff]
    %v263 = vld [vmem:[%s1 + $0x758] sm:$0xff]
    %v264 = vld [vmem:[%s1 + $0x760] sm:$0xff]
    %v265 = vld [vmem:[%s1 + $0x768] sm:$0xff]
    %v266 = vld [vmem:[%s1 + $0x770] sm:$0xff]
    %v267 = vld [vmem:[%s1 + $0x778] sm:$0xff]
    %v268 = vld [vmem:[%s1 + $0x780] sm:$0xff]
    %v269 = vld [vmem:[%s1 + $0x788] sm:$0xff]
    %v270 = vld [vmem:[%s1 + $0x790] sm:$0xff]
    %v271 = vld [vmem:[%s1 + $0x798] sm:$0xff]
    %v272 = vld [vmem:[%s1 + $0x7a0] sm:$0xff]
    %v273 = vld [vmem:[%s1 + $0x7a8] sm:$0xff]
    %v274 = vld [vmem:[%s1 + $0x7b0] sm:$0xff]
    %v275 = vld [vmem:[%s1 + $0x7b8] sm:$0xff]
    %v276 = vld [vmem:[%s1 + $0x7c0] sm:$0xff]
    %v277 = vld [vmem:[%s1 + $0x7c8] sm:$0xff]
    %v278 = vld [vmem:[%s1 + $0x7d0] sm:$0xff]
    %v279 = vld [vmem:[%s1 + $0x7d8] sm:$0xff]
    %v280 = vld [vmem:[%s1 + $0x7e0] sm:$0xff]
    %v281 = vld [vmem:[%s1 + $0x7e8] sm:$0xff]
    %v282 = vld [vmem:[%s1 + $0x7f0] sm:$0xff]
    %v283 = vld [vmem:[%s1 + $0x7f8] sm:$0xff]
    %v284 = vld [vmem:[%s1 + $0x800] sm:$0xff]
    %v285 = vld [vmem:[%s1 + $0x808] sm:$0xff]
    %v286 = vld [vmem:[%s1 + $0x810] sm:$0xff]
    %v287 = vld [vmem:[%s1 + $0x818] sm:$0xff]
    %v288 = vld [vmem:[%s1 + $0x820] sm:$0xff]
    %v289 = vld [vmem:[%s1 + $0x828] sm:$0xff]
    %v290 = vld [vmem:[%s1 + $0x830] sm:$0xff]
    %v291 = vld [vmem:[%s1 + $0x838] sm:$0xff]
    %v292 = vld [vmem:[%s1 + $0x840] sm:$0xff]
    %v293 = vld [vmem:[%s1 + $0x848] sm:$0xff]
    %v294 = vld [vmem:[%s1 + $0x850] sm:$0xff]
    %v295 = vld [vmem:[%s1 + $0x858] sm:$0xff]
    %v296 = vld [vmem:[%s1 + $0x860] sm:$0xff]
    %v297 = vld [vmem:[%s1 + $0x868] sm:$0xff]
    %v298 = vld [vmem:[%s1 + $0x870] sm:$0xff]
    %v299 = vld [vmem:[%s1 + $0x878] sm:$0xff]
    %v300 = vld [vmem:[%s1 + $0x880] sm:$0xff]
    %v301 = vld [vmem:[%s1 + $0x888] sm:$0xff]
    %v302 = vld [vmem:[%s1 + $0x890] sm:$0xff]
    %v303 = vld [vmem:[%s1 + $0x898] sm:$0xff]
    %v304 = vld [vmem:[%s1 + $0x8a0] sm:$0xff]
    %v305 = vld [vmem:[%s1 + $0x8a8] sm:$0xff]
    %v306 = vld [vmem:[%s1 + $0x8b0] sm:$0xff]
    %v307 = vld [vmem:[%s1 + $0x8b8] sm:$0xff]
    %v308 = vld [vmem:[%s1 + $0x8c0] sm:$0xff]
    %v309 = vld [vmem:[%s1 + $0x8c8] sm:$0xff]
    %v310 = vld [vmem:[%s1 + $0x8d0] sm:$0xff]
    %v311 = vld [vmem:[%s1 + $0x8d8] sm:$0xff]
    %v312 = vld [vmem:[%s1 + $0x8e0] sm:$0xff]
    %v313 = vld [vmem:[%s1 + $0x8e8] sm:$0xff]
    %v314 = vld [vmem:[%s1 + $0x8f0] sm:$0xff]
    %v315 = vld [vmem:[%s1 + $0x8f8] sm:$0xff]
    %v316 = vld [vmem:[%s1 + $0x900] sm:$0xff]
    %v317 = vld [vmem:[%s1 + $0x908] sm:$0xff]
    %v318 = vld [vmem:[%s1 + $0x910] sm:$0xff]
    %v319 = vld [vmem:[%s1 + $0x918] sm:$0xff]
    %v320 = vld [vmem:[%s1 + $0x920] sm:$0xff]
    %v321 = vld [vmem:[%s1 + $0x928] sm:$0xff]
    %v322 = vld [vmem:[%s1 + $0x930] sm:$0xff]
    %v323 = vld [vmem:[%s1 + $0x938] sm:$0xff]
    %v324 = vld [vmem:[%s1 + $0x940] sm:$0xff]
    %v325 = vld [vmem:[%s1 + $0x948] sm:$0xff]
    %v326 = vld [vmem:[%s1 + $0x950] sm:$0xff]
    %v327 = vld [vmem:[%s1 + $0x958] sm:$0xff]
    %v328 = vld [vmem:[%s1 + $0x960] sm:$0xff]
    %v329 = vld [vmem:[%s1 + $0x968] sm:$0xff]
    %v330 = vld [vmem:[%s1 + $0x970] sm:$0xff]
    %v331 = vld [vmem:[%s1 + $0x978] sm:$0xff]
    %v332 = vld [vmem:[%s1 + $0x980] sm:$0xff]
    %v333 = vld [vmem:[%s1 + $0x988] sm:$0xff]
    %v334 = vld [vmem:[%s1 + $0x990] sm:$0xff]
    %v335 = vld [vmem:[%s1 + $0x998] sm:$0xff]
    %v336 = vld [vmem:[%s1 + $0x9a0] sm:$0xff]
    %v337 = vld [vmem:[%s1 + $0x9a8] sm:$0xff]
    %v338 = vld [vmem:[%s1 + $0x9b0] sm:$0xff]
    %v339 = vld [vmem:[%s1 + $0x9b8] sm:$0xff]
    %v340 = vld [vmem:[%s1 + $0x9c0] sm:$0xff]
    %v341 = vld [vmem:[%s1 + $0x9c8] sm:$0xff]
    %v342 = vld [vmem:[%s1 + $0x9d0] sm:$0xff]
    %v343 = vld [vmem:[%s1 + $0x9d8] sm:$0xff]
    %v344 = vld [vmem:[%s1 + $0x9e0] sm:$0xff]
    %v345 = vld [vmem:[%s1 + $0x9e8] sm:$0xff]
    %v346 = vld [vmem:[%s1 + $0x9f0] sm:$0xff]
    %v347 = vld [vmem:[%s1 + $0x9f8] sm:$0xff]
    %v348 = vld [vmem:[%s1 + $0xa00] sm:$0xff]
    %v349 = vld [vmem:[%s1 + $0xa08] sm:$0xff]
    %v350 = vld [vmem:[%s1 + $0xa10] sm:$0xff]
    %v351 = vld [vmem:[%s1 + $0xa18] sm:$0xff]
    %v352 = vld [vmem:[%s1 + $0xa20] sm:$0xff]
    %v353 = vld [vmem:[%s1 + $0xa28] sm:$0xff]
    %v354 = vld [vmem:[%s1 + $0xa30] sm:$0xff]
    %v355 = vld [vmem:[%s1 + $0xa38] sm:$0xff]
    %v356 = vld [vmem:[%s1 + $0xa40] sm:$0xff]
    %v357 = vld [vmem:[%s1 + $0xa48] sm:$0xff]
    %v358 = vld [vmem:[%s1 + $0xa50] sm:$0xff]
    %v359 = vld [vmem:[%s1 + $0xa58] sm:$0xff]
    %v360 = vld [vmem:[%s1 + $0xa60] sm:$0xff]
    %v361 = vld [vmem:[%s1 + $0xa68] sm:$0xff]
    %v362 = vld [vmem:[%s1 + $0xa70] sm:$0xff]
    %v363 = vld [vmem:[%s1 + $0xa78] sm:$0xff]
    %v364 = vld [vmem:[%s1 + $0xa80] sm:$0xff]
    %v365 = vld [vmem:[%s1 + $0xa88] sm:$0xff]
    %v366 = vld [vmem:[%s1 + $0xa90] sm:$0xff]
    %v367 = vld [vmem:[%s1 + $0xa98] sm:$0xff]
    %v368 = vld [vmem:[%s1 + $0xaa0] sm:$0xff]
    %v369 = vld [vmem:[%s1 + $0xaa8] sm:$0xff]
    %v370 = vld [vmem:[%s1 + $0xab0] sm:$0xff]
    %v371 = vld [vmem:[%s1 + $0xab8] sm:$0xff]
    %v372 = vld [vmem:[%s1 + $0xac0] sm:$0xff]
    %v373 = vld [vmem:[%s1 + $0xac8] sm:$0xff]
    %v374 = vld [vmem:[%s1 + $0xad0] sm:$0xff]
    %v375 = vld [vmem:[%s1 + $0xad8] sm:$0xff]
    %v376 = vld [vmem:[%s1 + $0xae0] sm:$0xff]
    %v377 = vld [vmem:[%s1 + $0xae8] sm:$0xff]
    %v378 = vld [vmem:[%s1 + $0xaf0] sm:$0xff]
    %v379 = vld [vmem:[%s1 + $0xaf8] sm:$0xff]
    %v380 = vld [vmem:[%s1 + $0xb00] sm:$0xff]
    %v381 = vld [vmem:[%s1 + $0xb08] sm:$0xff]
    %v382 = vld [vmem:[%s1 + $0xb10] sm:$0xff]
    %v383 = vld [vmem:[%s1 + $0xb18] sm:$0xff]
    %v384 = vld [vmem:[%s1 + $0xb20] sm:$0xff]
    %v385 = vld [vmem:[%s1 + $0xb28] sm:$0xff]
    %v386 = vld [vmem:[%s1 + $0xb30] sm:$0xff]
    %v387 = vld [vmem:[%s1 + $0xb38] sm:$0xff]
    %v388 = vld [vmem:[%s1 + $0xb40] sm:$0xff]
    %v389 = vld [vmem:[%s1 + $0xb48] sm:$0xff]
    %v390 = vld [vmem:[%s1 + $0xb50] sm:$0xff]
    %v391 = vld [vmem:[%s1 + $0xb58] sm:$0xff]
    %v392 = vld [vmem:[%s1 + $0xb60] sm:$0xff]
    %v393 = vld [vmem:[%s1 + $0xb68] sm:$0xff]
    %v394 = vld [vmem:[%s1 + $0xb70] sm:$0xff]
    %v395 = vld [vmem:[%s1 + $0xb78] sm:$0xff]
    %v396 = vld [vmem:[%s1 + $0xb80] sm:$0xff]
    %v397 = vld [vmem:[%s1 + $0xb88] sm:$0xff]
    %v398 = vld [vmem:[%s1 + $0xb90] sm:$0xff]
    %v399 = vld [vmem:[%s1 + $0xb98] sm:$0xff]
    %v400 = vld [vmem:[%s1 + $0xba0] sm:$0xff]
    %v401 = vld [vmem:[%s1 + $0xba8] sm:$0xff]
    %v402 = vld [vmem:[%s1 + $0xbb0] sm:$0xff]
    %v403 = vld [vmem:[%s1 + $0xbb8] sm:$0xff]
    %v404 = vld [vmem:[%s1 + $0xbc0] sm:$0xff]
    %v405 = vld [vmem:[%s1 + $0xbc8] sm:$0xff]
    %v406 = vld [vmem:[%s1 + $0xbd0] sm:$0xff]
    %v407 = vld [vmem:[%s1 + $0xbd8] sm:$0xff]
    %v408 = vld [vmem:[%s1 + $0xbe0] sm:$0xff]
    %v409 = vld [vmem:[%s1 + $0xbe8] sm:$0xff]
    %v410 = vld [vmem:[%s1 + $0xbf0] sm:$0xff]
    %v411 = vld [vmem:[%s1 + $0xbf8] sm:$0xff]
    %v412 = vld [vmem:[%s1 + $0xc00] sm:$0xff]
    %v413 = vld [vmem:[%s1 + $0xc08] sm:$0xff]
    %v414 = vld [vmem:[%s1 + $0xc10] sm:$0xff]
    %v415 = vld [vmem:[%s1 + $0xc18] sm:$0xff]
    %v416 = vld [vmem:[%s1 + $0xc20] sm:$0xff]
    %v417 = vld [vmem:[%s1 + $0xc28] sm:$0xff]
    %v418 = vld [vmem:[%s1 + $0xc30] sm:$0xff]
    %v419 = vld [vmem:[%s1 + $0xc38] sm:$0xff]
    %v420 = vld [vmem:[%s1 + $0xc40] sm:$0xff]
    %v421 = vld [vmem:[%s1 + $0xc48] sm:$0xff]
    %v422 = vld [vmem:[%s1 + $0xc50] sm:$0xff]
    %v423 = vld [vmem:[%s1 + $0xc58] sm:$0xff]
    %v424 = vld [vmem:[%s1 + $0xc60] sm:$0xff]
    %v425 = vld [vmem:[%s1 + $0xc68] sm:$0xff]
    %v426 = vld [vmem:[%s1 + $0xc70] sm:$0xff]
    %v427 = vld [vmem:[%s1 + $0xc78] sm:$0xff]
    %v428 = vld [vmem:[%s1 + $0xc80] sm:$0xff]
    %v429 = vld [vmem:[%s1 + $0xc88] sm:$0xff]
    %v430 = vld [vmem:[%s1 + $0xc90] sm:$0xff]
    %v431 = vld [vmem:[%s1 + $0xc98] sm:$0xff]
    %v432 = vld [vmem:[%s1 + $0xca0] sm:$0xff]
    %v433 = vld [vmem:[%s1 + $0xca8] sm:$0xff]
    %v434 = vld [vmem:[%s1 + $0xcb0] sm:$0xff]
    %v435 = vld [vmem:[%s1 + $0xcb8] sm:$0xff]
    %v436 = vld [vmem:[%s1 + $0xcc0] sm:$0xff]
    %v437 = vld [vmem:[%s1 + $0xcc8] sm:$0xff]
    %v438 = vld [vmem:[%s1 + $0xcd0] sm:$0xff]
    %v439 = vld [vmem:[%s1 + $0xcd8] sm:$0xff]
    %v440 = vld [vmem:[%s1 + $0xce0] sm:$0xff]
    %v441 = vld [vmem:[%s1 + $0xce8] sm:$0xff]
    %v442 = vld [vmem:[%s1 + $0xcf0] sm:$0xff]
    %v443 = vld [vmem:[%s1 + $0xcf8] sm:$0xff]
    %v444 = vld [vmem:[%s1 + $0xd00] sm:$0xff]
    %v445 = vld [vmem:[%s1 + $0xd08] sm:$0xff]
    %v446 = vld [vmem:[%s1 + $0xd10] sm:$0xff]
    %v447 = vld [vmem:[%s1 + $0xd18] sm:$0xff]
    %v448 = vld [vmem:[%s1 + $0xd20] sm:$0xff]
    %v449 = vld [vmem:[%s1 + $0xd28] sm:$0xff]
    %v450 = vld [vmem:[%s1 + $0xd30] sm:$0xff]
    %v451 = vld [vmem:[%s1 + $0xd38] sm:$0xff]
    %v452 = vld [vmem:[%s1 + $0xd40] sm:$0xff]
    %v453 = vld [vmem:[%s1 + $0xd48] sm:$0xff]
    %v454 = vld [vmem:[%s1 + $0xd50] sm:$0xff]
    %v455 = vld [vmem:[%s1 + $0xd58] sm:$0xff]
    %v456 = vld [vmem:[%s1 + $0xd60] sm:$0xff]
    %v457 = vld [vmem:[%s1 + $0xd68] sm:$0xff]
    %v458 = vld [vmem:[%s1 + $0xd70] sm:$0xff]
    %v459 = vld [vmem:[%s1 + $0xd78] sm:$0xff]
    %v460 = vld [vmem:[%s1 + $0xd80] sm:$0xff]
    %v461 = vld [vmem:[%s1 + $0xd88] sm:$0xff]
    %v462 = vld [vmem:[%s1 + $0xd90] sm:$0xff]
    %v463 = vld [vmem:[%s1 + $0xd98] sm:$0xff]
    %v464 = vld [vmem:[%s1 + $0xda0] sm:$0xff]
    %v465 = vld [vmem:[%s1 + $0xda8] sm:$0xff]
    %v466 = vld [vmem:[%s1 + $0xdb0] sm:$0xff]
    %v467 = vld [vmem:[%s1 + $0xdb8] sm:$0xff]
    %v468 = vld [vmem:[%s1 + $0xdc0] sm:$0xff]
    %v469 = vld [vmem:[%s1 + $0xdc8] sm:$0xff]
    %v470 = vld [vmem:[%s1 + $0xdd0] sm:$0xff]
    %v471 = vld [vmem:[%s1 + $0xdd8] sm:$0xff]
    %v472 = vld [vmem:[%s1 + $0xde0] sm:$0xff]
    %v473 = vld [vmem:[%s1 + $0xde8] sm:$0xff]
    %v474 = vld [vmem:[%s1 + $0xdf0] sm:$0xff]
    %v475 = vld [vmem:[%s1 + $0xdf8] sm:$0xff]
    %v476 = vld [vmem:[%s1 + $0xe00] sm:$0xff]
    %v477 = vld [vmem:[%s1 + $0xe08] sm:$0xff]
    %v478 = vld [vmem:[%s1 + $0xe10] sm:$0xff]
    %v479 = vld [vmem:[%s1 + $0xe18] sm:$0xff]
    %v480 = vld [vmem:[%s1 + $0xe20] sm:$0xff]
    %v481 = vld [vmem:[%s1 + $0xe28] sm:$0xff]
    %v482 = vld [vmem:[%s1 + $0xe30] sm:$0xff]
    %v483 = vld [vmem:[%s1 + $0xe38] sm:$0xff]
    %v484 = vld [vmem:[%s1 + $0xe40] sm:$0xff]
    %v485 = vld [vmem:[%s1 + $0xe48] sm:$0xff]
    %v486 = vld [vmem:[%s1 + $0xe50] sm:$0xff]
    %v487 = vld [vmem:[%s1 + $0xe58] sm:$0xff]
    %v488 = vld [vmem:[%s1 + $0xe60] sm:$0xff]
    %v489 = vld [vmem:[%s1 + $0xe68] sm:$0xff]
    %v490 = vld [vmem:[%s1 + $0xe70] sm:$0xff]
    %v491 = vld [vmem:[%s1 + $0xe78] sm:$0xff]
    %v492 = vld [vmem:[%s1 + $0xe80] sm:$0xff]
    %v493 = vld [vmem:[%s1 + $0xe88] sm:$0xff]
    %v494 = vld [vmem:[%s1 + $0xe90] sm:$0xff]
    %v495 = vld [vmem:[%s1 + $0xe98] sm:$0xff]
    %v496 = vld [vmem:[%s1 + $0xea0] sm:$0xff]
    %v497 = vld [vmem:[%s1 + $0xea8] sm:$0xff]
    %v498 = vld [vmem:[%s1 + $0xeb0] sm:$0xff]
    %v499 = vld [vmem:[%s1 + $0xeb8] sm:$0xff]
    %v500 = vld [vmem:[%s1 + $0xec0] sm:$0xff]
    %v501 = vld [vmem:[%s1 + $0xec8] sm:$0xff]
    %v502 = vld [vmem:[%s1 + $0xed0] sm:$0xff]
    %v503 = vld [vmem:[%s1 + $0xed8] sm:$0xff]
    %v504 = vld [vmem:[%s1 + $0xee0] sm:$0xff]
    %v505 = vld [vmem:[%s1 + $0xee8] sm:$0xff]
    %v506 = vld [vmem:[%s1 + $0xef0] sm:$0xff]
    %v507 = vld [vmem:[%s1 + $0xef8] sm:$0xff]
    %v508 = vld [vmem:[%s1 + $0xf00] sm:$0xff]
    %v509 = vld [vmem:[%s1 + $0xf08] sm:$0xff]
    %v510 = vld [vmem:[%s1 + $0xf10] sm:$0xff]
    %v511 = vld [vmem:[%s1 + $0xf18] sm:$0xff]
    %v512 = vld [vmem:[%s1 + $0xf20] sm:$0xff]
    %v513 = vld [vmem:[%s1 + $0xf28] sm:$0xff]
    %v514 = vld [vmem:[%s1 + $0xf30] sm:$0xff]
    %v515 = vld [vmem:[%s1 + $0xf38] sm:$0xff]
    %v516 = vld [vmem:[%s1 + $0xf40] sm:$0xff]
    %v517 = vld [vmem:[%s1 + $0xf48] sm:$0xff]
    %v518 = vld [vmem:[%s1 + $0xf50] sm:$0xff]
    %v519 = vld [vmem:[%s1 + $0xf58] sm:$0xff]
    %v520 = vld [vmem:[%s1 + $0xf60] sm:$0xff]
    %v521 = vld [vmem:[%s1 + $0xf68] sm:$0xff]
    %v522 = vld [vmem:[%s1 + $0xf70] sm:$0xff]
    %v523 = vld [vmem:[%s1 + $0xf78] sm:$0xff]
    %v524 = vld [vmem:[%s1 + $0xf80] sm:$0xff]
    %v525 = vld [vmem:[%s1 + $0xf88] sm:$0xff]
    %v526 = vld [vmem:[%s1 + $0xf90] sm:$0xff]
    %v527 = vld [vmem:[%s1 + $0xf98] sm:$0xff]
    %v528 = vld [vmem:[%s1 + $0xfa0] sm:$0xff]
    %v529 = vld [vmem:[%s1 + $0xfa8] sm:$0xff]
    %v530 = vld [vmem:[%s1 + $0xfb0] sm:$0xff]
    %v531 = vld [vmem:[%s1 + $0xfb8] sm:$0xff]
    %v532 = vld [vmem:[%s1 + $0xfc0] sm:$0xff]
    %v533 = vld [vmem:[%s1 + $0xfc8] sm:$0xff]
    %v534 = vld [vmem:[%s1 + $0xfd0] sm:$0xff]
    %v535 = vld [vmem:[%s1 + $0xfd8] sm:$0xff]
    %v536 = vld [vmem:[%s1 + $0xfe0] sm:$0xff]
    %v537 = vld [vmem:[%s1 + $0xfe8] sm:$0xff]
    %v538 = vld [vmem:[%s1 + $0xff0] sm:$0xff]
    %v539 = vld [vmem:[%s1 + $0xff8] sm:$0xff]
    %v540 = vld [vmem:[%s1 + $0x1000] sm:$0xff]
    %v541 = vld [vmem:[%s1 + $0x1008] sm:$0xff]
    %v542 = vld [vmem:[%s1 + $0x1010] sm:$0xff]
    %v543 = vld [vmem:[%s1 + $0x1018] sm:$0xff]
    %v544 = vld [vmem:[%s1 + $0x1020] sm:$0xff]
    %v545 = vld [vmem:[%s1 + $0x1028] sm:$0xff]
    %v546 = vld [vmem:[%s1 + $0x1030] sm:$0xff]
    %v547 = vld [vmem:[%s1 + $0x1038] sm:$0xff]
    %v548 = vld [vmem:[%s1 + $0x1040] sm:$0xff]
    %v549 = vld [vmem:[%s1 + $0x1048] sm:$0xff]
    %v550 = vld [vmem:[%s1 + $0x1050] sm:$0xff]
    %v551 = vld [vmem:[%s1 + $0x1058] sm:$0xff]
    %v552 = vld [vmem:[%s1 + $0x1060] sm:$0xff]
    %v553 = vld [vmem:[%s1 + $0x1068] sm:$0xff]
    %v554 = vld [vmem:[%s1 + $0x1070] sm:$0xff]
    %v555 = vld [vmem:[%s1 + $0x1078] sm:$0xff]
    %v556 = vld [vmem:[%s1 + $0x1080] sm:$0xff]
    %v557 = vld [vmem:[%s1 + $0x1088] sm:$0xff]
    %v558 = vld [vmem:[%s1 + $0x1090] sm:$0xff]
    %v559 = vld [vmem:[%s1 + $0x1098] sm:$0xff]
    %v560 = vld [vmem:[%s1 + $0x10a0] sm:$0xff]
    %v561 = vld [vmem:[%s1 + $0x10a8] sm:$0xff]
    %v562 = vld [vmem:[%s1 + $0x10b0] sm:$0xff]
    %v563 = vld [vmem:[%s1 + $0x10b8] sm:$0xff]
    %v564 = vld [vmem:[%s1 + $0x10c0] sm:$0xff]
    %v565 = vld [vmem:[%s1 + $0x10c8] sm:$0xff]
    %v566 = vld [vmem:[%s1 + $0x10d0] sm:$0xff]
    %v567 = vld [vmem:[%s1 + $0x10d8] sm:$0xff]
    %v568 = vld [vmem:[%s1 + $0x10e0] sm:$0xff]
    %v569 = vld [vmem:[%s1 + $0x10e8] sm:$0xff]
    %v570 = vld [vmem:[%s1 + $0x10f0] sm:$0xff]
    %v571 = vld [vmem:[%s1 + $0x10f8] sm:$0xff]
    %v572 = vld [vmem:[%s1 + $0x1100] sm:$0xff]
    %v573 = vld [vmem:[%s1 + $0x1108] sm:$0xff]
    %v574 = vld [vmem:[%s1 + $0x1110] sm:$0xff]
    %v575 = vld [vmem:[%s1 + $0x1118] sm:$0xff]
    %v576 = vld [vmem:[%s1 + $0x1120] sm:$0xff]
    %v577 = vld [vmem:[%s1 + $0x1128] sm:$0xff]
    %v578 = vld [vmem:[%s1 + $0x1130] sm:$0xff]
    %v579 = vld [vmem:[%s1 + $0x1138] sm:$0xff]
    %v580 = vld [vmem:[%s1 + $0x1140] sm:$0xff]
    %v581 = vld [vmem:[%s1 + $0x1148] sm:$0xff]
    %v582 = vld [vmem:[%s1 + $0x1150] sm:$0xff]
    %v583 = vld [vmem:[%s1 + $0x1158] sm:$0xff]
    %v584 = vld [vmem:[%s1 + $0x1160] sm:$0xff]
    %v585 = vld [vmem:[%s1 + $0x1168] sm:$0xff]
    %v586 = vld [vmem:[%s1 + $0x1170] sm:$0xff]
    %v587 = vld [vmem:[%s1 + $0x1178] sm:$0xff]
    %v588 = vld [vmem:[%s1 + $0x1180] sm:$0xff]
    %v589 = vld [vmem:[%s1 + $0x1188] sm:$0xff]
    %v590 = vld [vmem:[%s1 + $0x1190] sm:$0xff]
    %v591 = vld [vmem:[%s1 + $0x1198] sm:$0xff]
    %v592 = vld [vmem:[%s1 + $0x11a0] sm:$0xff]
    %v593 = vld [vmem:[%s1 + $0x11a8] sm:$0xff]
    %v594 = vld [vmem:[%s1 + $0x11b0] sm:$0xff]
    %v595 = vld [vmem:[%s1 + $0x11b8] sm:$0xff]
    %v596 = vld [vmem:[%s1 + $0x11c0] sm:$0xff]
    %v597 = vld [vmem:[%s1 + $0x11c8] sm:$0xff]
    %v598 = vld [vmem:[%s1 + $0x11d0] sm:$0xff]
    %v599 = vld [vmem:[%s1 + $0x11d8] sm:$0xff]
    %v600 = vld [vmem:[%s1 + $0x11e0] sm:$0xff]
    %v601 = vld [vmem:[%s1 + $0x11e8] sm:$0xff]
    %v602 = vld [vmem:[%s1 + $0x11f0] sm:$0xff]
    %v603 = vld [vmem:[%s1 + $0x11f8] sm:$0xff]
    %v604 = vld [vmem:[%s1 + $0x1200] sm:$0xff]
    %v605 = vld [vmem:[%s1 + $0x1208] sm:$0xff]
    %v606 = vld [vmem:[%s1 + $0x1210] sm:$0xff]
    %v607 = vld [vmem:[%s1 + $0x1218] sm:$0xff]
    %v608 = vld [vmem:[%s1 + $0x1220] sm:$0xff]
    %v609 = vld [vmem:[%s1 + $0x1228] sm:$0xff]
    %v610 = vld [vmem:[%s1 + $0x1230] sm:$0xff]
    %v611 = vld [vmem:[%s1 + $0x1238] sm:$0xff]
    %v612 = vld [vmem:[%s1 + $0x1240] sm:$0xff]
    %v613 = vld [vmem:[%s1 + $0x1248] sm:$0xff]
    %v614 = vld [vmem:[%s1 + $0x1250] sm:$0xff]
    %v615 = vld [vmem:[%s1 + $0x1258] sm:$0xff]
    %v616 = vld [vmem:[%s1 + $0x1260] sm:$0xff]
    %v617 = vld [vmem:[%s1 + $0x1268] sm:$0xff]
    %v618 = vld [vmem:[%s1 + $0x1270] sm:$0xff]
    %v619 = vld [vmem:[%s1 + $0x1278] sm:$0xff]
    %v620 = vld [vmem:[%s1 + $0x1280] sm:$0xff]
    %v621 = vld [vmem:[%s1 + $0x1288] sm:$0xff]
    %v622 = vld [vmem:[%s1 + $0x1290] sm:$0xff]
    %v623 = vld [vmem:[%s1 + $0x1298] sm:$0xff]
    %v624 = vld [vmem:[%s1 + $0x12a0] sm:$0xff]
    %v625 = vld [vmem:[%s1 + $0x12a8] sm:$0xff]
    %v626 = vld [vmem:[%s1 + $0x12b0] sm:$0xff]
    %v627 = vld [vmem:[%s1 + $0x12b8] sm:$0xff]
    %v628 = vld [vmem:[%s1 + $0x12c0] sm:$0xff]
    %v629 = vld [vmem:[%s1 + $0x12c8] sm:$0xff]
    %v630 = vld [vmem:[%s1 + $0x12d0] sm:$0xff]
    %v631 = vld [vmem:[%s1 + $0x12d8] sm:$0xff]
    %v632 = vld [vmem:[%s1 + $0x12e0] sm:$0xff]
    %v633 = vld [vmem:[%s1 + $0x12e8] sm:$0xff]
    %v634 = vld [vmem:[%s1 + $0x12f0] sm:$0xff]
    %v635 = vld [vmem:[%s1 + $0x12f8] sm:$0xff]
    %v636 = vld [vmem:[%s1 + $0x1300] sm:$0xff]
    %v637 = vld [vmem:[%s1 + $0x1308] sm:$0xff]
    %v638 = vld [vmem:[%s1 + $0x1310] sm:$0xff]
    %v639 = vld [vmem:[%s1 + $0x1318] sm:$0xff]
    %v640 = vld [vmem:[%s1 + $0x1320] sm:$0xff]
    %v641 = vld [vmem:[%s1 + $0x1328] sm:$0xff]
    %v642 = vld [vmem:[%s1 + $0x1330] sm:$0xff]
    %v643 = vld [vmem:[%s1 + $0x1338] sm:$0xff]
    %v644 = vld [vmem:[%s1 + $0x1340] sm:$0xff]
    %v645 = vld [vmem:[%s1 + $0x1348] sm:$0xff]
    %v646 = vld [vmem:[%s1 + $0x1350] sm:$0xff]
    %v647 = vld [vmem:[%s1 + $0x1358] sm:$0xff]
    %v648 = vld [vmem:[%s1 + $0x1360] sm:$0xff]
    %v649 = vld [vmem:[%s1 + $0x1368] sm:$0xff]
    %v650 = vld [vmem:[%s1 + $0x1370] sm:$0xff]
    %v651 = vld [vmem:[%s1 + $0x1378] sm:$0xff]
    %v652 = vld [vmem:[%s1 + $0x1380] sm:$0xff]
    %v653 = vld [vmem:[%s1 + $0x1388] sm:$0xff]
    %v654 = vld [vmem:[%s1 + $0x1390] sm:$0xff]
    %v655 = vld [vmem:[%s1 + $0x1398] sm:$0xff]
    %v656 = vld [vmem:[%s1 + $0x13a0] sm:$0xff]
    %v657 = vld [vmem:[%s1 + $0x13a8] sm:$0xff]
    %v658 = vld [vmem:[%s1 + $0x13b0] sm:$0xff]
    %v659 = vld [vmem:[%s1 + $0x13b8] sm:$0xff]
    %v660 = vld [vmem:[%s1 + $0x13c0] sm:$0xff]
    %v661 = vld [vmem:[%s1 + $0x13c8] sm:$0xff]
    %v662 = vld [vmem:[%s1 + $0x13d0] sm:$0xff]
    %v663 = vld [vmem:[%s1 + $0x13d8] sm:$0xff]
    %v664 = vld [vmem:[%s1 + $0x13e0] sm:$0xff]
    %v665 = vld [vmem:[%s1 + $0x13e8] sm:$0xff]
    %v666 = vld [vmem:[%s1 + $0x13f0] sm:$0xff]
    %v667 = vld [vmem:[%s1 + $0x13f8] sm:$0xff]
    %v668 = vld [vmem:[%s1 + $0x1400] sm:$0xff]
    %v669 = vld [vmem:[%s1 + $0x1408] sm:$0xff]
    %v670 = vld [vmem:[%s1 + $0x1410] sm:$0xff]
    %v671 = vld [vmem:[%s1 + $0x1418] sm:$0xff]
    %v672 = vld [vmem:[%s1 + $0x1420] sm:$0xff]
    %v673 = vld [vmem:[%s1 + $0x1428] sm:$0xff]
    %v674 = vld [vmem:[%s1 + $0x1430] sm:$0xff]
    %v675 = vld [vmem:[%s1 + $0x1438] sm:$0xff]
    %v676 = vld [vmem:[%s1 + $0x1440] sm:$0xff]
    %v677 = vld [vmem:[%s1 + $0x1448] sm:$0xff]
    %v678 = vld [vmem:[%s1 + $0x1450] sm:$0xff]
    %v679 = vld [vmem:[%s1 + $0x1458] sm:$0xff]
    %v680 = vld [vmem:[%s1 + $0x1460] sm:$0xff]
    %v681 = vld [vmem:[%s1 + $0x1468] sm:$0xff]
    %v682 = vld [vmem:[%s1 + $0x1470] sm:$0xff]
    %v683 = vld [vmem:[%s1 + $0x1478] sm:$0xff]
    %v684 = vld [vmem:[%s1 + $0x1480] sm:$0xff]
    %v685 = vld [vmem:[%s1 + $0x1488] sm:$0xff]
    %v686 = vld [vmem:[%s1 + $0x1490] sm:$0xff]
    %v687 = vld [vmem:[%s1 + $0x1498] sm:$0xff]
    %v688 = vld [vmem:[%s1 + $0x14a0] sm:$0xff]
    %v689 = vld [vmem:[%s1 + $0x14a8] sm:$0xff]
    %v690 = vld [vmem:[%s1 + $0x14b0] sm:$0xff]
    %v691 = vld [vmem:[%s1 + $0x14b8] sm:$0xff]
    %v692 = vld [vmem:[%s1 + $0x14c0] sm:$0xff]
    %v693 = vld [vmem:[%s1 + $0x14c8] sm:$0xff]
    %v694 = vld [vmem:[%s1 + $0x14d0] sm:$0xff]
    %v695 = vld [vmem:[%s1 + $0x14d8] sm:$0xff]
    %v696 = vld [vmem:[%s1 + $0x14e0] sm:$0xff]
    %v697 = vld [vmem:[%s1 + $0x14e8] sm:$0xff]
    %v698 = vld [vmem:[%s1 + $0x14f0] sm:$0xff]
    %v699 = vld [vmem:[%s1 + $0x14f8] sm:$0xff]
    %v700 = vld [vmem:[%s1 + $0x1500] sm:$0xff]
    %v701 = vld [vmem:[%s1 + $0x1508] sm:$0xff]
    %v702 = vld [vmem:[%s1 + $0x1510] sm:$0xff]
    %v703 = vld [vmem:[%s1 + $0x1518] sm:$0xff]
    %v704 = vld [vmem:[%s1 + $0x1520] sm:$0xff]
    %v705 = vld [vmem:[%s1 + $0x1528] sm:$0xff]
    %v706 = vld [vmem:[%s1 + $0x1530] sm:$0xff]
    %v707 = vld [vmem:[%s1 + $0x1538] sm:$0xff]
    %v708 = vld [vmem:[%s1 + $0x1540] sm:$0xff]
    %v709 = vld [vmem:[%s1 + $0x1548] sm:$0xff]
    %v710 = vld [vmem:[%s1 + $0x1550] sm:$0xff]
    %v711 = vld [vmem:[%s1 + $0x1558] sm:$0xff]
    %v712 = vld [vmem:[%s1 + $0x1560] sm:$0xff]
    %v713 = vld [vmem:[%s1 + $0x1568] sm:$0xff]
    %v714 = vld [vmem:[%s1 + $0x1570] sm:$0xff]
    %v715 = vld [vmem:[%s1 + $0x1578] sm:$0xff]
    %v716 = vld [vmem:[%s1 + $0x1580] sm:$0xff]
    %v717 = vld [vmem:[%s1 + $0x1588] sm:$0xff]
    %v718 = vld [vmem:[%s1 + $0x1590] sm:$0xff]
    %v719 = vld [vmem:[%s1 + $0x1598] sm:$0xff]
    %v720 = vld [vmem:[%s1 + $0x15a0] sm:$0xff]
    %v721 = vld [vmem:[%s1 + $0x15a8] sm:$0xff]
    %v722 = vld [vmem:[%s1 + $0x15b0] sm:$0xff]
    %v723 = vld [vmem:[%s1 + $0x15b8] sm:$0xff]
    %v724 = vld [vmem:[%s1 + $0x15c0] sm:$0xff]
    %v725 = vld [vmem:[%s1 + $0x15c8] sm:$0xff]
    %v726 = vld [vmem:[%s1 + $0x15d0] sm:$0xff]
    %v727 = vld [vmem:[%s1 + $0x15d8] sm:$0xff]
    %v728 = vld [vmem:[%s1 + $0x15e0] sm:$0xff]
    %v729 = vld [vmem:[%s1 + $0x15e8] sm:$0xff]
    %v730 = vld [vmem:[%s1 + $0x15f0] sm:$0xff]
    %v731 = vld [vmem:[%s1 + $0x15f8] sm:$0xff]
    %v732 = vld [vmem:[%s1 + $0x1600] sm:$0xff]
    %v733 = vld [vmem:[%s1 + $0x1608] sm:$0xff]
    %v734 = vld [vmem:[%s1 + $0x1610] sm:$0xff]
    %v735 = vld [vmem:[%s1 + $0x1618] sm:$0xff]
    %v736 = vld [vmem:[%s1 + $0x1620] sm:$0xff]
    %v737 = vld [vmem:[%s1 + $0x1628] sm:$0xff]
    %v738 = vld [vmem:[%s1 + $0x1630] sm:$0xff]
    %v739 = vld [vmem:[%s1 + $0x1638] sm:$0xff]
    %v740 = vld [vmem:[%s1 + $0x1640] sm:$0xff]
    %v741 = vld [vmem:[%s1 + $0x1648] sm:$0xff]
    %v742 = vld [vmem:[%s1 + $0x1650] sm:$0xff]
    %v743 = vld [vmem:[%s1 + $0x1658] sm:$0xff]
    %v744 = vld [vmem:[%s1 + $0x1660] sm:$0xff]
    %v745 = vld [vmem:[%s1 + $0x1668] sm:$0xff]
    %v746 = vld [vmem:[%s1 + $0x1670] sm:$0xff]
    %v747 = vld [vmem:[%s1 + $0x1678] sm:$0xff]
    %v748 = vld [vmem:[%s1 + $0x1680] sm:$0xff]
    %v749 = vld [vmem:[%s1 + $0x1688] sm:$0xff]
    %v750 = vld [vmem:[%s1 + $0x1690] sm:$0xff]
    %v751 = vld [vmem:[%s1 + $0x1698] sm:$0xff]
    %v752 = vld [vmem:[%s1 + $0x16a0] sm:$0xff]
    %v753 = vld [vmem:[%s1 + $0x16a8] sm:$0xff]
    %v754 = vld [vmem:[%s1 + $0x16b0] sm:$0xff]
    %v755 = vld [vmem:[%s1 + $0x16b8] sm:$0xff]
    %v756 = vld [vmem:[%s1 + $0x16c0] sm:$0xff]
    %v757 = vld [vmem:[%s1 + $0x16c8] sm:$0xff]
    %v758 = vld [vmem:[%s1 + $0x16d0] sm:$0xff]
    %v759 = vld [vmem:[%s1 + $0x16d8] sm:$0xff]
    %v760 = vld [vmem:[%s1 + $0x16e0] sm:$0xff]
    %v761 = vld [vmem:[%s1 + $0x16e8] sm:$0xff]
    %v762 = vld [vmem:[%s1 + $0x16f0] sm:$0xff]
    %v763 = vld [vmem:[%s1 + $0x16f8] sm:$0xff]
    %v764 = vld [vmem:[%s1 + $0x1700] sm:$0xff]
    %v765 = vld [vmem:[%s1 + $0x1708] sm:$0xff]
    %v766 = vld [vmem:[%s1 + $0x1710] sm:$0xff]
    %v767 = vld [vmem:[%s1 + $0x1718] sm:$0xff]
    %v768 = vld [vmem:[%s1 + $0x1720] sm:$0xff]
    %v769 = vld [vmem:[%s1 + $0x1728] sm:$0xff]
    %v770 = vld [vmem:[%s1 + $0x1730] sm:$0xff]
    %v771 = vld [vmem:[%s1 + $0x1738] sm:$0xff]
    %v772 = vld [vmem:[%s1 + $0x1740] sm:$0xff]
    %v773 = vld [vmem:[%s1 + $0x1748] sm:$0xff]
    %v774 = vld [vmem:[%s1 + $0x1750] sm:$0xff]
    %v775 = vld [vmem:[%s1 + $0x1758] sm:$0xff]
    %v776 = vld [vmem:[%s1 + $0x1760] sm:$0xff]
    %v777 = vld [vmem:[%s1 + $0x1768] sm:$0xff]
    %v778 = vld [vmem:[%s1 + $0x1770] sm:$0xff]
    %v779 = vld [vmem:[%s1 + $0x1778] sm:$0xff]
    %v780 = vld [vmem:[%s1 + $0x1780] sm:$0xff]
    %v781 = vld [vmem:[%s1 + $0x1788] sm:$0xff]
    %v782 = vld [vmem:[%s1 + $0x1790] sm:$0xff]
    %v783 = vld [vmem:[%s1 + $0x1798] sm:$0xff]
    %v784 = vld [vmem:[%s1 + $0x17a0] sm:$0xff]
    %v785 = vld [vmem:[%s1 + $0x17a8] sm:$0xff]
    %v786 = vld [vmem:[%s1 + $0x17b0] sm:$0xff]
    %v787 = vld [vmem:[%s1 + $0x17b8] sm:$0xff]
    %v788 = vld [vmem:[%s1 + $0x17c0] sm:$0xff]
    %v789 = vld [vmem:[%s1 + $0x17c8] sm:$0xff]
    %v790 = vld [vmem:[%s1 + $0x17d0] sm:$0xff]
    %v791 = vld [vmem:[%s1 + $0x17d8] sm:$0xff]
    %v792 = vld [vmem:[%s1 + $0x17e0] sm:$0xff]
    %v793 = vld [vmem:[%s1 + $0x17e8] sm:$0xff]
    %v794 = vld [vmem:[%s1 + $0x17f0] sm:$0xff]
    %v795 = vld [vmem:[%s1 + $0x17f8] sm:$0xff]
    %v796 = vld [vmem:[%s1 + $0x1800] sm:$0xff]
    %v797 = vld [vmem:[%s1 + $0x1808] sm:$0xff]
    %v798 = vld [vmem:[%s1 + $0x1810] sm:$0xff]
    %v799 = vld [vmem:[%s1 + $0x1818] sm:$0xff]
    %v800 = vld [vmem:[%s1 + $0x1820] sm:$0xff]
    %v801 = vld [vmem:[%s1 + $0x1828] sm:$0xff]
    %v802 = vld [vmem:[%s1 + $0x1830] sm:$0xff]
    %v803 = vld [vmem:[%s1 + $0x1838] sm:$0xff]
    %v804 = vld [vmem:[%s1 + $0x1840] sm:$0xff]
    %v805 = vld [vmem:[%s1 + $0x1848] sm:$0xff]
    %v806 = vld [vmem:[%s1 + $0x1850] sm:$0xff]
    %v807 = vld [vmem:[%s1 + $0x1858] sm:$0xff]
    %v808 = vld [vmem:[%s1 + $0x1860] sm:$0xff]
    %v809 = vld [vmem:[%s1 + $0x1868] sm:$0xff]
    %v810 = vld [vmem:[%s1 + $0x1870] sm:$0xff]
    %v811 = vld [vmem:[%s1 + $0x1878] sm:$0xff]
    %v812 = vld [vmem:[%s1 + $0x1880] sm:$0xff]
    %v813 = vld [vmem:[%s1 + $0x1888] sm:$0xff]
    %v814 = vld [vmem:[%s1 + $0x1890] sm:$0xff]
    %v815 = vld [vmem:[%s1 + $0x1898] sm:$0xff]
    %v816 = vld [vmem:[%s1 + $0x18a0] sm:$0xff]
    %v817 = vld [vmem:[%s1 + $0x18a8] sm:$0xff]
    %v818 = vld [vmem:[%s1 + $0x18b0] sm:$0xff]
    %v819 = vld [vmem:[%s1 + $0x18b8] sm:$0xff]
    %v820 = vld [vmem:[%s1 + $0x18c0] sm:$0xff]
    %v821 = vld [vmem:[%s1 + $0x18c8] sm:$0xff]
    %v822 = vld [vmem:[%s1 + $0x18d0] sm:$0xff]
    %v823 = vld [vmem:[%s1 + $0x18d8] sm:$0xff]
    %v824 = vld [vmem:[%s1 + $0x18e0] sm:$0xff]
    %v825 = vld [vmem:[%s1 + $0x18e8] sm:$0xff]
    %v826 = vld [vmem:[%s1 + $0x18f0] sm:$0xff]
    %v827 = vld [vmem:[%s1 + $0x18f8] sm:$0xff]
    %v828 = vld [vmem:[%s1 + $0x1900] sm:$0xff]
    %v829 = vld [vmem:[%s1 + $0x1908] sm:$0xff]
    %v830 = vld [vmem:[%s1 + $0x1910] sm:$0xff]
    %v831 = vld [vmem:[%s1 + $0x1918] sm:$0xff]
    %v832 = vld [vmem:[%s1 + $0x1920] sm:$0xff]
    %v833 = vld [vmem:[%s1 + $0x1928] sm:$0xff]
    %v834 = vld [vmem:[%s1 + $0x1930] sm:$0xff]
    %v835 = vld [vmem:[%s1 + $0x1938] sm:$0xff]
    %v836 = vld [vmem:[%s1 + $0x1940] sm:$0xff]
    %v837 = vld [vmem:[%s1 + $0x1948] sm:$0xff]
    %v838 = vld [vmem:[%s1 + $0x1950] sm:$0xff]
    %v839 = vld [vmem:[%s1 + $0x1958] sm:$0xff]
    %v840 = vld [vmem:[%s1 + $0x1960] sm:$0xff]
    %v841 = vld [vmem:[%s1 + $0x1968] sm:$0xff]
    %v842 = vld [vmem:[%s1 + $0x1970] sm:$0xff]
    %v843 = vld [vmem:[%s1 + $0x1978] sm:$0xff]
    %v844 = vld [vmem:[%s1 + $0x1980] sm:$0xff]
    %v845 = vld [vmem:[%s1 + $0x1988] sm:$0xff]
    %v846 = vld [vmem:[%s1 + $0x1990] sm:$0xff]
    %v847 = vld [vmem:[%s1 + $0x1998] sm:$0xff]
    %v848 = vld [vmem:[%s1 + $0x19a0] sm:$0xff]
    %v849 = vld [vmem:[%s1 + $0x19a8] sm:$0xff]
    %v850 = vld [vmem:[%s1 + $0x19b0] sm:$0xff]
    %v851 = vld [vmem:[%s1 + $0x19b8] sm:$0xff]
    %v852 = vld [vmem:[%s1 + $0x19c0] sm:$0xff]
    %v853 = vld [vmem:[%s1 + $0x19c8] sm:$0xff]
    %v854 = vld [vmem:[%s1 + $0x19d0] sm:$0xff]
    %v855 = vld [vmem:[%s1 + $0x19d8] sm:$0xff]
    %v856 = vld [vmem:[%s1 + $0x19e0] sm:$0xff]
    %v857 = vld [vmem:[%s1 + $0x19e8] sm:$0xff]
    %v858 = vld [vmem:[%s1 + $0x19f0] sm:$0xff]
    %v859 = vld [vmem:[%s1 + $0x19f8] sm:$0xff]
    %v860 = vld [vmem:[%s1 + $0x1a00] sm:$0xff]
    %v861 = vld [vmem:[%s1 + $0x1a08] sm:$0xff]
    %v862 = vld [vmem:[%s1 + $0x1a10] sm:$0xff]
    %v863 = vld [vmem:[%s1 + $0x1a18] sm:$0xff]
    %v864 = vld [vmem:[%s1 + $0x1a20] sm:$0xff]
    %v865 = vld [vmem:[%s1 + $0x1a28] sm:$0xff]
    %v866 = vld [vmem:[%s1 + $0x1a30] sm:$0xff]
    %v867 = vld [vmem:[%s1 + $0x1a38] sm:$0xff]
    %v868 = vld [vmem:[%s1 + $0x1a40] sm:$0xff]
    %v869 = vld [vmem:[%s1 + $0x1a48] sm:$0xff]
    %v870 = vld [vmem:[%s1 + $0x1a50] sm:$0xff]
    %v871 = vld [vmem:[%s1 + $0x1a58] sm:$0xff]
    %v872 = vld [vmem:[%s1 + $0x1a60] sm:$0xff]
    %v873 = vld [vmem:[%s1 + $0x1a68] sm:$0xff]
    %v874 = vld [vmem:[%s1 + $0x1a70] sm:$0xff]
    %v875 = vld [vmem:[%s1 + $0x1a78] sm:$0xff]
    %v876 = vld [vmem:[%s1 + $0x1a80] sm:$0xff]
    %v877 = vld [vmem:[%s1 + $0x1a88] sm:$0xff]
    %v878 = vld [vmem:[%s1 + $0x1a90] sm:$0xff]
    %v879 = vld [vmem:[%s1 + $0x1a98] sm:$0xff]
    %v880 = vld [vmem:[%s1 + $0x1aa0] sm:$0xff]
    %v881 = vld [vmem:[%s1 + $0x1aa8] sm:$0xff]
    %v882 = vld [vmem:[%s1 + $0x1ab0] sm:$0xff]
    %v883 = vld [vmem:[%s1 + $0x1ab8] sm:$0xff]
    %v884 = vld [vmem:[%s1 + $0x1ac0] sm:$0xff]
    %v885 = vld [vmem:[%s1 + $0x1ac8] sm:$0xff]
    %v886 = vld [vmem:[%s1 + $0x1ad0] sm:$0xff]
    %v887 = vld [vmem:[%s1 + $0x1ad8] sm:$0xff]
    %v888 = vld [vmem:[%s1 + $0x1ae0] sm:$0xff]
    %v889 = vld [vmem:[%s1 + $0x1ae8] sm:$0xff]
    %v890 = vld [vmem:[%s1 + $0x1af0] sm:$0xff]
    %v891 = vld [vmem:[%s1 + $0x1af8] sm:$0xff]
    %v892 = vld [vmem:[%s1 + $0x1b00] sm:$0xff]
    %v893 = vld [vmem:[%s1 + $0x1b08] sm:$0xff]
    %v894 = vld [vmem:[%s1 + $0x1b10] sm:$0xff]
    %v895 = vld [vmem:[%s1 + $0x1b18] sm:$0xff]
    %v896 = vld [vmem:[%s1 + $0x1b20] sm:$0xff]
    %v897 = vld [vmem:[%s1 + $0x1b28] sm:$0xff]
    %v898 = vld [vmem:[%s1 + $0x1b30] sm:$0xff]
    %v899 = vld [vmem:[%s1 + $0x1b38] sm:$0xff]
    %v900 = vld [vmem:[%s1 + $0x1b40] sm:$0xff]
    %v901 = vld [vmem:[%s1 + $0x1b48] sm:$0xff]
    %v902 = vld [vmem:[%s1 + $0x1b50] sm:$0xff]
    %v903 = vld [vmem:[%s1 + $0x1b58] sm:$0xff]
    %v904 = vld [vmem:[%s1 + $0x1b60] sm:$0xff]
    %v905 = vld [vmem:[%s1 + $0x1b68] sm:$0xff]
    %v906 = vld [vmem:[%s1 + $0x1b70] sm:$0xff]
    %v907 = vld [vmem:[%s1 + $0x1b78] sm:$0xff]
    %v908 = vld [vmem:[%s1 + $0x1b80] sm:$0xff]
    %v909 = vld [vmem:[%s1 + $0x1b88] sm:$0xff]
    %v910 = vld [vmem:[%s1 + $0x1b90] sm:$0xff]
    %v911 = vld [vmem:[%s1 + $0x1b98] sm:$0xff]
    %v912 = vld [vmem:[%s1 + $0x1ba0] sm:$0xff]
    %v913 = vld [vmem:[%s1 + $0x1ba8] sm:$0xff]
    %v914 = vld [vmem:[%s1 + $0x1bb0] sm:$0xff]
    %v915 = vld [vmem:[%s1 + $0x1bb8] sm:$0xff]
    %v916 = vld [vmem:[%s1 + $0x1bc0] sm:$0xff]
    %v917 = vld [vmem:[%s1 + $0x1bc8] sm:$0xff]
    %v918 = vld [vmem:[%s1 + $0x1bd0] sm:$0xff]
    %v919 = vld [vmem:[%s1 + $0x1bd8] sm:$0xff]
    %v920 = vld [vmem:[%s1 + $0x1be0] sm:$0xff]
    %v921 = vld [vmem:[%s1 + $0x1be8] sm:$0xff]
    %v922 = vld [vmem:[%s1 + $0x1bf0] sm:$0xff]
    %v923 = vld [vmem:[%s1 + $0x1bf8] sm:$0xff]
    %v924 = vld [vmem:[%s1 + $0x1c00] sm:$0xff]
    %v925 = vld [vmem:[%s1 + $0x1c08] sm:$0xff]
    %v926 = vld [vmem:[%s1 + $0x1c10] sm:$0xff]
    %v927 = vld [vmem:[%s1 + $0x1c18] sm:$0xff]
    %v928 = vld [vmem:[%s1 + $0x1c20] sm:$0xff]
    %v929 = vld [vmem:[%s1 + $0x1c28] sm:$0xff]
    %v930 = vld [vmem:[%s1 + $0x1c30] sm:$0xff]
    %v931 = vld [vmem:[%s1 + $0x1c38] sm:$0xff]
    %v932 = vld [vmem:[%s1 + $0x1c40] sm:$0xff]
    %v933 = vld [vmem:[%s1 + $0x1c48] sm:$0xff]
    %v934 = vld [vmem:[%s1 + $0x1c50] sm:$0xff]
    %v935 = vld [vmem:[%s1 + $0x1c58] sm:$0xff]
    %v936 = vld [vmem:[%s1 + $0x1c60] sm:$0xff]
    %v937 = vld [vmem:[%s1 + $0x1c68] sm:$0xff]
    %v938 = vld [vmem:[%s1 + $0x1c70] sm:$0xff]
    %v939 = vld [vmem:[%s1 + $0x1c78] sm:$0xff]
    %v940 = vld [vmem:[%s1 + $0x1c80] sm:$0xff]
    %v941 = vld [vmem:[%s1 + $0x1c88] sm:$0xff]
    %v942 = vld [vmem:[%s1 + $0x1c90] sm:$0xff]
    %v943 = vld [vmem:[%s1 + $0x1c98] sm:$0xff]
    %v944 = vld [vmem:[%s1 + $0x1ca0] sm:$0xff]
    %v945 = vld [vmem:[%s1 + $0x1ca8] sm:$0xff]
    %v946 = vld [vmem:[%s1 + $0x1cb0] sm:$0xff]
    %v947 = vld [vmem:[%s1 + $0x1cb8] sm:$0xff]
    %v948 = vld [vmem:[%s1 + $0x1cc0] sm:$0xff]
    %v949 = vld [vmem:[%s1 + $0x1cc8] sm:$0xff]
    %v950 = vld [vmem:[%s1 + $0x1cd0] sm:$0xff]
    %v951 = vld [vmem:[%s1 + $0x1cd8] sm:$0xff]
    %v952 = vld [vmem:[%s1 + $0x1ce0] sm:$0xff]
    %v953 = vld [vmem:[%s1 + $0x1ce8] sm:$0xff]
    %v954 = vld [vmem:[%s1 + $0x1cf0] sm:$0xff]
    %v955 = vld [vmem:[%s1 + $0x1cf8] sm:$0xff]
    %v956 = vld [vmem:[%s1 + $0x1d00] sm:$0xff]
    %v957 = vld [vmem:[%s1 + $0x1d08] sm:$0xff]
    %v958 = vld [vmem:[%s1 + $0x1d10] sm:$0xff]
    %v959 = vld [vmem:[%s1 + $0x1d18] sm:$0xff]
    %v960 = vld [vmem:[%s1 + $0x1d20] sm:$0xff]
    %v961 = vld [vmem:[%s1 + $0x1d28] sm:$0xff]
    %v962 = vld [vmem:[%s1 + $0x1d30] sm:$0xff]
    %v963 = vld [vmem:[%s1 + $0x1d38] sm:$0xff]
    %v964 = vld [vmem:[%s1 + $0x1d40] sm:$0xff]
    %v965 = vld [vmem:[%s1 + $0x1d48] sm:$0xff]
    %v966 = vld [vmem:[%s1 + $0x1d50] sm:$0xff]
    %v967 = vld [vmem:[%s1 + $0x1d58] sm:$0xff]
    %v968 = vld [vmem:[%s1 + $0x1d60] sm:$0xff]
    %v969 = vld [vmem:[%s1 + $0x1d68] sm:$0xff]
    %v970 = vld [vmem:[%s1 + $0x1d70] sm:$0xff]
    %v971 = vld [vmem:[%s1 + $0x1d78] sm:$0xff]
    %v972 = vld [vmem:[%s1 + $0x1d80] sm:$0xff]
    %v973 = vld [vmem:[%s1 + $0x1d88] sm:$0xff]
    %v974 = vld [vmem:[%s1 + $0x1d90] sm:$0xff]
    %v975 = vld [vmem:[%s1 + $0x1d98] sm:$0xff]
    %v976 = vld [vmem:[%s1 + $0x1da0] sm:$0xff]
    %v977 = vld [vmem:[%s1 + $0x1da8] sm:$0xff]
    %v978 = vld [vmem:[%s1 + $0x1db0] sm:$0xff]
    %v979 = vld [vmem:[%s1 + $0x1db8] sm:$0xff]
    %v980 = vld [vmem:[%s1 + $0x1dc0] sm:$0xff]
    %v981 = vld [vmem:[%s1 + $0x1dc8] sm:$0xff]
    %v982 = vld [vmem:[%s1 + $0x1dd0] sm:$0xff]
    %v983 = vld [vmem:[%s1 + $0x1dd8] sm:$0xff]
    %v984 = vld [vmem:[%s1 + $0x1de0] sm:$0xff]
    %v985 = vld [vmem:[%s1 + $0x1de8] sm:$0xff]
    %v986 = vld [vmem:[%s1 + $0x1df0] sm:$0xff]
    %v987 = vld [vmem:[%s1 + $0x1df8] sm:$0xff]
    %v988 = vld [vmem:[%s1 + $0x1e00] sm:$0xff]
    %v989 = vld [vmem:[%s1 + $0x1e08] sm:$0xff]
    %v990 = vld [vmem:[%s1 + $0x1e10] sm:$0xff]
    %v991 = vld [vmem:[%s1 + $0x1e18] sm:$0xff]
    %v992 = vld [vmem:[%s1 + $0x1e20] sm:$0xff]
    %v993 = vld [vmem:[%s1 + $0x1e28] sm:$0xff]
    %v994 = vld [vmem:[%s1 + $0x1e30] sm:$0xff]
    %v995 = vld [vmem:[%s1 + $0x1e38] sm:$0xff]
    %v996 = vld [vmem:[%s1 + $0x1e40] sm:$0xff]
    %v997 = vld [vmem:[%s1 + $0x1e48] sm:$0xff]
    %v998 = vld [vmem:[%s1 + $0x1e50] sm:$0xff]
    %v999 = vld [vmem:[%s1 + $0x1e58] sm:$0xff]
    %v1000 = vld [vmem:[%s1 + $0x1e60] sm:$0xff]
    %v1001 = vld [vmem:[%s1 + $0x1e68] sm:$0xff]
    %v1002 = vld [vmem:[%s1 + $0x1e70] sm:$0xff]
    %v1003 = vld [vmem:[%s1 + $0x1e78] sm:$0xff]
    %v1004 = vld [vmem:[%s1 + $0x1e80] sm:$0xff]
    %v1005 = vld [vmem:[%s1 + $0x1e88] sm:$0xff]
    %v1006 = vld [vmem:[%s1 + $0x1e90] sm:$0xff]
    %v1007 = vld [vmem:[%s1 + $0x1e98] sm:$0xff]
    %v1008 = vld [vmem:[%s1 + $0x1ea0] sm:$0xff]
    %v1009 = vld [vmem:[%s1 + $0x1ea8] sm:$0xff]
    %v1010 = vld [vmem:[%s1 + $0x1eb0] sm:$0xff]
    %v1011 = vld [vmem:[%s1 + $0x1eb8] sm:$0xff]
    %v1012 = vld [vmem:[%s1 + $0x1ec0] sm:$0xff]
    %v1013 = vld [vmem:[%s1 + $0x1ec8] sm:$0xff]
    %v1014 = vld [vmem:[%s1 + $0x1ed0] sm:$0xff]
    %v1015 = vld [vmem:[%s1 + $0x1ed8] sm:$0xff]
    %v1016 = vld [vmem:[%s1 + $0x1ee0] sm:$0xff]
    %v1017 = vld [vmem:[%s1 + $0x1ee8] sm:$0xff]
    %v1018 = vld [vmem:[%s1 + $0x1ef0] sm:$0xff]
    %v1019 = vld [vmem:[%s1 + $0x1ef8] sm:$0xff]
    %v1020 = vld [vmem:[%s1 + $0x1f00] sm:$0xff]
    %v1021 = vld [vmem:[%s1 + $0x1f08] sm:$0xff]
    %v1022 = vld [vmem:[%s1 + $0x1f10] sm:$0xff]
    %v1023 = vld [vmem:[%s1 + $0x1f18] sm:$0xff]
    %v1024 = vld [vmem:[%s1 + $0x1f20] sm:$0xff]
    %v1025 = vld [vmem:[%s1 + $0x1f28] sm:$0xff]
    %v1026 = vld [vmem:[%s1 + $0x1f30] sm:$0xff]
    %v1027 = vld [vmem:[%s1 + $0x1f38] sm:$0xff]
    %v1028 = vld [vmem:[%s1 + $0x1f40] sm:$0xff]
    %v1029 = vld [vmem:[%s1 + $0x1f48] sm:$0xff]
    %v1030 = vld [vmem:[%s1 + $0x1f50] sm:$0xff]
    %v1031 = vld [vmem:[%s1 + $0x1f58] sm:$0xff]
    %v1032 = vld [vmem:[%s1 + $0x1f60] sm:$0xff]
    %v1033 = vld [vmem:[%s1 + $0x1f68] sm:$0xff]
    %v1034 = vld [vmem:[%s1 + $0x1f70] sm:$0xff]
    %v1035 = vld [vmem:[%s1 + $0x1f78] sm:$0xff]
    %v1036 = vld [vmem:[%s1 + $0x1f80] sm:$0xff]
    %v1037 = vld [vmem:[%s1 + $0x1f88] sm:$0xff]
    %v1038 = vld [vmem:[%s1 + $0x1f90] sm:$0xff]
    %v1039 = vld [vmem:[%s1 + $0x1f98] sm:$0xff]
    %v1040 = vld [vmem:[%s1 + $0x1fa0] sm:$0xff]
    %v1041 = vld [vmem:[%s1 + $0x1fa8] sm:$0xff]
    %v1042 = vld [vmem:[%s1 + $0x1fb0] sm:$0xff]
    %v1043 = vld [vmem:[%s1 + $0x1fb8] sm:$0xff]
    %v1044 = vld [vmem:[%s1 + $0x1fc0] sm:$0xff]
    %v1045 = vld [vmem:[%s1 + $0x1fc8] sm:$0xff]
    %v1046 = vld [vmem:[%s1 + $0x1fd0] sm:$0xff]
    %v1047 = vld [vmem:[%s1 + $0x1fd8] sm:$0xff]
    %v1048 = vld [vmem:[%s1 + $0x1fe0] sm:$0xff]
    %v1049 = vld [vmem:[%s1 + $0x1fe8] sm:$0xff]
    %v1050 = vld [vmem:[%s1 + $0x1ff0] sm:$0xff]
    %v1051 = vld [vmem:[%s1 + $0x1ff8] sm:$0xff]
    %v1052 = vld [vmem:[%s1 + $0x2000] sm:$0xff]
    %v1053 = vld [vmem:[%s1 + $0x2008] sm:$0xff]
    %v1054 = vld [vmem:[%s1 + $0x2010] sm:$0xff]
    %v1055 = vld [vmem:[%s1 + $0x2018] sm:$0xff]
    %v1056 = vld [vmem:[%s1 + $0x2020] sm:$0xff]
    %v1057 = vld [vmem:[%s1 + $0x2028] sm:$0xff]
    %v1058 = vld [vmem:[%s1 + $0x2030] sm:$0xff]
    %v1059 = vld [vmem:[%s1 + $0x2038] sm:$0xff]
    %v1060 = vld [vmem:[%s1 + $0x2040] sm:$0xff]
    %v1061 = vld [vmem:[%s1 + $0x2048] sm:$0xff]
    %v1062 = vld [vmem:[%s1 + $0x2050] sm:$0xff]
    %v1063 = vld [vmem:[%s1 + $0x2058] sm:$0xff]
    %v1064 = vld [vmem:[%s1 + $0x2060] sm:$0xff]
    %v1065 = vld [vmem:[%s1 + $0x2068] sm:$0xff]
    %v1066 = vld [vmem:[%s1 + $0x2070] sm:$0xff]
    %v1067 = vld [vmem:[%s1 + $0x2078] sm:$0xff]
    %v1068 = vld [vmem:[%s1 + $0x2080] sm:$0xff]
    %v1069 = vld [vmem:[%s1 + $0x2088] sm:$0xff]
    %v1070 = vld [vmem:[%s1 + $0x2090] sm:$0xff]
    %v1071 = vld [vmem:[%s1 + $0x2098] sm:$0xff]
    %v1072 = vld [vmem:[%s1 + $0x20a0] sm:$0xff]
    %v1073 = vld [vmem:[%s1 + $0x20a8] sm:$0xff]
    %v1074 = vld [vmem:[%s1 + $0x20b0] sm:$0xff]
    %v1075 = vld [vmem:[%s1 + $0x20b8] sm:$0xff]
    %v1076 = vld [vmem:[%s1 + $0x20c0] sm:$0xff]
    %v1077 = vld [vmem:[%s1 + $0x20c8] sm:$0xff]
    %v1078 = vld [vmem:[%s1 + $0x20d0] sm:$0xff]
    %v1079 = vld [vmem:[%s1 + $0x20d8] sm:$0xff]
    %v1080 = vld [vmem:[%s1 + $0x20e0] sm:$0xff]
    %v1081 = vld [vmem:[%s1 + $0x20e8] sm:$0xff]
    %v1082 = vld [vmem:[%s1 + $0x20f0] sm:$0xff]
    %v1083 = vld [vmem:[%s1 + $0x20f8] sm:$0xff]
    %v1084 = vld [vmem:[%s1 + $0x2100] sm:$0xff]
    %v1085 = vld [vmem:[%s1 + $0x2108] sm:$0xff]
    %v1086 = vld [vmem:[%s1 + $0x2110] sm:$0xff]
    %v1087 = vld [vmem:[%s1 + $0x2118] sm:$0xff]
    %v1088 = vld [vmem:[%s1 + $0x2120] sm:$0xff]
    %v1089 = vld [vmem:[%s1 + $0x2128] sm:$0xff]
    %v1090 = vld [vmem:[%s1 + $0x2130] sm:$0xff]
    %v1091 = vld [vmem:[%s1 + $0x2138] sm:$0xff]
    %v1092 = vld [vmem:[%s1 + $0x2140] sm:$0xff]
    %v1093 = vld [vmem:[%s1 + $0x2148] sm:$0xff]
    %v1094 = vld [vmem:[%s1 + $0x2150] sm:$0xff]
    %v1095 = vld [vmem:[%s1 + $0x2158] sm:$0xff]
    %v1096 = vld [vmem:[%s1 + $0x2160] sm:$0xff]
    %v1097 = vld [vmem:[%s1 + $0x2168] sm:$0xff]
    %v1098 = vld [vmem:[%s1 + $0x2170] sm:$0xff]
    %v1099 = vld [vmem:[%s1 + $0x2178] sm:$0xff]
    %v1100 = vld [vmem:[%s1 + $0x2180] sm:$0xff]
    %v1101 = vld [vmem:[%s1 + $0x2188] sm:$0xff]
    %v1102 = vld [vmem:[%s1 + $0x2190] sm:$0xff]
    %v1103 = vld [vmem:[%s1 + $0x2198] sm:$0xff]
    %v1104 = vld [vmem:[%s1 + $0x21a0] sm:$0xff]
    %v1105 = vld [vmem:[%s1 + $0x21a8] sm:$0xff]
    %v1106 = vld [vmem:[%s1 + $0x21b0] sm:$0xff]
    %v1107 = vld [vmem:[%s1 + $0x21b8] sm:$0xff]
    %v1108 = vld [vmem:[%s1 + $0x21c0] sm:$0xff]
    %v1109 = vld [vmem:[%s1 + $0x21c8] sm:$0xff]
    %v1110 = vld [vmem:[%s1 + $0x21d0] sm:$0xff]
    %v1111 = vld [vmem:[%s1 + $0x21d8] sm:$0xff]
    %v1112 = vld [vmem:[%s1 + $0x21e0] sm:$0xff]
    %v1113 = vld [vmem:[%s1 + $0x21e8] sm:$0xff]
    %v1114 = vld [vmem:[%s1 + $0x21f0] sm:$0xff]
    %v1115 = vld [vmem:[%s1 + $0x21f8] sm:$0xff]
    %v1116 = vld [vmem:[%s1 + $0x2200] sm:$0xff]
    %v1117 = vld [vmem:[%s1 + $0x2208] sm:$0xff]
    %v1118 = vld [vmem:[%s1 + $0x2210] sm:$0xff]
    %v1119 = vld [vmem:[%s1 + $0x2218] sm:$0xff]
    %v1120 = vld [vmem:[%s1 + $0x2220] sm:$0xff]
    %v1121 = vld [vmem:[%s1 + $0x2228] sm:$0xff]
    %v1122 = vld [vmem:[%s1 + $0x2230] sm:$0xff]
    %v1123 = vld [vmem:[%s1 + $0x2238] sm:$0xff]
    %v1124 = vld [vmem:[%s1 + $0x2240] sm:$0xff]
    %v1125 = vld [vmem:[%s1 + $0x2248] sm:$0xff]
    %v1126 = vld [vmem:[%s1 + $0x2250] sm:$0xff]
    %v1127 = vld [vmem:[%s1 + $0x2258] sm:$0xff]
    %v1128 = vld [vmem:[%s1 + $0x2260] sm:$0xff]
    %v1129 = vld [vmem:[%s1 + $0x2268] sm:$0xff]
    %v1130 = vld [vmem:[%s1 + $0x2270] sm:$0xff]
    %v1131 = vld [vmem:[%s1 + $0x2278] sm:$0xff]
    %v1132 = vld [vmem:[%s1 + $0x2280] sm:$0xff]
    %v1133 = vld [vmem:[%s1 + $0x2288] sm:$0xff]
    %v1134 = vld [vmem:[%s1 + $0x2290] sm:$0xff]
    %v1135 = vld [vmem:[%s1 + $0x2298] sm:$0xff]
    %v1136 = vld [vmem:[%s1 + $0x22a0] sm:$0xff]
    %v1137 = vld [vmem:[%s1 + $0x22a8] sm:$0xff]
    %v1138 = vld [vmem:[%s1 + $0x22b0] sm:$0xff]
    %v1139 = vld [vmem:[%s1 + $0x22b8] sm:$0xff]
    %v1140 = vld [vmem:[%s1 + $0x22c0] sm:$0xff]
    %v1141 = vld [vmem:[%s1 + $0x22c8] sm:$0xff]
    %v1142 = vld [vmem:[%s1 + $0x22d0] sm:$0xff]
    %v1143 = vld [vmem:[%s1 + $0x22d8] sm:$0xff]
    %v1144 = vld [vmem:[%s1 + $0x22e0] sm:$0xff]
    %v1145 = vld [vmem:[%s1 + $0x22e8] sm:$0xff]
    %v1146 = vld [vmem:[%s1 + $0x22f0] sm:$0xff]
    %v1147 = vld [vmem:[%s1 + $0x22f8] sm:$0xff]
    %v1148 = vld [vmem:[%s1 + $0x2300] sm:$0xff]
    %v1149 = vld [vmem:[%s1 + $0x2308] sm:$0xff]
    %v1150 = vld [vmem:[%s1 + $0x2310] sm:$0xff]
    %v1151 = vld [vmem:[%s1 + $0x2318] sm:$0xff]
    %v1152 = vld [vmem:[%s1 + $0x2320] sm:$0xff]
    %v1153 = vld [vmem:[%s1 + $0x2328] sm:$0xff]
    %v1154 = vld [vmem:[%s1 + $0x2330] sm:$0xff]
    %v1155 = vld [vmem:[%s1 + $0x2338] sm:$0xff]
    %v1156 = vld [vmem:[%s1 + $0x2340] sm:$0xff]
    %v1157 = vld [vmem:[%s1 + $0x2348] sm:$0xff]
    %v1158 = vld [vmem:[%s1 + $0x2350] sm:$0xff]
    %v1159 = vld [vmem:[%s1 + $0x2358] sm:$0xff]
    %v1160 = vld [vmem:[%s1 + $0x2360] sm:$0xff]
    %v1161 = vld [vmem:[%s1 + $0x2368] sm:$0xff]
    %v1162 = vld [vmem:[%s1 + $0x2370] sm:$0xff]
    %v1163 = vld [vmem:[%s1 + $0x2378] sm:$0xff]
    %v1164 = vld [vmem:[%s1 + $0x2380] sm:$0xff]
    %v1165 = vld [vmem:[%s1 + $0x2388] sm:$0xff]
    %v1166 = vld [vmem:[%s1 + $0x2390] sm:$0xff]
    %v1167 = vld [vmem:[%s1 + $0x2398] sm:$0xff]
    %v1168 = vld [vmem:[%s1 + $0x23a0] sm:$0xff]
    %v1169 = vld [vmem:[%s1 + $0x23a8] sm:$0xff]
    %v1170 = vld [vmem:[%s1 + $0x23b0] sm:$0xff]
    %v1171 = vld [vmem:[%s1 + $0x23b8] sm:$0xff]
    %v1172 = vld [vmem:[%s1 + $0x23c0] sm:$0xff]
    %v1173 = vld [vmem:[%s1 + $0x23c8] sm:$0xff]
    %v1174 = vld [vmem:[%s1 + $0x23d0] sm:$0xff]
    %v1175 = vld [vmem:[%s1 + $0x23d8] sm:$0xff]
    %v1176 = vld [vmem:[%s1 + $0x23e0] sm:$0xff]
    %v1177 = vld [vmem:[%s1 + $0x23e8] sm:$0xff]
    %v1178 = vld [vmem:[%s1 + $0x23f0] sm:$0xff]
    %v1179 = vld [vmem:[%s1 + $0x23f8] sm:$0xff]
    %v1180 = vld [vmem:[%s1 + $0x2400] sm:$0xff]
    %v1181 = vld [vmem:[%s1 + $0x2408] sm:$0xff]
    %v1182 = vld [vmem:[%s1 + $0x2410] sm:$0xff]
    %v1183 = vld [vmem:[%s1 + $0x2418] sm:$0xff]
    %v1184 = vld [vmem:[%s1 + $0x2420] sm:$0xff]
    %v1185 = vld [vmem:[%s1 + $0x2428] sm:$0xff]
    %v1186 = vld [vmem:[%s1 + $0x2430] sm:$0xff]
    %v1187 = vld [vmem:[%s1 + $0x2438] sm:$0xff]
    %v1188 = vld [vmem:[%s1 + $0x2440] sm:$0xff]
    %v1189 = vld [vmem:[%s1 + $0x2448] sm:$0xff]
    %v1190 = vld [vmem:[%s1 + $0x2450] sm:$0xff]
    %v1191 = vld [vmem:[%s1 + $0x2458] sm:$0xff]
    %v1192 = vld [vmem:[%s1 + $0x2460] sm:$0xff]
    %v1193 = vld [vmem:[%s1 + $0x2468] sm:$0xff]
    %v1194 = vld [vmem:[%s1 + $0x2470] sm:$0xff]
    %v1195 = vld [vmem:[%s1 + $0x2478] sm:$0xff]
    %v1196 = vld [vmem:[%s1 + $0x2480] sm:$0xff]
    %v1197 = vld [vmem:[%s1 + $0x2488] sm:$0xff]
    %v1198 = vld [vmem:[%s1 + $0x2490] sm:$0xff]
    %v1199 = vld [vmem:[%s1 + $0x2498] sm:$0xff]
    %v1200 = vld [vmem:[%s1 + $0x24a0] sm:$0xff]
    %v1201 = vld [vmem:[%s1 + $0x24a8] sm:$0xff]
    %v1202 = vld [vmem:[%s1 + $0x24b0] sm:$0xff]
    %v1203 = vld [vmem:[%s1 + $0x24b8] sm:$0xff]
    %v1204 = vld [vmem:[%s1 + $0x24c0] sm:$0xff]
    %v1205 = vld [vmem:[%s1 + $0x24c8] sm:$0xff]
    %v1206 = vld [vmem:[%s1 + $0x24d0] sm:$0xff]
    %v1207 = vld [vmem:[%s1 + $0x24d8] sm:$0xff]
    %v1208 = vld [vmem:[%s1 + $0x24e0] sm:$0xff]
    %v1209 = vld [vmem:[%s1 + $0x24e8] sm:$0xff]
    %v1210 = vld [vmem:[%s1 + $0x24f0] sm:$0xff]
    %v1211 = vld [vmem:[%s1 + $0x24f8] sm:$0xff]
    %v1212 = vld [vmem:[%s1 + $0x2500] sm:$0xff]
    %v1213 = vld [vmem:[%s1 + $0x2508] sm:$0xff]
    %v1214 = vld [vmem:[%s1 + $0x2510] sm:$0xff]
    %v1215 = vld [vmem:[%s1 + $0x2518] sm:$0xff]
    %v1216 = vld [vmem:[%s1 + $0x2520] sm:$0xff]
    %v1217 = vld [vmem:[%s1 + $0x2528] sm:$0xff]
    %v1218 = vld [vmem:[%s1 + $0x2530] sm:$0xff]
    %v1219 = vld [vmem:[%s1 + $0x2538] sm:$0xff]
    %v1220 = vld [vmem:[%s1 + $0x2540] sm:$0xff]
    %v1221 = vld [vmem:[%s1 + $0x2548] sm:$0xff]
    %v1222 = vld [vmem:[%s1 + $0x2550] sm:$0xff]
    %v1223 = vld [vmem:[%s1 + $0x2558] sm:$0xff]
    %v1224 = vld [vmem:[%s1 + $0x2560] sm:$0xff]
    %v1225 = vld [vmem:[%s1 + $0x2568] sm:$0xff]
    %v1226 = vld [vmem:[%s1 + $0x2570] sm:$0xff]
    %v1227 = vld [vmem:[%s1 + $0x2578] sm:$0xff]
    %v1228 = vld [vmem:[%s1 + $0x2580] sm:$0xff]
    %v1229 = vld [vmem:[%s1 + $0x2588] sm:$0xff]
    %v1230 = vld [vmem:[%s1 + $0x2590] sm:$0xff]
    %v1231 = vld [vmem:[%s1 + $0x2598] sm:$0xff]
    %v1232 = vld [vmem:[%s1 + $0x25a0] sm:$0xff]
    %v1233 = vld [vmem:[%s1 + $0x25a8] sm:$0xff]
    %v1234 = vld [vmem:[%s1 + $0x25b0] sm:$0xff]
    %v1235 = vld [vmem:[%s1 + $0x25b8] sm:$0xff]
    %v1236 = vld [vmem:[%s1 + $0x25c0] sm:$0xff]
    %v1237 = vld [vmem:[%s1 + $0x25c8] sm:$0xff]
    %v1238 = vld [vmem:[%s1 + $0x25d0] sm:$0xff]
    %v1239 = vld [vmem:[%s1 + $0x25d8] sm:$0xff]
    %v1240 = vld [vmem:[%s1 + $0x25e0] sm:$0xff]
    %v1241 = vld [vmem:[%s1 + $0x25e8] sm:$0xff]
    %v1242 = vld [vmem:[%s1 + $0x25f0] sm:$0xff]
    %v1243 = vld [vmem:[%s1 + $0x25f8] sm:$0xff]
    %v1244 = vld [vmem:[%s1 + $0x2600] sm:$0xff]
    %v1245 = vld [vmem:[%s1 + $0x2608] sm:$0xff]
    %v1246 = vld [vmem:[%s1 + $0x2610] sm:$0xff]
    %v1247 = vld [vmem:[%s1 + $0x2618] sm:$0xff]
    %v1248 = vld [vmem:[%s1 + $0x2620] sm:$0xff]
    %v1249 = vld [vmem:[%s1 + $0x2628] sm:$0xff]
    %v1250 = vld [vmem:[%s1 + $0x2630] sm:$0xff]
    %v1251 = vld [vmem:[%s1 + $0x2638] sm:$0xff]
    %v1252 = vld [vmem:[%s1 + $0x2640] sm:$0xff]
    %v1253 = vld [vmem:[%s1 + $0x2648] sm:$0xff]
    %v1254 = vld [vmem:[%s1 + $0x2650] sm:$0xff]
    %v1255 = vld [vmem:[%s1 + $0x2658] sm:$0xff]
    %v1256 = vld [vmem:[%s1 + $0x2660] sm:$0xff]
    %v1257 = vld [vmem:[%s1 + $0x2668] sm:$0xff]
    %v1258 = vld [vmem:[%s1 + $0x2670] sm:$0xff]
    %v1259 = vld [vmem:[%s1 + $0x2678] sm:$0xff]
    %v1260 = vld [vmem:[%s1 + $0x2680] sm:$0xff]
    %v1261 = vld [vmem:[%s1 + $0x2688] sm:$0xff]
    %v1262 = vld [vmem:[%s1 + $0x2690] sm:$0xff]
    %v1263 = vld [vmem:[%s1 + $0x2698] sm:$0xff]
    %v1264 = vld [vmem:[%s1 + $0x26a0] sm:$0xff]
    %v1265 = vld [vmem:[%s1 + $0x26a8] sm:$0xff]
    %v1266 = vld [vmem:[%s1 + $0x26b0] sm:$0xff]
    %v1267 = vld [vmem:[%s1 + $0x26b8] sm:$0xff]
    %v1268 = vld [vmem:[%s1 + $0x26c0] sm:$0xff]
    %v1269 = vld [vmem:[%s1 + $0x26c8] sm:$0xff]
    %v1270 = vld [vmem:[%s1 + $0x26d0] sm:$0xff]
    %v1271 = vld [vmem:[%s1 + $0x26d8] sm:$0xff]
    %v1272 = vld [vmem:[%s1 + $0x26e0] sm:$0xff]
    %v1273 = vld [vmem:[%s1 + $0x26e8] sm:$0xff]
    %v1274 = vld [vmem:[%s1 + $0x26f0] sm:$0xff]
    %v1275 = vld [vmem:[%s1 + $0x26f8] sm:$0xff]
    %v1276 = vld [vmem:[%s1 + $0x2700] sm:$0xff]
    %v1277 = vld [vmem:[%s1 + $0x2708] sm:$0xff]
    %v1278 = vld [vmem:[%s1 + $0x2710] sm:$0xff]
    %v1279 = vld [vmem:[%s1 + $0x2718] sm:$0xff]
    %v1280 = vld [vmem:[%s1 + $0x2720] sm:$0xff]
    %v1281 = vld [vmem:[%s1 + $0x2728] sm:$0xff]
    %v1282 = vld [vmem:[%s1 + $0x2730] sm:$0xff]
    %v1283 = vld [vmem:[%s1 + $0x2738] sm:$0xff]
    %v1284 = vld [vmem:[%s1 + $0x2740] sm:$0xff]
    %v1285 = vld [vmem:[%s1 + $0x2748] sm:$0xff]
    %v1286 = vld [vmem:[%s1 + $0x2750] sm:$0xff]
    %v1287 = vld [vmem:[%s1 + $0x2758] sm:$0xff]
    %v1288 = vld [vmem:[%s1 + $0x2760] sm:$0xff]
    %v1289 = vld [vmem:[%s1 + $0x2768] sm:$0xff]
    %v1290 = vld [vmem:[%s1 + $0x2770] sm:$0xff]
    %v1291 = vld [vmem:[%s1 + $0x2778] sm:$0xff]
    %v1292 = vld [vmem:[%s1 + $0x2780] sm:$0xff]
    %v1293 = vld [vmem:[%s1 + $0x2788] sm:$0xff]
    %v1294 = vld [vmem:[%s1 + $0x2790] sm:$0xff]
    %v1295 = vld [vmem:[%s1 + $0x2798] sm:$0xff]
    %v1296 = vld [vmem:[%s1 + $0x27a0] sm:$0xff]
    %v1297 = vld [vmem:[%s1 + $0x27a8] sm:$0xff]
    %v1298 = vld [vmem:[%s1 + $0x27b0] sm:$0xff]
    %v1299 = vld [vmem:[%s1 + $0x27b8] sm:$0xff]
    %v1300 = vld [vmem:[%s1 + $0x27c0] sm:$0xff]
    %v1301 = vld [vmem:[%s1 + $0x27c8] sm:$0xff]
    %v1302 = vld [vmem:[%s1 + $0x27d0] sm:$0xff]
    %v1303 = vld [vmem:[%s1 + $0x27d8] sm:$0xff]
    %v1304 = vld [vmem:[%s1 + $0x27e0] sm:$0xff]
    %v1305 = vld [vmem:[%s1 + $0x27e8] sm:$0xff]
    %v1306 = vld [vmem:[%s1 + $0x27f0] sm:$0xff]
    %v1307 = vld [vmem:[%s1 + $0x27f8] sm:$0xff]
    %v1308 = vld [vmem:[%s1 + $0x2800] sm:$0xff]
    %v1309 = vld [vmem:[%s1 + $0x2808] sm:$0xff]
    %v1310 = vld [vmem:[%s1 + $0x2810] sm:$0xff]
    %v1311 = vld [vmem:[%s1 + $0x2818] sm:$0xff]
    %v1312 = vld [vmem:[%s1 + $0x2820] sm:$0xff]
    %v1313 = vld [vmem:[%s1 + $0x2828] sm:$0xff]
    %v1314 = vld [vmem:[%s1 + $0x2830] sm:$0xff]
    %v1315 = vld [vmem:[%s1 + $0x2838] sm:$0xff]
    %v1316 = vld [vmem:[%s1 + $0x2840] sm:$0xff]
    %v1317 = vld [vmem:[%s1 + $0x2848] sm:$0xff]
    %v1318 = vld [vmem:[%s1 + $0x2850] sm:$0xff]
    %v1319 = vld [vmem:[%s1 + $0x2858] sm:$0xff]
    %v1320 = vld [vmem:[%s1 + $0x2860] sm:$0xff]
    %v1321 = vld [vmem:[%s1 + $0x2868] sm:$0xff]
    %v1322 = vld [vmem:[%s1 + $0x2870] sm:$0xff]
    %v1323 = vld [vmem:[%s1 + $0x2878] sm:$0xff]
    %v1324 = vld [vmem:[%s1 + $0x2880] sm:$0xff]
    %v1325 = vld [vmem:[%s1 + $0x2888] sm:$0xff]
    %v1326 = vld [vmem:[%s1 + $0x2890] sm:$0xff]
    %v1327 = vld [vmem:[%s1 + $0x2898] sm:$0xff]
    %v1328 = vld [vmem:[%s1 + $0x28a0] sm:$0xff]
    %v1329 = vld [vmem:[%s1 + $0x28a8] sm:$0xff]
    %v1330 = vld [vmem:[%s1 + $0x28b0] sm:$0xff]
    %v1331 = vld [vmem:[%s1 + $0x28b8] sm:$0xff]
    %v1332 = vld [vmem:[%s1 + $0x28c0] sm:$0xff]
    %v1333 = vld [vmem:[%s1 + $0x28c8] sm:$0xff]
    %v1334 = vld [vmem:[%s1 + $0x28d0] sm:$0xff]
    %v1335 = vld [vmem:[%s1 + $0x28d8] sm:$0xff]
    %v1336 = vld [vmem:[%s1 + $0x28e0] sm:$0xff]
    %v1337 = vld [vmem:[%s1 + $0x28e8] sm:$0xff]
    %v1338 = vld [vmem:[%s1 + $0x28f0] sm:$0xff]
    %v1339 = vld [vmem:[%s1 + $0x28f8] sm:$0xff]
    %v1340 = vld [vmem:[%s1 + $0x2900] sm:$0xff]
    %v1341 = vld [vmem:[%s1 + $0x2908] sm:$0xff]
    %v1342 = vld [vmem:[%s1 + $0x2910] sm:$0xff]
    %v1343 = vld [vmem:[%s1 + $0x2918] sm:$0xff]
    %v1344 = vld [vmem:[%s1 + $0x2920] sm:$0xff]
    %v1345 = vld [vmem:[%s1 + $0x2928] sm:$0xff]
    %v1346 = vld [vmem:[%s1 + $0x2930] sm:$0xff]
    %v1347 = vld [vmem:[%s1 + $0x2938] sm:$0xff]
    %v1348 = vld [vmem:[%s1 + $0x2940] sm:$0xff]
    %v1349 = vld [vmem:[%s1 + $0x2948] sm:$0xff]
    %v1350 = vld [vmem:[%s1 + $0x2950] sm:$0xff]
    %v1351 = vld [vmem:[%s1 + $0x2958] sm:$0xff]
    %v1352 = vld [vmem:[%s1 + $0x2960] sm:$0xff]
    %v1353 = vld [vmem:[%s1 + $0x2968] sm:$0xff]
    %v1354 = vld [vmem:[%s1 + $0x2970] sm:$0xff]
    %v1355 = vld [vmem:[%s1 + $0x2978] sm:$0xff]
    %v1356 = vld [vmem:[%s1 + $0x2980] sm:$0xff]
    %v1357 = vld [vmem:[%s1 + $0x2988] sm:$0xff]
    %v1358 = vld [vmem:[%s1 + $0x2990] sm:$0xff]
    %v1359 = vld [vmem:[%s1 + $0x2998] sm:$0xff]
    %v1360 = vld [vmem:[%s1 + $0x29a0] sm:$0xff]
    %v1361 = vld [vmem:[%s1 + $0x29a8] sm:$0xff]
    %v1362 = vld [vmem:[%s1 + $0x29b0] sm:$0xff]
    %v1363 = vld [vmem:[%s1 + $0x29b8] sm:$0xff]
    %v1364 = vld [vmem:[%s1 + $0x29c0] sm:$0xff]
    %v1365 = vld [vmem:[%s1 + $0x29c8] sm:$0xff]
    %v1366 = vld [vmem:[%s1 + $0x29d0] sm:$0xff]
    %v1367 = vld [vmem:[%s1 + $0x29d8] sm:$0xff]
    %v1368 = vld [vmem:[%s1 + $0x29e0] sm:$0xff]
    %v1369 = vld [vmem:[%s1 + $0x29e8] sm:$0xff]
    %v1370 = vld [vmem:[%s1 + $0x29f0] sm:$0xff]
    %v1371 = vld [vmem:[%s1 + $0x29f8] sm:$0xff]
    %v1372 = vld [vmem:[%s1 + $0x2a00] sm:$0xff]
    %v1373 = vld [vmem:[%s1 + $0x2a08] sm:$0xff]
    %v1374 = vld [vmem:[%s1 + $0x2a10] sm:$0xff]
    %v1375 = vld [vmem:[%s1 + $0x2a18] sm:$0xff]
    %v1376 = vld [vmem:[%s1 + $0x2a20] sm:$0xff]
    %v1377 = vld [vmem:[%s1 + $0x2a28] sm:$0xff]
    %v1378 = vld [vmem:[%s1 + $0x2a30] sm:$0xff]
    %v1379 = vld [vmem:[%s1 + $0x2a38] sm:$0xff]
    %v1380 = vld [vmem:[%s1 + $0x2a40] sm:$0xff]
    %v1381 = vld [vmem:[%s1 + $0x2a48] sm:$0xff]
    %v1382 = vld [vmem:[%s1 + $0x2a50] sm:$0xff]
    %v1383 = vld [vmem:[%s1 + $0x2a58] sm:$0xff]
    %v1384 = vld [vmem:[%s1 + $0x2a60] sm:$0xff]
    %v1385 = vld [vmem:[%s1 + $0x2a68] sm:$0xff]
    %v1386 = vld [vmem:[%s1 + $0x2a70] sm:$0xff]
    %v1387 = vld [vmem:[%s1 + $0x2a78] sm:$0xff]
    %v1388 = vld [vmem:[%s1 + $0x2a80] sm:$0xff]
    %v1389 = vld [vmem:[%s1 + $0x2a88] sm:$0xff]
    %v1390 = vld [vmem:[%s1 + $0x2a90] sm:$0xff]
    %v1391 = vld [vmem:[%s1 + $0x2a98] sm:$0xff]
    %v1392 = vld [vmem:[%s1 + $0x2aa0] sm:$0xff]
    %v1393 = vld [vmem:[%s1 + $0x2aa8] sm:$0xff]
    %v1394 = vld [vmem:[%s1 + $0x2ab0] sm:$0xff]
    %v1395 = vld [vmem:[%s1 + $0x2ab8] sm:$0xff]
    %v1396 = vld [vmem:[%s1 + $0x2ac0] sm:$0xff]
    %v1397 = vld [vmem:[%s1 + $0x2ac8] sm:$0xff]
    %v1398 = vld [vmem:[%s1 + $0x2ad0] sm:$0xff]
    %v1399 = vld [vmem:[%s1 + $0x2ad8] sm:$0xff]
    %v1400 = vld [vmem:[%s1 + $0x2ae0] sm:$0xff]
    %v1401 = vld [vmem:[%s1 + $0x2ae8] sm:$0xff]
    %v1402 = vld [vmem:[%s1 + $0x2af0] sm:$0xff]
    %v1403 = vld [vmem:[%s1 + $0x2af8] sm:$0xff]
    %v1404 = vld [vmem:[%s1 + $0x2b00] sm:$0xff]
    %v1405 = vld [vmem:[%s1 + $0x2b08] sm:$0xff]
    %v1406 = vld [vmem:[%s1 + $0x2b10] sm:$0xff]
    %v1407 = vld [vmem:[%s1 + $0x2b18] sm:$0xff]
    %v1408 = vld [vmem:[%s1 + $0x2b20] sm:$0xff]
    %v1409 = vld [vmem:[%s1 + $0x2b28] sm:$0xff]
    %v1410 = vld [vmem:[%s1 + $0x2b30] sm:$0xff]
    %v1411 = vld [vmem:[%s1 + $0x2b38] sm:$0xff]
    %v1412 = vld [vmem:[%s1 + $0x2b40] sm:$0xff]
    %v1413 = vld [vmem:[%s1 + $0x2b48] sm:$0xff]
    %v1414 = vld [vmem:[%s1 + $0x2b50] sm:$0xff]
    %v1415 = vld [vmem:[%s1 + $0x2b58] sm:$0xff]
    %v1416 = vld [vmem:[%s1 + $0x2b60] sm:$0xff]
    %v1417 = vld [vmem:[%s1 + $0x2b68] sm:$0xff]
    %v1418 = vld [vmem:[%s1 + $0x2b70] sm:$0xff]
    %v1419 = vld [vmem:[%s1 + $0x2b78] sm:$0xff]
    %v1420 = vld [vmem:[%s1 + $0x2b80] sm:$0xff]
    %v1421 = vld [vmem:[%s1 + $0x2b88] sm:$0xff]
    %v1422 = vld [vmem:[%s1 + $0x2b90] sm:$0xff]
    %v1423 = vld [vmem:[%s1 + $0x2b98] sm:$0xff]
    %v1424 = vld [vmem:[%s1 + $0x2ba0] sm:$0xff]
    %v1425 = vld [vmem:[%s1 + $0x2ba8] sm:$0xff]
    %v1426 = vld [vmem:[%s1 + $0x2bb0] sm:$0xff]
    %v1427 = vld [vmem:[%s1 + $0x2bb8] sm:$0xff]
    %v1428 = vld [vmem:[%s1 + $0x2bc0] sm:$0xff]
    %v1429 = vld [vmem:[%s1 + $0x2bc8] sm:$0xff]
    %v1430 = vld [vmem:[%s1 + $0x2bd0] sm:$0xff]
    %v1431 = vld [vmem:[%s1 + $0x2bd8] sm:$0xff]
    %v1432 = vld [vmem:[%s1 + $0x2be0] sm:$0xff]
    %v1433 = vld [vmem:[%s1 + $0x2be8] sm:$0xff]
    %v1434 = vld [vmem:[%s1 + $0x2bf0] sm:$0xff]
    %v1435 = vld [vmem:[%s1 + $0x2bf8] sm:$0xff]
    %v1436 = vld [vmem:[%s1 + $0x2c00] sm:$0xff]
    %v1437 = vld [vmem:[%s1 + $0x2c08] sm:$0xff]
    %v1438 = vld [vmem:[%s1 + $0x2c10] sm:$0xff]
    %v1439 = vld [vmem:[%s1 + $0x2c18] sm:$0xff]
    %v1440 = vld [vmem:[%s1 + $0x2c20] sm:$0xff]
    %v1441 = vld [vmem:[%s1 + $0x2c28] sm:$0xff]
    %v1442 = vld [vmem:[%s1 + $0x2c30] sm:$0xff]
    %v1443 = vld [vmem:[%s1 + $0x2c38] sm:$0xff]
    %v1444 = vld [vmem:[%s1 + $0x2c40] sm:$0xff]
    %v1445 = vld [vmem:[%s1 + $0x2c48] sm:$0xff]
    %v1446 = vld [vmem:[%s1 + $0x2c50] sm:$0xff]
    %v1447 = vld [vmem:[%s1 + $0x2c58] sm:$0xff]
    %v1448 = vld [vmem:[%s1 + $0x2c60] sm:$0xff]
    %v1449 = vld [vmem:[%s1 + $0x2c68] sm:$0xff]
    %v1450 = vld [vmem:[%s1 + $0x2c70] sm:$0xff]
    %v1451 = vld [vmem:[%s1 + $0x2c78] sm:$0xff]
    %v1452 = vld [vmem:[%s1 + $0x2c80] sm:$0xff]
    %v1453 = vld [vmem:[%s1 + $0x2c88] sm:$0xff]
    %v1454 = vld [vmem:[%s1 + $0x2c90] sm:$0xff]
    %v1455 = vld [vmem:[%s1 + $0x2c98] sm:$0xff]
    %v1456 = vld [vmem:[%s1 + $0x2ca0] sm:$0xff]
    %v1457 = vld [vmem:[%s1 + $0x2ca8] sm:$0xff]
    %v1458 = vld [vmem:[%s1 + $0x2cb0] sm:$0xff]
    %v1459 = vld [vmem:[%s1 + $0x2cb8] sm:$0xff]
    %v1460 = vld [vmem:[%s1 + $0x2cc0] sm:$0xff]
    %v1461 = vld [vmem:[%s1 + $0x2cc8] sm:$0xff]
    %v1462 = vld [vmem:[%s1 + $0x2cd0] sm:$0xff]
    %v1463 = vld [vmem:[%s1 + $0x2cd8] sm:$0xff]
    %v1464 = vld [vmem:[%s1 + $0x2ce0] sm:$0xff]
    %v1465 = vld [vmem:[%s1 + $0x2ce8] sm:$0xff]
    %v1466 = vld [vmem:[%s1 + $0x2cf0] sm:$0xff]
    %v1467 = vld [vmem:[%s1 + $0x2cf8] sm:$0xff]
    %v1468 = vld [vmem:[%s1 + $0x2d00] sm:$0xff]
    %v1469 = vld [vmem:[%s1 + $0x2d08] sm:$0xff]
    %v1470 = vld [vmem:[%s1 + $0x2d10] sm:$0xff]
    %v1471 = vld [vmem:[%s1 + $0x2d18] sm:$0xff]
    %v1472 = vld [vmem:[%s1 + $0x2d20] sm:$0xff]
    %v1473 = vld [vmem:[%s1 + $0x2d28] sm:$0xff]
    %v1474 = vld [vmem:[%s1 + $0x2d30] sm:$0xff]
    %v1475 = vld [vmem:[%s1 + $0x2d38] sm:$0xff]
    %v1476 = vld [vmem:[%s1 + $0x2d40] sm:$0xff]
    %v1477 = vld [vmem:[%s1 + $0x2d48] sm:$0xff]
    %v1478 = vld [vmem:[%s1 + $0x2d50] sm:$0xff]
    %v1479 = vld [vmem:[%s1 + $0x2d58] sm:$0xff]
    %v1480 = vld [vmem:[%s1 + $0x2d60] sm:$0xff]
    %v1481 = vld [vmem:[%s1 + $0x2d68] sm:$0xff]
    %v1482 = vld [vmem:[%s1 + $0x2d70] sm:$0xff]
    %v1483 = vld [vmem:[%s1 + $0x2d78] sm:$0xff]
    %v1484 = vld [vmem:[%s1 + $0x2d80] sm:$0xff]
    %v1485 = vld [vmem:[%s1 + $0x2d88] sm:$0xff]
    %v1486 = vld [vmem:[%s1 + $0x2d90] sm:$0xff]
    %v1487 = vld [vmem:[%s1 + $0x2d98] sm:$0xff]
    %v1488 = vld [vmem:[%s1 + $0x2da0] sm:$0xff]
    %v1489 = vld [vmem:[%s1 + $0x2da8] sm:$0xff]
    %v1490 = vld [vmem:[%s1 + $0x2db0] sm:$0xff]
    %v1491 = vld [vmem:[%s1 + $0x2db8] sm:$0xff]
    %v1492 = vld [vmem:[%s1 + $0x2dc0] sm:$0xff]
    %v1493 = vld [vmem:[%s1 + $0x2dc8] sm:$0xff]
    %v1494 = vld [vmem:[%s1 + $0x2dd0] sm:$0xff]
    %v1495 = vld [vmem:[%s1 + $0x2dd8] sm:$0xff]
    %v1496 = vld [vmem:[%s1 + $0x2de0] sm:$0xff]
    %v1497 = vld [vmem:[%s1 + $0x2de8] sm:$0xff]
    %v1498 = vld [vmem:[%s1 + $0x2df0] sm:$0xff]
    %v1499 = vld [vmem:[%s1 + $0x2df8] sm:$0xff]
    %v1500 = vld [vmem:[%s1 + $0x2e00] sm:$0xff]
    %v1501 = vld [vmem:[%s1 + $0x2e08] sm:$0xff]
    %v1502 = vld [vmem:[%s1 + $0x2e10] sm:$0xff]
    %v1503 = vld [vmem:[%s1 + $0x2e18] sm:$0xff]
    %v1504 = vld [vmem:[%s1 + $0x2e20] sm:$0xff]
    %v1505 = vld [vmem:[%s1 + $0x2e28] sm:$0xff]
    %v1506 = vld [vmem:[%s1 + $0x2e30] sm:$0xff]
    %v1507 = vld [vmem:[%s1 + $0x2e38] sm:$0xff]
    %v1508 = vld [vmem:[%s1 + $0x2e40] sm:$0xff]
    %v1509 = vld [vmem:[%s1 + $0x2e48] sm:$0xff]
    %v1510 = vld [vmem:[%s1 + $0x2e50] sm:$0xff]
    %v1511 = vld [vmem:[%s1 + $0x2e58] sm:$0xff]
    %v1512 = vld [vmem:[%s1 + $0x2e60] sm:$0xff]
    %v1513 = vld [vmem:[%s1 + $0x2e68] sm:$0xff]
    %v1514 = vld [vmem:[%s1 + $0x2e70] sm:$0xff]
    %v1515 = vld [vmem:[%s1 + $0x2e78] sm:$0xff]
    %v1516 = vld [vmem:[%s1 + $0x2e80] sm:$0xff]
    %v1517 = vld [vmem:[%s1 + $0x2e88] sm:$0xff]
    %v1518 = vld [vmem:[%s1 + $0x2e90] sm:$0xff]
    %v1519 = vld [vmem:[%s1 + $0x2e98] sm:$0xff]
    %v1520 = vld [vmem:[%s1 + $0x2ea0] sm:$0xff]
    %v1521 = vld [vmem:[%s1 + $0x2ea8] sm:$0xff]
    %v1522 = vld [vmem:[%s1 + $0x2eb0] sm:$0xff]
    %v1523 = vld [vmem:[%s1 + $0x2eb8] sm:$0xff]
    %v1524 = vld [vmem:[%s1 + $0x2ec0] sm:$0xff]
    %v1525 = vld [vmem:[%s1 + $0x2ec8] sm:$0xff]
    %v1526 = vld [vmem:[%s1 + $0x2ed0] sm:$0xff]
    %v1527 = vld [vmem:[%s1 + $0x2ed8] sm:$0xff]
    %v1528 = vld [vmem:[%s1 + $0x2ee0] sm:$0xff]
    %v1529 = vld [vmem:[%s1 + $0x2ee8] sm:$0xff]
    %v1530 = vld [vmem:[%s1 + $0x2ef0] sm:$0xff]
    %v1531 = vld [vmem:[%s1 + $0x2ef8] sm:$0xff]
    %v1532 = vld [vmem:[%s1 + $0x2f00] sm:$0xff]
    %v1533 = vld [vmem:[%s1 + $0x2f08] sm:$0xff]
    %v1534 = vld [vmem:[%s1 + $0x2f10] sm:$0xff]
    %v1535 = vld [vmem:[%s1 + $0x2f18] sm:$0xff]
    %v1536 = vld [vmem:[%s1 + $0x2f20] sm:$0xff]
    %v1537 = vld [vmem:[%s1 + $0x2f28] sm:$0xff]
    %v1538 = vld [vmem:[%s1 + $0x2f30] sm:$0xff]
    %v1539 = vld [vmem:[%s1 + $0x2f38] sm:$0xff]
    %v1540 = vld [vmem:[%s1 + $0x2f40] sm:$0xff]
    %v1541 = vld [vmem:[%s1 + $0x2f48] sm:$0xff]
    %v1542 = vld [vmem:[%s1 + $0x2f50] sm:$0xff]
    %v1543 = vld [vmem:[%s1 + $0x2f58] sm:$0xff]
    %v1544 = vld [vmem:[%s1 + $0x2f60] sm:$0xff]
    %v1545 = vld [vmem:[%s1 + $0x2f68] sm:$0xff]
    %v1546 = vld [vmem:[%s1 + $0x2f70] sm:$0xff]
    %v1547 = vld [vmem:[%s1 + $0x2f78] sm:$0xff]
    %v1548 = vld [vmem:[%s1 + $0x2f80] sm:$0xff]
    %v1549 = vld [vmem:[%s1 + $0x2f88] sm:$0xff]
    %v1550 = vld [vmem:[%s1 + $0x2f90] sm:$0xff]
    %v1551 = vld [vmem:[%s1 + $0x2f98] sm:$0xff]
    %v1552 = vld [vmem:[%s1 + $0x2fa0] sm:$0xff]
    %v1553 = vld [vmem:[%s1 + $0x2fa8] sm:$0xff]
    %v1554 = vld [vmem:[%s1 + $0x2fb0] sm:$0xff]
    %v1555 = vld [vmem:[%s1 + $0x2fb8] sm:$0xff]
    %v1556 = vld [vmem:[%s1 + $0x2fc0] sm:$0xff]
    %v1557 = vld [vmem:[%s1 + $0x2fc8] sm:$0xff]
    %v1558 = vld [vmem:[%s1 + $0x2fd0] sm:$0xff]
    %v1559 = vld [vmem:[%s1 + $0x2fd8] sm:$0xff]
    %v1560 = vld [vmem:[%s1 + $0x2fe0] sm:$0xff]
    %v1561 = vld [vmem:[%s1 + $0x2fe8] sm:$0xff]
    %v1562 = vld [vmem:[%s1 + $0x2ff0] sm:$0xff]
    %v1563 = vld [vmem:[%s1 + $0x2ff8] sm:$0xff]
    %v1564 = vld [vmem:[%s1 + $0x3000] sm:$0xff]
    %v1565 = vld [vmem:[%s1 + $0x3008] sm:$0xff]
    %v1566 = vld [vmem:[%s1 + $0x3010] sm:$0xff]
    %v1567 = vld [vmem:[%s1 + $0x3018] sm:$0xff]
    %v1568 = vld [vmem:[%s1 + $0x3020] sm:$0xff]
    %v1569 = vld [vmem:[%s1 + $0x3028] sm:$0xff]
    %v1570 = vld [vmem:[%s1 + $0x3030] sm:$0xff]
    %v1571 = vld [vmem:[%s1 + $0x3038] sm:$0xff]
    %v1572 = vld [vmem:[%s1 + $0x3040] sm:$0xff]
    %v1573 = vld [vmem:[%s1 + $0x3048] sm:$0xff]
    %v1574 = vld [vmem:[%s1 + $0x3050] sm:$0xff]
    %v1575 = vld [vmem:[%s1 + $0x3058] sm:$0xff]
    %v1576 = vld [vmem:[%s1 + $0x3060] sm:$0xff]
    %v1577 = vld [vmem:[%s1 + $0x3068] sm:$0xff]
    %v1578 = vld [vmem:[%s1 + $0x3070] sm:$0xff]
    %v1579 = vld [vmem:[%s1 + $0x3078] sm:$0xff]
    %v1580 = vld [vmem:[%s1 + $0x3080] sm:$0xff]
    %v1581 = vld [vmem:[%s1 + $0x3088] sm:$0xff]
    %v1582 = vld [vmem:[%s1 + $0x3090] sm:$0xff]
    %v1583 = vld [vmem:[%s1 + $0x3098] sm:$0xff]
    %v1584 = vld [vmem:[%s1 + $0x30a0] sm:$0xff]
    %v1585 = vld [vmem:[%s1 + $0x30a8] sm:$0xff]
    %v1586 = vld [vmem:[%s1 + $0x30b0] sm:$0xff]
    %v1587 = vld [vmem:[%s1 + $0x30b8] sm:$0xff]
    %v1588 = vld [vmem:[%s1 + $0x30c0] sm:$0xff]
    %v1589 = vld [vmem:[%s1 + $0x30c8] sm:$0xff]
    %v1590 = vld [vmem:[%s1 + $0x30d0] sm:$0xff]
    %v1591 = vld [vmem:[%s1 + $0x30d8] sm:$0xff]
    %v1592 = vld [vmem:[%s1 + $0x30e0] sm:$0xff]
    %v1593 = vld [vmem:[%s1 + $0x30e8] sm:$0xff]
    %v1594 = vld [vmem:[%s1 + $0x30f0] sm:$0xff]
    %v1595 = vld [vmem:[%s1 + $0x30f8] sm:$0xff]
    %v1596 = vld [vmem:[%s2] sm:$0xf]
    %v1598 = vlaneseq
    %v1599 = vshrl.u32 %v1598, 7
    %v1600 = vsub.s32 0, %v1599
    %v1601 = vrot.slane %v1596, %v1600
    %v1602 = vlaneseq
    %v1603 = vshrl.u32 %v1602, 7
    %v1604 = vsub.s32 1, %v1603
    %v1605 = vrot.slane %v1596, %v1604
    %v1606 = vlaneseq
    %v1607 = vshrl.u32 %v1606, 7
    %v1608 = vsub.s32 2, %v1607
    %v1609 = vrot.slane %v1596, %v1608
    %v1610 = vlaneseq
    %v1611 = vshrl.u32 %v1610, 7
    %v1612 = vsub.s32 3, %v1611
    %v1613 = vrot.slane %v1596, %v1612
    %v1625 = vcombine.high %v21, %v21
    %v1627 = vunpack.c.l.s4 1983009808
    %v1628 = vunpack.c.0.s8 %v1627
    %v1629 = vlaneseq
    %v1630 = vshrl.u32 %v1629, 7
    %v1631 = vsub.s32 %v1628, %v1630
    %v1632 = vrot.slane %v21, %v1631
    %v1634 = vunpack.c.l.s4 1983009808
    %v1635 = vunpack.c.0.s8 %v1634
    %v1636 = vlaneseq
    %v1637 = vshrl.u32 %v1636, 7
    %v1638 = vsub.s32 %v1635, %v1637
    %v1639 = vrot.slane %v1625, %v1638
    %v1640 = vcombine.high %v1632, %v1632
    %v1641 = vcombine.high %v1639, %v1639
    %v1642 = vcombine.high %v22, %v22
    %v1644 = vunpack.c.l.s4 1983009808
    %v1645 = vunpack.c.0.s8 %v1644
    %v1646 = vlaneseq
    %v1647 = vshrl.u32 %v1646, 7
    %v1648 = vsub.s32 %v1645, %v1647
    %v1649 = vrot.slane %v22, %v1648
    %v1651 = vunpack.c.l.s4 1983009808
    %v1652 = vunpack.c.0.s8 %v1651
    %v1653 = vlaneseq
    %v1654 = vshrl.u32 %v1653, 7
    %v1655 = vsub.s32 %v1652, %v1654
    %v1656 = vrot.slane %v1642, %v1655
    %v1657 = vcombine.high %v1649, %v1649
    %v1658 = vcombine.high %v1656, %v1656
    %v1659 = vcombine.high %v23, %v23
    %v1661 = vunpack.c.l.s4 1983009808
    %v1662 = vunpack.c.0.s8 %v1661
    %v1663 = vlaneseq
    %v1664 = vshrl.u32 %v1663, 7
    %v1665 = vsub.s32 %v1662, %v1664
    %v1666 = vrot.slane %v23, %v1665
    %v1668 = vunpack.c.l.s4 1983009808
    %v1669 = vunpack.c.0.s8 %v1668
    %v1670 = vlaneseq
    %v1671 = vshrl.u32 %v1670, 7
    %v1672 = vsub.s32 %v1669, %v1671
    %v1673 = vrot.slane %v1659, %v1672
    %v1674 = vcombine.high %v1666, %v1666
    %v1675 = vcombine.high %v1673, %v1673
    %v1676 = vcombine.high %v24, %v24
    %v1678 = vunpack.c.l.s4 1983009808
    %v1679 = vunpack.c.0.s8 %v1678
    %v1680 = vlaneseq
    %v1681 = vshrl.u32 %v1680, 7
    %v1682 = vsub.s32 %v1679, %v1681
    %v1683 = vrot.slane %v24, %v1682
    %v1685 = vunpack.c.l.s4 1983009808
    %v1686 = vunpack.c.0.s8 %v1685
    %v1687 = vlaneseq
    %v1688 = vshrl.u32 %v1687, 7
    %v1689 = vsub.s32 %v1686, %v1688
    %v1690 = vrot.slane %v1676, %v1689
    %v1691 = vcombine.high %v1683, %v1683
    %v1692 = vcombine.high %v1690, %v1690
    %v1693 = vcombine.high %v25, %v25
    %v1695 = vunpack.c.l.s4 1983009808
    %v1696 = vunpack.c.0.s8 %v1695
    %v1697 = vlaneseq
    %v1698 = vshrl.u32 %v1697, 7
    %v1699 = vsub.s32 %v1696, %v1698
    %v1700 = vrot.slane %v25, %v1699
    %v1702 = vunpack.c.l.s4 1983009808
    %v1703 = vunpack.c.0.s8 %v1702
    %v1704 = vlaneseq
    %v1705 = vshrl.u32 %v1704, 7
    %v1706 = vsub.s32 %v1703, %v1705
    %v1707 = vrot.slane %v1693, %v1706
    %v1708 = vcombine.high %v1700, %v1700
    %v1709 = vcombine.high %v1707, %v1707
    %v1710 = vcombine.high %v26, %v26
    %v1712 = vunpack.c.l.s4 1983009808
    %v1713 = vunpack.c.0.s8 %v1712
    %v1714 = vlaneseq
    %v1715 = vshrl.u32 %v1714, 7
    %v1716 = vsub.s32 %v1713, %v1715
    %v1717 = vrot.slane %v26, %v1716
    %v1719 = vunpack.c.l.s4 1983009808
    %v1720 = vunpack.c.0.s8 %v1719
    %v1721 = vlaneseq
    %v1722 = vshrl.u32 %v1721, 7
    %v1723 = vsub.s32 %v1720, %v1722
    %v1724 = vrot.slane %v1710, %v1723
    %v1725 = vcombine.high %v1717, %v1717
    %v1726 = vcombine.high %v1724, %v1724
    %v1728 = vunpack.c.l.s4 1983009808
    %v1729 = vunpack.c.0.s8 %v1728
    %v1730 = vlaneseq
    %v1731 = vshrl.u32 %v1730, 7
    %v1732 = vsub.s32 %v1729, %v1731
    %v1733 = vrot.slane %v27, %v1732
    %vm1758 = vcmask 523264
    %v1759 = vsel %vm1758, %v1733, 0
    %1761 = vmatprep.subr.mxu0 %v89
    %1762 = vmatpush1.msra.mxu0 %v88
    %1763 = vmatprep.subr.mxu0 %v85
    %1764 = vmatpush1.msra.mxu0 %v84
    %1765 = vmatprep.subr.mxu0 %v81
    %1766 = vmatpush1.msra.mxu0 %v80
    %1767 = vmatprep.subr.mxu0 %v77
    %1768 = vmatpush1.msra.mxu0 %v76
    %1769 = vmatprep.subr.mxu0 %v73
    %1770 = vmatpush1.msra.mxu0 %v72
    %1771 = vmatprep.subr.mxu0 %v69
    %1772 = vmatpush1.msra.mxu0 %v68
    %1773 = vmatprep.subr.mxu0 %v65
    %1774 = vmatpush1.msra.mxu0 %v64
    %1775 = vmatprep.subr.mxu0 %v61
    %1776 = vmatpush1.msra.mxu0 %v60
    %1777 = vmatprep.subr.mxu0 %v57
    %1778 = vmatpush1.msra.mxu0 %v56
    %1779 = vmatprep.subr.mxu0 %v53
    %1780 = vmatpush1.msra.mxu0 %v52
    %1781 = vmatprep.subr.mxu0 %v49
    %1782 = vmatpush1.msra.mxu0 %v48
    %1783 = vmatprep.subr.mxu0 %v45
    %1784 = vmatpush1.msra.mxu0 %v44
    %1785 = vmatprep.subr.mxu0 %v41
    %1786 = vmatpush1.msra.mxu0 %v40
    %1787 = vmatprep.subr.mxu0 %v37
    %1788 = vmatpush1.msra.mxu0 %v36
    %1789 = vmatprep.subr.mxu0 %v33
    %1790 = vmatpush1.msra.mxu0 %v32
    %1791 = vmatprep.subr.mxu0 %v29
    %1792 = vmatpush1.msra.mxu0 %v28
    %1793 = vmatprep.subr.mxu0 %v153
    %1794 = vmatpush2.msra.mxu0 %v152
    %1795 = vmatprep.subr.mxu0 %v149
    %1796 = vmatpush2.msra.mxu0 %v148
    %1797 = vmatprep.subr.mxu0 %v145
    %1798 = vmatpush2.msra.mxu0 %v144
    %1799 = vmatprep.subr.mxu0 %v141
    %1800 = vmatpush2.msra.mxu0 %v140
    %1801 = vmatprep.subr.mxu0 %v137
    %1802 = vmatpush2.msra.mxu0 %v136
    %1803 = vmatprep.subr.mxu0 %v133
    %1804 = vmatpush2.msra.mxu0 %v132
    %1805 = vmatprep.subr.mxu0 %v129
    %1806 = vmatpush2.msra.mxu0 %v128
    %1807 = vmatprep.subr.mxu0 %v125
    %1808 = vmatpush2.msra.mxu0 %v124
    %1809 = vmatprep.subr.mxu0 %v121
    %1810 = vmatpush2.msra.mxu0 %v120
    %1811 = vmatprep.subr.mxu0 %v117
    %1812 = vmatpush2.msra.mxu0 %v116
    %1813 = vmatprep.subr.mxu0 %v113
    %1814 = vmatpush2.msra.mxu0 %v112
    %1815 = vmatprep.subr.mxu0 %v109
    %1816 = vmatpush2.msra.mxu0 %v108
    %1817 = vmatprep.subr.mxu0 %v105
    %1818 = vmatpush2.msra.mxu0 %v104
    %1819 = vmatprep.subr.mxu0 %v101
    %1820 = vmatpush2.msra.mxu0 %v100
    %1821 = vmatprep.subr.mxu0 %v97
    %1822 = vmatpush2.msra.mxu0 %v96
    %1823 = vmatprep.subr.mxu0 %v93
    %1824 = vmatpush2.msra.mxu0 %v92
    %1825 = vmatprep.mubr.f32.mxu0 %v1640
    %1826 = vmatmul.mubr.f32.gmra.mxu0 %v1632
    %v1827 = vpop.f32.mrf.mxu0
    %v1828 = vadd.f32 %v1601, %v1827
    %v1829 = vpop.f32.mrf.mxu0
    %v1830 = vadd.f32 %v1605, %v1829
    %1831 = vdwg.mxu0
    %1832 = vmatprep.subr.mxu0 %v217
    %1833 = vmatpush1.msra.mxu0 %v216
    %1834 = vmatprep.subr.mxu0 %v213
    %1835 = vmatpush1.msra.mxu0 %v212
    %1836 = vmatprep.subr.mxu0 %v209
    %1837 = vmatpush1.msra.mxu0 %v208
    %1838 = vmatprep.subr.mxu0 %v205
    %1839 = vmatpush1.msra.mxu0 %v204
    %1840 = vmatprep.subr.mxu0 %v201
    %1841 = vmatpush1.msra.mxu0 %v200
    %1842 = vmatprep.subr.mxu0 %v197
    %1843 = vmatpush1.msra.mxu0 %v196
    %1844 = vmatprep.subr.mxu0 %v193
    %1845 = vmatpush1.msra.mxu0 %v192
    %1846 = vmatprep.subr.mxu0 %v189
    %1847 = vmatpush1.msra.mxu0 %v188
    %1848 = vmatprep.subr.mxu0 %v185
    %1849 = vmatpush1.msra.mxu0 %v184
    %1850 = vmatprep.subr.mxu0 %v181
    %1851 = vmatpush1.msra.mxu0 %v180
    %1852 = vmatprep.subr.mxu0 %v177
    %1853 = vmatpush1.msra.mxu0 %v176
    %1854 = vmatprep.subr.mxu0 %v173
    %1855 = vmatpush1.msra.mxu0 %v172
    %1856 = vmatprep.subr.mxu0 %v169
    %1857 = vmatpush1.msra.mxu0 %v168
    %1858 = vmatprep.subr.mxu0 %v165
    %1859 = vmatpush1.msra.mxu0 %v164
    %1860 = vmatprep.subr.mxu0 %v161
    %1861 = vmatpush1.msra.mxu0 %v160
    %1862 = vmatprep.subr.mxu0 %v157
    %1863 = vmatpush1.msra.mxu0 %v156
    %1864 = vmatprep.subr.mxu0 %v281
    %1865 = vmatpush2.msra.mxu0 %v280
    %1866 = vmatprep.subr.mxu0 %v277
    %1867 = vmatpush2.msra.mxu0 %v276
    %1868 = vmatprep.subr.mxu0 %v273
    %1869 = vmatpush2.msra.mxu0 %v272
    %1870 = vmatprep.subr.mxu0 %v269
    %1871 = vmatpush2.msra.mxu0 %v268
    %1872 = vmatprep.subr.mxu0 %v265
    %1873 = vmatpush2.msra.mxu0 %v264
    %1874 = vmatprep.subr.mxu0 %v261
    %1875 = vmatpush2.msra.mxu0 %v260
    %1876 = vmatprep.subr.mxu0 %v257
    %1877 = vmatpush2.msra.mxu0 %v256
    %1878 = vmatprep.subr.mxu0 %v253
    %1879 = vmatpush2.msra.mxu0 %v252
    %1880 = vmatprep.subr.mxu0 %v249
    %1881 = vmatpush2.msra.mxu0 %v248
    %1882 = vmatprep.subr.mxu0 %v245
    %1883 = vmatpush2.msra.mxu0 %v244
    %1884 = vmatprep.subr.mxu0 %v241
    %1885 = vmatpush2.msra.mxu0 %v240
    %1886 = vmatprep.subr.mxu0 %v237
    %1887 = vmatpush2.msra.mxu0 %v236
    %1888 = vmatprep.subr.mxu0 %v233
    %1889 = vmatpush2.msra.mxu0 %v232
    %1890 = vmatprep.subr.mxu0 %v229
    %1891 = vmatpush2.msra.mxu0 %v228
    %1892 = vmatprep.subr.mxu0 %v225
    %1893 = vmatpush2.msra.mxu0 %v224
    %1894 = vmatprep.subr.mxu0 %v221
    %1895 = vmatpush2.msra.mxu0 %v220
    %1896 = vmatprep.mubr.f32.mxu0 %v1641
    %1897 = vmatmul.mubr.f32.gmra.mxu0 %v1639
    %v1898 = vpop.f32.mrf.mxu0
    %v1899 = vadd.f32 %v1828, %v1898
    %v1900 = vpop.f32.mrf.mxu0
    %v1901 = vadd.f32 %v1830, %v1900
    %1902 = vdwg.mxu0
    %1903 = vmatprep.subr.mxu0 %v345
    %1904 = vmatpush1.msra.mxu0 %v344
    %1905 = vmatprep.subr.mxu0 %v341
    %1906 = vmatpush1.msra.mxu0 %v340
    %1907 = vmatprep.subr.mxu0 %v337
    %1908 = vmatpush1.msra.mxu0 %v336
    %1909 = vmatprep.subr.mxu0 %v333
    %1910 = vmatpush1.msra.mxu0 %v332
    %1911 = vmatprep.subr.mxu0 %v329
    %1912 = vmatpush1.msra.mxu0 %v328
    %1913 = vmatprep.subr.mxu0 %v325
    %1914 = vmatpush1.msra.mxu0 %v324
    %1915 = vmatprep.subr.mxu0 %v321
    %1916 = vmatpush1.msra.mxu0 %v320
    %1917 = vmatprep.subr.mxu0 %v317
    %1918 = vmatpush1.msra.mxu0 %v316
    %1919 = vmatprep.subr.mxu0 %v313
    %1920 = vmatpush1.msra.mxu0 %v312
    %1921 = vmatprep.subr.mxu0 %v309
    %1922 = vmatpush1.msra.mxu0 %v308
    %1923 = vmatprep.subr.mxu0 %v305
    %1924 = vmatpush1.msra.mxu0 %v304
    %1925 = vmatprep.subr.mxu0 %v301
    %1926 = vmatpush1.msra.mxu0 %v300
    %1927 = vmatprep.subr.mxu0 %v297
    %1928 = vmatpush1.msra.mxu0 %v296
    %1929 = vmatprep.subr.mxu0 %v293
    %1930 = vmatpush1.msra.mxu0 %v292
    %1931 = vmatprep.subr.mxu0 %v289
    %1932 = vmatpush1.msra.mxu0 %v288
    %1933 = vmatprep.subr.mxu0 %v285
    %1934 = vmatpush1.msra.mxu0 %v284
    %1935 = vmatprep.subr.mxu0 %v409
    %1936 = vmatpush2.msra.mxu0 %v408
    %1937 = vmatprep.subr.mxu0 %v405
    %1938 = vmatpush2.msra.mxu0 %v404
    %1939 = vmatprep.subr.mxu0 %v401
    %1940 = vmatpush2.msra.mxu0 %v400
    %1941 = vmatprep.subr.mxu0 %v397
    %1942 = vmatpush2.msra.mxu0 %v396
    %1943 = vmatprep.subr.mxu0 %v393
    %1944 = vmatpush2.msra.mxu0 %v392
    %1945 = vmatprep.subr.mxu0 %v389
    %1946 = vmatpush2.msra.mxu0 %v388
    %1947 = vmatprep.subr.mxu0 %v385
    %1948 = vmatpush2.msra.mxu0 %v384
    %1949 = vmatprep.subr.mxu0 %v381
    %1950 = vmatpush2.msra.mxu0 %v380
    %1951 = vmatprep.subr.mxu0 %v377
    %1952 = vmatpush2.msra.mxu0 %v376
    %1953 = vmatprep.subr.mxu0 %v373
    %1954 = vmatpush2.msra.mxu0 %v372
    %1955 = vmatprep.subr.mxu0 %v369
    %1956 = vmatpush2.msra.mxu0 %v368
    %1957 = vmatprep.subr.mxu0 %v365
    %1958 = vmatpush2.msra.mxu0 %v364
    %1959 = vmatprep.subr.mxu0 %v361
    %1960 = vmatpush2.msra.mxu0 %v360
    %1961 = vmatprep.subr.mxu0 %v357
    %1962 = vmatpush2.msra.mxu0 %v356
    %1963 = vmatprep.subr.mxu0 %v353
    %1964 = vmatpush2.msra.mxu0 %v352
    %1965 = vmatprep.subr.mxu0 %v349
    %1966 = vmatpush2.msra.mxu0 %v348
    %1967 = vmatprep.mubr.f32.mxu0 %v1657
    %1968 = vmatmul.mubr.f32.gmra.mxu0 %v1649
    %v1969 = vpop.f32.mrf.mxu0
    %v1970 = vadd.f32 %v1899, %v1969
    %v1971 = vpop.f32.mrf.mxu0
    %v1972 = vadd.f32 %v1901, %v1971
    %1973 = vdwg.mxu0
    %1974 = vmatprep.subr.mxu0 %v473
    %1975 = vmatpush1.msra.mxu0 %v472
    %1976 = vmatprep.subr.mxu0 %v469
    %1977 = vmatpush1.msra.mxu0 %v468
    %1978 = vmatprep.subr.mxu0 %v465
    %1979 = vmatpush1.msra.mxu0 %v464
    %1980 = vmatprep.subr.mxu0 %v461
    %1981 = vmatpush1.msra.mxu0 %v460
    %1982 = vmatprep.subr.mxu0 %v457
    %1983 = vmatpush1.msra.mxu0 %v456
    %1984 = vmatprep.subr.mxu0 %v453
    %1985 = vmatpush1.msra.mxu0 %v452
    %1986 = vmatprep.subr.mxu0 %v449
    %1987 = vmatpush1.msra.mxu0 %v448
    %1988 = vmatprep.subr.mxu0 %v445
    %1989 = vmatpush1.msra.mxu0 %v444
    %1990 = vmatprep.subr.mxu0 %v441
    %1991 = vmatpush1.msra.mxu0 %v440
    %1992 = vmatprep.subr.mxu0 %v437
    %1993 = vmatpush1.msra.mxu0 %v436
    %1994 = vmatprep.subr.mxu0 %v433
    %1995 = vmatpush1.msra.mxu0 %v432
    %1996 = vmatprep.subr.mxu0 %v429
    %1997 = vmatpush1.msra.mxu0 %v428
    %1998 = vmatprep.subr.mxu0 %v425
    %1999 = vmatpush1.msra.mxu0 %v424
    %2000 = vmatprep.subr.mxu0 %v421
    %2001 = vmatpush1.msra.mxu0 %v420
    %2002 = vmatprep.subr.mxu0 %v417
    %2003 = vmatpush1.msra.mxu0 %v416
    %2004 = vmatprep.subr.mxu0 %v413
    %2005 = vmatpush1.msra.mxu0 %v412
    %2006 = vmatprep.subr.mxu0 %v537
    %2007 = vmatpush2.msra.mxu0 %v536
    %2008 = vmatprep.subr.mxu0 %v533
    %2009 = vmatpush2.msra.mxu0 %v532
    %2010 = vmatprep.subr.mxu0 %v529
    %2011 = vmatpush2.msra.mxu0 %v528
    %2012 = vmatprep.subr.mxu0 %v525
    %2013 = vmatpush2.msra.mxu0 %v524
    %2014 = vmatprep.subr.mxu0 %v521
    %2015 = vmatpush2.msra.mxu0 %v520
    %2016 = vmatprep.subr.mxu0 %v517
    %2017 = vmatpush2.msra.mxu0 %v516
    %2018 = vmatprep.subr.mxu0 %v513
    %2019 = vmatpush2.msra.mxu0 %v512
    %2020 = vmatprep.subr.mxu0 %v509
    %2021 = vmatpush2.msra.mxu0 %v508
    %2022 = vmatprep.subr.mxu0 %v505
    %2023 = vmatpush2.msra.mxu0 %v504
    %2024 = vmatprep.subr.mxu0 %v501
    %2025 = vmatpush2.msra.mxu0 %v500
    %2026 = vmatprep.subr.mxu0 %v497
    %2027 = vmatpush2.msra.mxu0 %v496
    %2028 = vmatprep.subr.mxu0 %v493
    %2029 = vmatpush2.msra.mxu0 %v492
    %2030 = vmatprep.subr.mxu0 %v489
    %2031 = vmatpush2.msra.mxu0 %v488
    %2032 = vmatprep.subr.mxu0 %v485
    %2033 = vmatpush2.msra.mxu0 %v484
    %2034 = vmatprep.subr.mxu0 %v481
    %2035 = vmatpush2.msra.mxu0 %v480
    %2036 = vmatprep.subr.mxu0 %v477
    %2037 = vmatpush2.msra.mxu0 %v476
    %2038 = vmatprep.mubr.f32.mxu0 %v1658
    %2039 = vmatmul.mubr.f32.gmra.mxu0 %v1656
    %v2040 = vpop.f32.mrf.mxu0
    %v2041 = vadd.f32 %v1970, %v2040
    %v2042 = vpop.f32.mrf.mxu0
    %v2043 = vadd.f32 %v1972, %v2042
    %2044 = vdwg.mxu0
    %2045 = vmatprep.subr.mxu0 %v601
    %2046 = vmatpush1.msra.mxu0 %v600
    %2047 = vmatprep.subr.mxu0 %v597
    %2048 = vmatpush1.msra.mxu0 %v596
    %2049 = vmatprep.subr.mxu0 %v593
    %2050 = vmatpush1.msra.mxu0 %v592
    %2051 = vmatprep.subr.mxu0 %v589
    %2052 = vmatpush1.msra.mxu0 %v588
    %2053 = vmatprep.subr.mxu0 %v585
    %2054 = vmatpush1.msra.mxu0 %v584
    %2055 = vmatprep.subr.mxu0 %v581
    %2056 = vmatpush1.msra.mxu0 %v580
    %2057 = vmatprep.subr.mxu0 %v577
    %2058 = vmatpush1.msra.mxu0 %v576
    %2059 = vmatprep.subr.mxu0 %v573
    %2060 = vmatpush1.msra.mxu0 %v572
    %2061 = vmatprep.subr.mxu0 %v569
    %2062 = vmatpush1.msra.mxu0 %v568
    %2063 = vmatprep.subr.mxu0 %v565
    %2064 = vmatpush1.msra.mxu0 %v564
    %2065 = vmatprep.subr.mxu0 %v561
    %2066 = vmatpush1.msra.mxu0 %v560
    %2067 = vmatprep.subr.mxu0 %v557
    %2068 = vmatpush1.msra.mxu0 %v556
    %2069 = vmatprep.subr.mxu0 %v553
    %2070 = vmatpush1.msra.mxu0 %v552
    %2071 = vmatprep.subr.mxu0 %v549
    %2072 = vmatpush1.msra.mxu0 %v548
    %2073 = vmatprep.subr.mxu0 %v545
    %2074 = vmatpush1.msra.mxu0 %v544
    %2075 = vmatprep.subr.mxu0 %v541
    %2076 = vmatpush1.msra.mxu0 %v540
    %2077 = vmatprep.subr.mxu0 %v665
    %2078 = vmatpush2.msra.mxu0 %v664
    %2079 = vmatprep.subr.mxu0 %v661
    %2080 = vmatpush2.msra.mxu0 %v660
    %2081 = vmatprep.subr.mxu0 %v657
    %2082 = vmatpush2.msra.mxu0 %v656
    %2083 = vmatprep.subr.mxu0 %v653
    %2084 = vmatpush2.msra.mxu0 %v652
    %2085 = vmatprep.subr.mxu0 %v649
    %2086 = vmatpush2.msra.mxu0 %v648
    %2087 = vmatprep.subr.mxu0 %v645
    %2088 = vmatpush2.msra.mxu0 %v644
    %2089 = vmatprep.subr.mxu0 %v641
    %2090 = vmatpush2.msra.mxu0 %v640
    %2091 = vmatprep.subr.mxu0 %v637
    %2092 = vmatpush2.msra.mxu0 %v636
    %2093 = vmatprep.subr.mxu0 %v633
    %2094 = vmatpush2.msra.mxu0 %v632
    %2095 = vmatprep.subr.mxu0 %v629
    %2096 = vmatpush2.msra.mxu0 %v628
    %2097 = vmatprep.subr.mxu0 %v625
    %2098 = vmatpush2.msra.mxu0 %v624
    %2099 = vmatprep.subr.mxu0 %v621
    %2100 = vmatpush2.msra.mxu0 %v620
    %2101 = vmatprep.subr.mxu0 %v617
    %2102 = vmatpush2.msra.mxu0 %v616
    %2103 = vmatprep.subr.mxu0 %v613
    %2104 = vmatpush2.msra.mxu0 %v612
    %2105 = vmatprep.subr.mxu0 %v609
    %2106 = vmatpush2.msra.mxu0 %v608
    %2107 = vmatprep.subr.mxu0 %v605
    %2108 = vmatpush2.msra.mxu0 %v604
    %2109 = vmatprep.mubr.f32.mxu0 %v1674
    %2110 = vmatmul.mubr.f32.gmra.mxu0 %v1666
    %v2111 = vpop.f32.mrf.mxu0
    %v2112 = vadd.f32 %v2041, %v2111
    %v2113 = vpop.f32.mrf.mxu0
    %v2114 = vadd.f32 %v2043, %v2113
    %2115 = vdwg.mxu0
    %2116 = vmatprep.subr.mxu0 %v729
    %2117 = vmatpush1.msra.mxu0 %v728
    %2118 = vmatprep.subr.mxu0 %v725
    %2119 = vmatpush1.msra.mxu0 %v724
    %2120 = vmatprep.subr.mxu0 %v721
    %2121 = vmatpush1.msra.mxu0 %v720
    %2122 = vmatprep.subr.mxu0 %v717
    %2123 = vmatpush1.msra.mxu0 %v716
    %2124 = vmatprep.subr.mxu0 %v713
    %2125 = vmatpush1.msra.mxu0 %v712
    %2126 = vmatprep.subr.mxu0 %v709
    %2127 = vmatpush1.msra.mxu0 %v708
    %2128 = vmatprep.subr.mxu0 %v705
    %2129 = vmatpush1.msra.mxu0 %v704
    %2130 = vmatprep.subr.mxu0 %v701
    %2131 = vmatpush1.msra.mxu0 %v700
    %2132 = vmatprep.subr.mxu0 %v697
    %2133 = vmatpush1.msra.mxu0 %v696
    %2134 = vmatprep.subr.mxu0 %v693
    %2135 = vmatpush1.msra.mxu0 %v692
    %2136 = vmatprep.subr.mxu0 %v689
    %2137 = vmatpush1.msra.mxu0 %v688
    %2138 = vmatprep.subr.mxu0 %v685
    %2139 = vmatpush1.msra.mxu0 %v684
    %2140 = vmatprep.subr.mxu0 %v681
    %2141 = vmatpush1.msra.mxu0 %v680
    %2142 = vmatprep.subr.mxu0 %v677
    %2143 = vmatpush1.msra.mxu0 %v676
    %2144 = vmatprep.subr.mxu0 %v673
    %2145 = vmatpush1.msra.mxu0 %v672
    %2146 = vmatprep.subr.mxu0 %v669
    %2147 = vmatpush1.msra.mxu0 %v668
    %2148 = vmatprep.subr.mxu0 %v793
    %2149 = vmatpush2.msra.mxu0 %v792
    %2150 = vmatprep.subr.mxu0 %v789
    %2151 = vmatpush2.msra.mxu0 %v788
    %2152 = vmatprep.subr.mxu0 %v785
    %2153 = vmatpush2.msra.mxu0 %v784
    %2154 = vmatprep.subr.mxu0 %v781
    %2155 = vmatpush2.msra.mxu0 %v780
    %2156 = vmatprep.subr.mxu0 %v777
    %2157 = vmatpush2.msra.mxu0 %v776
    %2158 = vmatprep.subr.mxu0 %v773
    %2159 = vmatpush2.msra.mxu0 %v772
    %2160 = vmatprep.subr.mxu0 %v769
    %2161 = vmatpush2.msra.mxu0 %v768
    %2162 = vmatprep.subr.mxu0 %v765
    %2163 = vmatpush2.msra.mxu0 %v764
    %2164 = vmatprep.subr.mxu0 %v761
    %2165 = vmatpush2.msra.mxu0 %v760
    %2166 = vmatprep.subr.mxu0 %v757
    %2167 = vmatpush2.msra.mxu0 %v756
    %2168 = vmatprep.subr.mxu0 %v753
    %2169 = vmatpush2.msra.mxu0 %v752
    %2170 = vmatprep.subr.mxu0 %v749
    %2171 = vmatpush2.msra.mxu0 %v748
    %2172 = vmatprep.subr.mxu0 %v745
    %2173 = vmatpush2.msra.mxu0 %v744
    %2174 = vmatprep.subr.mxu0 %v741
    %2175 = vmatpush2.msra.mxu0 %v740
    %2176 = vmatprep.subr.mxu0 %v737
    %2177 = vmatpush2.msra.mxu0 %v736
    %2178 = vmatprep.subr.mxu0 %v733
    %2179 = vmatpush2.msra.mxu0 %v732
    %2180 = vmatprep.mubr.f32.mxu0 %v1675
    %2181 = vmatmul.mubr.f32.gmra.mxu0 %v1673
    %v2182 = vpop.f32.mrf.mxu0
    %v2183 = vadd.f32 %v2112, %v2182
    %v2184 = vpop.f32.mrf.mxu0
    %v2185 = vadd.f32 %v2114, %v2184
    %2186 = vdwg.mxu0
    %2187 = vmatprep.subr.mxu0 %v857
    %2188 = vmatpush1.msra.mxu0 %v856
    %2189 = vmatprep.subr.mxu0 %v853
    %2190 = vmatpush1.msra.mxu0 %v852
    %2191 = vmatprep.subr.mxu0 %v849
    %2192 = vmatpush1.msra.mxu0 %v848
    %2193 = vmatprep.subr.mxu0 %v845
    %2194 = vmatpush1.msra.mxu0 %v844
    %2195 = vmatprep.subr.mxu0 %v841
    %2196 = vmatpush1.msra.mxu0 %v840
    %2197 = vmatprep.subr.mxu0 %v837
    %2198 = vmatpush1.msra.mxu0 %v836
    %2199 = vmatprep.subr.mxu0 %v833
    %2200 = vmatpush1.msra.mxu0 %v832
    %2201 = vmatprep.subr.mxu0 %v829
    %2202 = vmatpush1.msra.mxu0 %v828
    %2203 = vmatprep.subr.mxu0 %v825
    %2204 = vmatpush1.msra.mxu0 %v824
    %2205 = vmatprep.subr.mxu0 %v821
    %2206 = vmatpush1.msra.mxu0 %v820
    %2207 = vmatprep.subr.mxu0 %v817
    %2208 = vmatpush1.msra.mxu0 %v816
    %2209 = vmatprep.subr.mxu0 %v813
    %2210 = vmatpush1.msra.mxu0 %v812
    %2211 = vmatprep.subr.mxu0 %v809
    %2212 = vmatpush1.msra.mxu0 %v808
    %2213 = vmatprep.subr.mxu0 %v805
    %2214 = vmatpush1.msra.mxu0 %v804
    %2215 = vmatprep.subr.mxu0 %v801
    %2216 = vmatpush1.msra.mxu0 %v800
    %2217 = vmatprep.subr.mxu0 %v797
    %2218 = vmatpush1.msra.mxu0 %v796
    %2219 = vmatprep.subr.mxu0 %v921
    %2220 = vmatpush2.msra.mxu0 %v920
    %2221 = vmatprep.subr.mxu0 %v917
    %2222 = vmatpush2.msra.mxu0 %v916
    %2223 = vmatprep.subr.mxu0 %v913
    %2224 = vmatpush2.msra.mxu0 %v912
    %2225 = vmatprep.subr.mxu0 %v909
    %2226 = vmatpush2.msra.mxu0 %v908
    %2227 = vmatprep.subr.mxu0 %v905
    %2228 = vmatpush2.msra.mxu0 %v904
    %2229 = vmatprep.subr.mxu0 %v901
    %2230 = vmatpush2.msra.mxu0 %v900
    %2231 = vmatprep.subr.mxu0 %v897
    %2232 = vmatpush2.msra.mxu0 %v896
    %2233 = vmatprep.subr.mxu0 %v893
    %2234 = vmatpush2.msra.mxu0 %v892
    %2235 = vmatprep.subr.mxu0 %v889
    %2236 = vmatpush2.msra.mxu0 %v888
    %2237 = vmatprep.subr.mxu0 %v885
    %2238 = vmatpush2.msra.mxu0 %v884
    %2239 = vmatprep.subr.mxu0 %v881
    %2240 = vmatpush2.msra.mxu0 %v880
    %2241 = vmatprep.subr.mxu0 %v877
    %2242 = vmatpush2.msra.mxu0 %v876
    %2243 = vmatprep.subr.mxu0 %v873
    %2244 = vmatpush2.msra.mxu0 %v872
    %2245 = vmatprep.subr.mxu0 %v869
    %2246 = vmatpush2.msra.mxu0 %v868
    %2247 = vmatprep.subr.mxu0 %v865
    %2248 = vmatpush2.msra.mxu0 %v864
    %2249 = vmatprep.subr.mxu0 %v861
    %2250 = vmatpush2.msra.mxu0 %v860
    %2251 = vmatprep.mubr.f32.mxu0 %v1691
    %2252 = vmatmul.mubr.f32.gmra.mxu0 %v1683
    %v2253 = vpop.f32.mrf.mxu0
    %v2254 = vadd.f32 %v2183, %v2253
    %v2255 = vpop.f32.mrf.mxu0
    %v2256 = vadd.f32 %v2185, %v2255
    %2257 = vdwg.mxu0
    %2258 = vmatprep.subr.mxu0 %v985
    %2259 = vmatpush1.msra.mxu0 %v984
    %2260 = vmatprep.subr.mxu0 %v981
    %2261 = vmatpush1.msra.mxu0 %v980
    %2262 = vmatprep.subr.mxu0 %v977
    %2263 = vmatpush1.msra.mxu0 %v976
    %2264 = vmatprep.subr.mxu0 %v973
    %2265 = vmatpush1.msra.mxu0 %v972
    %2266 = vmatprep.subr.mxu0 %v969
    %2267 = vmatpush1.msra.mxu0 %v968
    %2268 = vmatprep.subr.mxu0 %v965
    %2269 = vmatpush1.msra.mxu0 %v964
    %2270 = vmatprep.subr.mxu0 %v961
    %2271 = vmatpush1.msra.mxu0 %v960
    %2272 = vmatprep.subr.mxu0 %v957
    %2273 = vmatpush1.msra.mxu0 %v956
    %2274 = vmatprep.subr.mxu0 %v953
    %2275 = vmatpush1.msra.mxu0 %v952
    %2276 = vmatprep.subr.mxu0 %v949
    %2277 = vmatpush1.msra.mxu0 %v948
    %2278 = vmatprep.subr.mxu0 %v945
    %2279 = vmatpush1.msra.mxu0 %v944
    %2280 = vmatprep.subr.mxu0 %v941
    %2281 = vmatpush1.msra.mxu0 %v940
    %2282 = vmatprep.subr.mxu0 %v937
    %2283 = vmatpush1.msra.mxu0 %v936
    %2284 = vmatprep.subr.mxu0 %v933
    %2285 = vmatpush1.msra.mxu0 %v932
    %2286 = vmatprep.subr.mxu0 %v929
    %2287 = vmatpush1.msra.mxu0 %v928
    %2288 = vmatprep.subr.mxu0 %v925
    %2289 = vmatpush1.msra.mxu0 %v924
    %2290 = vmatprep.subr.mxu0 %v1049
    %2291 = vmatpush2.msra.mxu0 %v1048
    %2292 = vmatprep.subr.mxu0 %v1045
    %2293 = vmatpush2.msra.mxu0 %v1044
    %2294 = vmatprep.subr.mxu0 %v1041
    %2295 = vmatpush2.msra.mxu0 %v1040
    %2296 = vmatprep.subr.mxu0 %v1037
    %2297 = vmatpush2.msra.mxu0 %v1036
    %2298 = vmatprep.subr.mxu0 %v1033
    %2299 = vmatpush2.msra.mxu0 %v1032
    %2300 = vmatprep.subr.mxu0 %v1029
    %2301 = vmatpush2.msra.mxu0 %v1028
    %2302 = vmatprep.subr.mxu0 %v1025
    %2303 = vmatpush2.msra.mxu0 %v1024
    %2304 = vmatprep.subr.mxu0 %v1021
    %2305 = vmatpush2.msra.mxu0 %v1020
    %2306 = vmatprep.subr.mxu0 %v1017
    %2307 = vmatpush2.msra.mxu0 %v1016
    %2308 = vmatprep.subr.mxu0 %v1013
    %2309 = vmatpush2.msra.mxu0 %v1012
    %2310 = vmatprep.subr.mxu0 %v1009
    %2311 = vmatpush2.msra.mxu0 %v1008
    %2312 = vmatprep.subr.mxu0 %v1005
    %2313 = vmatpush2.msra.mxu0 %v1004
    %2314 = vmatprep.subr.mxu0 %v1001
    %2315 = vmatpush2.msra.mxu0 %v1000
    %2316 = vmatprep.subr.mxu0 %v997
    %2317 = vmatpush2.msra.mxu0 %v996
    %2318 = vmatprep.subr.mxu0 %v993
    %2319 = vmatpush2.msra.mxu0 %v992
    %2320 = vmatprep.subr.mxu0 %v989
    %2321 = vmatpush2.msra.mxu0 %v988
    %2322 = vmatprep.mubr.f32.mxu0 %v1692
    %2323 = vmatmul.mubr.f32.gmra.mxu0 %v1690
    %v2324 = vpop.f32.mrf.mxu0
    %v2325 = vadd.f32 %v2254, %v2324
    %v2326 = vpop.f32.mrf.mxu0
    %v2327 = vadd.f32 %v2256, %v2326
    %2328 = vdwg.mxu0
    %2329 = vmatprep.subr.mxu0 %v1113
    %2330 = vmatpush1.msra.mxu0 %v1112
    %2331 = vmatprep.subr.mxu0 %v1109
    %2332 = vmatpush1.msra.mxu0 %v1108
    %2333 = vmatprep.subr.mxu0 %v1105
    %2334 = vmatpush1.msra.mxu0 %v1104
    %2335 = vmatprep.subr.mxu0 %v1101
    %2336 = vmatpush1.msra.mxu0 %v1100
    %2337 = vmatprep.subr.mxu0 %v1097
    %2338 = vmatpush1.msra.mxu0 %v1096
    %2339 = vmatprep.subr.mxu0 %v1093
    %2340 = vmatpush1.msra.mxu0 %v1092
    %2341 = vmatprep.subr.mxu0 %v1089
    %2342 = vmatpush1.msra.mxu0 %v1088
    %2343 = vmatprep.subr.mxu0 %v1085
    %2344 = vmatpush1.msra.mxu0 %v1084
    %2345 = vmatprep.subr.mxu0 %v1081
    %2346 = vmatpush1.msra.mxu0 %v1080
    %2347 = vmatprep.subr.mxu0 %v1077
    %2348 = vmatpush1.msra.mxu0 %v1076
    %2349 = vmatprep.subr.mxu0 %v1073
    %2350 = vmatpush1.msra.mxu0 %v1072
    %2351 = vmatprep.subr.mxu0 %v1069
    %2352 = vmatpush1.msra.mxu0 %v1068
    %2353 = vmatprep.subr.mxu0 %v1065
    %2354 = vmatpush1.msra.mxu0 %v1064
    %2355 = vmatprep.subr.mxu0 %v1061
    %2356 = vmatpush1.msra.mxu0 %v1060
    %2357 = vmatprep.subr.mxu0 %v1057
    %2358 = vmatpush1.msra.mxu0 %v1056
    %2359 = vmatprep.subr.mxu0 %v1053
    %2360 = vmatpush1.msra.mxu0 %v1052
    %2361 = vmatprep.subr.mxu0 %v1177
    %2362 = vmatpush2.msra.mxu0 %v1176
    %2363 = vmatprep.subr.mxu0 %v1173
    %2364 = vmatpush2.msra.mxu0 %v1172
    %2365 = vmatprep.subr.mxu0 %v1169
    %2366 = vmatpush2.msra.mxu0 %v1168
    %2367 = vmatprep.subr.mxu0 %v1165
    %2368 = vmatpush2.msra.mxu0 %v1164
    %2369 = vmatprep.subr.mxu0 %v1161
    %2370 = vmatpush2.msra.mxu0 %v1160
    %2371 = vmatprep.subr.mxu0 %v1157
    %2372 = vmatpush2.msra.mxu0 %v1156
    %2373 = vmatprep.subr.mxu0 %v1153
    %2374 = vmatpush2.msra.mxu0 %v1152
    %2375 = vmatprep.subr.mxu0 %v1149
    %2376 = vmatpush2.msra.mxu0 %v1148
    %2377 = vmatprep.subr.mxu0 %v1145
    %2378 = vmatpush2.msra.mxu0 %v1144
    %2379 = vmatprep.subr.mxu0 %v1141
    %2380 = vmatpush2.msra.mxu0 %v1140
    %2381 = vmatprep.subr.mxu0 %v1137
    %2382 = vmatpush2.msra.mxu0 %v1136
    %2383 = vmatprep.subr.mxu0 %v1133
    %2384 = vmatpush2.msra.mxu0 %v1132
    %2385 = vmatprep.subr.mxu0 %v1129
    %2386 = vmatpush2.msra.mxu0 %v1128
    %2387 = vmatprep.subr.mxu0 %v1125
    %2388 = vmatpush2.msra.mxu0 %v1124
    %2389 = vmatprep.subr.mxu0 %v1121
    %2390 = vmatpush2.msra.mxu0 %v1120
    %2391 = vmatprep.subr.mxu0 %v1117
    %2392 = vmatpush2.msra.mxu0 %v1116
    %2393 = vmatprep.mubr.f32.mxu0 %v1708
    %2394 = vmatmul.mubr.f32.gmra.mxu0 %v1700
    %v2395 = vpop.f32.mrf.mxu0
    %v2396 = vadd.f32 %v2325, %v2395
    %v2397 = vpop.f32.mrf.mxu0
    %v2398 = vadd.f32 %v2327, %v2397
    %2399 = vdwg.mxu0
    %2400 = vmatprep.subr.mxu0 %v1241
    %2401 = vmatpush1.msra.mxu0 %v1240
    %2402 = vmatprep.subr.mxu0 %v1237
    %2403 = vmatpush1.msra.mxu0 %v1236
    %2404 = vmatprep.subr.mxu0 %v1233
    %2405 = vmatpush1.msra.mxu0 %v1232
    %2406 = vmatprep.subr.mxu0 %v1229
    %2407 = vmatpush1.msra.mxu0 %v1228
    %2408 = vmatprep.subr.mxu0 %v1225
    %2409 = vmatpush1.msra.mxu0 %v1224
    %2410 = vmatprep.subr.mxu0 %v1221
    %2411 = vmatpush1.msra.mxu0 %v1220
    %2412 = vmatprep.subr.mxu0 %v1217
    %2413 = vmatpush1.msra.mxu0 %v1216
    %2414 = vmatprep.subr.mxu0 %v1213
    %2415 = vmatpush1.msra.mxu0 %v1212
    %2416 = vmatprep.subr.mxu0 %v1209
    %2417 = vmatpush1.msra.mxu0 %v1208
    %2418 = vmatprep.subr.mxu0 %v1205
    %2419 = vmatpush1.msra.mxu0 %v1204
    %2420 = vmatprep.subr.mxu0 %v1201
    %2421 = vmatpush1.msra.mxu0 %v1200
    %2422 = vmatprep.subr.mxu0 %v1197
    %2423 = vmatpush1.msra.mxu0 %v1196
    %2424 = vmatprep.subr.mxu0 %v1193
    %2425 = vmatpush1.msra.mxu0 %v1192
    %2426 = vmatprep.subr.mxu0 %v1189
    %2427 = vmatpush1.msra.mxu0 %v1188
    %2428 = vmatprep.subr.mxu0 %v1185
    %2429 = vmatpush1.msra.mxu0 %v1184
    %2430 = vmatprep.subr.mxu0 %v1181
    %2431 = vmatpush1.msra.mxu0 %v1180
    %2432 = vmatprep.subr.mxu0 %v1305
    %2433 = vmatpush2.msra.mxu0 %v1304
    %2434 = vmatprep.subr.mxu0 %v1301
    %2435 = vmatpush2.msra.mxu0 %v1300
    %2436 = vmatprep.subr.mxu0 %v1297
    %2437 = vmatpush2.msra.mxu0 %v1296
    %2438 = vmatprep.subr.mxu0 %v1293
    %2439 = vmatpush2.msra.mxu0 %v1292
    %2440 = vmatprep.subr.mxu0 %v1289
    %2441 = vmatpush2.msra.mxu0 %v1288
    %2442 = vmatprep.subr.mxu0 %v1285
    %2443 = vmatpush2.msra.mxu0 %v1284
    %2444 = vmatprep.subr.mxu0 %v1281
    %2445 = vmatpush2.msra.mxu0 %v1280
    %2446 = vmatprep.subr.mxu0 %v1277
    %2447 = vmatpush2.msra.mxu0 %v1276
    %2448 = vmatprep.subr.mxu0 %v1273
    %2449 = vmatpush2.msra.mxu0 %v1272
    %2450 = vmatprep.subr.mxu0 %v1269
    %2451 = vmatpush2.msra.mxu0 %v1268
    %2452 = vmatprep.subr.mxu0 %v1265
    %2453 = vmatpush2.msra.mxu0 %v1264
    %2454 = vmatprep.subr.mxu0 %v1261
    %2455 = vmatpush2.msra.mxu0 %v1260
    %2456 = vmatprep.subr.mxu0 %v1257
    %2457 = vmatpush2.msra.mxu0 %v1256
    %2458 = vmatprep.subr.mxu0 %v1253
    %2459 = vmatpush2.msra.mxu0 %v1252
    %2460 = vmatprep.subr.mxu0 %v1249
    %2461 = vmatpush2.msra.mxu0 %v1248
    %2462 = vmatprep.subr.mxu0 %v1245
    %2463 = vmatpush2.msra.mxu0 %v1244
    %2464 = vmatprep.mubr.f32.mxu0 %v1709
    %2465 = vmatmul.mubr.f32.gmra.mxu0 %v1707
    %v2466 = vpop.f32.mrf.mxu0
    %v2467 = vadd.f32 %v2396, %v2466
    %v2468 = vpop.f32.mrf.mxu0
    %v2469 = vadd.f32 %v2398, %v2468
    %2470 = vdwg.mxu0
    %2471 = vmatprep.subr.mxu0 %v1369
    %2472 = vmatpush1.msra.mxu0 %v1368
    %2473 = vmatprep.subr.mxu0 %v1365
    %2474 = vmatpush1.msra.mxu0 %v1364
    %2475 = vmatprep.subr.mxu0 %v1361
    %2476 = vmatpush1.msra.mxu0 %v1360
    %2477 = vmatprep.subr.mxu0 %v1357
    %2478 = vmatpush1.msra.mxu0 %v1356
    %2479 = vmatprep.subr.mxu0 %v1353
    %2480 = vmatpush1.msra.mxu0 %v1352
    %2481 = vmatprep.subr.mxu0 %v1349
    %2482 = vmatpush1.msra.mxu0 %v1348
    %2483 = vmatprep.subr.mxu0 %v1345
    %2484 = vmatpush1.msra.mxu0 %v1344
    %2485 = vmatprep.subr.mxu0 %v1341
    %2486 = vmatpush1.msra.mxu0 %v1340
    %2487 = vmatprep.subr.mxu0 %v1337
    %2488 = vmatpush1.msra.mxu0 %v1336
    %2489 = vmatprep.subr.mxu0 %v1333
    %2490 = vmatpush1.msra.mxu0 %v1332
    %2491 = vmatprep.subr.mxu0 %v1329
    %2492 = vmatpush1.msra.mxu0 %v1328
    %2493 = vmatprep.subr.mxu0 %v1325
    %2494 = vmatpush1.msra.mxu0 %v1324
    %2495 = vmatprep.subr.mxu0 %v1321
    %2496 = vmatpush1.msra.mxu0 %v1320
    %2497 = vmatprep.subr.mxu0 %v1317
    %2498 = vmatpush1.msra.mxu0 %v1316
    %2499 = vmatprep.subr.mxu0 %v1313
    %2500 = vmatpush1.msra.mxu0 %v1312
    %2501 = vmatprep.subr.mxu0 %v1309
    %2502 = vmatpush1.msra.mxu0 %v1308
    %2503 = vmatprep.subr.mxu0 %v1433
    %2504 = vmatpush2.msra.mxu0 %v1432
    %2505 = vmatprep.subr.mxu0 %v1429
    %2506 = vmatpush2.msra.mxu0 %v1428
    %2507 = vmatprep.subr.mxu0 %v1425
    %2508 = vmatpush2.msra.mxu0 %v1424
    %2509 = vmatprep.subr.mxu0 %v1421
    %2510 = vmatpush2.msra.mxu0 %v1420
    %2511 = vmatprep.subr.mxu0 %v1417
    %2512 = vmatpush2.msra.mxu0 %v1416
    %2513 = vmatprep.subr.mxu0 %v1413
    %2514 = vmatpush2.msra.mxu0 %v1412
    %2515 = vmatprep.subr.mxu0 %v1409
    %2516 = vmatpush2.msra.mxu0 %v1408
    %2517 = vmatprep.subr.mxu0 %v1405
    %2518 = vmatpush2.msra.mxu0 %v1404
    %2519 = vmatprep.subr.mxu0 %v1401
    %2520 = vmatpush2.msra.mxu0 %v1400
    %2521 = vmatprep.subr.mxu0 %v1397
    %2522 = vmatpush2.msra.mxu0 %v1396
    %2523 = vmatprep.subr.mxu0 %v1393
    %2524 = vmatpush2.msra.mxu0 %v1392
    %2525 = vmatprep.subr.mxu0 %v1389
    %2526 = vmatpush2.msra.mxu0 %v1388
    %2527 = vmatprep.subr.mxu0 %v1385
    %2528 = vmatpush2.msra.mxu0 %v1384
    %2529 = vmatprep.subr.mxu0 %v1381
    %2530 = vmatpush2.msra.mxu0 %v1380
    %2531 = vmatprep.subr.mxu0 %v1377
    %2532 = vmatpush2.msra.mxu0 %v1376
    %2533 = vmatprep.subr.mxu0 %v1373
    %2534 = vmatpush2.msra.mxu0 %v1372
    %2535 = vmatprep.mubr.f32.mxu0 %v1725
    %2536 = vmatmul.mubr.f32.gmra.mxu0 %v1717
    %v2537 = vpop.f32.mrf.mxu0
    %v2538 = vadd.f32 %v2467, %v2537
    %v2539 = vpop.f32.mrf.mxu0
    %v2540 = vadd.f32 %v2469, %v2539
    %2541 = vdwg.mxu0
    %2542 = vmatprep.subr.mxu0 %v1497
    %2543 = vmatpush1.msra.mxu0 %v1496
    %2544 = vmatprep.subr.mxu0 %v1493
    %2545 = vmatpush1.msra.mxu0 %v1492
    %2546 = vmatprep.subr.mxu0 %v1489
    %2547 = vmatpush1.msra.mxu0 %v1488
    %2548 = vmatprep.subr.mxu0 %v1485
    %2549 = vmatpush1.msra.mxu0 %v1484
    %2550 = vmatprep.subr.mxu0 %v1481
    %2551 = vmatpush1.msra.mxu0 %v1480
    %2552 = vmatprep.subr.mxu0 %v1477
    %2553 = vmatpush1.msra.mxu0 %v1476
    %2554 = vmatprep.subr.mxu0 %v1473
    %2555 = vmatpush1.msra.mxu0 %v1472
    %2556 = vmatprep.subr.mxu0 %v1469
    %2557 = vmatpush1.msra.mxu0 %v1468
    %2558 = vmatprep.subr.mxu0 %v1465
    %2559 = vmatpush1.msra.mxu0 %v1464
    %2560 = vmatprep.subr.mxu0 %v1461
    %2561 = vmatpush1.msra.mxu0 %v1460
    %2562 = vmatprep.subr.mxu0 %v1457
    %2563 = vmatpush1.msra.mxu0 %v1456
    %2564 = vmatprep.subr.mxu0 %v1453
    %2565 = vmatpush1.msra.mxu0 %v1452
    %2566 = vmatprep.subr.mxu0 %v1449
    %2567 = vmatpush1.msra.mxu0 %v1448
    %2568 = vmatprep.subr.mxu0 %v1445
    %2569 = vmatpush1.msra.mxu0 %v1444
    %2570 = vmatprep.subr.mxu0 %v1441
    %2571 = vmatpush1.msra.mxu0 %v1440
    %2572 = vmatprep.subr.mxu0 %v1437
    %2573 = vmatpush1.msra.mxu0 %v1436
    %2574 = vmatprep.subr.mxu0 %v1561
    %2575 = vmatpush2.msra.mxu0 %v1560
    %2576 = vmatprep.subr.mxu0 %v1557
    %2577 = vmatpush2.msra.mxu0 %v1556
    %2578 = vmatprep.subr.mxu0 %v1553
    %2579 = vmatpush2.msra.mxu0 %v1552
    %2580 = vmatprep.subr.mxu0 %v1549
    %2581 = vmatpush2.msra.mxu0 %v1548
    %2582 = vmatprep.subr.mxu0 %v1545
    %2583 = vmatpush2.msra.mxu0 %v1544
    %2584 = vmatprep.subr.mxu0 %v1541
    %2585 = vmatpush2.msra.mxu0 %v1540
    %2586 = vmatprep.subr.mxu0 %v1537
    %2587 = vmatpush2.msra.mxu0 %v1536
    %2588 = vmatprep.subr.mxu0 %v1533
    %2589 = vmatpush2.msra.mxu0 %v1532
    %2590 = vmatprep.subr.mxu0 %v1529
    %2591 = vmatpush2.msra.mxu0 %v1528
    %2592 = vmatprep.subr.mxu0 %v1525
    %2593 = vmatpush2.msra.mxu0 %v1524
    %2594 = vmatprep.subr.mxu0 %v1521
    %2595 = vmatpush2.msra.mxu0 %v1520
    %2596 = vmatprep.subr.mxu0 %v1517
    %2597 = vmatpush2.msra.mxu0 %v1516
    %2598 = vmatprep.subr.mxu0 %v1513
    %2599 = vmatpush2.msra.mxu0 %v1512
    %2600 = vmatprep.subr.mxu0 %v1509
    %2601 = vmatpush2.msra.mxu0 %v1508
    %2602 = vmatprep.subr.mxu0 %v1505
    %2603 = vmatpush2.msra.mxu0 %v1504
    %2604 = vmatprep.subr.mxu0 %v1501
    %2605 = vmatpush2.msra.mxu0 %v1500
    %2606 = vmatprep.mubr.f32.mxu0 %v1726
    %2607 = vmatmul.mubr.f32.gmra.mxu0 %v1724
    %v2608 = vpop.f32.mrf.mxu0
    %v2609 = vadd.f32 %v2538, %v2608
    %v2610 = vpop.f32.mrf.mxu0
    %v2611 = vadd.f32 %v2540, %v2610
    %2612 = vdwg.mxu0
    %2613 = vmatprep.subr.mxu0 0.0
    %2614 = vmatpush1.msra.mxu0 0.0
    %2615 = vmatprep.subr.mxu0 0.0
    %2616 = vmatpush1.msra.mxu0 0.0
    %2617 = vmatprep.subr.mxu0 0.0
    %2618 = vmatpush1.msra.mxu0 0.0
    %2619 = vmatprep.subr.mxu0 0.0
    %2620 = vmatpush1.msra.mxu0 0.0
    %2621 = vmatprep.subr.mxu0 0.0
    %2622 = vmatpush1.msra.mxu0 0.0
    %2623 = vmatprep.subr.mxu0 0.0
    %2624 = vmatpush1.msra.mxu0 0.0
    %2625 = vmatprep.subr.mxu0 0.0
    %2626 = vmatpush1.msra.mxu0 0.0
    %2627 = vmatprep.subr.mxu0 0.0
    %2628 = vmatpush1.msra.mxu0 0.0
    %2629 = vmatprep.subr.mxu0 %v1593
    %2630 = vmatpush1.msra.mxu0 %v1592
    %2631 = vmatprep.subr.mxu0 %v1589
    %2632 = vmatpush1.msra.mxu0 %v1588
    %2633 = vmatprep.subr.mxu0 %v1585
    %2634 = vmatpush1.msra.mxu0 %v1584
    %2635 = vmatprep.subr.mxu0 %v1581
    %2636 = vmatpush1.msra.mxu0 %v1580
    %2637 = vmatprep.subr.mxu0 %v1577
    %2638 = vmatpush1.msra.mxu0 %v1576
    %2639 = vmatprep.subr.mxu0 %v1573
    %2640 = vmatpush1.msra.mxu0 %v1572
    %2641 = vmatprep.subr.mxu0 %v1569
    %2642 = vmatpush1.msra.mxu0 %v1568
    %2643 = vmatprep.subr.mxu0 %v1565
    %2644 = vmatpush1.msra.mxu0 %v1564
    %2645 = vmatprep.subr.mxu0 0.0
    %2646 = vmatpush2.msra.mxu0 0.0
    %2647 = vmatprep.subr.mxu0 0.0
    %2648 = vmatpush2.msra.mxu0 0.0
    %2649 = vmatprep.subr.mxu0 0.0
    %2650 = vmatpush2.msra.mxu0 0.0
    %2651 = vmatprep.subr.mxu0 0.0
    %2652 = vmatpush2.msra.mxu0 0.0
    %2653 = vmatprep.subr.mxu0 0.0
    %2654 = vmatpush2.msra.mxu0 0.0
    %2655 = vmatprep.subr.mxu0 0.0
    %2656 = vmatpush2.msra.mxu0 0.0
    %2657 = vmatprep.subr.mxu0 0.0
    %2658 = vmatpush2.msra.mxu0 0.0
    %2659 = vmatprep.subr.mxu0 0.0
    %2660 = vmatpush2.msra.mxu0 0.0
    %2661 = vmatprep.subr.mxu0 0.0
    %2662 = vmatpush2.msra.mxu0 0.0
    %2663 = vmatprep.subr.mxu0 0.0
    %2664 = vmatpush2.msra.mxu0 0.0
    %2665 = vmatprep.subr.mxu0 0.0
    %2666 = vmatpush2.msra.mxu0 0.0
    %2667 = vmatprep.subr.mxu0 0.0
    %2668 = vmatpush2.msra.mxu0 0.0
    %2669 = vmatprep.subr.mxu0 0.0
    %2670 = vmatpush2.msra.mxu0 0.0
    %2671 = vmatprep.subr.mxu0 0.0
    %2672 = vmatpush2.msra.mxu0 0.0
    %2673 = vmatprep.subr.mxu0 0.0
    %2674 = vmatpush2.msra.mxu0 0.0
    %2675 = vmatprep.subr.mxu0 0.0
    %2676 = vmatpush2.msra.mxu0 0.0
    %2677 = vmatprep.mubr.f32.mxu0 0.0
    %2678 = vmatmul.mubr.f32.gmra.mxu0 %v1759
    %v2679 = vpop.f32.mrf.mxu0
    %v2680 = vadd.f32 %v2609, %v2679
    %v2681 = vpop.f32.mrf.mxu0
    %v2682 = vadd.f32 %v2611, %v2681
    %2683 = vdwg.mxu0
    %2684 = vmatprep.subr.mxu0 %v91
    %2685 = vmatpush1.msra.mxu0 %v90
    %2686 = vmatprep.subr.mxu0 %v87
    %2687 = vmatpush1.msra.mxu0 %v86
    %2688 = vmatprep.subr.mxu0 %v83
    %2689 = vmatpush1.msra.mxu0 %v82
    %2690 = vmatprep.subr.mxu0 %v79
    %2691 = vmatpush1.msra.mxu0 %v78
    %2692 = vmatprep.subr.mxu0 %v75
    %2693 = vmatpush1.msra.mxu0 %v74
    %2694 = vmatprep.subr.mxu0 %v71
    %2695 = vmatpush1.msra.mxu0 %v70
    %2696 = vmatprep.subr.mxu0 %v67
    %2697 = vmatpush1.msra.mxu0 %v66
    %2698 = vmatprep.subr.mxu0 %v63
    %2699 = vmatpush1.msra.mxu0 %v62
    %2700 = vmatprep.subr.mxu0 %v59
    %2701 = vmatpush1.msra.mxu0 %v58
    %2702 = vmatprep.subr.mxu0 %v55
    %2703 = vmatpush1.msra.mxu0 %v54
    %2704 = vmatprep.subr.mxu0 %v51
    %2705 = vmatpush1.msra.mxu0 %v50
    %2706 = vmatprep.subr.mxu0 %v47
    %2707 = vmatpush1.msra.mxu0 %v46
    %2708 = vmatprep.subr.mxu0 %v43
    %2709 = vmatpush1.msra.mxu0 %v42
    %2710 = vmatprep.subr.mxu0 %v39
    %2711 = vmatpush1.msra.mxu0 %v38
    %2712 = vmatprep.subr.mxu0 %v35
    %2713 = vmatpush1.msra.mxu0 %v34
    %2714 = vmatprep.subr.mxu0 %v31
    %2715 = vmatpush1.msra.mxu0 %v30
    %2716 = vmatprep.subr.mxu0 %v155
    %2717 = vmatpush2.msra.mxu0 %v154
    %2718 = vmatprep.subr.mxu0 %v151
    %2719 = vmatpush2.msra.mxu0 %v150
    %2720 = vmatprep.subr.mxu0 %v147
    %2721 = vmatpush2.msra.mxu0 %v146
    %2722 = vmatprep.subr.mxu0 %v143
    %2723 = vmatpush2.msra.mxu0 %v142
    %2724 = vmatprep.subr.mxu0 %v139
    %2725 = vmatpush2.msra.mxu0 %v138
    %2726 = vmatprep.subr.mxu0 %v135
    %2727 = vmatpush2.msra.mxu0 %v134
    %2728 = vmatprep.subr.mxu0 %v131
    %2729 = vmatpush2.msra.mxu0 %v130
    %2730 = vmatprep.subr.mxu0 %v127
    %2731 = vmatpush2.msra.mxu0 %v126
    %2732 = vmatprep.subr.mxu0 %v123
    %2733 = vmatpush2.msra.mxu0 %v122
    %2734 = vmatprep.subr.mxu0 %v119
    %2735 = vmatpush2.msra.mxu0 %v118
    %2736 = vmatprep.subr.mxu0 %v115
    %2737 = vmatpush2.msra.mxu0 %v114
    %2738 = vmatprep.subr.mxu0 %v111
    %2739 = vmatpush2.msra.mxu0 %v110
    %2740 = vmatprep.subr.mxu0 %v107
    %2741 = vmatpush2.msra.mxu0 %v106
    %2742 = vmatprep.subr.mxu0 %v103
    %2743 = vmatpush2.msra.mxu0 %v102
    %2744 = vmatprep.subr.mxu0 %v99
    %2745 = vmatpush2.msra.mxu0 %v98
    %2746 = vmatprep.subr.mxu0 %v95
    %2747 = vmatpush2.msra.mxu0 %v94
    %2748 = vmatprep.mubr.f32.mxu0 %v1640
    %2749 = vmatmul.mubr.f32.gmra.mxu0 %v1632
    %v2750 = vpop.f32.mrf.mxu0
    %v2751 = vadd.f32 %v1609, %v2750
    %v2752 = vpop.f32.mrf.mxu0
    %v2753 = vadd.f32 %v1613, %v2752
    %2754 = vdwg.mxu0
    %2755 = vmatprep.subr.mxu0 %v219
    %2756 = vmatpush1.msra.mxu0 %v218
    %2757 = vmatprep.subr.mxu0 %v215
    %2758 = vmatpush1.msra.mxu0 %v214
    %2759 = vmatprep.subr.mxu0 %v211
    %2760 = vmatpush1.msra.mxu0 %v210
    %2761 = vmatprep.subr.mxu0 %v207
    %2762 = vmatpush1.msra.mxu0 %v206
    %2763 = vmatprep.subr.mxu0 %v203
    %2764 = vmatpush1.msra.mxu0 %v202
    %2765 = vmatprep.subr.mxu0 %v199
    %2766 = vmatpush1.msra.mxu0 %v198
    %2767 = vmatprep.subr.mxu0 %v195
    %2768 = vmatpush1.msra.mxu0 %v194
    %2769 = vmatprep.subr.mxu0 %v191
    %2770 = vmatpush1.msra.mxu0 %v190
    %2771 = vmatprep.subr.mxu0 %v187
    %2772 = vmatpush1.msra.mxu0 %v186
    %2773 = vmatprep.subr.mxu0 %v183
    %2774 = vmatpush1.msra.mxu0 %v182
    %2775 = vmatprep.subr.mxu0 %v179
    %2776 = vmatpush1.msra.mxu0 %v178
    %2777 = vmatprep.subr.mxu0 %v175
    %2778 = vmatpush1.msra.mxu0 %v174
    %2779 = vmatprep.subr.mxu0 %v171
    %2780 = vmatpush1.msra.mxu0 %v170
    %2781 = vmatprep.subr.mxu0 %v167
    %2782 = vmatpush1.msra.mxu0 %v166
    %2783 = vmatprep.subr.mxu0 %v163
    %2784 = vmatpush1.msra.mxu0 %v162
    %2785 = vmatprep.subr.mxu0 %v159
    %2786 = vmatpush1.msra.mxu0 %v158
    %2787 = vmatprep.subr.mxu0 %v283
    %2788 = vmatpush2.msra.mxu0 %v282
    %2789 = vmatprep.subr.mxu0 %v279
    %2790 = vmatpush2.msra.mxu0 %v278
    %2791 = vmatprep.subr.mxu0 %v275
    %2792 = vmatpush2.msra.mxu0 %v274
    %2793 = vmatprep.subr.mxu0 %v271
    %2794 = vmatpush2.msra.mxu0 %v270
    %2795 = vmatprep.subr.mxu0 %v267
    %2796 = vmatpush2.msra.mxu0 %v266
    %2797 = vmatprep.subr.mxu0 %v263
    %2798 = vmatpush2.msra.mxu0 %v262
    %2799 = vmatprep.subr.mxu0 %v259
    %2800 = vmatpush2.msra.mxu0 %v258
    %2801 = vmatprep.subr.mxu0 %v255
    %2802 = vmatpush2.msra.mxu0 %v254
    %2803 = vmatprep.subr.mxu0 %v251
    %2804 = vmatpush2.msra.mxu0 %v250
    %2805 = vmatprep.subr.mxu0 %v247
    %2806 = vmatpush2.msra.mxu0 %v246
    %2807 = vmatprep.subr.mxu0 %v243
    %2808 = vmatpush2.msra.mxu0 %v242
    %2809 = vmatprep.subr.mxu0 %v239
    %2810 = vmatpush2.msra.mxu0 %v238
    %2811 = vmatprep.subr.mxu0 %v235
    %2812 = vmatpush2.msra.mxu0 %v234
    %2813 = vmatprep.subr.mxu0 %v231
    %2814 = vmatpush2.msra.mxu0 %v230
    %2815 = vmatprep.subr.mxu0 %v227
    %2816 = vmatpush2.msra.mxu0 %v226
    %2817 = vmatprep.subr.mxu0 %v223
    %2818 = vmatpush2.msra.mxu0 %v222
    %2819 = vmatprep.mubr.f32.mxu0 %v1641
    %2820 = vmatmul.mubr.f32.gmra.mxu0 %v1639
    %v2821 = vpop.f32.mrf.mxu0
    %v2822 = vadd.f32 %v2751, %v2821
    %v2823 = vpop.f32.mrf.mxu0
    %v2824 = vadd.f32 %v2753, %v2823
    %2825 = vdwg.mxu0
    %2826 = vmatprep.subr.mxu0 %v347
    %2827 = vmatpush1.msra.mxu0 %v346
    %2828 = vmatprep.subr.mxu0 %v343
    %2829 = vmatpush1.msra.mxu0 %v342
    %2830 = vmatprep.subr.mxu0 %v339
    %2831 = vmatpush1.msra.mxu0 %v338
    %2832 = vmatprep.subr.mxu0 %v335
    %2833 = vmatpush1.msra.mxu0 %v334
    %2834 = vmatprep.subr.mxu0 %v331
    %2835 = vmatpush1.msra.mxu0 %v330
    %2836 = vmatprep.subr.mxu0 %v327
    %2837 = vmatpush1.msra.mxu0 %v326
    %2838 = vmatprep.subr.mxu0 %v323
    %2839 = vmatpush1.msra.mxu0 %v322
    %2840 = vmatprep.subr.mxu0 %v319
    %2841 = vmatpush1.msra.mxu0 %v318
    %2842 = vmatprep.subr.mxu0 %v315
    %2843 = vmatpush1.msra.mxu0 %v314
    %2844 = vmatprep.subr.mxu0 %v311
    %2845 = vmatpush1.msra.mxu0 %v310
    %2846 = vmatprep.subr.mxu0 %v307
    %2847 = vmatpush1.msra.mxu0 %v306
    %2848 = vmatprep.subr.mxu0 %v303
    %2849 = vmatpush1.msra.mxu0 %v302
    %2850 = vmatprep.subr.mxu0 %v299
    %2851 = vmatpush1.msra.mxu0 %v298
    %2852 = vmatprep.subr.mxu0 %v295
    %2853 = vmatpush1.msra.mxu0 %v294
    %2854 = vmatprep.subr.mxu0 %v291
    %2855 = vmatpush1.msra.mxu0 %v290
    %2856 = vmatprep.subr.mxu0 %v287
    %2857 = vmatpush1.msra.mxu0 %v286
    %2858 = vmatprep.subr.mxu0 %v411
    %2859 = vmatpush2.msra.mxu0 %v410
    %2860 = vmatprep.subr.mxu0 %v407
    %2861 = vmatpush2.msra.mxu0 %v406
    %2862 = vmatprep.subr.mxu0 %v403
    %2863 = vmatpush2.msra.mxu0 %v402
    %2864 = vmatprep.subr.mxu0 %v399
    %2865 = vmatpush2.msra.mxu0 %v398
    %2866 = vmatprep.subr.mxu0 %v395
    %2867 = vmatpush2.msra.mxu0 %v394
    %2868 = vmatprep.subr.mxu0 %v391
    %2869 = vmatpush2.msra.mxu0 %v390
    %2870 = vmatprep.subr.mxu0 %v387
    %2871 = vmatpush2.msra.mxu0 %v386
    %2872 = vmatprep.subr.mxu0 %v383
    %2873 = vmatpush2.msra.mxu0 %v382
    %2874 = vmatprep.subr.mxu0 %v379
    %2875 = vmatpush2.msra.mxu0 %v378
    %2876 = vmatprep.subr.mxu0 %v375
    %2877 = vmatpush2.msra.mxu0 %v374
    %2878 = vmatprep.subr.mxu0 %v371
    %2879 = vmatpush2.msra.mxu0 %v370
    %2880 = vmatprep.subr.mxu0 %v367
    %2881 = vmatpush2.msra.mxu0 %v366
    %2882 = vmatprep.subr.mxu0 %v363
    %2883 = vmatpush2.msra.mxu0 %v362
    %2884 = vmatprep.subr.mxu0 %v359
    %2885 = vmatpush2.msra.mxu0 %v358
    %2886 = vmatprep.subr.mxu0 %v355
    %2887 = vmatpush2.msra.mxu0 %v354
    %2888 = vmatprep.subr.mxu0 %v351
    %2889 = vmatpush2.msra.mxu0 %v350
    %2890 = vmatprep.mubr.f32.mxu0 %v1657
    %2891 = vmatmul.mubr.f32.gmra.mxu0 %v1649
    %v2892 = vpop.f32.mrf.mxu0
    %v2893 = vadd.f32 %v2822, %v2892
    %v2894 = vpop.f32.mrf.mxu0
    %v2895 = vadd.f32 %v2824, %v2894
    %2896 = vdwg.mxu0
    %2897 = vmatprep.subr.mxu0 %v475
    %2898 = vmatpush1.msra.mxu0 %v474
    %2899 = vmatprep.subr.mxu0 %v471
    %2900 = vmatpush1.msra.mxu0 %v470
    %2901 = vmatprep.subr.mxu0 %v467
    %2902 = vmatpush1.msra.mxu0 %v466
    %2903 = vmatprep.subr.mxu0 %v463
    %2904 = vmatpush1.msra.mxu0 %v462
    %2905 = vmatprep.subr.mxu0 %v459
    %2906 = vmatpush1.msra.mxu0 %v458
    %2907 = vmatprep.subr.mxu0 %v455
    %2908 = vmatpush1.msra.mxu0 %v454
    %2909 = vmatprep.subr.mxu0 %v451
    %2910 = vmatpush1.msra.mxu0 %v450
    %2911 = vmatprep.subr.mxu0 %v447
    %2912 = vmatpush1.msra.mxu0 %v446
    %2913 = vmatprep.subr.mxu0 %v443
    %2914 = vmatpush1.msra.mxu0 %v442
    %2915 = vmatprep.subr.mxu0 %v439
    %2916 = vmatpush1.msra.mxu0 %v438
    %2917 = vmatprep.subr.mxu0 %v435
    %2918 = vmatpush1.msra.mxu0 %v434
    %2919 = vmatprep.subr.mxu0 %v431
    %2920 = vmatpush1.msra.mxu0 %v430
    %2921 = vmatprep.subr.mxu0 %v427
    %2922 = vmatpush1.msra.mxu0 %v426
    %2923 = vmatprep.subr.mxu0 %v423
    %2924 = vmatpush1.msra.mxu0 %v422
    %2925 = vmatprep.subr.mxu0 %v419
    %2926 = vmatpush1.msra.mxu0 %v418
    %2927 = vmatprep.subr.mxu0 %v415
    %2928 = vmatpush1.msra.mxu0 %v414
    %2929 = vmatprep.subr.mxu0 %v539
    %2930 = vmatpush2.msra.mxu0 %v538
    %2931 = vmatprep.subr.mxu0 %v535
    %2932 = vmatpush2.msra.mxu0 %v534
    %2933 = vmatprep.subr.mxu0 %v531
    %2934 = vmatpush2.msra.mxu0 %v530
    %2935 = vmatprep.subr.mxu0 %v527
    %2936 = vmatpush2.msra.mxu0 %v526
    %2937 = vmatprep.subr.mxu0 %v523
    %2938 = vmatpush2.msra.mxu0 %v522
    %2939 = vmatprep.subr.mxu0 %v519
    %2940 = vmatpush2.msra.mxu0 %v518
    %2941 = vmatprep.subr.mxu0 %v515
    %2942 = vmatpush2.msra.mxu0 %v514
    %2943 = vmatprep.subr.mxu0 %v511
    %2944 = vmatpush2.msra.mxu0 %v510
    %2945 = vmatprep.subr.mxu0 %v507
    %2946 = vmatpush2.msra.mxu0 %v506
    %2947 = vmatprep.subr.mxu0 %v503
    %2948 = vmatpush2.msra.mxu0 %v502
    %2949 = vmatprep.subr.mxu0 %v499
    %2950 = vmatpush2.msra.mxu0 %v498
    %2951 = vmatprep.subr.mxu0 %v495
    %2952 = vmatpush2.msra.mxu0 %v494
    %2953 = vmatprep.subr.mxu0 %v491
    %2954 = vmatpush2.msra.mxu0 %v490
    %2955 = vmatprep.subr.mxu0 %v487
    %2956 = vmatpush2.msra.mxu0 %v486
    %2957 = vmatprep.subr.mxu0 %v483
    %2958 = vmatpush2.msra.mxu0 %v482
    %2959 = vmatprep.subr.mxu0 %v479
    %2960 = vmatpush2.msra.mxu0 %v478
    %2961 = vmatprep.mubr.f32.mxu0 %v1658
    %2962 = vmatmul.mubr.f32.gmra.mxu0 %v1656
    %v2963 = vpop.f32.mrf.mxu0
    %v2964 = vadd.f32 %v2893, %v2963
    %v2965 = vpop.f32.mrf.mxu0
    %v2966 = vadd.f32 %v2895, %v2965
    %2967 = vdwg.mxu0
    %2968 = vmatprep.subr.mxu0 %v603
    %2969 = vmatpush1.msra.mxu0 %v602
    %2970 = vmatprep.subr.mxu0 %v599
    %2971 = vmatpush1.msra.mxu0 %v598
    %2972 = vmatprep.subr.mxu0 %v595
    %2973 = vmatpush1.msra.mxu0 %v594
    %2974 = vmatprep.subr.mxu0 %v591
    %2975 = vmatpush1.msra.mxu0 %v590
    %2976 = vmatprep.subr.mxu0 %v587
    %2977 = vmatpush1.msra.mxu0 %v586
    %2978 = vmatprep.subr.mxu0 %v583
    %2979 = vmatpush1.msra.mxu0 %v582
    %2980 = vmatprep.subr.mxu0 %v579
    %2981 = vmatpush1.msra.mxu0 %v578
    %2982 = vmatprep.subr.mxu0 %v575
    %2983 = vmatpush1.msra.mxu0 %v574
    %2984 = vmatprep.subr.mxu0 %v571
    %2985 = vmatpush1.msra.mxu0 %v570
    %2986 = vmatprep.subr.mxu0 %v567
    %2987 = vmatpush1.msra.mxu0 %v566
    %2988 = vmatprep.subr.mxu0 %v563
    %2989 = vmatpush1.msra.mxu0 %v562
    %2990 = vmatprep.subr.mxu0 %v559
    %2991 = vmatpush1.msra.mxu0 %v558
    %2992 = vmatprep.subr.mxu0 %v555
    %2993 = vmatpush1.msra.mxu0 %v554
    %2994 = vmatprep.subr.mxu0 %v551
    %2995 = vmatpush1.msra.mxu0 %v550
    %2996 = vmatprep.subr.mxu0 %v547
    %2997 = vmatpush1.msra.mxu0 %v546
    %2998 = vmatprep.subr.mxu0 %v543
    %2999 = vmatpush1.msra.mxu0 %v542
    %3000 = vmatprep.subr.mxu0 %v667
    %3001 = vmatpush2.msra.mxu0 %v666
    %3002 = vmatprep.subr.mxu0 %v663
    %3003 = vmatpush2.msra.mxu0 %v662
    %3004 = vmatprep.subr.mxu0 %v659
    %3005 = vmatpush2.msra.mxu0 %v658
    %3006 = vmatprep.subr.mxu0 %v655
    %3007 = vmatpush2.msra.mxu0 %v654
    %3008 = vmatprep.subr.mxu0 %v651
    %3009 = vmatpush2.msra.mxu0 %v650
    %3010 = vmatprep.subr.mxu0 %v647
    %3011 = vmatpush2.msra.mxu0 %v646
    %3012 = vmatprep.subr.mxu0 %v643
    %3013 = vmatpush2.msra.mxu0 %v642
    %3014 = vmatprep.subr.mxu0 %v639
    %3015 = vmatpush2.msra.mxu0 %v638
    %3016 = vmatprep.subr.mxu0 %v635
    %3017 = vmatpush2.msra.mxu0 %v634
    %3018 = vmatprep.subr.mxu0 %v631
    %3019 = vmatpush2.msra.mxu0 %v630
    %3020 = vmatprep.subr.mxu0 %v627
    %3021 = vmatpush2.msra.mxu0 %v626
    %3022 = vmatprep.subr.mxu0 %v623
    %3023 = vmatpush2.msra.mxu0 %v622
    %3024 = vmatprep.subr.mxu0 %v619
    %3025 = vmatpush2.msra.mxu0 %v618
    %3026 = vmatprep.subr.mxu0 %v615
    %3027 = vmatpush2.msra.mxu0 %v614
    %3028 = vmatprep.subr.mxu0 %v611
    %3029 = vmatpush2.msra.mxu0 %v610
    %3030 = vmatprep.subr.mxu0 %v607
    %3031 = vmatpush2.msra.mxu0 %v606
    %3032 = vmatprep.mubr.f32.mxu0 %v1674
    %3033 = vmatmul.mubr.f32.gmra.mxu0 %v1666
    %v3034 = vpop.f32.mrf.mxu0
    %v3035 = vadd.f32 %v2964, %v3034
    %v3036 = vpop.f32.mrf.mxu0
    %v3037 = vadd.f32 %v2966, %v3036
    %3038 = vdwg.mxu0
    %3039 = vmatprep.subr.mxu0 %v731
    %3040 = vmatpush1.msra.mxu0 %v730
    %3041 = vmatprep.subr.mxu0 %v727
    %3042 = vmatpush1.msra.mxu0 %v726
    %3043 = vmatprep.subr.mxu0 %v723
    %3044 = vmatpush1.msra.mxu0 %v722
    %3045 = vmatprep.subr.mxu0 %v719
    %3046 = vmatpush1.msra.mxu0 %v718
    %3047 = vmatprep.subr.mxu0 %v715
    %3048 = vmatpush1.msra.mxu0 %v714
    %3049 = vmatprep.subr.mxu0 %v711
    %3050 = vmatpush1.msra.mxu0 %v710
    %3051 = vmatprep.subr.mxu0 %v707
    %3052 = vmatpush1.msra.mxu0 %v706
    %3053 = vmatprep.subr.mxu0 %v703
    %3054 = vmatpush1.msra.mxu0 %v702
    %3055 = vmatprep.subr.mxu0 %v699
    %3056 = vmatpush1.msra.mxu0 %v698
    %3057 = vmatprep.subr.mxu0 %v695
    %3058 = vmatpush1.msra.mxu0 %v694
    %3059 = vmatprep.subr.mxu0 %v691
    %3060 = vmatpush1.msra.mxu0 %v690
    %3061 = vmatprep.subr.mxu0 %v687
    %3062 = vmatpush1.msra.mxu0 %v686
    %3063 = vmatprep.subr.mxu0 %v683
    %3064 = vmatpush1.msra.mxu0 %v682
    %3065 = vmatprep.subr.mxu0 %v679
    %3066 = vmatpush1.msra.mxu0 %v678
    %3067 = vmatprep.subr.mxu0 %v675
    %3068 = vmatpush1.msra.mxu0 %v674
    %3069 = vmatprep.subr.mxu0 %v671
    %3070 = vmatpush1.msra.mxu0 %v670
    %3071 = vmatprep.subr.mxu0 %v795
    %3072 = vmatpush2.msra.mxu0 %v794
    %3073 = vmatprep.subr.mxu0 %v791
    %3074 = vmatpush2.msra.mxu0 %v790
    %3075 = vmatprep.subr.mxu0 %v787
    %3076 = vmatpush2.msra.mxu0 %v786
    %3077 = vmatprep.subr.mxu0 %v783
    %3078 = vmatpush2.msra.mxu0 %v782
    %3079 = vmatprep.subr.mxu0 %v779
    %3080 = vmatpush2.msra.mxu0 %v778
    %3081 = vmatprep.subr.mxu0 %v775
    %3082 = vmatpush2.msra.mxu0 %v774
    %3083 = vmatprep.subr.mxu0 %v771
    %3084 = vmatpush2.msra.mxu0 %v770
    %3085 = vmatprep.subr.mxu0 %v767
    %3086 = vmatpush2.msra.mxu0 %v766
    %3087 = vmatprep.subr.mxu0 %v763
    %3088 = vmatpush2.msra.mxu0 %v762
    %3089 = vmatprep.subr.mxu0 %v759
    %3090 = vmatpush2.msra.mxu0 %v758
    %3091 = vmatprep.subr.mxu0 %v755
    %3092 = vmatpush2.msra.mxu0 %v754
    %3093 = vmatprep.subr.mxu0 %v751
    %3094 = vmatpush2.msra.mxu0 %v750
    %3095 = vmatprep.subr.mxu0 %v747
    %3096 = vmatpush2.msra.mxu0 %v746
    %3097 = vmatprep.subr.mxu0 %v743
    %3098 = vmatpush2.msra.mxu0 %v742
    %3099 = vmatprep.subr.mxu0 %v739
    %3100 = vmatpush2.msra.mxu0 %v738
    %3101 = vmatprep.subr.mxu0 %v735
    %3102 = vmatpush2.msra.mxu0 %v734
    %3103 = vmatprep.mubr.f32.mxu0 %v1675
    %3104 = vmatmul.mubr.f32.gmra.mxu0 %v1673
    %v3105 = vpop.f32.mrf.mxu0
    %v3106 = vadd.f32 %v3035, %v3105
    %v3107 = vpop.f32.mrf.mxu0
    %v3108 = vadd.f32 %v3037, %v3107
    %3109 = vdwg.mxu0
    %3110 = vmatprep.subr.mxu0 %v859
    %3111 = vmatpush1.msra.mxu0 %v858
    %3112 = vmatprep.subr.mxu0 %v855
    %3113 = vmatpush1.msra.mxu0 %v854
    %3114 = vmatprep.subr.mxu0 %v851
    %3115 = vmatpush1.msra.mxu0 %v850
    %3116 = vmatprep.subr.mxu0 %v847
    %3117 = vmatpush1.msra.mxu0 %v846
    %3118 = vmatprep.subr.mxu0 %v843
    %3119 = vmatpush1.msra.mxu0 %v842
    %3120 = vmatprep.subr.mxu0 %v839
    %3121 = vmatpush1.msra.mxu0 %v838
    %3122 = vmatprep.subr.mxu0 %v835
    %3123 = vmatpush1.msra.mxu0 %v834
    %3124 = vmatprep.subr.mxu0 %v831
    %3125 = vmatpush1.msra.mxu0 %v830
    %3126 = vmatprep.subr.mxu0 %v827
    %3127 = vmatpush1.msra.mxu0 %v826
    %3128 = vmatprep.subr.mxu0 %v823
    %3129 = vmatpush1.msra.mxu0 %v822
    %3130 = vmatprep.subr.mxu0 %v819
    %3131 = vmatpush1.msra.mxu0 %v818
    %3132 = vmatprep.subr.mxu0 %v815
    %3133 = vmatpush1.msra.mxu0 %v814
    %3134 = vmatprep.subr.mxu0 %v811
    %3135 = vmatpush1.msra.mxu0 %v810
    %3136 = vmatprep.subr.mxu0 %v807
    %3137 = vmatpush1.msra.mxu0 %v806
    %3138 = vmatprep.subr.mxu0 %v803
    %3139 = vmatpush1.msra.mxu0 %v802
    %3140 = vmatprep.subr.mxu0 %v799
    %3141 = vmatpush1.msra.mxu0 %v798
    %3142 = vmatprep.subr.mxu0 %v923
    %3143 = vmatpush2.msra.mxu0 %v922
    %3144 = vmatprep.subr.mxu0 %v919
    %3145 = vmatpush2.msra.mxu0 %v918
    %3146 = vmatprep.subr.mxu0 %v915
    %3147 = vmatpush2.msra.mxu0 %v914
    %3148 = vmatprep.subr.mxu0 %v911
    %3149 = vmatpush2.msra.mxu0 %v910
    %3150 = vmatprep.subr.mxu0 %v907
    %3151 = vmatpush2.msra.mxu0 %v906
    %3152 = vmatprep.subr.mxu0 %v903
    %3153 = vmatpush2.msra.mxu0 %v902
    %3154 = vmatprep.subr.mxu0 %v899
    %3155 = vmatpush2.msra.mxu0 %v898
    %3156 = vmatprep.subr.mxu0 %v895
    %3157 = vmatpush2.msra.mxu0 %v894
    %3158 = vmatprep.subr.mxu0 %v891
    %3159 = vmatpush2.msra.mxu0 %v890
    %3160 = vmatprep.subr.mxu0 %v887
    %3161 = vmatpush2.msra.mxu0 %v886
    %3162 = vmatprep.subr.mxu0 %v883
    %3163 = vmatpush2.msra.mxu0 %v882
    %3164 = vmatprep.subr.mxu0 %v879
    %3165 = vmatpush2.msra.mxu0 %v878
    %3166 = vmatprep.subr.mxu0 %v875
    %3167 = vmatpush2.msra.mxu0 %v874
    %3168 = vmatprep.subr.mxu0 %v871
    %3169 = vmatpush2.msra.mxu0 %v870
    %3170 = vmatprep.subr.mxu0 %v867
    %3171 = vmatpush2.msra.mxu0 %v866
    %3172 = vmatprep.subr.mxu0 %v863
    %3173 = vmatpush2.msra.mxu0 %v862
    %3174 = vmatprep.mubr.f32.mxu0 %v1691
    %3175 = vmatmul.mubr.f32.gmra.mxu0 %v1683
    %v3176 = vpop.f32.mrf.mxu0
    %v3177 = vadd.f32 %v3106, %v3176
    %v3178 = vpop.f32.mrf.mxu0
    %v3179 = vadd.f32 %v3108, %v3178
    %3180 = vdwg.mxu0
    %3181 = vmatprep.subr.mxu0 %v987
    %3182 = vmatpush1.msra.mxu0 %v986
    %3183 = vmatprep.subr.mxu0 %v983
    %3184 = vmatpush1.msra.mxu0 %v982
    %3185 = vmatprep.subr.mxu0 %v979
    %3186 = vmatpush1.msra.mxu0 %v978
    %3187 = vmatprep.subr.mxu0 %v975
    %3188 = vmatpush1.msra.mxu0 %v974
    %3189 = vmatprep.subr.mxu0 %v971
    %3190 = vmatpush1.msra.mxu0 %v970
    %3191 = vmatprep.subr.mxu0 %v967
    %3192 = vmatpush1.msra.mxu0 %v966
    %3193 = vmatprep.subr.mxu0 %v963
    %3194 = vmatpush1.msra.mxu0 %v962
    %3195 = vmatprep.subr.mxu0 %v959
    %3196 = vmatpush1.msra.mxu0 %v958
    %3197 = vmatprep.subr.mxu0 %v955
    %3198 = vmatpush1.msra.mxu0 %v954
    %3199 = vmatprep.subr.mxu0 %v951
    %3200 = vmatpush1.msra.mxu0 %v950
    %3201 = vmatprep.subr.mxu0 %v947
    %3202 = vmatpush1.msra.mxu0 %v946
    %3203 = vmatprep.subr.mxu0 %v943
    %3204 = vmatpush1.msra.mxu0 %v942
    %3205 = vmatprep.subr.mxu0 %v939
    %3206 = vmatpush1.msra.mxu0 %v938
    %3207 = vmatprep.subr.mxu0 %v935
    %3208 = vmatpush1.msra.mxu0 %v934
    %3209 = vmatprep.subr.mxu0 %v931
    %3210 = vmatpush1.msra.mxu0 %v930
    %3211 = vmatprep.subr.mxu0 %v927
    %3212 = vmatpush1.msra.mxu0 %v926
    %3213 = vmatprep.subr.mxu0 %v1051
    %3214 = vmatpush2.msra.mxu0 %v1050
    %3215 = vmatprep.subr.mxu0 %v1047
    %3216 = vmatpush2.msra.mxu0 %v1046
    %3217 = vmatprep.subr.mxu0 %v1043
    %3218 = vmatpush2.msra.mxu0 %v1042
    %3219 = vmatprep.subr.mxu0 %v1039
    %3220 = vmatpush2.msra.mxu0 %v1038
    %3221 = vmatprep.subr.mxu0 %v1035
    %3222 = vmatpush2.msra.mxu0 %v1034
    %3223 = vmatprep.subr.mxu0 %v1031
    %3224 = vmatpush2.msra.mxu0 %v1030
    %3225 = vmatprep.subr.mxu0 %v1027
    %3226 = vmatpush2.msra.mxu0 %v1026
    %3227 = vmatprep.subr.mxu0 %v1023
    %3228 = vmatpush2.msra.mxu0 %v1022
    %3229 = vmatprep.subr.mxu0 %v1019
    %3230 = vmatpush2.msra.mxu0 %v1018
    %3231 = vmatprep.subr.mxu0 %v1015
    %3232 = vmatpush2.msra.mxu0 %v1014
    %3233 = vmatprep.subr.mxu0 %v1011
    %3234 = vmatpush2.msra.mxu0 %v1010
    %3235 = vmatprep.subr.mxu0 %v1007
    %3236 = vmatpush2.msra.mxu0 %v1006
    %3237 = vmatprep.subr.mxu0 %v1003
    %3238 = vmatpush2.msra.mxu0 %v1002
    %3239 = vmatprep.subr.mxu0 %v999
    %3240 = vmatpush2.msra.mxu0 %v998
    %3241 = vmatprep.subr.mxu0 %v995
    %3242 = vmatpush2.msra.mxu0 %v994
    %3243 = vmatprep.subr.mxu0 %v991
    %3244 = vmatpush2.msra.mxu0 %v990
    %3245 = vmatprep.mubr.f32.mxu0 %v1692
    %3246 = vmatmul.mubr.f32.gmra.mxu0 %v1690
    %v3247 = vpop.f32.mrf.mxu0
    %v3248 = vadd.f32 %v3177, %v3247
    %v3249 = vpop.f32.mrf.mxu0
    %v3250 = vadd.f32 %v3179, %v3249
    %3251 = vdwg.mxu0
    %3252 = vmatprep.subr.mxu0 %v1115
    %3253 = vmatpush1.msra.mxu0 %v1114
    %3254 = vmatprep.subr.mxu0 %v1111
    %3255 = vmatpush1.msra.mxu0 %v1110
    %3256 = vmatprep.subr.mxu0 %v1107
    %3257 = vmatpush1.msra.mxu0 %v1106
    %3258 = vmatprep.subr.mxu0 %v1103
    %3259 = vmatpush1.msra.mxu0 %v1102
    %3260 = vmatprep.subr.mxu0 %v1099
    %3261 = vmatpush1.msra.mxu0 %v1098
    %3262 = vmatprep.subr.mxu0 %v1095
    %3263 = vmatpush1.msra.mxu0 %v1094
    %3264 = vmatprep.subr.mxu0 %v1091
    %3265 = vmatpush1.msra.mxu0 %v1090
    %3266 = vmatprep.subr.mxu0 %v1087
    %3267 = vmatpush1.msra.mxu0 %v1086
    %3268 = vmatprep.subr.mxu0 %v1083
    %3269 = vmatpush1.msra.mxu0 %v1082
    %3270 = vmatprep.subr.mxu0 %v1079
    %3271 = vmatpush1.msra.mxu0 %v1078
    %3272 = vmatprep.subr.mxu0 %v1075
    %3273 = vmatpush1.msra.mxu0 %v1074
    %3274 = vmatprep.subr.mxu0 %v1071
    %3275 = vmatpush1.msra.mxu0 %v1070
    %3276 = vmatprep.subr.mxu0 %v1067
    %3277 = vmatpush1.msra.mxu0 %v1066
    %3278 = vmatprep.subr.mxu0 %v1063
    %3279 = vmatpush1.msra.mxu0 %v1062
    %3280 = vmatprep.subr.mxu0 %v1059
    %3281 = vmatpush1.msra.mxu0 %v1058
    %3282 = vmatprep.subr.mxu0 %v1055
    %3283 = vmatpush1.msra.mxu0 %v1054
    %3284 = vmatprep.subr.mxu0 %v1179
    %3285 = vmatpush2.msra.mxu0 %v1178
    %3286 = vmatprep.subr.mxu0 %v1175
    %3287 = vmatpush2.msra.mxu0 %v1174
    %3288 = vmatprep.subr.mxu0 %v1171
    %3289 = vmatpush2.msra.mxu0 %v1170
    %3290 = vmatprep.subr.mxu0 %v1167
    %3291 = vmatpush2.msra.mxu0 %v1166
    %3292 = vmatprep.subr.mxu0 %v1163
    %3293 = vmatpush2.msra.mxu0 %v1162
    %3294 = vmatprep.subr.mxu0 %v1159
    %3295 = vmatpush2.msra.mxu0 %v1158
    %3296 = vmatprep.subr.mxu0 %v1155
    %3297 = vmatpush2.msra.mxu0 %v1154
    %3298 = vmatprep.subr.mxu0 %v1151
    %3299 = vmatpush2.msra.mxu0 %v1150
    %3300 = vmatprep.subr.mxu0 %v1147
    %3301 = vmatpush2.msra.mxu0 %v1146
    %3302 = vmatprep.subr.mxu0 %v1143
    %3303 = vmatpush2.msra.mxu0 %v1142
    %3304 = vmatprep.subr.mxu0 %v1139
    %3305 = vmatpush2.msra.mxu0 %v1138
    %3306 = vmatprep.subr.mxu0 %v1135
    %3307 = vmatpush2.msra.mxu0 %v1134
    %3308 = vmatprep.subr.mxu0 %v1131
    %3309 = vmatpush2.msra.mxu0 %v1130
    %3310 = vmatprep.subr.mxu0 %v1127
    %3311 = vmatpush2.msra.mxu0 %v1126
    %3312 = vmatprep.subr.mxu0 %v1123
    %3313 = vmatpush2.msra.mxu0 %v1122
    %3314 = vmatprep.subr.mxu0 %v1119
    %3315 = vmatpush2.msra.mxu0 %v1118
    %3316 = vmatprep.mubr.f32.mxu0 %v1708
    %3317 = vmatmul.mubr.f32.gmra.mxu0 %v1700
    %v3318 = vpop.f32.mrf.mxu0
    %v3319 = vadd.f32 %v3248, %v3318
    %v3320 = vpop.f32.mrf.mxu0
    %v3321 = vadd.f32 %v3250, %v3320
    %3322 = vdwg.mxu0
    %3323 = vmatprep.subr.mxu0 %v1243
    %3324 = vmatpush1.msra.mxu0 %v1242
    %3325 = vmatprep.subr.mxu0 %v1239
    %3326 = vmatpush1.msra.mxu0 %v1238
    %3327 = vmatprep.subr.mxu0 %v1235
    %3328 = vmatpush1.msra.mxu0 %v1234
    %3329 = vmatprep.subr.mxu0 %v1231
    %3330 = vmatpush1.msra.mxu0 %v1230
    %3331 = vmatprep.subr.mxu0 %v1227
    %3332 = vmatpush1.msra.mxu0 %v1226
    %3333 = vmatprep.subr.mxu0 %v1223
    %3334 = vmatpush1.msra.mxu0 %v1222
    %3335 = vmatprep.subr.mxu0 %v1219
    %3336 = vmatpush1.msra.mxu0 %v1218
    %3337 = vmatprep.subr.mxu0 %v1215
    %3338 = vmatpush1.msra.mxu0 %v1214
    %3339 = vmatprep.subr.mxu0 %v1211
    %3340 = vmatpush1.msra.mxu0 %v1210
    %3341 = vmatprep.subr.mxu0 %v1207
    %3342 = vmatpush1.msra.mxu0 %v1206
    %3343 = vmatprep.subr.mxu0 %v1203
    %3344 = vmatpush1.msra.mxu0 %v1202
    %3345 = vmatprep.subr.mxu0 %v1199
    %3346 = vmatpush1.msra.mxu0 %v1198
    %3347 = vmatprep.subr.mxu0 %v1195
    %3348 = vmatpush1.msra.mxu0 %v1194
    %3349 = vmatprep.subr.mxu0 %v1191
    %3350 = vmatpush1.msra.mxu0 %v1190
    %3351 = vmatprep.subr.mxu0 %v1187
    %3352 = vmatpush1.msra.mxu0 %v1186
    %3353 = vmatprep.subr.mxu0 %v1183
    %3354 = vmatpush1.msra.mxu0 %v1182
    %3355 = vmatprep.subr.mxu0 %v1307
    %3356 = vmatpush2.msra.mxu0 %v1306
    %3357 = vmatprep.subr.mxu0 %v1303
    %3358 = vmatpush2.msra.mxu0 %v1302
    %3359 = vmatprep.subr.mxu0 %v1299
    %3360 = vmatpush2.msra.mxu0 %v1298
    %3361 = vmatprep.subr.mxu0 %v1295
    %3362 = vmatpush2.msra.mxu0 %v1294
    %3363 = vmatprep.subr.mxu0 %v1291
    %3364 = vmatpush2.msra.mxu0 %v1290
    %3365 = vmatprep.subr.mxu0 %v1287
    %3366 = vmatpush2.msra.mxu0 %v1286
    %3367 = vmatprep.subr.mxu0 %v1283
    %3368 = vmatpush2.msra.mxu0 %v1282
    %3369 = vmatprep.subr.mxu0 %v1279
    %3370 = vmatpush2.msra.mxu0 %v1278
    %3371 = vmatprep.subr.mxu0 %v1275
    %3372 = vmatpush2.msra.mxu0 %v1274
    %3373 = vmatprep.subr.mxu0 %v1271
    %3374 = vmatpush2.msra.mxu0 %v1270
    %3375 = vmatprep.subr.mxu0 %v1267
    %3376 = vmatpush2.msra.mxu0 %v1266
    %3377 = vmatprep.subr.mxu0 %v1263
    %3378 = vmatpush2.msra.mxu0 %v1262
    %3379 = vmatprep.subr.mxu0 %v1259
    %3380 = vmatpush2.msra.mxu0 %v1258
    %3381 = vmatprep.subr.mxu0 %v1255
    %3382 = vmatpush2.msra.mxu0 %v1254
    %3383 = vmatprep.subr.mxu0 %v1251
    %3384 = vmatpush2.msra.mxu0 %v1250
    %3385 = vmatprep.subr.mxu0 %v1247
    %3386 = vmatpush2.msra.mxu0 %v1246
    %3387 = vmatprep.mubr.f32.mxu0 %v1709
    %3388 = vmatmul.mubr.f32.gmra.mxu0 %v1707
    %v3389 = vpop.f32.mrf.mxu0
    %v3390 = vadd.f32 %v3319, %v3389
    %v3391 = vpop.f32.mrf.mxu0
    %v3392 = vadd.f32 %v3321, %v3391
    %3393 = vdwg.mxu0
    %3394 = vmatprep.subr.mxu0 %v1371
    %3395 = vmatpush1.msra.mxu0 %v1370
    %3396 = vmatprep.subr.mxu0 %v1367
    %3397 = vmatpush1.msra.mxu0 %v1366
    %3398 = vmatprep.subr.mxu0 %v1363
    %3399 = vmatpush1.msra.mxu0 %v1362
    %3400 = vmatprep.subr.mxu0 %v1359
    %3401 = vmatpush1.msra.mxu0 %v1358
    %3402 = vmatprep.subr.mxu0 %v1355
    %3403 = vmatpush1.msra.mxu0 %v1354
    %3404 = vmatprep.subr.mxu0 %v1351
    %3405 = vmatpush1.msra.mxu0 %v1350
    %3406 = vmatprep.subr.mxu0 %v1347
    %3407 = vmatpush1.msra.mxu0 %v1346
    %3408 = vmatprep.subr.mxu0 %v1343
    %3409 = vmatpush1.msra.mxu0 %v1342
    %3410 = vmatprep.subr.mxu0 %v1339
    %3411 = vmatpush1.msra.mxu0 %v1338
    %3412 = vmatprep.subr.mxu0 %v1335
    %3413 = vmatpush1.msra.mxu0 %v1334
    %3414 = vmatprep.subr.mxu0 %v1331
    %3415 = vmatpush1.msra.mxu0 %v1330
    %3416 = vmatprep.subr.mxu0 %v1327
    %3417 = vmatpush1.msra.mxu0 %v1326
    %3418 = vmatprep.subr.mxu0 %v1323
    %3419 = vmatpush1.msra.mxu0 %v1322
    %3420 = vmatprep.subr.mxu0 %v1319
    %3421 = vmatpush1.msra.mxu0 %v1318
    %3422 = vmatprep.subr.mxu0 %v1315
    %3423 = vmatpush1.msra.mxu0 %v1314
    %3424 = vmatprep.subr.mxu0 %v1311
    %3425 = vmatpush1.msra.mxu0 %v1310
    %3426 = vmatprep.subr.mxu0 %v1435
    %3427 = vmatpush2.msra.mxu0 %v1434
    %3428 = vmatprep.subr.mxu0 %v1431
    %3429 = vmatpush2.msra.mxu0 %v1430
    %3430 = vmatprep.subr.mxu0 %v1427
    %3431 = vmatpush2.msra.mxu0 %v1426
    %3432 = vmatprep.subr.mxu0 %v1423
    %3433 = vmatpush2.msra.mxu0 %v1422
    %3434 = vmatprep.subr.mxu0 %v1419
    %3435 = vmatpush2.msra.mxu0 %v1418
    %3436 = vmatprep.subr.mxu0 %v1415
    %3437 = vmatpush2.msra.mxu0 %v1414
    %3438 = vmatprep.subr.mxu0 %v1411
    %3439 = vmatpush2.msra.mxu0 %v1410
    %3440 = vmatprep.subr.mxu0 %v1407
    %3441 = vmatpush2.msra.mxu0 %v1406
    %3442 = vmatprep.subr.mxu0 %v1403
    %3443 = vmatpush2.msra.mxu0 %v1402
    %3444 = vmatprep.subr.mxu0 %v1399
    %3445 = vmatpush2.msra.mxu0 %v1398
    %3446 = vmatprep.subr.mxu0 %v1395
    %3447 = vmatpush2.msra.mxu0 %v1394
    %3448 = vmatprep.subr.mxu0 %v1391
    %3449 = vmatpush2.msra.mxu0 %v1390
    %3450 = vmatprep.subr.mxu0 %v1387
    %3451 = vmatpush2.msra.mxu0 %v1386
    %3452 = vmatprep.subr.mxu0 %v1383
    %3453 = vmatpush2.msra.mxu0 %v1382
    %3454 = vmatprep.subr.mxu0 %v1379
    %3455 = vmatpush2.msra.mxu0 %v1378
    %3456 = vmatprep.subr.mxu0 %v1375
    %3457 = vmatpush2.msra.mxu0 %v1374
    %3458 = vmatprep.mubr.f32.mxu0 %v1725
    %3459 = vmatmul.mubr.f32.gmra.mxu0 %v1717
    %v3460 = vpop.f32.mrf.mxu0
    %v3461 = vadd.f32 %v3390, %v3460
    %v3462 = vpop.f32.mrf.mxu0
    %v3463 = vadd.f32 %v3392, %v3462
    %3464 = vdwg.mxu0
    %3465 = vmatprep.subr.mxu0 %v1499
    %3466 = vmatpush1.msra.mxu0 %v1498
    %3467 = vmatprep.subr.mxu0 %v1495
    %3468 = vmatpush1.msra.mxu0 %v1494
    %3469 = vmatprep.subr.mxu0 %v1491
    %3470 = vmatpush1.msra.mxu0 %v1490
    %3471 = vmatprep.subr.mxu0 %v1487
    %3472 = vmatpush1.msra.mxu0 %v1486
    %3473 = vmatprep.subr.mxu0 %v1483
    %3474 = vmatpush1.msra.mxu0 %v1482
    %3475 = vmatprep.subr.mxu0 %v1479
    %3476 = vmatpush1.msra.mxu0 %v1478
    %3477 = vmatprep.subr.mxu0 %v1475
    %3478 = vmatpush1.msra.mxu0 %v1474
    %3479 = vmatprep.subr.mxu0 %v1471
    %3480 = vmatpush1.msra.mxu0 %v1470
    %3481 = vmatprep.subr.mxu0 %v1467
    %3482 = vmatpush1.msra.mxu0 %v1466
    %3483 = vmatprep.subr.mxu0 %v1463
    %3484 = vmatpush1.msra.mxu0 %v1462
    %3485 = vmatprep.subr.mxu0 %v1459
    %3486 = vmatpush1.msra.mxu0 %v1458
    %3487 = vmatprep.subr.mxu0 %v1455
    %3488 = vmatpush1.msra.mxu0 %v1454
    %3489 = vmatprep.subr.mxu0 %v1451
    %3490 = vmatpush1.msra.mxu0 %v1450
    %3491 = vmatprep.subr.mxu0 %v1447
    %3492 = vmatpush1.msra.mxu0 %v1446
    %3493 = vmatprep.subr.mxu0 %v1443
    %3494 = vmatpush1.msra.mxu0 %v1442
    %3495 = vmatprep.subr.mxu0 %v1439
    %3496 = vmatpush1.msra.mxu0 %v1438
    %3497 = vmatprep.subr.mxu0 %v1563
    %3498 = vmatpush2.msra.mxu0 %v1562
    %3499 = vmatprep.subr.mxu0 %v1559
    %3500 = vmatpush2.msra.mxu0 %v1558
    %3501 = vmatprep.subr.mxu0 %v1555
    %3502 = vmatpush2.msra.mxu0 %v1554
    %3503 = vmatprep.subr.mxu0 %v1551
    %3504 = vmatpush2.msra.mxu0 %v1550
    %3505 = vmatprep.subr.mxu0 %v1547
    %3506 = vmatpush2.msra.mxu0 %v1546
    %3507 = vmatprep.subr.mxu0 %v1543
    %3508 = vmatpush2.msra.mxu0 %v1542
    %3509 = vmatprep.subr.mxu0 %v1539
    %3510 = vmatpush2.msra.mxu0 %v1538
    %3511 = vmatprep.subr.mxu0 %v1535
    %3512 = vmatpush2.msra.mxu0 %v1534
    %3513 = vmatprep.subr.mxu0 %v1531
    %3514 = vmatpush2.msra.mxu0 %v1530
    %3515 = vmatprep.subr.mxu0 %v1527
    %3516 = vmatpush2.msra.mxu0 %v1526
    %3517 = vmatprep.subr.mxu0 %v1523
    %3518 = vmatpush2.msra.mxu0 %v1522
    %3519 = vmatprep.subr.mxu0 %v1519
    %3520 = vmatpush2.msra.mxu0 %v1518
    %3521 = vmatprep.subr.mxu0 %v1515
    %3522 = vmatpush2.msra.mxu0 %v1514
    %3523 = vmatprep.subr.mxu0 %v1511
    %3524 = vmatpush2.msra.mxu0 %v1510
    %3525 = vmatprep.subr.mxu0 %v1507
    %3526 = vmatpush2.msra.mxu0 %v1506
    %3527 = vmatprep.subr.mxu0 %v1503
    %3528 = vmatpush2.msra.mxu0 %v1502
    %3529 = vmatprep.mubr.f32.mxu0 %v1726
    %3530 = vmatmul.mubr.f32.gmra.mxu0 %v1724
    %v3531 = vpop.f32.mrf.mxu0
    %v3532 = vadd.f32 %v3461, %v3531
    %v3533 = vpop.f32.mrf.mxu0
    %v3534 = vadd.f32 %v3463, %v3533
    %3535 = vdwg.mxu0
    %3536 = vmatprep.subr.mxu0 0.0
    %3537 = vmatpush1.msra.mxu0 0.0
    %3538 = vmatprep.subr.mxu0 0.0
    %3539 = vmatpush1.msra.mxu0 0.0
    %3540 = vmatprep.subr.mxu0 0.0
    %3541 = vmatpush1.msra.mxu0 0.0
    %3542 = vmatprep.subr.mxu0 0.0
    %3543 = vmatpush1.msra.mxu0 0.0
    %3544 = vmatprep.subr.mxu0 0.0
    %3545 = vmatpush1.msra.mxu0 0.0
    %3546 = vmatprep.subr.mxu0 0.0
    %3547 = vmatpush1.msra.mxu0 0.0
    %3548 = vmatprep.subr.mxu0 0.0
    %3549 = vmatpush1.msra.mxu0 0.0
    %3550 = vmatprep.subr.mxu0 0.0
    %3551 = vmatpush1.msra.mxu0 0.0
    %3552 = vmatprep.subr.mxu0 %v1595
    %3553 = vmatpush1.msra.mxu0 %v1594
    %3554 = vmatprep.subr.mxu0 %v1591
    %3555 = vmatpush1.msra.mxu0 %v1590
    %3556 = vmatprep.subr.mxu0 %v1587
    %3557 = vmatpush1.msra.mxu0 %v1586
    %3558 = vmatprep.subr.mxu0 %v1583
    %3559 = vmatpush1.msra.mxu0 %v1582
    %3560 = vmatprep.subr.mxu0 %v1579
    %3561 = vmatpush1.msra.mxu0 %v1578
    %3562 = vmatprep.subr.mxu0 %v1575
    %3563 = vmatpush1.msra.mxu0 %v1574
    %3564 = vmatprep.subr.mxu0 %v1571
    %3565 = vmatpush1.msra.mxu0 %v1570
    %3566 = vmatprep.subr.mxu0 %v1567
    %3567 = vmatpush1.msra.mxu0 %v1566
    %3568 = vmatprep.subr.mxu0 0.0
    %3569 = vmatpush2.msra.mxu0 0.0
    %3570 = vmatprep.subr.mxu0 0.0
    %3571 = vmatpush2.msra.mxu0 0.0
    %3572 = vmatprep.subr.mxu0 0.0
    %3573 = vmatpush2.msra.mxu0 0.0
    %3574 = vmatprep.subr.mxu0 0.0
    %3575 = vmatpush2.msra.mxu0 0.0
    %3576 = vmatprep.subr.mxu0 0.0
    %3577 = vmatpush2.msra.mxu0 0.0
    %3578 = vmatprep.subr.mxu0 0.0
    %3579 = vmatpush2.msra.mxu0 0.0
    %3580 = vmatprep.subr.mxu0 0.0
    %3581 = vmatpush2.msra.mxu0 0.0
    %3582 = vmatprep.subr.mxu0 0.0
    %3583 = vmatpush2.msra.mxu0 0.0
    %3584 = vmatprep.subr.mxu0 0.0
    %3585 = vmatpush2.msra.mxu0 0.0
    %3586 = vmatprep.subr.mxu0 0.0
    %3587 = vmatpush2.msra.mxu0 0.0
    %3588 = vmatprep.subr.mxu0 0.0
    %3589 = vmatpush2.msra.mxu0 0.0
    %3590 = vmatprep.subr.mxu0 0.0
    %3591 = vmatpush2.msra.mxu0 0.0
    %3592 = vmatprep.subr.mxu0 0.0
    %3593 = vmatpush2.msra.mxu0 0.0
    %3594 = vmatprep.subr.mxu0 0.0
    %3595 = vmatpush2.msra.mxu0 0.0
    %3596 = vmatprep.subr.mxu0 0.0
    %3597 = vmatpush2.msra.mxu0 0.0
    %3598 = vmatprep.subr.mxu0 0.0
    %3599 = vmatpush2.msra.mxu0 0.0
    %3600 = vmatprep.mubr.f32.mxu0 0.0
    %3601 = vmatmul.mubr.f32.gmra.mxu0 %v1759
    %v3602 = vpop.f32.mrf.mxu0
    %v3603 = vadd.f32 %v3532, %v3602
    %v3604 = vpop.f32.mrf.mxu0
    %v3605 = vadd.f32 %v3534, %v3604
    %3606 = vdwg.mxu0
    %v3607 = vmax.f32 %v2680, 0.0
    %v3608 = vmax.f32 %v2682, 0.0
    %v3609 = vmax.f32 %v3603, 0.0
    %v3610 = vmax.f32 %v3605, 0.0
    %v3611 = vld [vmem:[%s3] sm:$0xff]
    %v3612 = vld [vmem:[%s3 + $0x8] sm:$0xff]
    %v3613 = vld [vmem:[%s3 + $0x10] sm:$0xff]
    %v3614 = vld [vmem:[%s3 + $0x18] sm:$0xff]
    %v3615 = vld [vmem:[%s3 + $0x20] sm:$0xff]
    %v3616 = vld [vmem:[%s3 + $0x28] sm:$0xff]
    %v3617 = vld [vmem:[%s3 + $0x30] sm:$0xff]
    %v3618 = vld [vmem:[%s3 + $0x38] sm:$0xff]
    %v3619 = vld [vmem:[%s3 + $0x40] sm:$0xff]
    %v3620 = vld [vmem:[%s3 + $0x48] sm:$0xff]
    %v3621 = vld [vmem:[%s3 + $0x50] sm:$0xff]
    %v3622 = vld [vmem:[%s3 + $0x58] sm:$0xff]
    %v3623 = vld [vmem:[%s3 + $0x60] sm:$0xff]
    %v3624 = vld [vmem:[%s3 + $0x68] sm:$0xff]
    %v3625 = vld [vmem:[%s3 + $0x70] sm:$0xff]
    %v3626 = vld [vmem:[%s3 + $0x78] sm:$0xff]
    %v3627 = vld [vmem:[%s3 + $0x80] sm:$0xff]
    %v3628 = vld [vmem:[%s3 + $0x88] sm:$0xff]
    %v3629 = vld [vmem:[%s3 + $0x90] sm:$0xff]
    %v3630 = vld [vmem:[%s3 + $0x98] sm:$0xff]
    %v3631 = vld [vmem:[%s3 + $0xa0] sm:$0xff]
    %v3632 = vld [vmem:[%s3 + $0xa8] sm:$0xff]
    %v3633 = vld [vmem:[%s3 + $0xb0] sm:$0xff]
    %v3634 = vld [vmem:[%s3 + $0xb8] sm:$0xff]
    %v3635 = vld [vmem:[%s3 + $0xc0] sm:$0xff]
    %v3636 = vld [vmem:[%s3 + $0xc8] sm:$0xff]
    %v3637 = vld [vmem:[%s3 + $0xd0] sm:$0xff]
    %v3638 = vld [vmem:[%s3 + $0xd8] sm:$0xff]
    %v3639 = vld [vmem:[%s3 + $0xe0] sm:$0xff]
    %v3640 = vld [vmem:[%s3 + $0xe8] sm:$0xff]
    %v3641 = vld [vmem:[%s3 + $0xf0] sm:$0xff]
    %v3642 = vld [vmem:[%s3 + $0xf8] sm:$0xff]
    %v3643 = vld [vmem:[%s3 + $0x100] sm:$0xff]
    %v3644 = vld [vmem:[%s3 + $0x108] sm:$0xff]
    %v3645 = vld [vmem:[%s3 + $0x110] sm:$0xff]
    %v3646 = vld [vmem:[%s3 + $0x118] sm:$0xff]
    %v3647 = vld [vmem:[%s3 + $0x120] sm:$0xff]
    %v3648 = vld [vmem:[%s3 + $0x128] sm:$0xff]
    %v3649 = vld [vmem:[%s3 + $0x130] sm:$0xff]
    %v3650 = vld [vmem:[%s3 + $0x138] sm:$0xff]
    %v3651 = vld [vmem:[%s3 + $0x140] sm:$0xff]
    %v3652 = vld [vmem:[%s3 + $0x148] sm:$0xff]
    %v3653 = vld [vmem:[%s3 + $0x150] sm:$0xff]
    %v3654 = vld [vmem:[%s3 + $0x158] sm:$0xff]
    %v3655 = vld [vmem:[%s3 + $0x160] sm:$0xff]
    %v3656 = vld [vmem:[%s3 + $0x168] sm:$0xff]
    %v3657 = vld [vmem:[%s3 + $0x170] sm:$0xff]
    %v3658 = vld [vmem:[%s3 + $0x178] sm:$0xff]
    %v3659 = vld [vmem:[%s3 + $0x180] sm:$0xff]
    %v3660 = vld [vmem:[%s3 + $0x188] sm:$0xff]
    %v3661 = vld [vmem:[%s3 + $0x190] sm:$0xff]
    %v3662 = vld [vmem:[%s3 + $0x198] sm:$0xff]
    %v3663 = vld [vmem:[%s3 + $0x1a0] sm:$0xff]
    %v3664 = vld [vmem:[%s3 + $0x1a8] sm:$0xff]
    %v3665 = vld [vmem:[%s3 + $0x1b0] sm:$0xff]
    %v3666 = vld [vmem:[%s3 + $0x1b8] sm:$0xff]
    %v3667 = vld [vmem:[%s3 + $0x1c0] sm:$0xff]
    %v3668 = vld [vmem:[%s3 + $0x1c8] sm:$0xff]
    %v3669 = vld [vmem:[%s3 + $0x1d0] sm:$0xff]
    %v3670 = vld [vmem:[%s3 + $0x1d8] sm:$0xff]
    %v3671 = vld [vmem:[%s3 + $0x1e0] sm:$0xff]
    %v3672 = vld [vmem:[%s3 + $0x1e8] sm:$0xff]
    %v3673 = vld [vmem:[%s3 + $0x1f0] sm:$0xff]
    %v3674 = vld [vmem:[%s3 + $0x1f8] sm:$0xff]
    %v3675 = vld [vmem:[%s4] sm:$0x1]
    %v3677 = vlaneseq
    %v3678 = vshrl.u32 %v3677, 7
    %v3679 = vsub.s32 0, %v3678
    %v3680 = vrot.slane %v3675, %v3679
    %3682 = vmatprep.subr.mxu0 0.0
    %3683 = vmatpush1.msra.mxu0 %v3626
    %3684 = vmatprep.subr.mxu0 0.0
    %3685 = vmatpush1.msra.mxu0 %v3625
    %3686 = vmatprep.subr.mxu0 0.0
    %3687 = vmatpush1.msra.mxu0 %v3624
    %3688 = vmatprep.subr.mxu0 0.0
    %3689 = vmatpush1.msra.mxu0 %v3623
    %3690 = vmatprep.subr.mxu0 0.0
    %3691 = vmatpush1.msra.mxu0 %v3622
    %3692 = vmatprep.subr.mxu0 0.0
    %3693 = vmatpush1.msra.mxu0 %v3621
    %3694 = vmatprep.subr.mxu0 0.0
    %3695 = vmatpush1.msra.mxu0 %v3620
    %3696 = vmatprep.subr.mxu0 0.0
    %3697 = vmatpush1.msra.mxu0 %v3619
    %3698 = vmatprep.subr.mxu0 0.0
    %3699 = vmatpush1.msra.mxu0 %v3618
    %3700 = vmatprep.subr.mxu0 0.0
    %3701 = vmatpush1.msra.mxu0 %v3617
    %3702 = vmatprep.subr.mxu0 0.0
    %3703 = vmatpush1.msra.mxu0 %v3616
    %3704 = vmatprep.subr.mxu0 0.0
    %3705 = vmatpush1.msra.mxu0 %v3615
    %3706 = vmatprep.subr.mxu0 0.0
    %3707 = vmatpush1.msra.mxu0 %v3614
    %3708 = vmatprep.subr.mxu0 0.0
    %3709 = vmatpush1.msra.mxu0 %v3613
    %3710 = vmatprep.subr.mxu0 0.0
    %3711 = vmatpush1.msra.mxu0 %v3612
    %3712 = vmatprep.subr.mxu0 0.0
    %3713 = vmatpush1.msra.mxu0 %v3611
    %3714 = vmatprep.subr.mxu0 0.0
    %3715 = vmatpush2.msra.mxu0 %v3642
    %3716 = vmatprep.subr.mxu0 0.0
    %3717 = vmatpush2.msra.mxu0 %v3641
    %3718 = vmatprep.subr.mxu0 0.0
    %3719 = vmatpush2.msra.mxu0 %v3640
    %3720 = vmatprep.subr.mxu0 0.0
    %3721 = vmatpush2.msra.mxu0 %v3639
    %3722 = vmatprep.subr.mxu0 0.0
    %3723 = vmatpush2.msra.mxu0 %v3638
    %3724 = vmatprep.subr.mxu0 0.0
    %3725 = vmatpush2.msra.mxu0 %v3637
    %3726 = vmatprep.subr.mxu0 0.0
    %3727 = vmatpush2.msra.mxu0 %v3636
    %3728 = vmatprep.subr.mxu0 0.0
    %3729 = vmatpush2.msra.mxu0 %v3635
    %3730 = vmatprep.subr.mxu0 0.0
    %3731 = vmatpush2.msra.mxu0 %v3634
    %3732 = vmatprep.subr.mxu0 0.0
    %3733 = vmatpush2.msra.mxu0 %v3633
    %3734 = vmatprep.subr.mxu0 0.0
    %3735 = vmatpush2.msra.mxu0 %v3632
    %3736 = vmatprep.subr.mxu0 0.0
    %3737 = vmatpush2.msra.mxu0 %v3631
    %3738 = vmatprep.subr.mxu0 0.0
    %3739 = vmatpush2.msra.mxu0 %v3630
    %3740 = vmatprep.subr.mxu0 0.0
    %3741 = vmatpush2.msra.mxu0 %v3629
    %3742 = vmatprep.subr.mxu0 0.0
    %3743 = vmatpush2.msra.mxu0 %v3628
    %3744 = vmatprep.subr.mxu0 0.0
    %3745 = vmatpush2.msra.mxu0 %v3627
    %3746 = vmatprep.mubr.f32.mxu0 %v3608
    %3747 = vmatmul.mubr.f32.gmra.mxu0 %v3607
    %v3748 = vpop.f32.mrf.mxu0
    %v3749 = vadd.f32 %v3680, %v3748
    %v3750 = vpop.f32.mrf.mxu0
    %3751 = vdwg.mxu0
    %3752 = vmatprep.subr.mxu0 0.0
    %3753 = vmatpush1.msra.mxu0 %v3658
    %3754 = vmatprep.subr.mxu0 0.0
    %3755 = vmatpush1.msra.mxu0 %v3657
    %3756 = vmatprep.subr.mxu0 0.0
    %3757 = vmatpush1.msra.mxu0 %v3656
    %3758 = vmatprep.subr.mxu0 0.0
    %3759 = vmatpush1.msra.mxu0 %v3655
    %3760 = vmatprep.subr.mxu0 0.0
    %3761 = vmatpush1.msra.mxu0 %v3654
    %3762 = vmatprep.subr.mxu0 0.0
    %3763 = vmatpush1.msra.mxu0 %v3653
    %3764 = vmatprep.subr.mxu0 0.0
    %3765 = vmatpush1.msra.mxu0 %v3652
    %3766 = vmatprep.subr.mxu0 0.0
    %3767 = vmatpush1.msra.mxu0 %v3651
    %3768 = vmatprep.subr.mxu0 0.0
    %3769 = vmatpush1.msra.mxu0 %v3650
    %3770 = vmatprep.subr.mxu0 0.0
    %3771 = vmatpush1.msra.mxu0 %v3649
    %3772 = vmatprep.subr.mxu0 0.0
    %3773 = vmatpush1.msra.mxu0 %v3648
    %3774 = vmatprep.subr.mxu0 0.0
    %3775 = vmatpush1.msra.mxu0 %v3647
    %3776 = vmatprep.subr.mxu0 0.0
    %3777 = vmatpush1.msra.mxu0 %v3646
    %3778 = vmatprep.subr.mxu0 0.0
    %3779 = vmatpush1.msra.mxu0 %v3645
    %3780 = vmatprep.subr.mxu0 0.0
    %3781 = vmatpush1.msra.mxu0 %v3644
    %3782 = vmatprep.subr.mxu0 0.0
    %3783 = vmatpush1.msra.mxu0 %v3643
    %3784 = vmatprep.subr.mxu0 0.0
    %3785 = vmatpush2.msra.mxu0 %v3674
    %3786 = vmatprep.subr.mxu0 0.0
    %3787 = vmatpush2.msra.mxu0 %v3673
    %3788 = vmatprep.subr.mxu0 0.0
    %3789 = vmatpush2.msra.mxu0 %v3672
    %3790 = vmatprep.subr.mxu0 0.0
    %3791 = vmatpush2.msra.mxu0 %v3671
    %3792 = vmatprep.subr.mxu0 0.0
    %3793 = vmatpush2.msra.mxu0 %v3670
    %3794 = vmatprep.subr.mxu0 0.0
    %3795 = vmatpush2.msra.mxu0 %v3669
    %3796 = vmatprep.subr.mxu0 0.0
    %3797 = vmatpush2.msra.mxu0 %v3668
    %3798 = vmatprep.subr.mxu0 0.0
    %3799 = vmatpush2.msra.mxu0 %v3667
    %3800 = vmatprep.subr.mxu0 0.0
    %3801 = vmatpush2.msra.mxu0 %v3666
    %3802 = vmatprep.subr.mxu0 0.0
    %3803 = vmatpush2.msra.mxu0 %v3665
    %3804 = vmatprep.subr.mxu0 0.0
    %3805 = vmatpush2.msra.mxu0 %v3664
    %3806 = vmatprep.subr.mxu0 0.0
    %3807 = vmatpush2.msra.mxu0 %v3663
    %3808 = vmatprep.subr.mxu0 0.0
    %3809 = vmatpush2.msra.mxu0 %v3662
    %3810 = vmatprep.subr.mxu0 0.0
    %3811 = vmatpush2.msra.mxu0 %v3661
    %3812 = vmatprep.subr.mxu0 0.0
    %3813 = vmatpush2.msra.mxu0 %v3660
    %3814 = vmatprep.subr.mxu0 0.0
    %3815 = vmatpush2.msra.mxu0 %v3659
    %3816 = vmatprep.mubr.f32.mxu0 %v3610
    %3817 = vmatmul.mubr.f32.gmra.mxu0 %v3609
    %v3818 = vpop.f32.mrf.mxu0
    %v3819 = vadd.f32 %v3749, %v3818
    %v3820 = vpop.f32.mrf.mxu0
    %3821 = vdwg.mxu0
    %vm3822 = vcmask 41984
    %3823 = vst.msk [vmem:[#allocation2] sm:$0x3] %vm3822, %v3819
    // Predicated region
    $region22: #{atari_deep_net_forward.3} parent=1 // pred_check
      _
    $region23: #{atari_deep_net_forward.3} parent=1 // pred_check_branch
      %3825 = sbr.rel (0) target = $region25
    $region24: #{atari_deep_net_forward.3} parent=1 // pred_region
      %s3827 = ssub.s32 32, 32
      %3828 = vsyncadd [#allocation3], %s3827
      %s3830 = sshll.u32 [#allocation2], 4
      %s3831 = int_to_ptr.vmem [resolvable:$true] %s3830
      %3833 = dma.vmem_to_hbm [thread:$0]  %s3831, 32, %s5, [#allocation3]
    $region25: #{atari_deep_net_forward.3} parent=1 // pred_fallthru
      _
    // Predicated region
    $region26: #{atari_deep_net_forward.3} parent=1 // pred_check
      _
    $region27: #{atari_deep_net_forward.3} parent=1 // pred_check_branch
      %3835 = sbr.rel (0) target = $region29
    $region28: #{atari_deep_net_forward.3} parent=1 // pred_region
      %3836 = dma.done [#allocation3], 32
    $region29: #{atari_deep_net_forward.3} parent=1 // pred_fallthru
      _
    %3837 = vsyncpa [#allocation3], 1

</llo_original>
